<compile_context>
chip_gen: v7x
topology: tpu7x:2x2x1
jax: 0.10.0
libtpu: 0.0.40
codegen_flags: <defaults>
</compile_context>

<pallas_src>
import jax
import jax.numpy as jnp
from jax.experimental import pallas as pl
from jax.experimental.pallas import tpu as pltpu

# ----------------------------- fixed geometry ------------------------------
NP1 = 28 * 28          # 784  conv1 output pixels per image
NB1 = 196              # 14*14 pixels per pool-phase block (4 blocks = 784)

WP2 = 18               # zero-padded height/width of conv2's input grid
NF2 = WP2 * WP2        # 324  rows of the padded, flattened conv2 input
R2 = 13 * WP2 + 14     # 248  conv2 output rows (flat over the padded grid)
K2 = 25 * 20           # 500  conv2 im2col contraction depth


# ------------------------------ fused kernel -------------------------------
def _net_kernel(x_ref, w1_ref, b1_ref, w2_ref, b2_ref,
                wc31_ref, bc1_ref, wfc2_ref, bfc2_ref,
                out_ref, fbuf2, im2, cbuf2, fcin):
    f32 = jnp.float32
    bsz = x_ref.shape[0]

    for b in range(bsz):
        # ---- conv1 (MXU) + ReLU + 2x2/2 max-pool ---------------------------
        # Input rows are pre-ordered in 4 pool-phase blocks of 196 rows each
        # (block s = 2*sy+sx holds output pixels (2*py+sy, 2*px+sx) ordered by
        # py*14+px), so the pool is an elementwise max of the 4 block results.
        blks = []
        for s in range(4):
            o = jnp.dot(x_ref[b, s * NB1:(s + 1) * NB1, :], w1_ref[...],
                        preferred_element_type=f32)
            blks.append(jnp.maximum(o + b1_ref[...], 0.0))
        pooled1 = jnp.maximum(jnp.maximum(blks[0], blks[1]),
                              jnp.maximum(blks[2], blks[3]))        # (196, 20)

        # ---- scatter pool1 into the zero-padded, flattened conv2 input -----
        fbuf2[...] = jnp.zeros_like(fbuf2)
        for py in range(14):
            dst = (py + 2) * WP2 + 2
            fbuf2[dst:dst + 14, :] = pooled1[py * 14:py * 14 + 14, :]

        # ---- conv2: in-VMEM im2col (25 shifted slabs along lanes) + 1 dot --
        for di in range(5):
            for dj in range(5):
                t = di * 5 + dj
                off = di * WP2 + dj
                im2[:, t * 20:(t + 1) * 20] = fbuf2[off:off + R2, :]
        out2 = jnp.dot(im2[...], w2_ref[...], preferred_element_type=f32)
        cbuf2[...] = jnp.maximum(out2 + b2_ref[...], 0.0)           # (248, 50)

        # ---- pool2 (only the 16 pixels conv3 keeps) -> fc-fold input row ---
        # conv3 output pixel k = 4*i + j reads pool2 pixel (2i, 2j); its 2x2
        # window sits at flat rows {r, r+1, r+18, r+19}, r = 72*i + 4*j.
        for k in range(16):
            i, j = divmod(k, 4)
            r = 72 * i + 4 * j
            px = jnp.maximum(
                jnp.maximum(cbuf2[r:r + 1, :], cbuf2[r + 1:r + 2, :]),
                jnp.maximum(cbuf2[r + WP2:r + WP2 + 1, :],
                            cbuf2[r + WP2 + 1:r + WP2 + 2, :]))     # (1, 50)
            fcin[b:b + 1, k * 50:(k + 1) * 50] = px

    # ---- conv3+fc1 fold (one batched dot) + ReLU, fc2, log_softmax ---------
    y1 = jnp.dot(fcin[...], wc31_ref[...], preferred_element_type=f32)
    y1 = jnp.maximum(y1 + bc1_ref[...], 0.0)                        # (B, 500)
    logits = (jnp.dot(y1, wfc2_ref[...], preferred_element_type=f32)
              + bfc2_ref[...])                                      # (B, 10)
    m = jnp.max(logits, axis=-1, keepdims=True)
    lse = m + jnp.log(jnp.sum(jnp.exp(logits - m), axis=-1, keepdims=True))
    out_ref[0] = (logits - lse).astype(out_ref.dtype)


# --------------------------- parameter preparation --------------------------
def prepare_params(params):
    """One-time repack of torch-layout params into kernel layout."""
    hi = jax.lax.Precision.HIGHEST
    # conv1 / conv2 weights -> (taps*cin, cout), tap index = di*5 + dj.
    w1 = jnp.transpose(params["conv1_w"], (2, 3, 1, 0)).reshape(25, 20)
    w2 = jnp.transpose(params["conv2_w"], (2, 3, 1, 0)).reshape(25 * 20, 50)
    # Fold conv3 (1x1 linear) + channel-major flatten into fc1:
    #   fc1 input index m = c3*16 + (4*i + j)
    w3 = params["conv3_w"].reshape(100, 50)                       # (c3, cin)
    fc1_r = params["fc1_w"].reshape(500, 100, 16)                 # (o, c3, k)
    wc31 = jnp.einsum("ci,ock->kio", w3, fc1_r, precision=hi)     # (16, 50, 500)
    bc1 = params["fc1_b"] + jnp.einsum("c,ock->o", params["conv3_b"], fc1_r,
                                       precision=hi)
    return {
        "w1": w1, "b1": params["conv1_b"].reshape(1, 20),
        "w2": w2, "b2": params["conv2_b"].reshape(1, 50),
        "wc31": wc31.reshape(16 * 50, 500), "bc1": bc1.reshape(1, 500),
        "wfc2": params["fc2_w"].T,                                # (500, 10)
        "bfc2": params["fc2_b"].reshape(1, 10),
    }


# --------------------------------- forward ----------------------------------
@jax.jit
def net_forward(prepped, x_nchw):
    """x_nchw: (N, 1, 28, 28) float32 (same as the PyTorch module input)."""
    n = x_nchw.shape[0]
    # B images per grid step; keeps grid >= 2 whenever n >= 2 (v7x megacore)
    # and caps per-step VMEM (~11 MiB at B=8, safe on v5e/v6e/v7x).
    bsz = max(1, min(8, n // 2))
    steps = -(-n // bsz)
    n_pad = steps * bsz

    # Zero-pad batch + 2-pixel spatial halo, extract the 25 conv1 taps per
    # output pixel, and order rows by (pool phase, pooled pixel) so the
    # in-kernel 2x2 max-pool is 3 vector maxes over contiguous 196-row blocks.
    xp = jnp.pad(x_nchw, ((0, n_pad - n), (0, 0), (2, 2), (2, 2)))[:, 0]
    patches = jnp.stack(
        [xp[:, di:di + 28, dj:dj + 28] for di in range(5) for dj in range(5)],
        axis=-1)                                            # (n_pad, 28, 28, 25)
    patches = patches.reshape(n_pad, 14, 2, 14, 2, 25)
    patches = patches.transpose(0, 2, 4, 1, 3, 5).reshape(n_pad, NP1, 25)

    def full(shape):
        return pl.BlockSpec(shape, lambda i, _s=len(shape): (0,) * _s)

    out = pl.pallas_call(
        _net_kernel,
        out_shape=jax.ShapeDtypeStruct((steps, bsz, 10), jnp.float32),
        grid_spec=pltpu.PrefetchScalarGridSpec(
            num_scalar_prefetch=0,
            grid=(steps,),
            in_specs=[
                pl.BlockSpec((bsz, NP1, 25), lambda i: (i, 0, 0)),  # conv1 taps
                full((25, 20)), full((1, 20)),                      # conv1
                full((K2, 50)), full((1, 50)),                      # conv2 (im2col)
                full((16 * 50, 500)), full((1, 500)),               # conv3+fc1 fold
                full((500, 10)), full((1, 10)),                     # fc2
            ],
            out_specs=pl.BlockSpec((1, bsz, 10), lambda i: (i, 0, 0)),
            scratch_shapes=[
                pltpu.VMEM((NF2, 20), jnp.float32),     # padded pool1 grid
                pltpu.VMEM((R2, K2), jnp.float32),      # conv2 im2col
                pltpu.VMEM((R2, 50), jnp.float32),      # conv2 output
                pltpu.VMEM((bsz, 800), jnp.float32),    # fc-fold input rows
            ],
        ),
        compiler_params=pltpu.CompilerParams(
            dimension_semantics=("parallel",),
            vmem_limit_bytes=32 * 1024 * 1024,
        ),
    )(patches, prepped["w1"], prepped["b1"], prepped["w2"], prepped["b2"],
      prepped["wc31"], prepped["bc1"], prepped["wfc2"], prepped["bfc2"])
    return out.reshape(n_pad, 10)[:n]


# ------------------------------ synthetic params -----------------------------
def init_params(key):
    """Deterministic synthetic params, PyTorch-style uniform(+-1/sqrt(fan_in))."""
    keys = jax.random.split(key, 10)

    def u(k, shape, fan_in):
        bound = 1.0 / jnp.sqrt(float(fan_in))
        return jax.random.uniform(k, shape, jnp.float32, -bound, bound)

    return {
        "conv1_w": u(keys[0], (20, 1, 5, 5), 1 * 25),
        "conv1_b": u(keys[1], (20,), 1 * 25),
        "conv2_w": u(keys[2], (50, 20, 5, 5), 20 * 25),
        "conv2_b": u(keys[3], (50,), 20 * 25),
        "conv3_w": u(keys[4], (100, 50, 1, 1), 50),
        "conv3_b": u(keys[5], (100,), 50),
        "fc1_w": u(keys[6], (500, 1600), 1600),   # torch nn.Linear layout (out, in)
        "fc1_b": u(keys[7], (500,), 1600),
        "fc2_w": u(keys[8], (10, 500), 500),
        "fc2_b": u(keys[9], (10,), 500),
    }


# ------------------------------ pure-JAX reference ---------------------------
def _reference_forward(params, x):
    hi = jax.lax.Precision.HIGHEST
    dn = ("NCHW", "OIHW", "NCHW")
    y = jax.lax.conv_general_dilated(x, params["conv1_w"], (1, 1),
                                     [(2, 2), (2, 2)], dimension_numbers=dn,
                                     precision=hi)
    y = jax.nn.relu(y + params["conv1_b"][None, :, None, None])
    y = jax.lax.reduce_window(y, -jnp.inf, jax.lax.max, (1, 1, 2, 2),
                              (1, 1, 2, 2), "VALID")
    y = jax.lax.conv_general_dilated(y, params["conv2_w"], (1, 1),
                                     [(2, 2), (2, 2)], dimension_numbers=dn,
                                     precision=hi)
    y = jax.nn.relu(y + params["conv2_b"][None, :, None, None])
    y = jax.lax.reduce_window(y, -jnp.inf, jax.lax.max, (1, 1, 2, 2),
                              (1, 1, 2, 2), "VALID")
    y = jax.lax.conv_general_dilated(y, params["conv3_w"], (2, 2),
                                     [(0, 0), (0, 0)], dimension_numbers=dn,
                                     precision=hi)
    y = y + params["conv3_b"][None, :, None, None]
    y = y.reshape(y.shape[0], -1)
    y = jax.nn.relu(jnp.dot(y, params["fc1_w"].T, precision=hi) + params["fc1_b"])
    y = jnp.dot(y, params["fc2_w"].T, precision=hi) + params["fc2_b"]
    return jax.nn.log_softmax(y, axis=-1)


if __name__ == "__main__":
    key = jax.random.PRNGKey(0)
    pkey, xkey = jax.random.split(key)
    params = init_params(pkey)
    x = jax.random.normal(xkey, (2, 1, 28, 28), jnp.float32)  # batch=2 MNIST-sized

    prepped = prepare_params(params)                          # one-time weight repack
    out = net_forward(prepped, x)
    jax.block_until_ready(out)
    assert out.shape == (2, 10) and out.dtype == jnp.float32

    ref = _reference_forward(params, x)
    err = float(jnp.max(jnp.abs(out - ref)))
    assert err < 1e-3, f"mismatch vs reference, max abs err = {err}"
    print("KERNEL_OK")
</pallas_src>

<mosaic_0001>
module attributes {stable_mosaic.version = 11 : i64} {
  func.func @_net_kernel(%arg0: i32, %arg1: memref<1x784x25xf32, #tpu.memory_space<vmem>>, %arg2: memref<25x20xf32, #tpu.memory_space<vmem>>, %arg3: memref<1x20xf32, #tpu.memory_space<vmem>>, %arg4: memref<500x50xf32, #tpu.memory_space<vmem>>, %arg5: memref<1x50xf32, #tpu.memory_space<vmem>>, %arg6: memref<800x500xf32, #tpu.memory_space<vmem>>, %arg7: memref<1x500xf32, #tpu.memory_space<vmem>>, %arg8: memref<500x10xf32, #tpu.memory_space<vmem>>, %arg9: memref<1x10xf32, #tpu.memory_space<vmem>>, %arg10: memref<1x1x10xf32, #tpu.memory_space<vmem>>, %arg11: memref<324x20xf32, #tpu.memory_space<vmem>>, %arg12: memref<248x500xf32, #tpu.memory_space<vmem>>, %arg13: memref<248x50xf32, #tpu.memory_space<vmem>>, %arg14: memref<1x800xf32, #tpu.memory_space<vmem>>) attributes {dimension_semantics = [#tpu.dimension_semantics<parallel>], iteration_bounds = array<i64: 2>, scalar_prefetch = 0 : i64, scratch_operands = 4 : i64, tpu.core_type = #tpu.core_type<tc>, window_params = [{transform_indices = @transform_0, window_bounds = array<i64: 1, 784, 25>}, {pipeline_mode = #tpu.pipeline_mode<synchronous>, transform_indices = @transform_1, window_bounds = array<i64: 25, 20>}, {pipeline_mode = #tpu.pipeline_mode<synchronous>, transform_indices = @transform_2, window_bounds = array<i64: 1, 20>}, {pipeline_mode = #tpu.pipeline_mode<synchronous>, transform_indices = @transform_3, window_bounds = array<i64: 500, 50>}, {pipeline_mode = #tpu.pipeline_mode<synchronous>, transform_indices = @transform_4, window_bounds = array<i64: 1, 50>}, {pipeline_mode = #tpu.pipeline_mode<synchronous>, transform_indices = @transform_5, window_bounds = array<i64: 800, 500>}, {pipeline_mode = #tpu.pipeline_mode<synchronous>, transform_indices = @transform_6, window_bounds = array<i64: 1, 500>}, {pipeline_mode = #tpu.pipeline_mode<synchronous>, transform_indices = @transform_7, window_bounds = array<i64: 500, 10>}, {pipeline_mode = #tpu.pipeline_mode<synchronous>, transform_indices = @transform_8, window_bounds = array<i64: 1, 10>}, {transform_indices = @transform_9, window_bounds = array<i64: 1, 1, 10>}]} {
    %c0 = arith.constant 0 : index
    %c0_0 = arith.constant 0 : index
    %c0_1 = arith.constant 0 : index
    %0 = vector.load %arg1[%c0, %c0_0, %c0_1] : memref<1x784x25xf32, #tpu.memory_space<vmem>>, vector<1x196x25xf32>
    %1 = vector.shape_cast %0 : vector<1x196x25xf32> to vector<196x25xf32>
    %c0_2 = arith.constant 0 : index
    %c0_3 = arith.constant 0 : index
    %2 = vector.load %arg2[%c0_2, %c0_3] : memref<25x20xf32, #tpu.memory_space<vmem>>, vector<25x20xf32>
    %cst = arith.constant dense<0.000000e+00> : vector<196x20xf32>
    %3 = tpu.matmul %1, %2, %cst {dimension_numbers = #tpu.dot_dimension_numbers<[1], [0], [0], [1], [0, 0, 1, 1], [], []>} : vector<196x25xf32>, vector<25x20xf32>, vector<196x20xf32> -> vector<196x20xf32>
    %c0_4 = arith.constant 0 : index
    %c0_5 = arith.constant 0 : index
    %4 = vector.load %arg3[%c0_4, %c0_5] : memref<1x20xf32, #tpu.memory_space<vmem>>, vector<1x20xf32>
    %5 = vector.broadcast %4 : vector<1x20xf32> to vector<196x20xf32>
    %6 = arith.addf %3, %5 : vector<196x20xf32>
    %cst_6 = arith.constant 0.000000e+00 : f32
    %7 = vector.broadcast %cst_6 : f32 to vector<196x20xf32>
    %8 = arith.maximumf %6, %7 : vector<196x20xf32>
    %c0_7 = arith.constant 0 : index
    %c196 = arith.constant 196 : index
    %c0_8 = arith.constant 0 : index
    %9 = vector.load %arg1[%c0_7, %c196, %c0_8] : memref<1x784x25xf32, #tpu.memory_space<vmem>>, vector<1x196x25xf32>
    %10 = vector.shape_cast %9 : vector<1x196x25xf32> to vector<196x25xf32>
    %c0_9 = arith.constant 0 : index
    %c0_10 = arith.constant 0 : index
    %11 = vector.load %arg2[%c0_9, %c0_10] : memref<25x20xf32, #tpu.memory_space<vmem>>, vector<25x20xf32>
    %cst_11 = arith.constant dense<0.000000e+00> : vector<196x20xf32>
    %12 = tpu.matmul %10, %11, %cst_11 {dimension_numbers = #tpu.dot_dimension_numbers<[1], [0], [0], [1], [0, 0, 1, 1], [], []>} : vector<196x25xf32>, vector<25x20xf32>, vector<196x20xf32> -> vector<196x20xf32>
    %c0_12 = arith.constant 0 : index
    %c0_13 = arith.constant 0 : index
    %13 = vector.load %arg3[%c0_12, %c0_13] : memref<1x20xf32, #tpu.memory_space<vmem>>, vector<1x20xf32>
    %14 = vector.broadcast %13 : vector<1x20xf32> to vector<196x20xf32>
    %15 = arith.addf %12, %14 : vector<196x20xf32>
    %cst_14 = arith.constant 0.000000e+00 : f32
    %16 = vector.broadcast %cst_14 : f32 to vector<196x20xf32>
    %17 = arith.maximumf %15, %16 : vector<196x20xf32>
    %c0_15 = arith.constant 0 : index
    %c392 = arith.constant 392 : index
    %c0_16 = arith.constant 0 : index
    %18 = vector.load %arg1[%c0_15, %c392, %c0_16] : memref<1x784x25xf32, #tpu.memory_space<vmem>>, vector<1x196x25xf32>
    %19 = vector.shape_cast %18 : vector<1x196x25xf32> to vector<196x25xf32>
    %c0_17 = arith.constant 0 : index
    %c0_18 = arith.constant 0 : index
    %20 = vector.load %arg2[%c0_17, %c0_18] : memref<25x20xf32, #tpu.memory_space<vmem>>, vector<25x20xf32>
    %cst_19 = arith.constant dense<0.000000e+00> : vector<196x20xf32>
    %21 = tpu.matmul %19, %20, %cst_19 {dimension_numbers = #tpu.dot_dimension_numbers<[1], [0], [0], [1], [0, 0, 1, 1], [], []>} : vector<196x25xf32>, vector<25x20xf32>, vector<196x20xf32> -> vector<196x20xf32>
    %c0_20 = arith.constant 0 : index
    %c0_21 = arith.constant 0 : index
    %22 = vector.load %arg3[%c0_20, %c0_21] : memref<1x20xf32, #tpu.memory_space<vmem>>, vector<1x20xf32>
    %23 = vector.broadcast %22 : vector<1x20xf32> to vector<196x20xf32>
    %24 = arith.addf %21, %23 : vector<196x20xf32>
    %cst_22 = arith.constant 0.000000e+00 : f32
    %25 = vector.broadcast %cst_22 : f32 to vector<196x20xf32>
    %26 = arith.maximumf %24, %25 : vector<196x20xf32>
    %c0_23 = arith.constant 0 : index
    %c588 = arith.constant 588 : index
    %c0_24 = arith.constant 0 : index
    %27 = vector.load %arg1[%c0_23, %c588, %c0_24] : memref<1x784x25xf32, #tpu.memory_space<vmem>>, vector<1x196x25xf32>
    %28 = vector.shape_cast %27 : vector<1x196x25xf32> to vector<196x25xf32>
    %c0_25 = arith.constant 0 : index
    %c0_26 = arith.constant 0 : index
    %29 = vector.load %arg2[%c0_25, %c0_26] : memref<25x20xf32, #tpu.memory_space<vmem>>, vector<25x20xf32>
    %cst_27 = arith.constant dense<0.000000e+00> : vector<196x20xf32>
    %30 = tpu.matmul %28, %29, %cst_27 {dimension_numbers = #tpu.dot_dimension_numbers<[1], [0], [0], [1], [0, 0, 1, 1], [], []>} : vector<196x25xf32>, vector<25x20xf32>, vector<196x20xf32> -> vector<196x20xf32>
    %c0_28 = arith.constant 0 : index
    %c0_29 = arith.constant 0 : index
    %31 = vector.load %arg3[%c0_28, %c0_29] : memref<1x20xf32, #tpu.memory_space<vmem>>, vector<1x20xf32>
    %32 = vector.broadcast %31 : vector<1x20xf32> to vector<196x20xf32>
    %33 = arith.addf %30, %32 : vector<196x20xf32>
    %cst_30 = arith.constant 0.000000e+00 : f32
    %34 = vector.broadcast %cst_30 : f32 to vector<196x20xf32>
    %35 = arith.maximumf %33, %34 : vector<196x20xf32>
    %36 = arith.maximumf %8, %17 : vector<196x20xf32>
    %37 = arith.maximumf %26, %35 : vector<196x20xf32>
    %38 = arith.maximumf %36, %37 : vector<196x20xf32>
    %cst_31 = arith.constant 0.000000e+00 : f32
    %39 = vector.broadcast %cst_31 : f32 to vector<324x20xf32>
    %c0_32 = arith.constant 0 : index
    %c0_33 = arith.constant 0 : index
    %40 = vector.load %arg11[%c0_32, %c0_33] : memref<324x20xf32, #tpu.memory_space<vmem>>, vector<324x20xf32>
    tpu.vector_store %arg11[%c0_32, %c0_33], %39 {strides = array<i32>} : memref<324x20xf32, #tpu.memory_space<vmem>>, vector<324x20xf32>,
    %41 = vector.extract_strided_slice %38 {offsets = [0, 0], sizes = [14, 20], strides = [1, 1]} : vector<196x20xf32> to vector<14x20xf32>
    %c38 = arith.constant 38 : index
    %c0_34 = arith.constant 0 : index
    %42 = vector.load %arg11[%c38, %c0_34] : memref<324x20xf32, #tpu.memory_space<vmem>>, vector<14x20xf32>
    tpu.vector_store %arg11[%c38, %c0_34], %41 {strides = array<i32>} : memref<324x20xf32, #tpu.memory_space<vmem>>, vector<14x20xf32>,
    %43 = vector.extract_strided_slice %38 {offsets = [14, 0], sizes = [14, 20], strides = [1, 1]} : vector<196x20xf32> to vector<14x20xf32>
    %c56 = arith.constant 56 : index
    %c0_35 = arith.constant 0 : index
    %44 = vector.load %arg11[%c56, %c0_35] : memref<324x20xf32, #tpu.memory_space<vmem>>, vector<14x20xf32>
    tpu.vector_store %arg11[%c56, %c0_35], %43 {strides = array<i32>} : memref<324x20xf32, #tpu.memory_space<vmem>>, vector<14x20xf32>,
    %45 = vector.extract_strided_slice %38 {offsets = [28, 0], sizes = [14, 20], strides = [1, 1]} : vector<196x20xf32> to vector<14x20xf32>
    %c74 = arith.constant 74 : index
    %c0_36 = arith.constant 0 : index
    %46 = vector.load %arg11[%c74, %c0_36] : memref<324x20xf32, #tpu.memory_space<vmem>>, vector<14x20xf32>
    tpu.vector_store %arg11[%c74, %c0_36], %45 {strides = array<i32>} : memref<324x20xf32, #tpu.memory_space<vmem>>, vector<14x20xf32>,
    %47 = vector.extract_strided_slice %38 {offsets = [42, 0], sizes = [14, 20], strides = [1, 1]} : vector<196x20xf32> to vector<14x20xf32>
    %c92 = arith.constant 92 : index
    %c0_37 = arith.constant 0 : index
    %48 = vector.load %arg11[%c92, %c0_37] : memref<324x20xf32, #tpu.memory_space<vmem>>, vector<14x20xf32>
    tpu.vector_store %arg11[%c92, %c0_37], %47 {strides = array<i32>} : memref<324x20xf32, #tpu.memory_space<vmem>>, vector<14x20xf32>,
    %49 = vector.extract_strided_slice %38 {offsets = [56, 0], sizes = [14, 20], strides = [1, 1]} : vector<196x20xf32> to vector<14x20xf32>
    %c110 = arith.constant 110 : index
    %c0_38 = arith.constant 0 : index
    %50 = vector.load %arg11[%c110, %c0_38] : memref<324x20xf32, #tpu.memory_space<vmem>>, vector<14x20xf32>
    tpu.vector_store %arg11[%c110, %c0_38], %49 {strides = array<i32>} : memref<324x20xf32, #tpu.memory_space<vmem>>, vector<14x20xf32>,
    %51 = vector.extract_strided_slice %38 {offsets = [70, 0], sizes = [14, 20], strides = [1, 1]} : vector<196x20xf32> to vector<14x20xf32>
    %c128 = arith.constant 128 : index
    %c0_39 = arith.constant 0 : index
    %52 = vector.load %arg11[%c128, %c0_39] : memref<324x20xf32, #tpu.memory_space<vmem>>, vector<14x20xf32>
    tpu.vector_store %arg11[%c128, %c0_39], %51 {strides = array<i32>} : memref<324x20xf32, #tpu.memory_space<vmem>>, vector<14x20xf32>,
    %53 = vector.extract_strided_slice %38 {offsets = [84, 0], sizes = [14, 20], strides = [1, 1]} : vector<196x20xf32> to vector<14x20xf32>
    %c146 = arith.constant 146 : index
    %c0_40 = arith.constant 0 : index
    %54 = vector.load %arg11[%c146, %c0_40] : memref<324x20xf32, #tpu.memory_space<vmem>>, vector<14x20xf32>
    tpu.vector_store %arg11[%c146, %c0_40], %53 {strides = array<i32>} : memref<324x20xf32, #tpu.memory_space<vmem>>, vector<14x20xf32>,
    %55 = vector.extract_strided_slice %38 {offsets = [98, 0], sizes = [14, 20], strides = [1, 1]} : vector<196x20xf32> to vector<14x20xf32>
    %c164 = arith.constant 164 : index
    %c0_41 = arith.constant 0 : index
    %56 = vector.load %arg11[%c164, %c0_41] : memref<324x20xf32, #tpu.memory_space<vmem>>, vector<14x20xf32>
    tpu.vector_store %arg11[%c164, %c0_41], %55 {strides = array<i32>} : memref<324x20xf32, #tpu.memory_space<vmem>>, vector<14x20xf32>,
    %57 = vector.extract_strided_slice %38 {offsets = [112, 0], sizes = [14, 20], strides = [1, 1]} : vector<196x20xf32> to vector<14x20xf32>
    %c182 = arith.constant 182 : index
    %c0_42 = arith.constant 0 : index
    %58 = vector.load %arg11[%c182, %c0_42] : memref<324x20xf32, #tpu.memory_space<vmem>>, vector<14x20xf32>
    tpu.vector_store %arg11[%c182, %c0_42], %57 {strides = array<i32>} : memref<324x20xf32, #tpu.memory_space<vmem>>, vector<14x20xf32>,
    %59 = vector.extract_strided_slice %38 {offsets = [126, 0], sizes = [14, 20], strides = [1, 1]} : vector<196x20xf32> to vector<14x20xf32>
    %c200 = arith.constant 200 : index
    %c0_43 = arith.constant 0 : index
    %60 = vector.load %arg11[%c200, %c0_43] : memref<324x20xf32, #tpu.memory_space<vmem>>, vector<14x20xf32>
    tpu.vector_store %arg11[%c200, %c0_43], %59 {strides = array<i32>} : memref<324x20xf32, #tpu.memory_space<vmem>>, vector<14x20xf32>,
    %61 = vector.extract_strided_slice %38 {offsets = [140, 0], sizes = [14, 20], strides = [1, 1]} : vector<196x20xf32> to vector<14x20xf32>
    %c218 = arith.constant 218 : index
    %c0_44 = arith.constant 0 : index
    %62 = vector.load %arg11[%c218, %c0_44] : memref<324x20xf32, #tpu.memory_space<vmem>>, vector<14x20xf32>
    tpu.vector_store %arg11[%c218, %c0_44], %61 {strides = array<i32>} : memref<324x20xf32, #tpu.memory_space<vmem>>, vector<14x20xf32>,
    %63 = vector.extract_strided_slice %38 {offsets = [154, 0], sizes = [14, 20], strides = [1, 1]} : vector<196x20xf32> to vector<14x20xf32>
    %c236 = arith.constant 236 : index
    %c0_45 = arith.constant 0 : index
    %64 = vector.load %arg11[%c236, %c0_45] : memref<324x20xf32, #tpu.memory_space<vmem>>, vector<14x20xf32>
    tpu.vector_store %arg11[%c236, %c0_45], %63 {strides = array<i32>} : memref<324x20xf32, #tpu.memory_space<vmem>>, vector<14x20xf32>,
    %65 = vector.extract_strided_slice %38 {offsets = [168, 0], sizes = [14, 20], strides = [1, 1]} : vector<196x20xf32> to vector<14x20xf32>
    %c254 = arith.constant 254 : index
    %c0_46 = arith.constant 0 : index
    %66 = vector.load %arg11[%c254, %c0_46] : memref<324x20xf32, #tpu.memory_space<vmem>>, vector<14x20xf32>
    tpu.vector_store %arg11[%c254, %c0_46], %65 {strides = array<i32>} : memref<324x20xf32, #tpu.memory_space<vmem>>, vector<14x20xf32>,
    %67 = vector.extract_strided_slice %38 {offsets = [182, 0], sizes = [14, 20], strides = [1, 1]} : vector<196x20xf32> to vector<14x20xf32>
    %c272 = arith.constant 272 : index
    %c0_47 = arith.constant 0 : index
    %68 = vector.load %arg11[%c272, %c0_47] : memref<324x20xf32, #tpu.memory_space<vmem>>, vector<14x20xf32>
    tpu.vector_store %arg11[%c272, %c0_47], %67 {strides = array<i32>} : memref<324x20xf32, #tpu.memory_space<vmem>>, vector<14x20xf32>,
    %c0_48 = arith.constant 0 : index
    %c0_49 = arith.constant 0 : index
    %69 = vector.load %arg11[%c0_48, %c0_49] : memref<324x20xf32, #tpu.memory_space<vmem>>, vector<248x20xf32>
    %c0_50 = arith.constant 0 : index
    %c0_51 = arith.constant 0 : index
    %70 = vector.load %arg12[%c0_50, %c0_51] : memref<248x500xf32, #tpu.memory_space<vmem>>, vector<248x20xf32>
    tpu.vector_store %arg12[%c0_50, %c0_51], %69 {strides = array<i32>} : memref<248x500xf32, #tpu.memory_space<vmem>>, vector<248x20xf32>,
    %c1 = arith.constant 1 : index
    %c0_52 = arith.constant 0 : index
    %71 = vector.load %arg11[%c1, %c0_52] : memref<324x20xf32, #tpu.memory_space<vmem>>, vector<248x20xf32>
    %c0_53 = arith.constant 0 : index
    %c20 = arith.constant 20 : index
    %72 = vector.load %arg12[%c0_53, %c20] : memref<248x500xf32, #tpu.memory_space<vmem>>, vector<248x20xf32>
    tpu.vector_store %arg12[%c0_53, %c20], %71 {strides = array<i32>} : memref<248x500xf32, #tpu.memory_space<vmem>>, vector<248x20xf32>,
    %c2 = arith.constant 2 : index
    %c0_54 = arith.constant 0 : index
    %73 = vector.load %arg11[%c2, %c0_54] : memref<324x20xf32, #tpu.memory_space<vmem>>, vector<248x20xf32>
    %c0_55 = arith.constant 0 : index
    %c40 = arith.constant 40 : index
    %74 = vector.load %arg12[%c0_55, %c40] : memref<248x500xf32, #tpu.memory_space<vmem>>, vector<248x20xf32>
    tpu.vector_store %arg12[%c0_55, %c40], %73 {strides = array<i32>} : memref<248x500xf32, #tpu.memory_space<vmem>>, vector<248x20xf32>,
    %c3 = arith.constant 3 : index
    %c0_56 = arith.constant 0 : index
    %75 = vector.load %arg11[%c3, %c0_56] : memref<324x20xf32, #tpu.memory_space<vmem>>, vector<248x20xf32>
    %c0_57 = arith.constant 0 : index
    %c60 = arith.constant 60 : index
    %76 = vector.load %arg12[%c0_57, %c60] : memref<248x500xf32, #tpu.memory_space<vmem>>, vector<248x20xf32>
    tpu.vector_store %arg12[%c0_57, %c60], %75 {strides = array<i32>} : memref<248x500xf32, #tpu.memory_space<vmem>>, vector<248x20xf32>,
    %c4 = arith.constant 4 : index
    %c0_58 = arith.constant 0 : index
    %77 = vector.load %arg11[%c4, %c0_58] : memref<324x20xf32, #tpu.memory_space<vmem>>, vector<248x20xf32>
    %c0_59 = arith.constant 0 : index
    %c80 = arith.constant 80 : index
    %78 = vector.load %arg12[%c0_59, %c80] : memref<248x500xf32, #tpu.memory_space<vmem>>, vector<248x20xf32>
    tpu.vector_store %arg12[%c0_59, %c80], %77 {strides = array<i32>} : memref<248x500xf32, #tpu.memory_space<vmem>>, vector<248x20xf32>,
    %c18 = arith.constant 18 : index
    %c0_60 = arith.constant 0 : index
    %79 = vector.load %arg11[%c18, %c0_60] : memref<324x20xf32, #tpu.memory_space<vmem>>, vector<248x20xf32>
    %c0_61 = arith.constant 0 : index
    %c100 = arith.constant 100 : index
    %80 = vector.load %arg12[%c0_61, %c100] : memref<248x500xf32, #tpu.memory_space<vmem>>, vector<248x20xf32>
    tpu.vector_store %arg12[%c0_61, %c100], %79 {strides = array<i32>} : memref<248x500xf32, #tpu.memory_space<vmem>>, vector<248x20xf32>,
    %c19 = arith.constant 19 : index
    %c0_62 = arith.constant 0 : index
    %81 = vector.load %arg11[%c19, %c0_62] : memref<324x20xf32, #tpu.memory_space<vmem>>, vector<248x20xf32>
    %c0_63 = arith.constant 0 : index
    %c120 = arith.constant 120 : index
    %82 = vector.load %arg12[%c0_63, %c120] : memref<248x500xf32, #tpu.memory_space<vmem>>, vector<248x20xf32>
    tpu.vector_store %arg12[%c0_63, %c120], %81 {strides = array<i32>} : memref<248x500xf32, #tpu.memory_space<vmem>>, vector<248x20xf32>,
    %c20_64 = arith.constant 20 : index
    %c0_65 = arith.constant 0 : index
    %83 = vector.load %arg11[%c20_64, %c0_65] : memref<324x20xf32, #tpu.memory_space<vmem>>, vector<248x20xf32>
    %c0_66 = arith.constant 0 : index
    %c140 = arith.constant 140 : index
    %84 = vector.load %arg12[%c0_66, %c140] : memref<248x500xf32, #tpu.memory_space<vmem>>, vector<248x20xf32>
    tpu.vector_store %arg12[%c0_66, %c140], %83 {strides = array<i32>} : memref<248x500xf32, #tpu.memory_space<vmem>>, vector<248x20xf32>,
    %c21 = arith.constant 21 : index
    %c0_67 = arith.constant 0 : index
    %85 = vector.load %arg11[%c21, %c0_67] : memref<324x20xf32, #tpu.memory_space<vmem>>, vector<248x20xf32>
    %c0_68 = arith.constant 0 : index
    %c160 = arith.constant 160 : index
    %86 = vector.load %arg12[%c0_68, %c160] : memref<248x500xf32, #tpu.memory_space<vmem>>, vector<248x20xf32>
    tpu.vector_store %arg12[%c0_68, %c160], %85 {strides = array<i32>} : memref<248x500xf32, #tpu.memory_space<vmem>>, vector<248x20xf32>,
    %c22 = arith.constant 22 : index
    %c0_69 = arith.constant 0 : index
    %87 = vector.load %arg11[%c22, %c0_69] : memref<324x20xf32, #tpu.memory_space<vmem>>, vector<248x20xf32>
    %c0_70 = arith.constant 0 : index
    %c180 = arith.constant 180 : index
    %88 = vector.load %arg12[%c0_70, %c180] : memref<248x500xf32, #tpu.memory_space<vmem>>, vector<248x20xf32>
    tpu.vector_store %arg12[%c0_70, %c180], %87 {strides = array<i32>} : memref<248x500xf32, #tpu.memory_space<vmem>>, vector<248x20xf32>,
    %c36 = arith.constant 36 : index
    %c0_71 = arith.constant 0 : index
    %89 = vector.load %arg11[%c36, %c0_71] : memref<324x20xf32, #tpu.memory_space<vmem>>, vector<248x20xf32>
    %c0_72 = arith.constant 0 : index
    %c200_73 = arith.constant 200 : index
    %90 = vector.load %arg12[%c0_72, %c200_73] : memref<248x500xf32, #tpu.memory_space<vmem>>, vector<248x20xf32>
    tpu.vector_store %arg12[%c0_72, %c200_73], %89 {strides = array<i32>} : memref<248x500xf32, #tpu.memory_space<vmem>>, vector<248x20xf32>,
    %c37 = arith.constant 37 : index
    %c0_74 = arith.constant 0 : index
    %91 = vector.load %arg11[%c37, %c0_74] : memref<324x20xf32, #tpu.memory_space<vmem>>, vector<248x20xf32>
    %c0_75 = arith.constant 0 : index
    %c220 = arith.constant 220 : index
    %92 = vector.load %arg12[%c0_75, %c220] : memref<248x500xf32, #tpu.memory_space<vmem>>, vector<248x20xf32>
    tpu.vector_store %arg12[%c0_75, %c220], %91 {strides = array<i32>} : memref<248x500xf32, #tpu.memory_space<vmem>>, vector<248x20xf32>,
    %c38_76 = arith.constant 38 : index
    %c0_77 = arith.constant 0 : index
    %93 = vector.load %arg11[%c38_76, %c0_77] : memref<324x20xf32, #tpu.memory_space<vmem>>, vector<248x20xf32>
    %c0_78 = arith.constant 0 : index
    %c240 = arith.constant 240 : index
    %94 = vector.load %arg12[%c0_78, %c240] : memref<248x500xf32, #tpu.memory_space<vmem>>, vector<248x20xf32>
    tpu.vector_store %arg12[%c0_78, %c240], %93 {strides = array<i32>} : memref<248x500xf32, #tpu.memory_space<vmem>>, vector<248x20xf32>,
    %c39 = arith.constant 39 : index
    %c0_79 = arith.constant 0 : index
    %95 = vector.load %arg11[%c39, %c0_79] : memref<324x20xf32, #tpu.memory_space<vmem>>, vector<248x20xf32>
    %c0_80 = arith.constant 0 : index
    %c260 = arith.constant 260 : index
    %96 = vector.load %arg12[%c0_80, %c260] : memref<248x500xf32, #tpu.memory_space<vmem>>, vector<248x20xf32>
    tpu.vector_store %arg12[%c0_80, %c260], %95 {strides = array<i32>} : memref<248x500xf32, #tpu.memory_space<vmem>>, vector<248x20xf32>,
    %c40_81 = arith.constant 40 : index
    %c0_82 = arith.constant 0 : index
    %97 = vector.load %arg11[%c40_81, %c0_82] : memref<324x20xf32, #tpu.memory_space<vmem>>, vector<248x20xf32>
    %c0_83 = arith.constant 0 : index
    %c280 = arith.constant 280 : index
    %98 = vector.load %arg12[%c0_83, %c280] : memref<248x500xf32, #tpu.memory_space<vmem>>, vector<248x20xf32>
    tpu.vector_store %arg12[%c0_83, %c280], %97 {strides = array<i32>} : memref<248x500xf32, #tpu.memory_space<vmem>>, vector<248x20xf32>,
    %c54 = arith.constant 54 : index
    %c0_84 = arith.constant 0 : index
    %99 = vector.load %arg11[%c54, %c0_84] : memref<324x20xf32, #tpu.memory_space<vmem>>, vector<248x20xf32>
    %c0_85 = arith.constant 0 : index
    %c300 = arith.constant 300 : index
    %100 = vector.load %arg12[%c0_85, %c300] : memref<248x500xf32, #tpu.memory_space<vmem>>, vector<248x20xf32>
    tpu.vector_store %arg12[%c0_85, %c300], %99 {strides = array<i32>} : memref<248x500xf32, #tpu.memory_space<vmem>>, vector<248x20xf32>,
    %c55 = arith.constant 55 : index
    %c0_86 = arith.constant 0 : index
    %101 = vector.load %arg11[%c55, %c0_86] : memref<324x20xf32, #tpu.memory_space<vmem>>, vector<248x20xf32>
    %c0_87 = arith.constant 0 : index
    %c320 = arith.constant 320 : index
    %102 = vector.load %arg12[%c0_87, %c320] : memref<248x500xf32, #tpu.memory_space<vmem>>, vector<248x20xf32>
    tpu.vector_store %arg12[%c0_87, %c320], %101 {strides = array<i32>} : memref<248x500xf32, #tpu.memory_space<vmem>>, vector<248x20xf32>,
    %c56_88 = arith.constant 56 : index
    %c0_89 = arith.constant 0 : index
    %103 = vector.load %arg11[%c56_88, %c0_89] : memref<324x20xf32, #tpu.memory_space<vmem>>, vector<248x20xf32>
    %c0_90 = arith.constant 0 : index
    %c340 = arith.constant 340 : index
    %104 = vector.load %arg12[%c0_90, %c340] : memref<248x500xf32, #tpu.memory_space<vmem>>, vector<248x20xf32>
    tpu.vector_store %arg12[%c0_90, %c340], %103 {strides = array<i32>} : memref<248x500xf32, #tpu.memory_space<vmem>>, vector<248x20xf32>,
    %c57 = arith.constant 57 : index
    %c0_91 = arith.constant 0 : index
    %105 = vector.load %arg11[%c57, %c0_91] : memref<324x20xf32, #tpu.memory_space<vmem>>, vector<248x20xf32>
    %c0_92 = arith.constant 0 : index
    %c360 = arith.constant 360 : index
    %106 = vector.load %arg12[%c0_92, %c360] : memref<248x500xf32, #tpu.memory_space<vmem>>, vector<248x20xf32>
    tpu.vector_store %arg12[%c0_92, %c360], %105 {strides = array<i32>} : memref<248x500xf32, #tpu.memory_space<vmem>>, vector<248x20xf32>,
    %c58 = arith.constant 58 : index
    %c0_93 = arith.constant 0 : index
    %107 = vector.load %arg11[%c58, %c0_93] : memref<324x20xf32, #tpu.memory_space<vmem>>, vector<248x20xf32>
    %c0_94 = arith.constant 0 : index
    %c380 = arith.constant 380 : index
    %108 = vector.load %arg12[%c0_94, %c380] : memref<248x500xf32, #tpu.memory_space<vmem>>, vector<248x20xf32>
    tpu.vector_store %arg12[%c0_94, %c380], %107 {strides = array<i32>} : memref<248x500xf32, #tpu.memory_space<vmem>>, vector<248x20xf32>,
    %c72 = arith.constant 72 : index
    %c0_95 = arith.constant 0 : index
    %109 = vector.load %arg11[%c72, %c0_95] : memref<324x20xf32, #tpu.memory_space<vmem>>, vector<248x20xf32>
    %c0_96 = arith.constant 0 : index
    %c400 = arith.constant 400 : index
    %110 = vector.load %arg12[%c0_96, %c400] : memref<248x500xf32, #tpu.memory_space<vmem>>, vector<248x20xf32>
    tpu.vector_store %arg12[%c0_96, %c400], %109 {strides = array<i32>} : memref<248x500xf32, #tpu.memory_space<vmem>>, vector<248x20xf32>,
    %c73 = arith.constant 73 : index
    %c0_97 = arith.constant 0 : index
    %111 = vector.load %arg11[%c73, %c0_97] : memref<324x20xf32, #tpu.memory_space<vmem>>, vector<248x20xf32>
    %c0_98 = arith.constant 0 : index
    %c420 = arith.constant 420 : index
    %112 = vector.load %arg12[%c0_98, %c420] : memref<248x500xf32, #tpu.memory_space<vmem>>, vector<248x20xf32>
    tpu.vector_store %arg12[%c0_98, %c420], %111 {strides = array<i32>} : memref<248x500xf32, #tpu.memory_space<vmem>>, vector<248x20xf32>,
    %c74_99 = arith.constant 74 : index
    %c0_100 = arith.constant 0 : index
    %113 = vector.load %arg11[%c74_99, %c0_100] : memref<324x20xf32, #tpu.memory_space<vmem>>, vector<248x20xf32>
    %c0_101 = arith.constant 0 : index
    %c440 = arith.constant 440 : index
    %114 = vector.load %arg12[%c0_101, %c440] : memref<248x500xf32, #tpu.memory_space<vmem>>, vector<248x20xf32>
    tpu.vector_store %arg12[%c0_101, %c440], %113 {strides = array<i32>} : memref<248x500xf32, #tpu.memory_space<vmem>>, vector<248x20xf32>,
    %c75 = arith.constant 75 : index
    %c0_102 = arith.constant 0 : index
    %115 = vector.load %arg11[%c75, %c0_102] : memref<324x20xf32, #tpu.memory_space<vmem>>, vector<248x20xf32>
    %c0_103 = arith.constant 0 : index
    %c460 = arith.constant 460 : index
    %116 = vector.load %arg12[%c0_103, %c460] : memref<248x500xf32, #tpu.memory_space<vmem>>, vector<248x20xf32>
    tpu.vector_store %arg12[%c0_103, %c460], %115 {strides = array<i32>} : memref<248x500xf32, #tpu.memory_space<vmem>>, vector<248x20xf32>,
    %c76 = arith.constant 76 : index
    %c0_104 = arith.constant 0 : index
    %117 = vector.load %arg11[%c76, %c0_104] : memref<324x20xf32, #tpu.memory_space<vmem>>, vector<248x20xf32>
    %c0_105 = arith.constant 0 : index
    %c480 = arith.constant 480 : index
    %118 = vector.load %arg12[%c0_105, %c480] : memref<248x500xf32, #tpu.memory_space<vmem>>, vector<248x20xf32>
    tpu.vector_store %arg12[%c0_105, %c480], %117 {strides = array<i32>} : memref<248x500xf32, #tpu.memory_space<vmem>>, vector<248x20xf32>,
    %c0_106 = arith.constant 0 : index
    %c0_107 = arith.constant 0 : index
    %119 = vector.load %arg12[%c0_106, %c0_107] : memref<248x500xf32, #tpu.memory_space<vmem>>, vector<248x500xf32>
    %c0_108 = arith.constant 0 : index
    %c0_109 = arith.constant 0 : index
    %120 = vector.load %arg4[%c0_108, %c0_109] : memref<500x50xf32, #tpu.memory_space<vmem>>, vector<500x50xf32>
    %cst_110 = arith.constant dense<0.000000e+00> : vector<248x50xf32>
    %121 = tpu.matmul %119, %120, %cst_110 {dimension_numbers = #tpu.dot_dimension_numbers<[1], [0], [0], [1], [0, 0, 1, 1], [], []>} : vector<248x500xf32>, vector<500x50xf32>, vector<248x50xf32> -> vector<248x50xf32>
    %c0_111 = arith.constant 0 : index
    %c0_112 = arith.constant 0 : index
    %122 = vector.load %arg5[%c0_111, %c0_112] : memref<1x50xf32, #tpu.memory_space<vmem>>, vector<1x50xf32>
    %123 = vector.broadcast %122 : vector<1x50xf32> to vector<248x50xf32>
    %124 = arith.addf %121, %123 : vector<248x50xf32>
    %cst_113 = arith.constant 0.000000e+00 : f32
    %125 = vector.broadcast %cst_113 : f32 to vector<248x50xf32>
    %126 = arith.maximumf %124, %125 : vector<248x50xf32>
    %c0_114 = arith.constant 0 : index
    %c0_115 = arith.constant 0 : index
    %127 = vector.load %arg13[%c0_114, %c0_115] : memref<248x50xf32, #tpu.memory_space<vmem>>, vector<248x50xf32>
    tpu.vector_store %arg13[%c0_114, %c0_115], %126 {strides = array<i32>} : memref<248x50xf32, #tpu.memory_space<vmem>>, vector<248x50xf32>,
    %c0_116 = arith.constant 0 : index
    %c0_117 = arith.constant 0 : index
    %128 = vector.load %arg13[%c0_116, %c0_117] : memref<248x50xf32, #tpu.memory_space<vmem>>, vector<1x50xf32>
    %c1_118 = arith.constant 1 : index
    %c0_119 = arith.constant 0 : index
    %129 = vector.load %arg13[%c1_118, %c0_119] : memref<248x50xf32, #tpu.memory_space<vmem>>, vector<1x50xf32>
    %130 = arith.maximumf %128, %129 : vector<1x50xf32>
    %c18_120 = arith.constant 18 : index
    %c0_121 = arith.constant 0 : index
    %131 = vector.load %arg13[%c18_120, %c0_121] : memref<248x50xf32, #tpu.memory_space<vmem>>, vector<1x50xf32>
    %c19_122 = arith.constant 19 : index
    %c0_123 = arith.constant 0 : index
    %132 = vector.load %arg13[%c19_122, %c0_123] : memref<248x50xf32, #tpu.memory_space<vmem>>, vector<1x50xf32>
    %133 = arith.maximumf %131, %132 : vector<1x50xf32>
    %134 = arith.maximumf %130, %133 : vector<1x50xf32>
    %c0_124 = arith.constant 0 : index
    %c0_125 = arith.constant 0 : index
    %135 = vector.load %arg14[%c0_124, %c0_125] : memref<1x800xf32, #tpu.memory_space<vmem>>, vector<1x50xf32>
    tpu.vector_store %arg14[%c0_124, %c0_125], %134 {strides = array<i32>} : memref<1x800xf32, #tpu.memory_space<vmem>>, vector<1x50xf32>,
    %c4_126 = arith.constant 4 : index
    %c0_127 = arith.constant 0 : index
    %136 = vector.load %arg13[%c4_126, %c0_127] : memref<248x50xf32, #tpu.memory_space<vmem>>, vector<1x50xf32>
    %c5 = arith.constant 5 : index
    %c0_128 = arith.constant 0 : index
    %137 = vector.load %arg13[%c5, %c0_128] : memref<248x50xf32, #tpu.memory_space<vmem>>, vector<1x50xf32>
    %138 = arith.maximumf %136, %137 : vector<1x50xf32>
    %c22_129 = arith.constant 22 : index
    %c0_130 = arith.constant 0 : index
    %139 = vector.load %arg13[%c22_129, %c0_130] : memref<248x50xf32, #tpu.memory_space<vmem>>, vector<1x50xf32>
    %c23 = arith.constant 23 : index
    %c0_131 = arith.constant 0 : index
    %140 = vector.load %arg13[%c23, %c0_131] : memref<248x50xf32, #tpu.memory_space<vmem>>, vector<1x50xf32>
    %141 = arith.maximumf %139, %140 : vector<1x50xf32>
    %142 = arith.maximumf %138, %141 : vector<1x50xf32>
    %c0_132 = arith.constant 0 : index
    %c50 = arith.constant 50 : index
    %143 = vector.load %arg14[%c0_132, %c50] : memref<1x800xf32, #tpu.memory_space<vmem>>, vector<1x50xf32>
    tpu.vector_store %arg14[%c0_132, %c50], %142 {strides = array<i32>} : memref<1x800xf32, #tpu.memory_space<vmem>>, vector<1x50xf32>,
    %c8 = arith.constant 8 : index
    %c0_133 = arith.constant 0 : index
    %144 = vector.load %arg13[%c8, %c0_133] : memref<248x50xf32, #tpu.memory_space<vmem>>, vector<1x50xf32>
    %c9 = arith.constant 9 : index
    %c0_134 = arith.constant 0 : index
    %145 = vector.load %arg13[%c9, %c0_134] : memref<248x50xf32, #tpu.memory_space<vmem>>, vector<1x50xf32>
    %146 = arith.maximumf %144, %145 : vector<1x50xf32>
    %c26 = arith.constant 26 : index
    %c0_135 = arith.constant 0 : index
    %147 = vector.load %arg13[%c26, %c0_135] : memref<248x50xf32, #tpu.memory_space<vmem>>, vector<1x50xf32>
    %c27 = arith.constant 27 : index
    %c0_136 = arith.constant 0 : index
    %148 = vector.load %arg13[%c27, %c0_136] : memref<248x50xf32, #tpu.memory_space<vmem>>, vector<1x50xf32>
    %149 = arith.maximumf %147, %148 : vector<1x50xf32>
    %150 = arith.maximumf %146, %149 : vector<1x50xf32>
    %c0_137 = arith.constant 0 : index
    %c100_138 = arith.constant 100 : index
    %151 = vector.load %arg14[%c0_137, %c100_138] : memref<1x800xf32, #tpu.memory_space<vmem>>, vector<1x50xf32>
    tpu.vector_store %arg14[%c0_137, %c100_138], %150 {strides = array<i32>} : memref<1x800xf32, #tpu.memory_space<vmem>>, vector<1x50xf32>,
    %c12 = arith.constant 12 : index
    %c0_139 = arith.constant 0 : index
    %152 = vector.load %arg13[%c12, %c0_139] : memref<248x50xf32, #tpu.memory_space<vmem>>, vector<1x50xf32>
    %c13 = arith.constant 13 : index
    %c0_140 = arith.constant 0 : index
    %153 = vector.load %arg13[%c13, %c0_140] : memref<248x50xf32, #tpu.memory_space<vmem>>, vector<1x50xf32>
    %154 = arith.maximumf %152, %153 : vector<1x50xf32>
    %c30 = arith.constant 30 : index
    %c0_141 = arith.constant 0 : index
    %155 = vector.load %arg13[%c30, %c0_141] : memref<248x50xf32, #tpu.memory_space<vmem>>, vector<1x50xf32>
    %c31 = arith.constant 31 : index
    %c0_142 = arith.constant 0 : index
    %156 = vector.load %arg13[%c31, %c0_142] : memref<248x50xf32, #tpu.memory_space<vmem>>, vector<1x50xf32>
    %157 = arith.maximumf %155, %156 : vector<1x50xf32>
    %158 = arith.maximumf %154, %157 : vector<1x50xf32>
    %c0_143 = arith.constant 0 : index
    %c150 = arith.constant 150 : index
    %159 = vector.load %arg14[%c0_143, %c150] : memref<1x800xf32, #tpu.memory_space<vmem>>, vector<1x50xf32>
    tpu.vector_store %arg14[%c0_143, %c150], %158 {strides = array<i32>} : memref<1x800xf32, #tpu.memory_space<vmem>>, vector<1x50xf32>,
    %c72_144 = arith.constant 72 : index
    %c0_145 = arith.constant 0 : index
    %160 = vector.load %arg13[%c72_144, %c0_145] : memref<248x50xf32, #tpu.memory_space<vmem>>, vector<1x50xf32>
    %c73_146 = arith.constant 73 : index
    %c0_147 = arith.constant 0 : index
    %161 = vector.load %arg13[%c73_146, %c0_147] : memref<248x50xf32, #tpu.memory_space<vmem>>, vector<1x50xf32>
    %162 = arith.maximumf %160, %161 : vector<1x50xf32>
    %c90 = arith.constant 90 : index
    %c0_148 = arith.constant 0 : index
    %163 = vector.load %arg13[%c90, %c0_148] : memref<248x50xf32, #tpu.memory_space<vmem>>, vector<1x50xf32>
    %c91 = arith.constant 91 : index
    %c0_149 = arith.constant 0 : index
    %164 = vector.load %arg13[%c91, %c0_149] : memref<248x50xf32, #tpu.memory_space<vmem>>, vector<1x50xf32>
    %165 = arith.maximumf %163, %164 : vector<1x50xf32>
    %166 = arith.maximumf %162, %165 : vector<1x50xf32>
    %c0_150 = arith.constant 0 : index
    %c200_151 = arith.constant 200 : index
    %167 = vector.load %arg14[%c0_150, %c200_151] : memref<1x800xf32, #tpu.memory_space<vmem>>, vector<1x50xf32>
    tpu.vector_store %arg14[%c0_150, %c200_151], %166 {strides = array<i32>} : memref<1x800xf32, #tpu.memory_space<vmem>>, vector<1x50xf32>,
    %c76_152 = arith.constant 76 : index
    %c0_153 = arith.constant 0 : index
    %168 = vector.load %arg13[%c76_152, %c0_153] : memref<248x50xf32, #tpu.memory_space<vmem>>, vector<1x50xf32>
    %c77 = arith.constant 77 : index
    %c0_154 = arith.constant 0 : index
    %169 = vector.load %arg13[%c77, %c0_154] : memref<248x50xf32, #tpu.memory_space<vmem>>, vector<1x50xf32>
    %170 = arith.maximumf %168, %169 : vector<1x50xf32>
    %c94 = arith.constant 94 : index
    %c0_155 = arith.constant 0 : index
    %171 = vector.load %arg13[%c94, %c0_155] : memref<248x50xf32, #tpu.memory_space<vmem>>, vector<1x50xf32>
    %c95 = arith.constant 95 : index
    %c0_156 = arith.constant 0 : index
    %172 = vector.load %arg13[%c95, %c0_156] : memref<248x50xf32, #tpu.memory_space<vmem>>, vector<1x50xf32>
    %173 = arith.maximumf %171, %172 : vector<1x50xf32>
    %174 = arith.maximumf %170, %173 : vector<1x50xf32>
    %c0_157 = arith.constant 0 : index
    %c250 = arith.constant 250 : index
    %175 = vector.load %arg14[%c0_157, %c250] : memref<1x800xf32, #tpu.memory_space<vmem>>, vector<1x50xf32>
    tpu.vector_store %arg14[%c0_157, %c250], %174 {strides = array<i32>} : memref<1x800xf32, #tpu.memory_space<vmem>>, vector<1x50xf32>,
    %c80_158 = arith.constant 80 : index
    %c0_159 = arith.constant 0 : index
    %176 = vector.load %arg13[%c80_158, %c0_159] : memref<248x50xf32, #tpu.memory_space<vmem>>, vector<1x50xf32>
    %c81 = arith.constant 81 : index
    %c0_160 = arith.constant 0 : index
    %177 = vector.load %arg13[%c81, %c0_160] : memref<248x50xf32, #tpu.memory_space<vmem>>, vector<1x50xf32>
    %178 = arith.maximumf %176, %177 : vector<1x50xf32>
    %c98 = arith.constant 98 : index
    %c0_161 = arith.constant 0 : index
    %179 = vector.load %arg13[%c98, %c0_161] : memref<248x50xf32, #tpu.memory_space<vmem>>, vector<1x50xf32>
    %c99 = arith.constant 99 : index
    %c0_162 = arith.constant 0 : index
    %180 = vector.load %arg13[%c99, %c0_162] : memref<248x50xf32, #tpu.memory_space<vmem>>, vector<1x50xf32>
    %181 = arith.maximumf %179, %180 : vector<1x50xf32>
    %182 = arith.maximumf %178, %181 : vector<1x50xf32>
    %c0_163 = arith.constant 0 : index
    %c300_164 = arith.constant 300 : index
    %183 = vector.load %arg14[%c0_163, %c300_164] : memref<1x800xf32, #tpu.memory_space<vmem>>, vector<1x50xf32>
    tpu.vector_store %arg14[%c0_163, %c300_164], %182 {strides = array<i32>} : memref<1x800xf32, #tpu.memory_space<vmem>>, vector<1x50xf32>,
    %c84 = arith.constant 84 : index
    %c0_165 = arith.constant 0 : index
    %184 = vector.load %arg13[%c84, %c0_165] : memref<248x50xf32, #tpu.memory_space<vmem>>, vector<1x50xf32>
    %c85 = arith.constant 85 : index
    %c0_166 = arith.constant 0 : index
    %185 = vector.load %arg13[%c85, %c0_166] : memref<248x50xf32, #tpu.memory_space<vmem>>, vector<1x50xf32>
    %186 = arith.maximumf %184, %185 : vector<1x50xf32>
    %c102 = arith.constant 102 : index
    %c0_167 = arith.constant 0 : index
    %187 = vector.load %arg13[%c102, %c0_167] : memref<248x50xf32, #tpu.memory_space<vmem>>, vector<1x50xf32>
    %c103 = arith.constant 103 : index
    %c0_168 = arith.constant 0 : index
    %188 = vector.load %arg13[%c103, %c0_168] : memref<248x50xf32, #tpu.memory_space<vmem>>, vector<1x50xf32>
    %189 = arith.maximumf %187, %188 : vector<1x50xf32>
    %190 = arith.maximumf %186, %189 : vector<1x50xf32>
    %c0_169 = arith.constant 0 : index
    %c350 = arith.constant 350 : index
    %191 = vector.load %arg14[%c0_169, %c350] : memref<1x800xf32, #tpu.memory_space<vmem>>, vector<1x50xf32>
    tpu.vector_store %arg14[%c0_169, %c350], %190 {strides = array<i32>} : memref<1x800xf32, #tpu.memory_space<vmem>>, vector<1x50xf32>,
    %c144 = arith.constant 144 : index
    %c0_170 = arith.constant 0 : index
    %192 = vector.load %arg13[%c144, %c0_170] : memref<248x50xf32, #tpu.memory_space<vmem>>, vector<1x50xf32>
    %c145 = arith.constant 145 : index
    %c0_171 = arith.constant 0 : index
    %193 = vector.load %arg13[%c145, %c0_171] : memref<248x50xf32, #tpu.memory_space<vmem>>, vector<1x50xf32>
    %194 = arith.maximumf %192, %193 : vector<1x50xf32>
    %c162 = arith.constant 162 : index
    %c0_172 = arith.constant 0 : index
    %195 = vector.load %arg13[%c162, %c0_172] : memref<248x50xf32, #tpu.memory_space<vmem>>, vector<1x50xf32>
    %c163 = arith.constant 163 : index
    %c0_173 = arith.constant 0 : index
    %196 = vector.load %arg13[%c163, %c0_173] : memref<248x50xf32, #tpu.memory_space<vmem>>, vector<1x50xf32>
    %197 = arith.maximumf %195, %196 : vector<1x50xf32>
    %198 = arith.maximumf %194, %197 : vector<1x50xf32>
    %c0_174 = arith.constant 0 : index
    %c400_175 = arith.constant 400 : index
    %199 = vector.load %arg14[%c0_174, %c400_175] : memref<1x800xf32, #tpu.memory_space<vmem>>, vector<1x50xf32>
    tpu.vector_store %arg14[%c0_174, %c400_175], %198 {strides = array<i32>} : memref<1x800xf32, #tpu.memory_space<vmem>>, vector<1x50xf32>,
    %c148 = arith.constant 148 : index
    %c0_176 = arith.constant 0 : index
    %200 = vector.load %arg13[%c148, %c0_176] : memref<248x50xf32, #tpu.memory_space<vmem>>, vector<1x50xf32>
    %c149 = arith.constant 149 : index
    %c0_177 = arith.constant 0 : index
    %201 = vector.load %arg13[%c149, %c0_177] : memref<248x50xf32, #tpu.memory_space<vmem>>, vector<1x50xf32>
    %202 = arith.maximumf %200, %201 : vector<1x50xf32>
    %c166 = arith.constant 166 : index
    %c0_178 = arith.constant 0 : index
    %203 = vector.load %arg13[%c166, %c0_178] : memref<248x50xf32, #tpu.memory_space<vmem>>, vector<1x50xf32>
    %c167 = arith.constant 167 : index
    %c0_179 = arith.constant 0 : index
    %204 = vector.load %arg13[%c167, %c0_179] : memref<248x50xf32, #tpu.memory_space<vmem>>, vector<1x50xf32>
    %205 = arith.maximumf %203, %204 : vector<1x50xf32>
    %206 = arith.maximumf %202, %205 : vector<1x50xf32>
    %c0_180 = arith.constant 0 : index
    %c450 = arith.constant 450 : index
    %207 = vector.load %arg14[%c0_180, %c450] : memref<1x800xf32, #tpu.memory_space<vmem>>, vector<1x50xf32>
    tpu.vector_store %arg14[%c0_180, %c450], %206 {strides = array<i32>} : memref<1x800xf32, #tpu.memory_space<vmem>>, vector<1x50xf32>,
    %c152 = arith.constant 152 : index
    %c0_181 = arith.constant 0 : index
    %208 = vector.load %arg13[%c152, %c0_181] : memref<248x50xf32, #tpu.memory_space<vmem>>, vector<1x50xf32>
    %c153 = arith.constant 153 : index
    %c0_182 = arith.constant 0 : index
    %209 = vector.load %arg13[%c153, %c0_182] : memref<248x50xf32, #tpu.memory_space<vmem>>, vector<1x50xf32>
    %210 = arith.maximumf %208, %209 : vector<1x50xf32>
    %c170 = arith.constant 170 : index
    %c0_183 = arith.constant 0 : index
    %211 = vector.load %arg13[%c170, %c0_183] : memref<248x50xf32, #tpu.memory_space<vmem>>, vector<1x50xf32>
    %c171 = arith.constant 171 : index
    %c0_184 = arith.constant 0 : index
    %212 = vector.load %arg13[%c171, %c0_184] : memref<248x50xf32, #tpu.memory_space<vmem>>, vector<1x50xf32>
    %213 = arith.maximumf %211, %212 : vector<1x50xf32>
    %214 = arith.maximumf %210, %213 : vector<1x50xf32>
    %c0_185 = arith.constant 0 : index
    %c500 = arith.constant 500 : index
    %215 = vector.load %arg14[%c0_185, %c500] : memref<1x800xf32, #tpu.memory_space<vmem>>, vector<1x50xf32>
    tpu.vector_store %arg14[%c0_185, %c500], %214 {strides = array<i32>} : memref<1x800xf32, #tpu.memory_space<vmem>>, vector<1x50xf32>,
    %c156 = arith.constant 156 : index
    %c0_186 = arith.constant 0 : index
    %216 = vector.load %arg13[%c156, %c0_186] : memref<248x50xf32, #tpu.memory_space<vmem>>, vector<1x50xf32>
    %c157 = arith.constant 157 : index
    %c0_187 = arith.constant 0 : index
    %217 = vector.load %arg13[%c157, %c0_187] : memref<248x50xf32, #tpu.memory_space<vmem>>, vector<1x50xf32>
    %218 = arith.maximumf %216, %217 : vector<1x50xf32>
    %c174 = arith.constant 174 : index
    %c0_188 = arith.constant 0 : index
    %219 = vector.load %arg13[%c174, %c0_188] : memref<248x50xf32, #tpu.memory_space<vmem>>, vector<1x50xf32>
    %c175 = arith.constant 175 : index
    %c0_189 = arith.constant 0 : index
    %220 = vector.load %arg13[%c175, %c0_189] : memref<248x50xf32, #tpu.memory_space<vmem>>, vector<1x50xf32>
    %221 = arith.maximumf %219, %220 : vector<1x50xf32>
    %222 = arith.maximumf %218, %221 : vector<1x50xf32>
    %c0_190 = arith.constant 0 : index
    %c550 = arith.constant 550 : index
    %223 = vector.load %arg14[%c0_190, %c550] : memref<1x800xf32, #tpu.memory_space<vmem>>, vector<1x50xf32>
    tpu.vector_store %arg14[%c0_190, %c550], %222 {strides = array<i32>} : memref<1x800xf32, #tpu.memory_space<vmem>>, vector<1x50xf32>,
    %c216 = arith.constant 216 : index
    %c0_191 = arith.constant 0 : index
    %224 = vector.load %arg13[%c216, %c0_191] : memref<248x50xf32, #tpu.memory_space<vmem>>, vector<1x50xf32>
    %c217 = arith.constant 217 : index
    %c0_192 = arith.constant 0 : index
    %225 = vector.load %arg13[%c217, %c0_192] : memref<248x50xf32, #tpu.memory_space<vmem>>, vector<1x50xf32>
    %226 = arith.maximumf %224, %225 : vector<1x50xf32>
    %c234 = arith.constant 234 : index
    %c0_193 = arith.constant 0 : index
    %227 = vector.load %arg13[%c234, %c0_193] : memref<248x50xf32, #tpu.memory_space<vmem>>, vector<1x50xf32>
    %c235 = arith.constant 235 : index
    %c0_194 = arith.constant 0 : index
    %228 = vector.load %arg13[%c235, %c0_194] : memref<248x50xf32, #tpu.memory_space<vmem>>, vector<1x50xf32>
    %229 = arith.maximumf %227, %228 : vector<1x50xf32>
    %230 = arith.maximumf %226, %229 : vector<1x50xf32>
    %c0_195 = arith.constant 0 : index
    %c600 = arith.constant 600 : index
    %231 = vector.load %arg14[%c0_195, %c600] : memref<1x800xf32, #tpu.memory_space<vmem>>, vector<1x50xf32>
    tpu.vector_store %arg14[%c0_195, %c600], %230 {strides = array<i32>} : memref<1x800xf32, #tpu.memory_space<vmem>>, vector<1x50xf32>,
    %c220_196 = arith.constant 220 : index
    %c0_197 = arith.constant 0 : index
    %232 = vector.load %arg13[%c220_196, %c0_197] : memref<248x50xf32, #tpu.memory_space<vmem>>, vector<1x50xf32>
    %c221 = arith.constant 221 : index
    %c0_198 = arith.constant 0 : index
    %233 = vector.load %arg13[%c221, %c0_198] : memref<248x50xf32, #tpu.memory_space<vmem>>, vector<1x50xf32>
    %234 = arith.maximumf %232, %233 : vector<1x50xf32>
    %c238 = arith.constant 238 : index
    %c0_199 = arith.constant 0 : index
    %235 = vector.load %arg13[%c238, %c0_199] : memref<248x50xf32, #tpu.memory_space<vmem>>, vector<1x50xf32>
    %c239 = arith.constant 239 : index
    %c0_200 = arith.constant 0 : index
    %236 = vector.load %arg13[%c239, %c0_200] : memref<248x50xf32, #tpu.memory_space<vmem>>, vector<1x50xf32>
    %237 = arith.maximumf %235, %236 : vector<1x50xf32>
    %238 = arith.maximumf %234, %237 : vector<1x50xf32>
    %c0_201 = arith.constant 0 : index
    %c650 = arith.constant 650 : index
    %239 = vector.load %arg14[%c0_201, %c650] : memref<1x800xf32, #tpu.memory_space<vmem>>, vector<1x50xf32>
    tpu.vector_store %arg14[%c0_201, %c650], %238 {strides = array<i32>} : memref<1x800xf32, #tpu.memory_space<vmem>>, vector<1x50xf32>,
    %c224 = arith.constant 224 : index
    %c0_202 = arith.constant 0 : index
    %240 = vector.load %arg13[%c224, %c0_202] : memref<248x50xf32, #tpu.memory_space<vmem>>, vector<1x50xf32>
    %c225 = arith.constant 225 : index
    %c0_203 = arith.constant 0 : index
    %241 = vector.load %arg13[%c225, %c0_203] : memref<248x50xf32, #tpu.memory_space<vmem>>, vector<1x50xf32>
    %242 = arith.maximumf %240, %241 : vector<1x50xf32>
    %c242 = arith.constant 242 : index
    %c0_204 = arith.constant 0 : index
    %243 = vector.load %arg13[%c242, %c0_204] : memref<248x50xf32, #tpu.memory_space<vmem>>, vector<1x50xf32>
    %c243 = arith.constant 243 : index
    %c0_205 = arith.constant 0 : index
    %244 = vector.load %arg13[%c243, %c0_205] : memref<248x50xf32, #tpu.memory_space<vmem>>, vector<1x50xf32>
    %245 = arith.maximumf %243, %244 : vector<1x50xf32>
    %246 = arith.maximumf %242, %245 : vector<1x50xf32>
    %c0_206 = arith.constant 0 : index
    %c700 = arith.constant 700 : index
    %247 = vector.load %arg14[%c0_206, %c700] : memref<1x800xf32, #tpu.memory_space<vmem>>, vector<1x50xf32>
    tpu.vector_store %arg14[%c0_206, %c700], %246 {strides = array<i32>} : memref<1x800xf32, #tpu.memory_space<vmem>>, vector<1x50xf32>,
    %c228 = arith.constant 228 : index
    %c0_207 = arith.constant 0 : index
    %248 = vector.load %arg13[%c228, %c0_207] : memref<248x50xf32, #tpu.memory_space<vmem>>, vector<1x50xf32>
    %c229 = arith.constant 229 : index
    %c0_208 = arith.constant 0 : index
    %249 = vector.load %arg13[%c229, %c0_208] : memref<248x50xf32, #tpu.memory_space<vmem>>, vector<1x50xf32>
    %250 = arith.maximumf %248, %249 : vector<1x50xf32>
    %c246 = arith.constant 246 : index
    %c0_209 = arith.constant 0 : index
    %251 = vector.load %arg13[%c246, %c0_209] : memref<248x50xf32, #tpu.memory_space<vmem>>, vector<1x50xf32>
    %c247 = arith.constant 247 : index
    %c0_210 = arith.constant 0 : index
    %252 = vector.load %arg13[%c247, %c0_210] : memref<248x50xf32, #tpu.memory_space<vmem>>, vector<1x50xf32>
    %253 = arith.maximumf %251, %252 : vector<1x50xf32>
    %254 = arith.maximumf %250, %253 : vector<1x50xf32>
    %c0_211 = arith.constant 0 : index
    %c750 = arith.constant 750 : index
    %255 = vector.load %arg14[%c0_211, %c750] : memref<1x800xf32, #tpu.memory_space<vmem>>, vector<1x50xf32>
    tpu.vector_store %arg14[%c0_211, %c750], %254 {strides = array<i32>} : memref<1x800xf32, #tpu.memory_space<vmem>>, vector<1x50xf32>,
    %c0_212 = arith.constant 0 : index
    %c0_213 = arith.constant 0 : index
    %256 = vector.load %arg14[%c0_212, %c0_213] : memref<1x800xf32, #tpu.memory_space<vmem>>, vector<1x800xf32>
    %c0_214 = arith.constant 0 : index
    %c0_215 = arith.constant 0 : index
    %257 = vector.load %arg6[%c0_214, %c0_215] : memref<800x500xf32, #tpu.memory_space<vmem>>, vector<800x500xf32>
    %cst_216 = arith.constant dense<0.000000e+00> : vector<1x500xf32>
    %258 = tpu.matmul %256, %257, %cst_216 {dimension_numbers = #tpu.dot_dimension_numbers<[1], [0], [0], [1], [0, 0, 1, 1], [], []>} : vector<1x800xf32>, vector<800x500xf32>, vector<1x500xf32> -> vector<1x500xf32>
    %c0_217 = arith.constant 0 : index
    %c0_218 = arith.constant 0 : index
    %259 = vector.load %arg7[%c0_217, %c0_218] : memref<1x500xf32, #tpu.memory_space<vmem>>, vector<1x500xf32>
    %260 = arith.addf %258, %259 : vector<1x500xf32>
    %cst_219 = arith.constant 0.000000e+00 : f32
    %261 = vector.broadcast %cst_219 : f32 to vector<1x500xf32>
    %262 = arith.maximumf %260, %261 : vector<1x500xf32>
    %c0_220 = arith.constant 0 : index
    %c0_221 = arith.constant 0 : index
    %263 = vector.load %arg8[%c0_220, %c0_221] : memref<500x10xf32, #tpu.memory_space<vmem>>, vector<500x10xf32>
    %cst_222 = arith.constant dense<0.000000e+00> : vector<1x10xf32>
    %264 = tpu.matmul %262, %263, %cst_222 {dimension_numbers = #tpu.dot_dimension_numbers<[1], [0], [0], [1], [0, 0, 1, 1], [], []>} : vector<1x500xf32>, vector<500x10xf32>, vector<1x10xf32> -> vector<1x10xf32>
    %c0_223 = arith.constant 0 : index
    %c0_224 = arith.constant 0 : index
    %265 = vector.load %arg9[%c0_223, %c0_224] : memref<1x10xf32, #tpu.memory_space<vmem>>, vector<1x10xf32>
    %266 = arith.addf %264, %265 : vector<1x10xf32>
    %cst_225 = arith.constant dense<0xFF800000> : vector<1xf32>
    %267 = vector.multi_reduction <maximumf>, %266, %cst_225 [1] : vector<1x10xf32> to vector<1xf32>
    %268 = vector.shape_cast %267 : vector<1xf32> to vector<1x1xf32>
    %269 = vector.broadcast %268 : vector<1x1xf32> to vector<1x10xf32>
    %270 = arith.subf %266, %269 : vector<1x10xf32>
    %271 = math.exp %270 : vector<1x10xf32>
    %cst_226 = arith.constant dense<0.000000e+00> : vector<1xf32>
    %272 = vector.multi_reduction <add>, %271, %cst_226 [1] : vector<1x10xf32> to vector<1xf32>
    %273 = vector.shape_cast %272 : vector<1xf32> to vector<1x1xf32>
    %274 = math.log %273 : vector<1x1xf32>
    %275 = arith.addf %268, %274 : vector<1x1xf32>
    %276 = vector.broadcast %275 : vector<1x1xf32> to vector<1x10xf32>
    %277 = arith.subf %266, %276 : vector<1x10xf32>
    %c0_227 = arith.constant 0 : index
    %c0_228 = arith.constant 0 : index
    %c0_229 = arith.constant 0 : index
    %278 = vector.load %arg10[%c0_227, %c0_228, %c0_229] : memref<1x1x10xf32, #tpu.memory_space<vmem>>, vector<1x1x10xf32>
    %279 = vector.shape_cast %278 : vector<1x1x10xf32> to vector<1x10xf32>
    %280 = vector.shape_cast %277 : vector<1x10xf32> to vector<1x1x10xf32>
    tpu.vector_store %arg10[%c0_227, %c0_228, %c0_229], %280 {strides = array<i32>} : memref<1x1x10xf32, #tpu.memory_space<vmem>>, vector<1x1x10xf32>,
    return
  }
  func.func @transform_0(%arg0: i32) -> (i32, i32, i32) {
    %c0_i32 = arith.constant 0 : i32
    %c0_i32_0 = arith.constant 0 : i32
    %c0_i32_1 = arith.constant 0 : i32
    return %arg0, %c0_i32, %c0_i32_0 : i32, i32, i32
  }
  func.func @transform_1(%arg0: i32) -> (i32, i32) {
    %c0_i32 = arith.constant 0 : i32
    %c0_i32_0 = arith.constant 0 : i32
    %c0_i32_1 = arith.constant 0 : i32
    return %c0_i32, %c0_i32_0 : i32, i32
  }
  func.func @transform_2(%arg0: i32) -> (i32, i32) {
    %c0_i32 = arith.constant 0 : i32
    %c0_i32_0 = arith.constant 0 : i32
    %c0_i32_1 = arith.constant 0 : i32
    return %c0_i32, %c0_i32_0 : i32, i32
  }
  func.func @transform_3(%arg0: i32) -> (i32, i32) {
    %c0_i32 = arith.constant 0 : i32
    %c0_i32_0 = arith.constant 0 : i32
    %c0_i32_1 = arith.constant 0 : i32
    return %c0_i32, %c0_i32_0 : i32, i32
  }
  func.func @transform_4(%arg0: i32) -> (i32, i32) {
    %c0_i32 = arith.constant 0 : i32
    %c0_i32_0 = arith.constant 0 : i32
    %c0_i32_1 = arith.constant 0 : i32
    return %c0_i32, %c0_i32_0 : i32, i32
  }
  func.func @transform_5(%arg0: i32) -> (i32, i32) {
    %c0_i32 = arith.constant 0 : i32
    %c0_i32_0 = arith.constant 0 : i32
    %c0_i32_1 = arith.constant 0 : i32
    return %c0_i32, %c0_i32_0 : i32, i32
  }
  func.func @transform_6(%arg0: i32) -> (i32, i32) {
    %c0_i32 = arith.constant 0 : i32
    %c0_i32_0 = arith.constant 0 : i32
    %c0_i32_1 = arith.constant 0 : i32
    return %c0_i32, %c0_i32_0 : i32, i32
  }
  func.func @transform_7(%arg0: i32) -> (i32, i32) {
    %c0_i32 = arith.constant 0 : i32
    %c0_i32_0 = arith.constant 0 : i32
    %c0_i32_1 = arith.constant 0 : i32
    return %c0_i32, %c0_i32_0 : i32, i32
  }
  func.func @transform_8(%arg0: i32) -> (i32, i32) {
    %c0_i32 = arith.constant 0 : i32
    %c0_i32_0 = arith.constant 0 : i32
    %c0_i32_1 = arith.constant 0 : i32
    return %c0_i32, %c0_i32_0 : i32, i32
  }
  func.func @transform_9(%arg0: i32) -> (i32, i32, i32) {
    %c0_i32 = arith.constant 0 : i32
    %c0_i32_0 = arith.constant 0 : i32
    %c0_i32_1 = arith.constant 0 : i32
    return %arg0, %c0_i32, %c0_i32_0 : i32, i32, i32
  }
}

</mosaic_0001>

<llo_original>
// kernel: net_forward.1
$region0: #{net_forward.1}
  #allocation0 [shape = 'u32[]', space=smem, size = 0x4, offset = 0x4, fixed_abs, tag = 'smem constant byte address 0x4 - core index']
  #allocation1 [shape = 'u32[144,128]{1,0:T(1,128)}', space=vmem, size = 0x12000, scoped, tag = 'internal scratch']
  #allocation2 [shape = 'f32[324,20]{1,0:T(8,128)}', space=vmem, size = 0x29000, scoped, tag = 'scratch operand']
  #allocation3 [shape = 'f32[248,500]{1,0:T(8,128)}', space=vmem, size = 0x7c000, scoped, tag = 'scratch operand']
  #allocation4 [shape = 'f32[248,50]{1,0:T(8,128)}', space=vmem, size = 0x1f000, scoped, tag = 'scratch operand']
  #allocation5 [shape = 'f32[1,800]{1,0:T(1,128)}', space=vmem, size = 0xe00, scoped, tag = 'scratch operand']
  %s0 = inlined_call_operand.vmem [shape: f32[2,784,25], index: 0, kind: input, shape index: {}]
  %s1 = inlined_call_operand.vmem [shape: f32[25,20], index: 1, kind: input, shape index: {}]
  %s2 = inlined_call_operand.vmem [shape: f32[1,20], index: 2, kind: input, shape index: {}]
  %s3 = inlined_call_operand.vmem [shape: f32[500,50], index: 3, kind: input, shape index: {}]
  %s4 = inlined_call_operand.vmem [shape: f32[1,50], index: 4, kind: input, shape index: {}]
  %s5 = inlined_call_operand.vmem [shape: f32[800,500], index: 5, kind: input, shape index: {}]
  %s6 = inlined_call_operand.vmem [shape: f32[1,500], index: 6, kind: input, shape index: {}]
  %s7 = inlined_call_operand.vmem [shape: f32[500,10], index: 7, kind: input, shape index: {}]
  %s8 = inlined_call_operand.vmem [shape: f32[1,10], index: 8, kind: input, shape index: {}]
  %s9 = inlined_call_operand.hbm [shape: f32[2,1,10], index: 9, kind: output, shape index: {}]
  %s10 = sld [smem:[#allocation0]]
  $region69: #{net_forward.1} parent=0
    _
  %s12 = ssub.s32 1, %s10
  %s13 = scalar_select 0, %s12, %s10
  $region1: #{net_forward.1} parent=0
    #allocation6 [shape = 'u8[1024]{0}', space=vmem, size = 0x400, scoped, tag = 'output window, operand 0']
    #allocation7 [shape = 's32[2]{0}', space=sflag, size = 0x8, scoped, tag = 'scoped memory for net_forward.1']
    %14 = vsyncpa [#allocation7], 0
    %s15 = scalar_lea.sflag [#allocation7], 1
    %16 = vsyncpa %s15, 0
    loop: start=0, step=1, limit=4
    $region2: #{net_forward.1} parent=1 // loop_pre_header
      _
    $region3: #{net_forward.1} parent=1 // loop_header
      %s18 = sphi 0, %s22
      %p19 = scmp.ge.s32.totalorder %s18, 4
      %s28 = sphi 0, %s30
      %s31 = sphi 0, %s28
      %s32 = sphi 0, %s31
      %s48 = sphi 0, %s32
      %s52 = sphi 0, %s52
      %s54 = sphi 0, %s52
      %s55 = sphi 0, %s54
      %s69 = sphi 0, %s55
      %s73 = sphi 0, %s73
      %s75 = sphi 0, %s73
      %s76 = sphi 0, %s75
      %s90 = sphi 0, %s76
      %s94 = sphi 0, %s94
      %s96 = sphi 0, %s94
      %s97 = sphi 0, %s96
      %s111 = sphi 0, %s97
      %s115 = sphi 0, %s115
      %s117 = sphi 0, %s115
      %s118 = sphi 0, %s117
      %s132 = sphi 0, %s118
      %s136 = sphi 0, %s136
      %s138 = sphi 0, %s136
      %s139 = sphi 0, %s138
      %s153 = sphi 0, %s139
      %s157 = sphi 0, %s157
      %s159 = sphi 0, %s157
      %s160 = sphi 0, %s159
      %s174 = sphi 0, %s160
      %s178 = sphi 0, %s178
      %s180 = sphi 0, %s178
      %s181 = sphi 0, %s180
      %s195 = sphi 0, %s181
      %s199 = sphi 0, %s199
      %s201 = sphi 0, %s199
      %s202 = sphi 0, %s201
      %s216 = sphi 0, %s202
      %s222 = sphi 0, %s224
      %s225 = sphi 0, %s222
      %s226 = sphi 0, %s225
      %s242 = sphi 0, %s226
    $region4: #{net_forward.1} parent=1 // loop_header_branch
      %21 = sbr.rel (%p19) target = $region8
    $region5: #{net_forward.1} parent=1 // loop_body
      %s23 = ssub.s32 %s18, 1
      %s24 = ssub.s32 %s18, 2
      %s25 = sadd.s32 %s18, 1
      %s26 = ssub.s32 %s18, %s25
      %p27 = scmp.eq.s32.totalorder %s26, 0
      %s29 = sadd.s32 %s28, 1
      %s30 = scalar_select %p27, %s28, %s29
      %p33 = pneg %p27
      %p34 = scmp.eq.s32.totalorder %s18, 1
      %p35 = por %p33, %p34
      %p36 = scmp.ne.s32.totalorder %s28, %s31
      %p37 = scmp.eq.s32.totalorder %s18, 0
      %p38 = por %p36, %p37
      %p39 = scmp.ne.s32.totalorder %s28, %s31
      %p40 = scmp.eq.s32.totalorder %s23, 1
      %p41 = por %p39, %p40
      %p42 = scmp.ne.s32.totalorder %s31, %s32
      %p43 = scmp.eq.s32.totalorder %s23, 0
      %p44 = por %p42, %p43
      %p45 = scmp.ne.s32.totalorder %s31, %s32
      %p46 = scmp.eq.s32.totalorder %s24, 1
      %p47 = por %p45, %p46
      %p49 = scmp.ne.s32.totalorder %s32, %s48
      %p50 = scmp.eq.s32.totalorder %s24, 0
      %p51 = por %p49, %p50
      %s53 = sadd.s32 %s52, 1
      %p56 = scmp.eq.s32.totalorder %s18, 1
      %p57 = scmp.ne.s32.totalorder %s52, %s54
      %p58 = scmp.eq.s32.totalorder %s18, 0
      %p59 = por %p57, %p58
      %p60 = scmp.ne.s32.totalorder %s52, %s54
      %p61 = scmp.eq.s32.totalorder %s23, 1
      %p62 = por %p60, %p61
      %p63 = scmp.ne.s32.totalorder %s54, %s55
      %p64 = scmp.eq.s32.totalorder %s23, 0
      %p65 = por %p63, %p64
      %p66 = scmp.ne.s32.totalorder %s54, %s55
      %p67 = scmp.eq.s32.totalorder %s24, 1
      %p68 = por %p66, %p67
      %p70 = scmp.ne.s32.totalorder %s55, %s69
      %p71 = scmp.eq.s32.totalorder %s24, 0
      %p72 = por %p70, %p71
      %s74 = sadd.s32 %s73, 1
      %p77 = scmp.eq.s32.totalorder %s18, 1
      %p78 = scmp.ne.s32.totalorder %s73, %s75
      %p79 = scmp.eq.s32.totalorder %s18, 0
      %p80 = por %p78, %p79
      %p81 = scmp.ne.s32.totalorder %s73, %s75
      %p82 = scmp.eq.s32.totalorder %s23, 1
      %p83 = por %p81, %p82
      %p84 = scmp.ne.s32.totalorder %s75, %s76
      %p85 = scmp.eq.s32.totalorder %s23, 0
      %p86 = por %p84, %p85
      %p87 = scmp.ne.s32.totalorder %s75, %s76
      %p88 = scmp.eq.s32.totalorder %s24, 1
      %p89 = por %p87, %p88
      %p91 = scmp.ne.s32.totalorder %s76, %s90
      %p92 = scmp.eq.s32.totalorder %s24, 0
      %p93 = por %p91, %p92
      %s95 = sadd.s32 %s94, 1
      %p98 = scmp.eq.s32.totalorder %s18, 1
      %p99 = scmp.ne.s32.totalorder %s94, %s96
      %p100 = scmp.eq.s32.totalorder %s18, 0
      %p101 = por %p99, %p100
      %p102 = scmp.ne.s32.totalorder %s94, %s96
      %p103 = scmp.eq.s32.totalorder %s23, 1
      %p104 = por %p102, %p103
      %p105 = scmp.ne.s32.totalorder %s96, %s97
      %p106 = scmp.eq.s32.totalorder %s23, 0
      %p107 = por %p105, %p106
      %p108 = scmp.ne.s32.totalorder %s96, %s97
      %p109 = scmp.eq.s32.totalorder %s24, 1
      %p110 = por %p108, %p109
      %p112 = scmp.ne.s32.totalorder %s97, %s111
      %p113 = scmp.eq.s32.totalorder %s24, 0
      %p114 = por %p112, %p113
      %s116 = sadd.s32 %s115, 1
      %p119 = scmp.eq.s32.totalorder %s18, 1
      %p120 = scmp.ne.s32.totalorder %s115, %s117
      %p121 = scmp.eq.s32.totalorder %s18, 0
      %p122 = por %p120, %p121
      %p123 = scmp.ne.s32.totalorder %s115, %s117
      %p124 = scmp.eq.s32.totalorder %s23, 1
      %p125 = por %p123, %p124
      %p126 = scmp.ne.s32.totalorder %s117, %s118
      %p127 = scmp.eq.s32.totalorder %s23, 0
      %p128 = por %p126, %p127
      %p129 = scmp.ne.s32.totalorder %s117, %s118
      %p130 = scmp.eq.s32.totalorder %s24, 1
      %p131 = por %p129, %p130
      %p133 = scmp.ne.s32.totalorder %s118, %s132
      %p134 = scmp.eq.s32.totalorder %s24, 0
      %p135 = por %p133, %p134
      %s137 = sadd.s32 %s136, 1
      %p140 = scmp.eq.s32.totalorder %s18, 1
      %p141 = scmp.ne.s32.totalorder %s136, %s138
      %p142 = scmp.eq.s32.totalorder %s18, 0
      %p143 = por %p141, %p142
      %p144 = scmp.ne.s32.totalorder %s136, %s138
      %p145 = scmp.eq.s32.totalorder %s23, 1
      %p146 = por %p144, %p145
      %p147 = scmp.ne.s32.totalorder %s138, %s139
      %p148 = scmp.eq.s32.totalorder %s23, 0
      %p149 = por %p147, %p148
      %p150 = scmp.ne.s32.totalorder %s138, %s139
      %p151 = scmp.eq.s32.totalorder %s24, 1
      %p152 = por %p150, %p151
      %p154 = scmp.ne.s32.totalorder %s139, %s153
      %p155 = scmp.eq.s32.totalorder %s24, 0
      %p156 = por %p154, %p155
      %s158 = sadd.s32 %s157, 1
      %p161 = scmp.eq.s32.totalorder %s18, 1
      %p162 = scmp.ne.s32.totalorder %s157, %s159
      %p163 = scmp.eq.s32.totalorder %s18, 0
      %p164 = por %p162, %p163
      %p165 = scmp.ne.s32.totalorder %s157, %s159
      %p166 = scmp.eq.s32.totalorder %s23, 1
      %p167 = por %p165, %p166
      %p168 = scmp.ne.s32.totalorder %s159, %s160
      %p169 = scmp.eq.s32.totalorder %s23, 0
      %p170 = por %p168, %p169
      %p171 = scmp.ne.s32.totalorder %s159, %s160
      %p172 = scmp.eq.s32.totalorder %s24, 1
      %p173 = por %p171, %p172
      %p175 = scmp.ne.s32.totalorder %s160, %s174
      %p176 = scmp.eq.s32.totalorder %s24, 0
      %p177 = por %p175, %p176
      %s179 = sadd.s32 %s178, 1
      %p182 = scmp.eq.s32.totalorder %s18, 1
      %p183 = scmp.ne.s32.totalorder %s178, %s180
      %p184 = scmp.eq.s32.totalorder %s18, 0
      %p185 = por %p183, %p184
      %p186 = scmp.ne.s32.totalorder %s178, %s180
      %p187 = scmp.eq.s32.totalorder %s23, 1
      %p188 = por %p186, %p187
      %p189 = scmp.ne.s32.totalorder %s180, %s181
      %p190 = scmp.eq.s32.totalorder %s23, 0
      %p191 = por %p189, %p190
      %p192 = scmp.ne.s32.totalorder %s180, %s181
      %p193 = scmp.eq.s32.totalorder %s24, 1
      %p194 = por %p192, %p193
      %p196 = scmp.ne.s32.totalorder %s181, %s195
      %p197 = scmp.eq.s32.totalorder %s24, 0
      %p198 = por %p196, %p197
      %s200 = sadd.s32 %s199, 1
      %p203 = scmp.eq.s32.totalorder %s18, 1
      %p204 = scmp.ne.s32.totalorder %s199, %s201
      %p205 = scmp.eq.s32.totalorder %s18, 0
      %p206 = por %p204, %p205
      %p207 = scmp.ne.s32.totalorder %s199, %s201
      %p208 = scmp.eq.s32.totalorder %s23, 1
      %p209 = por %p207, %p208
      %p210 = scmp.ne.s32.totalorder %s201, %s202
      %p211 = scmp.eq.s32.totalorder %s23, 0
      %p212 = por %p210, %p211
      %p213 = scmp.ne.s32.totalorder %s201, %s202
      %p214 = scmp.eq.s32.totalorder %s24, 1
      %p215 = por %p213, %p214
      %p217 = scmp.ne.s32.totalorder %s202, %s216
      %p218 = scmp.eq.s32.totalorder %s24, 0
      %p219 = por %p217, %p218
      %s220 = ssub.s32 %s18, %s25
      %p221 = scmp.eq.s32.totalorder %s220, 0
      %s223 = sadd.s32 %s222, 1
      %s224 = scalar_select %p221, %s222, %s223
      %p227 = pneg %p221
      %p228 = scmp.eq.s32.totalorder %s18, 1
      %p229 = por %p227, %p228
      %p230 = scmp.ne.s32.totalorder %s222, %s225
      %p231 = scmp.eq.s32.totalorder %s18, 0
      %p232 = por %p230, %p231
      %p233 = scmp.ne.s32.totalorder %s222, %s225
      %p234 = scmp.eq.s32.totalorder %s23, 1
      %p235 = por %p233, %p234
      %p236 = scmp.ne.s32.totalorder %s225, %s226
      %p237 = scmp.eq.s32.totalorder %s23, 0
      %p238 = por %p236, %p237
      %p239 = scmp.ne.s32.totalorder %s225, %s226
      %p240 = scmp.eq.s32.totalorder %s24, 1
      %p241 = por %p239, %p240
      %p243 = scmp.ne.s32.totalorder %s226, %s242
      %p244 = scmp.eq.s32.totalorder %s24, 0
      %p245 = por %p243, %p244
      %p246 = scmp.le.s32.totalorder 1, %s18
      %p247 = scmp.lt.s32.totalorder %s18, 3
      %p248 = pnand %p246, %p247
      %p249 = pneg %p248
      // Predicated region
      $region9: #{net_forward.1} parent=5 // pred_check
        _
      $region10: #{net_forward.1} parent=5 // pred_check_branch
        %251 = sbr.rel (%p248) target = $region12
      $region11: #{net_forward.1} parent=5 // pred_region
        %s252 = ssub.s32 %s18, 1
        // Predicated region
        $region13: #{net_forward.1} parent=11 // pred_check
          %p253 = pneg %p65
        $region14: #{net_forward.1} parent=11 // pred_check_branch
          %255 = sbr.rel (%p253) target = $region16
        $region15: #{net_forward.1} parent=11 // pred_region
          _
        $region16: #{net_forward.1} parent=11 // pred_fallthru
          _
        // Predicated region
        $region17: #{net_forward.1} parent=11 // pred_check
          %p256 = pneg %p86
        $region18: #{net_forward.1} parent=11 // pred_check_branch
          %258 = sbr.rel (%p256) target = $region20
        $region19: #{net_forward.1} parent=11 // pred_region
          _
        $region20: #{net_forward.1} parent=11 // pred_fallthru
          _
        // Predicated region
        $region21: #{net_forward.1} parent=11 // pred_check
          %p259 = pneg %p107
        $region22: #{net_forward.1} parent=11 // pred_check_branch
          %261 = sbr.rel (%p259) target = $region24
        $region23: #{net_forward.1} parent=11 // pred_region
          _
        $region24: #{net_forward.1} parent=11 // pred_fallthru
          _
        // Predicated region
        $region25: #{net_forward.1} parent=11 // pred_check
          %p262 = pneg %p128
        $region26: #{net_forward.1} parent=11 // pred_check_branch
          %264 = sbr.rel (%p262) target = $region28
        $region27: #{net_forward.1} parent=11 // pred_region
          _
        $region28: #{net_forward.1} parent=11 // pred_fallthru
          _
        // Predicated region
        $region29: #{net_forward.1} parent=11 // pred_check
          %p265 = pneg %p149
        $region30: #{net_forward.1} parent=11 // pred_check_branch
          %267 = sbr.rel (%p265) target = $region32
        $region31: #{net_forward.1} parent=11 // pred_region
          _
        $region32: #{net_forward.1} parent=11 // pred_fallthru
          _
        // Predicated region
        $region33: #{net_forward.1} parent=11 // pred_check
          %p268 = pneg %p170
        $region34: #{net_forward.1} parent=11 // pred_check_branch
          %270 = sbr.rel (%p268) target = $region36
        $region35: #{net_forward.1} parent=11 // pred_region
          _
        $region36: #{net_forward.1} parent=11 // pred_fallthru
          _
        // Predicated region
        $region37: #{net_forward.1} parent=11 // pred_check
          %p271 = pneg %p191
        $region38: #{net_forward.1} parent=11 // pred_check_branch
          %273 = sbr.rel (%p271) target = $region40
        $region39: #{net_forward.1} parent=11 // pred_region
          _
        $region40: #{net_forward.1} parent=11 // pred_fallthru
          _
        // Predicated region
        $region41: #{net_forward.1} parent=11 // pred_check
          %p274 = pneg %p212
        $region42: #{net_forward.1} parent=11 // pred_check_branch
          %276 = sbr.rel (%p274) target = $region44
        $region43: #{net_forward.1} parent=11 // pred_region
          _
        $region44: #{net_forward.1} parent=11 // pred_fallthru
          _
      $region12: #{net_forward.1} parent=5 // pred_fallthru
        _
      %p277 = scmp.lt.s32.totalorder %s18, 2
      // Predicated region
      $region45: #{net_forward.1} parent=5 // pred_check
        %p278 = pneg %p277
      $region46: #{net_forward.1} parent=5 // pred_check_branch
        %280 = sbr.rel (%p278) target = $region48
      $region47: #{net_forward.1} parent=5 // pred_region
        // Predicated region
        $region49: #{net_forward.1} parent=47 // pred_check
          %p281 = pneg %p38
        $region50: #{net_forward.1} parent=47 // pred_check_branch
          %283 = sbr.rel (%p281) target = $region52
        $region51: #{net_forward.1} parent=47 // pred_region
          %p284 = scmp.lt.s32.totalorder %s18, 1
          %s285 = scalar_select %p284, %s18, 1
          %s286 = smul.addr %s285, 98
          %s287 = smul.addr %s286, 8
          %s288 = scalar_lea.vmem %s0, %s287
        $region52: #{net_forward.1} parent=47 // pred_fallthru
          _
      $region48: #{net_forward.1} parent=5 // pred_fallthru
        _
      %p289 = scmp.le.s32.totalorder 1, %s18
      %p290 = scmp.lt.s32.totalorder %s18, 3
      %p291 = pnand %p289, %p290
      %p292 = pneg %p291
      // Predicated region
      $region53: #{net_forward.1} parent=5 // pred_check
        _
      $region54: #{net_forward.1} parent=5 // pred_check_branch
        %294 = sbr.rel (%p291) target = $region56
      $region55: #{net_forward.1} parent=5 // pred_region
        %s295 = ssub.s32 %s18, 1
        %p296 = scmp.lt.s32.totalorder %s23, 1
        %s297 = scalar_select %p296, %s23, 1
        %s298 = smul.addr %s297, 98
        %s299 = smul.addr %s298, 8
        %s300 = scalar_lea.vmem %s0, %s299
        %p301 = pneg %p44
        %p302 = pneg %p41
        %p303 = pneg %p65
        %p304 = pneg %p62
        %p305 = pneg %p86
        %p306 = pneg %p83
        %p307 = pneg %p107
        %p308 = pneg %p104
        %p309 = pneg %p128
        %p310 = pneg %p125
        %p311 = pneg %p149
        %p312 = pneg %p146
        %p313 = pneg %p170
        %p314 = pneg %p167
        %p315 = pneg %p191
        %p316 = pneg %p188
        %p317 = pneg %p212
        %p318 = pneg %p209
        %p319 = pneg %p238
        %p320 = pneg %p235
        %s321 = sand.u32 %s225, 1
        %s322 = scalar_lea.sflag [#allocation7], %s321
        %s323 = sand.u32 %s225, 1
        %s324 = scalar_lea.vmem [#allocation6], %s323
        %p325 = scmp.lt.s32.totalorder %s23, 1
        %s326 = scalar_select %p325, %s23, 1
        %s327 = smul.addr %s326, 98
        %s328 = smul.addr %s327, 8
        %s329 = scalar_lea.vmem %s0, %s328
        %v330 = vld [vmem:[%s329] sm:$0xff]
        %v331 = vld [vmem:[%s329 + $0x8] sm:$0xff]
        %v332 = vld [vmem:[%s329 + $0x10] sm:$0xff]
        %v333 = vld [vmem:[%s329 + $0x18] sm:$0xff]
        %v334 = vld [vmem:[%s329 + $0x20] sm:$0xff]
        %v335 = vld [vmem:[%s329 + $0x28] sm:$0xff]
        %v336 = vld [vmem:[%s329 + $0x30] sm:$0xff]
        %v337 = vld [vmem:[%s329 + $0x38] sm:$0xff]
        %v338 = vld [vmem:[%s329 + $0x40] sm:$0xff]
        %v339 = vld [vmem:[%s329 + $0x48] sm:$0xff]
        %v340 = vld [vmem:[%s329 + $0x50] sm:$0xff]
        %v341 = vld [vmem:[%s329 + $0x58] sm:$0xff]
        %v342 = vld [vmem:[%s329 + $0x60] sm:$0xff]
        %v343 = vld [vmem:[%s329 + $0x68] sm:$0xff]
        %v344 = vld [vmem:[%s329 + $0x70] sm:$0xff]
        %v345 = vld [vmem:[%s329 + $0x78] sm:$0xff]
        %v346 = vld [vmem:[%s329 + $0x80] sm:$0xff]
        %v347 = vld [vmem:[%s329 + $0x88] sm:$0xff]
        %v348 = vld [vmem:[%s329 + $0x90] sm:$0xff]
        %v349 = vld [vmem:[%s329 + $0x98] sm:$0xff]
        %v350 = vld [vmem:[%s329 + $0xa0] sm:$0xff]
        %v351 = vld [vmem:[%s329 + $0xa8] sm:$0xff]
        %v352 = vld [vmem:[%s329 + $0xb0] sm:$0xff]
        %v353 = vld [vmem:[%s329 + $0xb8] sm:$0xff]
        %v354 = vld [vmem:[%s329 + $0xc0] sm:$0xf]
        %v355 = vld [vmem:[%s1] sm:$0xff]
        %v356 = vld [vmem:[%s1 + $0x8] sm:$0xff]
        %v357 = vld [vmem:[%s1 + $0x10] sm:$0xff]
        %v358 = vld [vmem:[%s1 + $0x18] sm:$0x1]
        %v359 = vld [vmem:[%s2] sm:$0x1]
        %v361 = vlaneseq
        %v362 = vshrl.u32 %v361, 7
        %v363 = vsub.s32 0, %v362
        %v364 = vrot.slane %v359, %v363
        %vm366 = vcmask 203776
        %v368 = vsel %vm366, %v330, 0
        %v371 = vsel %vm366, %v331, 0
        %v374 = vsel %vm366, %v332, 0
        %v377 = vsel %vm366, %v333, 0
        %v380 = vsel %vm366, %v334, 0
        %v383 = vsel %vm366, %v335, 0
        %v386 = vsel %vm366, %v336, 0
        %v389 = vsel %vm366, %v337, 0
        %v392 = vsel %vm366, %v338, 0
        %v395 = vsel %vm366, %v339, 0
        %v398 = vsel %vm366, %v340, 0
        %v401 = vsel %vm366, %v341, 0
        %v404 = vsel %vm366, %v342, 0
        %v407 = vsel %vm366, %v343, 0
        %v410 = vsel %vm366, %v344, 0
        %v413 = vsel %vm366, %v345, 0
        %v416 = vsel %vm366, %v346, 0
        %v419 = vsel %vm366, %v347, 0
        %v422 = vsel %vm366, %v348, 0
        %v425 = vsel %vm366, %v349, 0
        %v428 = vsel %vm366, %v350, 0
        %v431 = vsel %vm366, %v351, 0
        %v434 = vsel %vm366, %v352, 0
        %v437 = vsel %vm366, %v353, 0
        %v440 = vsel %vm366, %v354, 0
        %vm442 = vcmask 1040384
        %v444 = vsel %vm442, %v358, 0
        %446 = vmatprep.subr.mxu0 0.0
        %447 = vmatpush1.msra.mxu0 %v355
        %448 = vmatprep.subr.mxu0 0.0
        %449 = vmatpush1.msra.mxu0 %v356
        %450 = vmatprep.subr.mxu0 0.0
        %451 = vmatpush1.msra.mxu0 %v357
        %452 = vmatprep.subr.mxu0 0.0
        %453 = vmatpush1.msra.mxu0 %v444
        %454 = vmatprep.subr.mxu0 0.0
        %455 = vmatpush1.msra.mxu0 0.0
        %456 = vmatprep.subr.mxu0 0.0
        %457 = vmatpush1.msra.mxu0 0.0
        %458 = vmatprep.subr.mxu0 0.0
        %459 = vmatpush1.msra.mxu0 0.0
        %460 = vmatprep.subr.mxu0 0.0
        %461 = vmatpush1.msra.mxu0 0.0
        %462 = vmatprep.subr.mxu0 0.0
        %463 = vmatpush1.msra.mxu0 0.0
        %464 = vmatprep.subr.mxu0 0.0
        %465 = vmatpush1.msra.mxu0 0.0
        %466 = vmatprep.subr.mxu0 0.0
        %467 = vmatpush1.msra.mxu0 0.0
        %468 = vmatprep.subr.mxu0 0.0
        %469 = vmatpush1.msra.mxu0 0.0
        %470 = vmatprep.subr.mxu0 0.0
        %471 = vmatpush1.msra.mxu0 0.0
        %472 = vmatprep.subr.mxu0 0.0
        %473 = vmatpush1.msra.mxu0 0.0
        %474 = vmatprep.subr.mxu0 0.0
        %475 = vmatpush1.msra.mxu0 0.0
        %476 = vmatprep.subr.mxu0 0.0
        %477 = vmatpush1.msra.mxu0 0.0
        %478 = vmatprep.subr.mxu0 0.0
        %479 = vmatpush1.msra.mxu0 0.0
        %480 = vmatprep.subr.mxu0 0.0
        %481 = vmatpush1.msra.mxu0 0.0
        %482 = vmatprep.subr.mxu0 0.0
        %483 = vmatpush1.msra.mxu0 0.0
        %484 = vmatprep.subr.mxu0 0.0
        %485 = vmatpush1.msra.mxu0 0.0
        %486 = vmatprep.subr.mxu0 0.0
        %487 = vmatpush1.msra.mxu0 0.0
        %488 = vmatprep.subr.mxu0 0.0
        %489 = vmatpush1.msra.mxu0 0.0
        %490 = vmatprep.subr.mxu0 0.0
        %491 = vmatpush1.msra.mxu0 0.0
        %492 = vmatprep.subr.mxu0 0.0
        %493 = vmatpush1.msra.mxu0 0.0
        %494 = vmatprep.subr.mxu0 0.0
        %495 = vmatpush1.msra.mxu0 0.0
        %496 = vmatprep.subr.mxu0 0.0
        %497 = vmatpush1.msra.mxu0 0.0
        %498 = vmatprep.subr.mxu0 0.0
        %499 = vmatpush1.msra.mxu0 0.0
        %500 = vmatprep.subr.mxu0 0.0
        %501 = vmatpush1.msra.mxu0 0.0
        %502 = vmatprep.subr.mxu0 0.0
        %503 = vmatpush1.msra.mxu0 0.0
        %504 = vmatprep.subr.mxu0 0.0
        %505 = vmatpush1.msra.mxu0 0.0
        %506 = vmatprep.subr.mxu0 0.0
        %507 = vmatpush1.msra.mxu0 0.0
        %508 = vmatprep.subr.mxu0 0.0
        %509 = vmatpush1.msra.mxu0 0.0
        %510 = vmatprep.mubr.f32.mxu0 0.0
        %511 = vmatmul.mubr.f32.gmra.mrb[0].mxu0 %v368
        %v512 = vpop.f32.mrb[0].mxu0
        %v513 = vadd.f32 %v364, %v512
        %v514 = vpop.f32.mrb[0].mxu0
        %515 = vmatprep.mubr.f32.mxu0 0.0
        %516 = vmatmul.mubr.f32.gmra.mrb[0].mxu0 %v371
        %v517 = vpop.f32.mrb[0].mxu0
        %v518 = vadd.f32 %v364, %v517
        %v519 = vpop.f32.mrb[0].mxu0
        %520 = vmatprep.mubr.f32.mxu0 0.0
        %521 = vmatmul.mubr.f32.gmra.mrb[0].mxu0 %v374
        %v522 = vpop.f32.mrb[0].mxu0
        %v523 = vadd.f32 %v364, %v522
        %v524 = vpop.f32.mrb[0].mxu0
        %525 = vmatprep.mubr.f32.mxu0 0.0
        %526 = vmatmul.mubr.f32.gmra.mrb[0].mxu0 %v377
        %v527 = vpop.f32.mrb[0].mxu0
        %v528 = vadd.f32 %v364, %v527
        %v529 = vpop.f32.mrb[0].mxu0
        %530 = vmatprep.mubr.f32.mxu0 0.0
        %531 = vmatmul.mubr.f32.gmra.mrb[0].mxu0 %v380
        %v532 = vpop.f32.mrb[0].mxu0
        %v533 = vadd.f32 %v364, %v532
        %v534 = vpop.f32.mrb[0].mxu0
        %535 = vmatprep.mubr.f32.mxu0 0.0
        %536 = vmatmul.mubr.f32.gmra.mrb[0].mxu0 %v383
        %v537 = vpop.f32.mrb[0].mxu0
        %v538 = vadd.f32 %v364, %v537
        %v539 = vpop.f32.mrb[0].mxu0
        %540 = vmatprep.mubr.f32.mxu0 0.0
        %541 = vmatmul.mubr.f32.gmra.mrb[0].mxu0 %v386
        %v542 = vpop.f32.mrb[0].mxu0
        %v543 = vadd.f32 %v364, %v542
        %v544 = vpop.f32.mrb[0].mxu0
        %545 = vmatprep.mubr.f32.mxu0 0.0
        %546 = vmatmul.mubr.f32.gmra.mrb[0].mxu0 %v389
        %v547 = vpop.f32.mrb[0].mxu0
        %v548 = vadd.f32 %v364, %v547
        %v549 = vpop.f32.mrb[0].mxu0
        %550 = vmatprep.mubr.f32.mxu0 0.0
        %551 = vmatmul.mubr.f32.gmra.mrb[0].mxu0 %v392
        %v552 = vpop.f32.mrb[0].mxu0
        %v553 = vadd.f32 %v364, %v552
        %v554 = vpop.f32.mrb[0].mxu0
        %555 = vmatprep.mubr.f32.mxu0 0.0
        %556 = vmatmul.mubr.f32.gmra.mrb[0].mxu0 %v395
        %v557 = vpop.f32.mrb[0].mxu0
        %v558 = vadd.f32 %v364, %v557
        %v559 = vpop.f32.mrb[0].mxu0
        %560 = vmatprep.mubr.f32.mxu0 0.0
        %561 = vmatmul.mubr.f32.gmra.mrb[0].mxu0 %v398
        %v562 = vpop.f32.mrb[0].mxu0
        %v563 = vadd.f32 %v364, %v562
        %v564 = vpop.f32.mrb[0].mxu0
        %565 = vmatprep.mubr.f32.mxu0 0.0
        %566 = vmatmul.mubr.f32.gmra.mrb[0].mxu0 %v401
        %v567 = vpop.f32.mrb[0].mxu0
        %v568 = vadd.f32 %v364, %v567
        %v569 = vpop.f32.mrb[0].mxu0
        %570 = vmatprep.mubr.f32.mxu0 0.0
        %571 = vmatmul.mubr.f32.gmra.mrb[0].mxu0 %v404
        %v572 = vpop.f32.mrb[0].mxu0
        %v573 = vadd.f32 %v364, %v572
        %v574 = vpop.f32.mrb[0].mxu0
        %575 = vmatprep.mubr.f32.mxu0 0.0
        %576 = vmatmul.mubr.f32.gmra.mrb[0].mxu0 %v407
        %v577 = vpop.f32.mrb[0].mxu0
        %v578 = vadd.f32 %v364, %v577
        %v579 = vpop.f32.mrb[0].mxu0
        %580 = vmatprep.mubr.f32.mxu0 0.0
        %581 = vmatmul.mubr.f32.gmra.mrb[0].mxu0 %v410
        %v582 = vpop.f32.mrb[0].mxu0
        %v583 = vadd.f32 %v364, %v582
        %v584 = vpop.f32.mrb[0].mxu0
        %585 = vmatprep.mubr.f32.mxu0 0.0
        %586 = vmatmul.mubr.f32.gmra.mrb[0].mxu0 %v413
        %v587 = vpop.f32.mrb[0].mxu0
        %v588 = vadd.f32 %v364, %v587
        %v589 = vpop.f32.mrb[0].mxu0
        %590 = vmatprep.mubr.f32.mxu0 0.0
        %591 = vmatmul.mubr.f32.gmra.mrb[0].mxu0 %v416
        %v592 = vpop.f32.mrb[0].mxu0
        %v593 = vadd.f32 %v364, %v592
        %v594 = vpop.f32.mrb[0].mxu0
        %595 = vmatprep.mubr.f32.mxu0 0.0
        %596 = vmatmul.mubr.f32.gmra.mrb[0].mxu0 %v419
        %v597 = vpop.f32.mrb[0].mxu0
        %v598 = vadd.f32 %v364, %v597
        %v599 = vpop.f32.mrb[0].mxu0
        %600 = vmatprep.mubr.f32.mxu0 0.0
        %601 = vmatmul.mubr.f32.gmra.mrb[0].mxu0 %v422
        %v602 = vpop.f32.mrb[0].mxu0
        %v603 = vadd.f32 %v364, %v602
        %v604 = vpop.f32.mrb[0].mxu0
        %605 = vmatprep.mubr.f32.mxu0 0.0
        %606 = vmatmul.mubr.f32.gmra.mrb[0].mxu0 %v425
        %v607 = vpop.f32.mrb[0].mxu0
        %v608 = vadd.f32 %v364, %v607
        %v609 = vpop.f32.mrb[0].mxu0
        %610 = vmatprep.mubr.f32.mxu0 0.0
        %611 = vmatmul.mubr.f32.gmra.mrb[0].mxu0 %v428
        %v612 = vpop.f32.mrb[0].mxu0
        %v613 = vadd.f32 %v364, %v612
        %v614 = vpop.f32.mrb[0].mxu0
        %615 = vmatprep.mubr.f32.mxu0 0.0
        %616 = vmatmul.mubr.f32.gmra.mrb[0].mxu0 %v431
        %v617 = vpop.f32.mrb[0].mxu0
        %v618 = vadd.f32 %v364, %v617
        %v619 = vpop.f32.mrb[0].mxu0
        %620 = vmatprep.mubr.f32.mxu0 0.0
        %621 = vmatmul.mubr.f32.gmra.mrb[0].mxu0 %v434
        %v622 = vpop.f32.mrb[0].mxu0
        %v623 = vadd.f32 %v364, %v622
        %v624 = vpop.f32.mrb[0].mxu0
        %625 = vmatprep.mubr.f32.mxu0 0.0
        %626 = vmatmul.mubr.f32.gmra.mrb[0].mxu0 %v437
        %v627 = vpop.f32.mrb[0].mxu0
        %v628 = vadd.f32 %v364, %v627
        %v629 = vpop.f32.mrb[0].mxu0
        %630 = vmatprep.mubr.f32.mxu0 0.0
        %631 = vmatmul.mubr.f32.gmra.mrb[0].mxu0 %v440
        %v632 = vpop.f32.mrb[0].mxu0
        %v633 = vadd.f32 %v364, %v632
        %v634 = vpop.f32.mrb[0].mxu0
        %635 = vdwg.mxu0
        %v636 = vmax.f32 %v513, 0.0
        %v637 = vmax.f32 %v518, 0.0
        %v638 = vmax.f32 %v523, 0.0
        %v639 = vmax.f32 %v528, 0.0
        %v640 = vmax.f32 %v533, 0.0
        %v641 = vmax.f32 %v538, 0.0
        %v642 = vmax.f32 %v543, 0.0
        %v643 = vmax.f32 %v548, 0.0
        %v644 = vmax.f32 %v553, 0.0
        %v645 = vmax.f32 %v558, 0.0
        %v646 = vmax.f32 %v563, 0.0
        %v647 = vmax.f32 %v568, 0.0
        %v648 = vmax.f32 %v573, 0.0
        %v649 = vmax.f32 %v578, 0.0
        %v650 = vmax.f32 %v583, 0.0
        %v651 = vmax.f32 %v588, 0.0
        %v652 = vmax.f32 %v593, 0.0
        %v653 = vmax.f32 %v598, 0.0
        %v654 = vmax.f32 %v603, 0.0
        %v655 = vmax.f32 %v608, 0.0
        %v656 = vmax.f32 %v613, 0.0
        %v657 = vmax.f32 %v618, 0.0
        %v658 = vmax.f32 %v623, 0.0
        %v659 = vmax.f32 %v628, 0.0
        %v660 = vmax.f32 %v633, 0.0
        %v661 = vld [vmem:[%s329 + $0xc4] sm:$0xff]
        %v662 = vld [vmem:[%s329 + $0xcc] sm:$0xff]
        %v663 = vld [vmem:[%s329 + $0xd4] sm:$0xff]
        %v664 = vld [vmem:[%s329 + $0xdc] sm:$0xff]
        %v665 = vld [vmem:[%s329 + $0xe4] sm:$0xff]
        %v666 = vld [vmem:[%s329 + $0xec] sm:$0xff]
        %v667 = vld [vmem:[%s329 + $0xf4] sm:$0xff]
        %v668 = vld [vmem:[%s329 + $0xfc] sm:$0xff]
        %v669 = vld [vmem:[%s329 + $0x104] sm:$0xff]
        %v670 = vld [vmem:[%s329 + $0x10c] sm:$0xff]
        %v671 = vld [vmem:[%s329 + $0x114] sm:$0xff]
        %v672 = vld [vmem:[%s329 + $0x11c] sm:$0xff]
        %v673 = vld [vmem:[%s329 + $0x124] sm:$0xff]
        %v674 = vld [vmem:[%s329 + $0x12c] sm:$0xff]
        %v675 = vld [vmem:[%s329 + $0x134] sm:$0xff]
        %v676 = vld [vmem:[%s329 + $0x13c] sm:$0xff]
        %v677 = vld [vmem:[%s329 + $0x144] sm:$0xff]
        %v678 = vld [vmem:[%s329 + $0x14c] sm:$0xff]
        %v679 = vld [vmem:[%s329 + $0x154] sm:$0xff]
        %v680 = vld [vmem:[%s329 + $0x15c] sm:$0xff]
        %v681 = vld [vmem:[%s329 + $0x164] sm:$0xff]
        %v682 = vld [vmem:[%s329 + $0x16c] sm:$0xff]
        %v683 = vld [vmem:[%s329 + $0x174] sm:$0xff]
        %v684 = vld [vmem:[%s329 + $0x17c] sm:$0xff]
        %v685 = vld [vmem:[%s329 + $0x184] sm:$0xf]
        %v687 = vsel %vm366, %v661, 0
        %v690 = vsel %vm366, %v662, 0
        %v693 = vsel %vm366, %v663, 0
        %v696 = vsel %vm366, %v664, 0
        %v699 = vsel %vm366, %v665, 0
        %v702 = vsel %vm366, %v666, 0
        %v705 = vsel %vm366, %v667, 0
        %v708 = vsel %vm366, %v668, 0
        %v711 = vsel %vm366, %v669, 0
        %v714 = vsel %vm366, %v670, 0
        %v717 = vsel %vm366, %v671, 0
        %v720 = vsel %vm366, %v672, 0
        %v723 = vsel %vm366, %v673, 0
        %v726 = vsel %vm366, %v674, 0
        %v729 = vsel %vm366, %v675, 0
        %v732 = vsel %vm366, %v676, 0
        %v735 = vsel %vm366, %v677, 0
        %v738 = vsel %vm366, %v678, 0
        %v741 = vsel %vm366, %v679, 0
        %v744 = vsel %vm366, %v680, 0
        %v747 = vsel %vm366, %v681, 0
        %v750 = vsel %vm366, %v682, 0
        %v753 = vsel %vm366, %v683, 0
        %v756 = vsel %vm366, %v684, 0
        %v759 = vsel %vm366, %v685, 0
        %761 = vmatprep.subr.mxu0 0.0
        %762 = vmatpush1.msra.mxu0 %v355
        %763 = vmatprep.subr.mxu0 0.0
        %764 = vmatpush1.msra.mxu0 %v356
        %765 = vmatprep.subr.mxu0 0.0
        %766 = vmatpush1.msra.mxu0 %v357
        %767 = vmatprep.subr.mxu0 0.0
        %768 = vmatpush1.msra.mxu0 %v444
        %769 = vmatprep.subr.mxu0 0.0
        %770 = vmatpush1.msra.mxu0 0.0
        %771 = vmatprep.subr.mxu0 0.0
        %772 = vmatpush1.msra.mxu0 0.0
        %773 = vmatprep.subr.mxu0 0.0
        %774 = vmatpush1.msra.mxu0 0.0
        %775 = vmatprep.subr.mxu0 0.0
        %776 = vmatpush1.msra.mxu0 0.0
        %777 = vmatprep.subr.mxu0 0.0
        %778 = vmatpush1.msra.mxu0 0.0
        %779 = vmatprep.subr.mxu0 0.0
        %780 = vmatpush1.msra.mxu0 0.0
        %781 = vmatprep.subr.mxu0 0.0
        %782 = vmatpush1.msra.mxu0 0.0
        %783 = vmatprep.subr.mxu0 0.0
        %784 = vmatpush1.msra.mxu0 0.0
        %785 = vmatprep.subr.mxu0 0.0
        %786 = vmatpush1.msra.mxu0 0.0
        %787 = vmatprep.subr.mxu0 0.0
        %788 = vmatpush1.msra.mxu0 0.0
        %789 = vmatprep.subr.mxu0 0.0
        %790 = vmatpush1.msra.mxu0 0.0
        %791 = vmatprep.subr.mxu0 0.0
        %792 = vmatpush1.msra.mxu0 0.0
        %793 = vmatprep.subr.mxu0 0.0
        %794 = vmatpush1.msra.mxu0 0.0
        %795 = vmatprep.subr.mxu0 0.0
        %796 = vmatpush1.msra.mxu0 0.0
        %797 = vmatprep.subr.mxu0 0.0
        %798 = vmatpush1.msra.mxu0 0.0
        %799 = vmatprep.subr.mxu0 0.0
        %800 = vmatpush1.msra.mxu0 0.0
        %801 = vmatprep.subr.mxu0 0.0
        %802 = vmatpush1.msra.mxu0 0.0
        %803 = vmatprep.subr.mxu0 0.0
        %804 = vmatpush1.msra.mxu0 0.0
        %805 = vmatprep.subr.mxu0 0.0
        %806 = vmatpush1.msra.mxu0 0.0
        %807 = vmatprep.subr.mxu0 0.0
        %808 = vmatpush1.msra.mxu0 0.0
        %809 = vmatprep.subr.mxu0 0.0
        %810 = vmatpush1.msra.mxu0 0.0
        %811 = vmatprep.subr.mxu0 0.0
        %812 = vmatpush1.msra.mxu0 0.0
        %813 = vmatprep.subr.mxu0 0.0
        %814 = vmatpush1.msra.mxu0 0.0
        %815 = vmatprep.subr.mxu0 0.0
        %816 = vmatpush1.msra.mxu0 0.0
        %817 = vmatprep.subr.mxu0 0.0
        %818 = vmatpush1.msra.mxu0 0.0
        %819 = vmatprep.subr.mxu0 0.0
        %820 = vmatpush1.msra.mxu0 0.0
        %821 = vmatprep.subr.mxu0 0.0
        %822 = vmatpush1.msra.mxu0 0.0
        %823 = vmatprep.subr.mxu0 0.0
        %824 = vmatpush1.msra.mxu0 0.0
        %825 = vmatprep.mubr.f32.mxu0 0.0
        %826 = vmatmul.mubr.f32.gmra.mrb[0].mxu0 %v687
        %v827 = vpop.f32.mrb[0].mxu0
        %v828 = vadd.f32 %v364, %v827
        %v829 = vpop.f32.mrb[0].mxu0
        %830 = vmatprep.mubr.f32.mxu0 0.0
        %831 = vmatmul.mubr.f32.gmra.mrb[0].mxu0 %v690
        %v832 = vpop.f32.mrb[0].mxu0
        %v833 = vadd.f32 %v364, %v832
        %v834 = vpop.f32.mrb[0].mxu0
        %835 = vmatprep.mubr.f32.mxu0 0.0
        %836 = vmatmul.mubr.f32.gmra.mrb[0].mxu0 %v693
        %v837 = vpop.f32.mrb[0].mxu0
        %v838 = vadd.f32 %v364, %v837
        %v839 = vpop.f32.mrb[0].mxu0
        %840 = vmatprep.mubr.f32.mxu0 0.0
        %841 = vmatmul.mubr.f32.gmra.mrb[0].mxu0 %v696
        %v842 = vpop.f32.mrb[0].mxu0
        %v843 = vadd.f32 %v364, %v842
        %v844 = vpop.f32.mrb[0].mxu0
        %845 = vmatprep.mubr.f32.mxu0 0.0
        %846 = vmatmul.mubr.f32.gmra.mrb[0].mxu0 %v699
        %v847 = vpop.f32.mrb[0].mxu0
        %v848 = vadd.f32 %v364, %v847
        %v849 = vpop.f32.mrb[0].mxu0
        %850 = vmatprep.mubr.f32.mxu0 0.0
        %851 = vmatmul.mubr.f32.gmra.mrb[0].mxu0 %v702
        %v852 = vpop.f32.mrb[0].mxu0
        %v853 = vadd.f32 %v364, %v852
        %v854 = vpop.f32.mrb[0].mxu0
        %855 = vmatprep.mubr.f32.mxu0 0.0
        %856 = vmatmul.mubr.f32.gmra.mrb[0].mxu0 %v705
        %v857 = vpop.f32.mrb[0].mxu0
        %v858 = vadd.f32 %v364, %v857
        %v859 = vpop.f32.mrb[0].mxu0
        %860 = vmatprep.mubr.f32.mxu0 0.0
        %861 = vmatmul.mubr.f32.gmra.mrb[0].mxu0 %v708
        %v862 = vpop.f32.mrb[0].mxu0
        %v863 = vadd.f32 %v364, %v862
        %v864 = vpop.f32.mrb[0].mxu0
        %865 = vmatprep.mubr.f32.mxu0 0.0
        %866 = vmatmul.mubr.f32.gmra.mrb[0].mxu0 %v711
        %v867 = vpop.f32.mrb[0].mxu0
        %v868 = vadd.f32 %v364, %v867
        %v869 = vpop.f32.mrb[0].mxu0
        %870 = vmatprep.mubr.f32.mxu0 0.0
        %871 = vmatmul.mubr.f32.gmra.mrb[0].mxu0 %v714
        %v872 = vpop.f32.mrb[0].mxu0
        %v873 = vadd.f32 %v364, %v872
        %v874 = vpop.f32.mrb[0].mxu0
        %875 = vmatprep.mubr.f32.mxu0 0.0
        %876 = vmatmul.mubr.f32.gmra.mrb[0].mxu0 %v717
        %v877 = vpop.f32.mrb[0].mxu0
        %v878 = vadd.f32 %v364, %v877
        %v879 = vpop.f32.mrb[0].mxu0
        %880 = vmatprep.mubr.f32.mxu0 0.0
        %881 = vmatmul.mubr.f32.gmra.mrb[0].mxu0 %v720
        %v882 = vpop.f32.mrb[0].mxu0
        %v883 = vadd.f32 %v364, %v882
        %v884 = vpop.f32.mrb[0].mxu0
        %885 = vmatprep.mubr.f32.mxu0 0.0
        %886 = vmatmul.mubr.f32.gmra.mrb[0].mxu0 %v723
        %v887 = vpop.f32.mrb[0].mxu0
        %v888 = vadd.f32 %v364, %v887
        %v889 = vpop.f32.mrb[0].mxu0
        %890 = vmatprep.mubr.f32.mxu0 0.0
        %891 = vmatmul.mubr.f32.gmra.mrb[0].mxu0 %v726
        %v892 = vpop.f32.mrb[0].mxu0
        %v893 = vadd.f32 %v364, %v892
        %v894 = vpop.f32.mrb[0].mxu0
        %895 = vmatprep.mubr.f32.mxu0 0.0
        %896 = vmatmul.mubr.f32.gmra.mrb[0].mxu0 %v729
        %v897 = vpop.f32.mrb[0].mxu0
        %v898 = vadd.f32 %v364, %v897
        %v899 = vpop.f32.mrb[0].mxu0
        %900 = vmatprep.mubr.f32.mxu0 0.0
        %901 = vmatmul.mubr.f32.gmra.mrb[0].mxu0 %v732
        %v902 = vpop.f32.mrb[0].mxu0
        %v903 = vadd.f32 %v364, %v902
        %v904 = vpop.f32.mrb[0].mxu0
        %905 = vmatprep.mubr.f32.mxu0 0.0
        %906 = vmatmul.mubr.f32.gmra.mrb[0].mxu0 %v735
        %v907 = vpop.f32.mrb[0].mxu0
        %v908 = vadd.f32 %v364, %v907
        %v909 = vpop.f32.mrb[0].mxu0
        %910 = vmatprep.mubr.f32.mxu0 0.0
        %911 = vmatmul.mubr.f32.gmra.mrb[0].mxu0 %v738
        %v912 = vpop.f32.mrb[0].mxu0
        %v913 = vadd.f32 %v364, %v912
        %v914 = vpop.f32.mrb[0].mxu0
        %915 = vmatprep.mubr.f32.mxu0 0.0
        %916 = vmatmul.mubr.f32.gmra.mrb[0].mxu0 %v741
        %v917 = vpop.f32.mrb[0].mxu0
        %v918 = vadd.f32 %v364, %v917
        %v919 = vpop.f32.mrb[0].mxu0
        %920 = vmatprep.mubr.f32.mxu0 0.0
        %921 = vmatmul.mubr.f32.gmra.mrb[0].mxu0 %v744
        %v922 = vpop.f32.mrb[0].mxu0
        %v923 = vadd.f32 %v364, %v922
        %v924 = vpop.f32.mrb[0].mxu0
        %925 = vmatprep.mubr.f32.mxu0 0.0
        %926 = vmatmul.mubr.f32.gmra.mrb[0].mxu0 %v747
        %v927 = vpop.f32.mrb[0].mxu0
        %v928 = vadd.f32 %v364, %v927
        %v929 = vpop.f32.mrb[0].mxu0
        %930 = vmatprep.mubr.f32.mxu0 0.0
        %931 = vmatmul.mubr.f32.gmra.mrb[0].mxu0 %v750
        %v932 = vpop.f32.mrb[0].mxu0
        %v933 = vadd.f32 %v364, %v932
        %v934 = vpop.f32.mrb[0].mxu0
        %935 = vmatprep.mubr.f32.mxu0 0.0
        %936 = vmatmul.mubr.f32.gmra.mrb[0].mxu0 %v753
        %v937 = vpop.f32.mrb[0].mxu0
        %v938 = vadd.f32 %v364, %v937
        %v939 = vpop.f32.mrb[0].mxu0
        %940 = vmatprep.mubr.f32.mxu0 0.0
        %941 = vmatmul.mubr.f32.gmra.mrb[0].mxu0 %v756
        %v942 = vpop.f32.mrb[0].mxu0
        %v943 = vadd.f32 %v364, %v942
        %v944 = vpop.f32.mrb[0].mxu0
        %945 = vmatprep.mubr.f32.mxu0 0.0
        %946 = vmatmul.mubr.f32.gmra.mrb[0].mxu0 %v759
        %v947 = vpop.f32.mrb[0].mxu0
        %v948 = vadd.f32 %v364, %v947
        %v949 = vpop.f32.mrb[0].mxu0
        %950 = vdwg.mxu0
        %v951 = vmax.f32 %v828, 0.0
        %v952 = vmax.f32 %v833, 0.0
        %v953 = vmax.f32 %v838, 0.0
        %v954 = vmax.f32 %v843, 0.0
        %v955 = vmax.f32 %v848, 0.0
        %v956 = vmax.f32 %v853, 0.0
        %v957 = vmax.f32 %v858, 0.0
        %v958 = vmax.f32 %v863, 0.0
        %v959 = vmax.f32 %v868, 0.0
        %v960 = vmax.f32 %v873, 0.0
        %v961 = vmax.f32 %v878, 0.0
        %v962 = vmax.f32 %v883, 0.0
        %v963 = vmax.f32 %v888, 0.0
        %v964 = vmax.f32 %v893, 0.0
        %v965 = vmax.f32 %v898, 0.0
        %v966 = vmax.f32 %v903, 0.0
        %v967 = vmax.f32 %v908, 0.0
        %v968 = vmax.f32 %v913, 0.0
        %v969 = vmax.f32 %v918, 0.0
        %v970 = vmax.f32 %v923, 0.0
        %v971 = vmax.f32 %v928, 0.0
        %v972 = vmax.f32 %v933, 0.0
        %v973 = vmax.f32 %v938, 0.0
        %v974 = vmax.f32 %v943, 0.0
        %v975 = vmax.f32 %v948, 0.0
        %v976 = vld [vmem:[%s329 + $0x188] sm:$0xff]
        %v977 = vld [vmem:[%s329 + $0x190] sm:$0xff]
        %v978 = vld [vmem:[%s329 + $0x198] sm:$0xff]
        %v979 = vld [vmem:[%s329 + $0x1a0] sm:$0xff]
        %v980 = vld [vmem:[%s329 + $0x1a8] sm:$0xff]
        %v981 = vld [vmem:[%s329 + $0x1b0] sm:$0xff]
        %v982 = vld [vmem:[%s329 + $0x1b8] sm:$0xff]
        %v983 = vld [vmem:[%s329 + $0x1c0] sm:$0xff]
        %v984 = vld [vmem:[%s329 + $0x1c8] sm:$0xff]
        %v985 = vld [vmem:[%s329 + $0x1d0] sm:$0xff]
        %v986 = vld [vmem:[%s329 + $0x1d8] sm:$0xff]
        %v987 = vld [vmem:[%s329 + $0x1e0] sm:$0xff]
        %v988 = vld [vmem:[%s329 + $0x1e8] sm:$0xff]
        %v989 = vld [vmem:[%s329 + $0x1f0] sm:$0xff]
        %v990 = vld [vmem:[%s329 + $0x1f8] sm:$0xff]
        %v991 = vld [vmem:[%s329 + $0x200] sm:$0xff]
        %v992 = vld [vmem:[%s329 + $0x208] sm:$0xff]
        %v993 = vld [vmem:[%s329 + $0x210] sm:$0xff]
        %v994 = vld [vmem:[%s329 + $0x218] sm:$0xff]
        %v995 = vld [vmem:[%s329 + $0x220] sm:$0xff]
        %v996 = vld [vmem:[%s329 + $0x228] sm:$0xff]
        %v997 = vld [vmem:[%s329 + $0x230] sm:$0xff]
        %v998 = vld [vmem:[%s329 + $0x238] sm:$0xff]
        %v999 = vld [vmem:[%s329 + $0x240] sm:$0xff]
        %v1000 = vld [vmem:[%s329 + $0x248] sm:$0xf]
        %v1002 = vsel %vm366, %v976, 0
        %v1005 = vsel %vm366, %v977, 0
        %v1008 = vsel %vm366, %v978, 0
        %v1011 = vsel %vm366, %v979, 0
        %v1014 = vsel %vm366, %v980, 0
        %v1017 = vsel %vm366, %v981, 0
        %v1020 = vsel %vm366, %v982, 0
        %v1023 = vsel %vm366, %v983, 0
        %v1026 = vsel %vm366, %v984, 0
        %v1029 = vsel %vm366, %v985, 0
        %v1032 = vsel %vm366, %v986, 0
        %v1035 = vsel %vm366, %v987, 0
        %v1038 = vsel %vm366, %v988, 0
        %v1041 = vsel %vm366, %v989, 0
        %v1044 = vsel %vm366, %v990, 0
        %v1047 = vsel %vm366, %v991, 0
        %v1050 = vsel %vm366, %v992, 0
        %v1053 = vsel %vm366, %v993, 0
        %v1056 = vsel %vm366, %v994, 0
        %v1059 = vsel %vm366, %v995, 0
        %v1062 = vsel %vm366, %v996, 0
        %v1065 = vsel %vm366, %v997, 0
        %v1068 = vsel %vm366, %v998, 0
        %v1071 = vsel %vm366, %v999, 0
        %v1074 = vsel %vm366, %v1000, 0
        %1076 = vmatprep.subr.mxu0 0.0
        %1077 = vmatpush1.msra.mxu0 %v355
        %1078 = vmatprep.subr.mxu0 0.0
        %1079 = vmatpush1.msra.mxu0 %v356
        %1080 = vmatprep.subr.mxu0 0.0
        %1081 = vmatpush1.msra.mxu0 %v357
        %1082 = vmatprep.subr.mxu0 0.0
        %1083 = vmatpush1.msra.mxu0 %v444
        %1084 = vmatprep.subr.mxu0 0.0
        %1085 = vmatpush1.msra.mxu0 0.0
        %1086 = vmatprep.subr.mxu0 0.0
        %1087 = vmatpush1.msra.mxu0 0.0
        %1088 = vmatprep.subr.mxu0 0.0
        %1089 = vmatpush1.msra.mxu0 0.0
        %1090 = vmatprep.subr.mxu0 0.0
        %1091 = vmatpush1.msra.mxu0 0.0
        %1092 = vmatprep.subr.mxu0 0.0
        %1093 = vmatpush1.msra.mxu0 0.0
        %1094 = vmatprep.subr.mxu0 0.0
        %1095 = vmatpush1.msra.mxu0 0.0
        %1096 = vmatprep.subr.mxu0 0.0
        %1097 = vmatpush1.msra.mxu0 0.0
        %1098 = vmatprep.subr.mxu0 0.0
        %1099 = vmatpush1.msra.mxu0 0.0
        %1100 = vmatprep.subr.mxu0 0.0
        %1101 = vmatpush1.msra.mxu0 0.0
        %1102 = vmatprep.subr.mxu0 0.0
        %1103 = vmatpush1.msra.mxu0 0.0
        %1104 = vmatprep.subr.mxu0 0.0
        %1105 = vmatpush1.msra.mxu0 0.0
        %1106 = vmatprep.subr.mxu0 0.0
        %1107 = vmatpush1.msra.mxu0 0.0
        %1108 = vmatprep.subr.mxu0 0.0
        %1109 = vmatpush1.msra.mxu0 0.0
        %1110 = vmatprep.subr.mxu0 0.0
        %1111 = vmatpush1.msra.mxu0 0.0
        %1112 = vmatprep.subr.mxu0 0.0
        %1113 = vmatpush1.msra.mxu0 0.0
        %1114 = vmatprep.subr.mxu0 0.0
        %1115 = vmatpush1.msra.mxu0 0.0
        %1116 = vmatprep.subr.mxu0 0.0
        %1117 = vmatpush1.msra.mxu0 0.0
        %1118 = vmatprep.subr.mxu0 0.0
        %1119 = vmatpush1.msra.mxu0 0.0
        %1120 = vmatprep.subr.mxu0 0.0
        %1121 = vmatpush1.msra.mxu0 0.0
        %1122 = vmatprep.subr.mxu0 0.0
        %1123 = vmatpush1.msra.mxu0 0.0
        %1124 = vmatprep.subr.mxu0 0.0
        %1125 = vmatpush1.msra.mxu0 0.0
        %1126 = vmatprep.subr.mxu0 0.0
        %1127 = vmatpush1.msra.mxu0 0.0
        %1128 = vmatprep.subr.mxu0 0.0
        %1129 = vmatpush1.msra.mxu0 0.0
        %1130 = vmatprep.subr.mxu0 0.0
        %1131 = vmatpush1.msra.mxu0 0.0
        %1132 = vmatprep.subr.mxu0 0.0
        %1133 = vmatpush1.msra.mxu0 0.0
        %1134 = vmatprep.subr.mxu0 0.0
        %1135 = vmatpush1.msra.mxu0 0.0
        %1136 = vmatprep.subr.mxu0 0.0
        %1137 = vmatpush1.msra.mxu0 0.0
        %1138 = vmatprep.subr.mxu0 0.0
        %1139 = vmatpush1.msra.mxu0 0.0
        %1140 = vmatprep.mubr.f32.mxu0 0.0
        %1141 = vmatmul.mubr.f32.gmra.mrb[0].mxu0 %v1002
        %v1142 = vpop.f32.mrb[0].mxu0
        %v1143 = vadd.f32 %v364, %v1142
        %v1144 = vpop.f32.mrb[0].mxu0
        %1145 = vmatprep.mubr.f32.mxu0 0.0
        %1146 = vmatmul.mubr.f32.gmra.mrb[0].mxu0 %v1005
        %v1147 = vpop.f32.mrb[0].mxu0
        %v1148 = vadd.f32 %v364, %v1147
        %v1149 = vpop.f32.mrb[0].mxu0
        %1150 = vmatprep.mubr.f32.mxu0 0.0
        %1151 = vmatmul.mubr.f32.gmra.mrb[0].mxu0 %v1008
        %v1152 = vpop.f32.mrb[0].mxu0
        %v1153 = vadd.f32 %v364, %v1152
        %v1154 = vpop.f32.mrb[0].mxu0
        %1155 = vmatprep.mubr.f32.mxu0 0.0
        %1156 = vmatmul.mubr.f32.gmra.mrb[0].mxu0 %v1011
        %v1157 = vpop.f32.mrb[0].mxu0
        %v1158 = vadd.f32 %v364, %v1157
        %v1159 = vpop.f32.mrb[0].mxu0
        %1160 = vmatprep.mubr.f32.mxu0 0.0
        %1161 = vmatmul.mubr.f32.gmra.mrb[0].mxu0 %v1014
        %v1162 = vpop.f32.mrb[0].mxu0
        %v1163 = vadd.f32 %v364, %v1162
        %v1164 = vpop.f32.mrb[0].mxu0
        %1165 = vmatprep.mubr.f32.mxu0 0.0
        %1166 = vmatmul.mubr.f32.gmra.mrb[0].mxu0 %v1017
        %v1167 = vpop.f32.mrb[0].mxu0
        %v1168 = vadd.f32 %v364, %v1167
        %v1169 = vpop.f32.mrb[0].mxu0
        %1170 = vmatprep.mubr.f32.mxu0 0.0
        %1171 = vmatmul.mubr.f32.gmra.mrb[0].mxu0 %v1020
        %v1172 = vpop.f32.mrb[0].mxu0
        %v1173 = vadd.f32 %v364, %v1172
        %v1174 = vpop.f32.mrb[0].mxu0
        %1175 = vmatprep.mubr.f32.mxu0 0.0
        %1176 = vmatmul.mubr.f32.gmra.mrb[0].mxu0 %v1023
        %v1177 = vpop.f32.mrb[0].mxu0
        %v1178 = vadd.f32 %v364, %v1177
        %v1179 = vpop.f32.mrb[0].mxu0
        %1180 = vmatprep.mubr.f32.mxu0 0.0
        %1181 = vmatmul.mubr.f32.gmra.mrb[0].mxu0 %v1026
        %v1182 = vpop.f32.mrb[0].mxu0
        %v1183 = vadd.f32 %v364, %v1182
        %v1184 = vpop.f32.mrb[0].mxu0
        %1185 = vmatprep.mubr.f32.mxu0 0.0
        %1186 = vmatmul.mubr.f32.gmra.mrb[0].mxu0 %v1029
        %v1187 = vpop.f32.mrb[0].mxu0
        %v1188 = vadd.f32 %v364, %v1187
        %v1189 = vpop.f32.mrb[0].mxu0
        %1190 = vmatprep.mubr.f32.mxu0 0.0
        %1191 = vmatmul.mubr.f32.gmra.mrb[0].mxu0 %v1032
        %v1192 = vpop.f32.mrb[0].mxu0
        %v1193 = vadd.f32 %v364, %v1192
        %v1194 = vpop.f32.mrb[0].mxu0
        %1195 = vmatprep.mubr.f32.mxu0 0.0
        %1196 = vmatmul.mubr.f32.gmra.mrb[0].mxu0 %v1035
        %v1197 = vpop.f32.mrb[0].mxu0
        %v1198 = vadd.f32 %v364, %v1197
        %v1199 = vpop.f32.mrb[0].mxu0
        %1200 = vmatprep.mubr.f32.mxu0 0.0
        %1201 = vmatmul.mubr.f32.gmra.mrb[0].mxu0 %v1038
        %v1202 = vpop.f32.mrb[0].mxu0
        %v1203 = vadd.f32 %v364, %v1202
        %v1204 = vpop.f32.mrb[0].mxu0
        %1205 = vmatprep.mubr.f32.mxu0 0.0
        %1206 = vmatmul.mubr.f32.gmra.mrb[0].mxu0 %v1041
        %v1207 = vpop.f32.mrb[0].mxu0
        %v1208 = vadd.f32 %v364, %v1207
        %v1209 = vpop.f32.mrb[0].mxu0
        %1210 = vmatprep.mubr.f32.mxu0 0.0
        %1211 = vmatmul.mubr.f32.gmra.mrb[0].mxu0 %v1044
        %v1212 = vpop.f32.mrb[0].mxu0
        %v1213 = vadd.f32 %v364, %v1212
        %v1214 = vpop.f32.mrb[0].mxu0
        %1215 = vmatprep.mubr.f32.mxu0 0.0
        %1216 = vmatmul.mubr.f32.gmra.mrb[0].mxu0 %v1047
        %v1217 = vpop.f32.mrb[0].mxu0
        %v1218 = vadd.f32 %v364, %v1217
        %v1219 = vpop.f32.mrb[0].mxu0
        %1220 = vmatprep.mubr.f32.mxu0 0.0
        %1221 = vmatmul.mubr.f32.gmra.mrb[0].mxu0 %v1050
        %v1222 = vpop.f32.mrb[0].mxu0
        %v1223 = vadd.f32 %v364, %v1222
        %v1224 = vpop.f32.mrb[0].mxu0
        %1225 = vmatprep.mubr.f32.mxu0 0.0
        %1226 = vmatmul.mubr.f32.gmra.mrb[0].mxu0 %v1053
        %v1227 = vpop.f32.mrb[0].mxu0
        %v1228 = vadd.f32 %v364, %v1227
        %v1229 = vpop.f32.mrb[0].mxu0
        %1230 = vmatprep.mubr.f32.mxu0 0.0
        %1231 = vmatmul.mubr.f32.gmra.mrb[0].mxu0 %v1056
        %v1232 = vpop.f32.mrb[0].mxu0
        %v1233 = vadd.f32 %v364, %v1232
        %v1234 = vpop.f32.mrb[0].mxu0
        %1235 = vmatprep.mubr.f32.mxu0 0.0
        %1236 = vmatmul.mubr.f32.gmra.mrb[0].mxu0 %v1059
        %v1237 = vpop.f32.mrb[0].mxu0
        %v1238 = vadd.f32 %v364, %v1237
        %v1239 = vpop.f32.mrb[0].mxu0
        %1240 = vmatprep.mubr.f32.mxu0 0.0
        %1241 = vmatmul.mubr.f32.gmra.mrb[0].mxu0 %v1062
        %v1242 = vpop.f32.mrb[0].mxu0
        %v1243 = vadd.f32 %v364, %v1242
        %v1244 = vpop.f32.mrb[0].mxu0
        %1245 = vmatprep.mubr.f32.mxu0 0.0
        %1246 = vmatmul.mubr.f32.gmra.mrb[0].mxu0 %v1065
        %v1247 = vpop.f32.mrb[0].mxu0
        %v1248 = vadd.f32 %v364, %v1247
        %v1249 = vpop.f32.mrb[0].mxu0
        %1250 = vmatprep.mubr.f32.mxu0 0.0
        %1251 = vmatmul.mubr.f32.gmra.mrb[0].mxu0 %v1068
        %v1252 = vpop.f32.mrb[0].mxu0
        %v1253 = vadd.f32 %v364, %v1252
        %v1254 = vpop.f32.mrb[0].mxu0
        %1255 = vmatprep.mubr.f32.mxu0 0.0
        %1256 = vmatmul.mubr.f32.gmra.mrb[0].mxu0 %v1071
        %v1257 = vpop.f32.mrb[0].mxu0
        %v1258 = vadd.f32 %v364, %v1257
        %v1259 = vpop.f32.mrb[0].mxu0
        %1260 = vmatprep.mubr.f32.mxu0 0.0
        %1261 = vmatmul.mubr.f32.gmra.mrb[0].mxu0 %v1074
        %v1262 = vpop.f32.mrb[0].mxu0
        %v1263 = vadd.f32 %v364, %v1262
        %v1264 = vpop.f32.mrb[0].mxu0
        %1265 = vdwg.mxu0
        %v1266 = vmax.f32 %v1143, 0.0
        %v1267 = vmax.f32 %v1148, 0.0
        %v1268 = vmax.f32 %v1153, 0.0
        %v1269 = vmax.f32 %v1158, 0.0
        %v1270 = vmax.f32 %v1163, 0.0
        %v1271 = vmax.f32 %v1168, 0.0
        %v1272 = vmax.f32 %v1173, 0.0
        %v1273 = vmax.f32 %v1178, 0.0
        %v1274 = vmax.f32 %v1183, 0.0
        %v1275 = vmax.f32 %v1188, 0.0
        %v1276 = vmax.f32 %v1193, 0.0
        %v1277 = vmax.f32 %v1198, 0.0
        %v1278 = vmax.f32 %v1203, 0.0
        %v1279 = vmax.f32 %v1208, 0.0
        %v1280 = vmax.f32 %v1213, 0.0
        %v1281 = vmax.f32 %v1218, 0.0
        %v1282 = vmax.f32 %v1223, 0.0
        %v1283 = vmax.f32 %v1228, 0.0
        %v1284 = vmax.f32 %v1233, 0.0
        %v1285 = vmax.f32 %v1238, 0.0
        %v1286 = vmax.f32 %v1243, 0.0
        %v1287 = vmax.f32 %v1248, 0.0
        %v1288 = vmax.f32 %v1253, 0.0
        %v1289 = vmax.f32 %v1258, 0.0
        %v1290 = vmax.f32 %v1263, 0.0
        %v1291 = vld [vmem:[%s329 + $0x24c] sm:$0xff]
        %v1292 = vld [vmem:[%s329 + $0x254] sm:$0xff]
        %v1293 = vld [vmem:[%s329 + $0x25c] sm:$0xff]
        %v1294 = vld [vmem:[%s329 + $0x264] sm:$0xff]
        %v1295 = vld [vmem:[%s329 + $0x26c] sm:$0xff]
        %v1296 = vld [vmem:[%s329 + $0x274] sm:$0xff]
        %v1297 = vld [vmem:[%s329 + $0x27c] sm:$0xff]
        %v1298 = vld [vmem:[%s329 + $0x284] sm:$0xff]
        %v1299 = vld [vmem:[%s329 + $0x28c] sm:$0xff]
        %v1300 = vld [vmem:[%s329 + $0x294] sm:$0xff]
        %v1301 = vld [vmem:[%s329 + $0x29c] sm:$0xff]
        %v1302 = vld [vmem:[%s329 + $0x2a4] sm:$0xff]
        %v1303 = vld [vmem:[%s329 + $0x2ac] sm:$0xff]
        %v1304 = vld [vmem:[%s329 + $0x2b4] sm:$0xff]
        %v1305 = vld [vmem:[%s329 + $0x2bc] sm:$0xff]
        %v1306 = vld [vmem:[%s329 + $0x2c4] sm:$0xff]
        %v1307 = vld [vmem:[%s329 + $0x2cc] sm:$0xff]
        %v1308 = vld [vmem:[%s329 + $0x2d4] sm:$0xff]
        %v1309 = vld [vmem:[%s329 + $0x2dc] sm:$0xff]
        %v1310 = vld [vmem:[%s329 + $0x2e4] sm:$0xff]
        %v1311 = vld [vmem:[%s329 + $0x2ec] sm:$0xff]
        %v1312 = vld [vmem:[%s329 + $0x2f4] sm:$0xff]
        %v1313 = vld [vmem:[%s329 + $0x2fc] sm:$0xff]
        %v1314 = vld [vmem:[%s329 + $0x304] sm:$0xff]
        %v1315 = vld [vmem:[%s329 + $0x30c] sm:$0xf]
        %v1317 = vsel %vm366, %v1291, 0
        %v1320 = vsel %vm366, %v1292, 0
        %v1323 = vsel %vm366, %v1293, 0
        %v1326 = vsel %vm366, %v1294, 0
        %v1329 = vsel %vm366, %v1295, 0
        %v1332 = vsel %vm366, %v1296, 0
        %v1335 = vsel %vm366, %v1297, 0
        %v1338 = vsel %vm366, %v1298, 0
        %v1341 = vsel %vm366, %v1299, 0
        %v1344 = vsel %vm366, %v1300, 0
        %v1347 = vsel %vm366, %v1301, 0
        %v1350 = vsel %vm366, %v1302, 0
        %v1353 = vsel %vm366, %v1303, 0
        %v1356 = vsel %vm366, %v1304, 0
        %v1359 = vsel %vm366, %v1305, 0
        %v1362 = vsel %vm366, %v1306, 0
        %v1365 = vsel %vm366, %v1307, 0
        %v1368 = vsel %vm366, %v1308, 0
        %v1371 = vsel %vm366, %v1309, 0
        %v1374 = vsel %vm366, %v1310, 0
        %v1377 = vsel %vm366, %v1311, 0
        %v1380 = vsel %vm366, %v1312, 0
        %v1383 = vsel %vm366, %v1313, 0
        %v1386 = vsel %vm366, %v1314, 0
        %v1389 = vsel %vm366, %v1315, 0
        %1391 = vmatprep.subr.mxu0 0.0
        %1392 = vmatpush1.msra.mxu0 %v355
        %1393 = vmatprep.subr.mxu0 0.0
        %1394 = vmatpush1.msra.mxu0 %v356
        %1395 = vmatprep.subr.mxu0 0.0
        %1396 = vmatpush1.msra.mxu0 %v357
        %1397 = vmatprep.subr.mxu0 0.0
        %1398 = vmatpush1.msra.mxu0 %v444
        %1399 = vmatprep.subr.mxu0 0.0
        %1400 = vmatpush1.msra.mxu0 0.0
        %1401 = vmatprep.subr.mxu0 0.0
        %1402 = vmatpush1.msra.mxu0 0.0
        %1403 = vmatprep.subr.mxu0 0.0
        %1404 = vmatpush1.msra.mxu0 0.0
        %1405 = vmatprep.subr.mxu0 0.0
        %1406 = vmatpush1.msra.mxu0 0.0
        %1407 = vmatprep.subr.mxu0 0.0
        %1408 = vmatpush1.msra.mxu0 0.0
        %1409 = vmatprep.subr.mxu0 0.0
        %1410 = vmatpush1.msra.mxu0 0.0
        %1411 = vmatprep.subr.mxu0 0.0
        %1412 = vmatpush1.msra.mxu0 0.0
        %1413 = vmatprep.subr.mxu0 0.0
        %1414 = vmatpush1.msra.mxu0 0.0
        %1415 = vmatprep.subr.mxu0 0.0
        %1416 = vmatpush1.msra.mxu0 0.0
        %1417 = vmatprep.subr.mxu0 0.0
        %1418 = vmatpush1.msra.mxu0 0.0
        %1419 = vmatprep.subr.mxu0 0.0
        %1420 = vmatpush1.msra.mxu0 0.0
        %1421 = vmatprep.subr.mxu0 0.0
        %1422 = vmatpush1.msra.mxu0 0.0
        %1423 = vmatprep.subr.mxu0 0.0
        %1424 = vmatpush1.msra.mxu0 0.0
        %1425 = vmatprep.subr.mxu0 0.0
        %1426 = vmatpush1.msra.mxu0 0.0
        %1427 = vmatprep.subr.mxu0 0.0
        %1428 = vmatpush1.msra.mxu0 0.0
        %1429 = vmatprep.subr.mxu0 0.0
        %1430 = vmatpush1.msra.mxu0 0.0
        %1431 = vmatprep.subr.mxu0 0.0
        %1432 = vmatpush1.msra.mxu0 0.0
        %1433 = vmatprep.subr.mxu0 0.0
        %1434 = vmatpush1.msra.mxu0 0.0
        %1435 = vmatprep.subr.mxu0 0.0
        %1436 = vmatpush1.msra.mxu0 0.0
        %1437 = vmatprep.subr.mxu0 0.0
        %1438 = vmatpush1.msra.mxu0 0.0
        %1439 = vmatprep.subr.mxu0 0.0
        %1440 = vmatpush1.msra.mxu0 0.0
        %1441 = vmatprep.subr.mxu0 0.0
        %1442 = vmatpush1.msra.mxu0 0.0
        %1443 = vmatprep.subr.mxu0 0.0
        %1444 = vmatpush1.msra.mxu0 0.0
        %1445 = vmatprep.subr.mxu0 0.0
        %1446 = vmatpush1.msra.mxu0 0.0
        %1447 = vmatprep.subr.mxu0 0.0
        %1448 = vmatpush1.msra.mxu0 0.0
        %1449 = vmatprep.subr.mxu0 0.0
        %1450 = vmatpush1.msra.mxu0 0.0
        %1451 = vmatprep.subr.mxu0 0.0
        %1452 = vmatpush1.msra.mxu0 0.0
        %1453 = vmatprep.subr.mxu0 0.0
        %1454 = vmatpush1.msra.mxu0 0.0
        %1455 = vmatprep.mubr.f32.mxu0 0.0
        %1456 = vmatmul.mubr.f32.gmra.mrb[0].mxu0 %v1317
        %v1457 = vpop.f32.mrb[0].mxu0
        %v1458 = vadd.f32 %v364, %v1457
        %v1459 = vpop.f32.mrb[0].mxu0
        %1460 = vmatprep.mubr.f32.mxu0 0.0
        %1461 = vmatmul.mubr.f32.gmra.mrb[0].mxu0 %v1320
        %v1462 = vpop.f32.mrb[0].mxu0
        %v1463 = vadd.f32 %v364, %v1462
        %v1464 = vpop.f32.mrb[0].mxu0
        %1465 = vmatprep.mubr.f32.mxu0 0.0
        %1466 = vmatmul.mubr.f32.gmra.mrb[0].mxu0 %v1323
        %v1467 = vpop.f32.mrb[0].mxu0
        %v1468 = vadd.f32 %v364, %v1467
        %v1469 = vpop.f32.mrb[0].mxu0
        %1470 = vmatprep.mubr.f32.mxu0 0.0
        %1471 = vmatmul.mubr.f32.gmra.mrb[0].mxu0 %v1326
        %v1472 = vpop.f32.mrb[0].mxu0
        %v1473 = vadd.f32 %v364, %v1472
        %v1474 = vpop.f32.mrb[0].mxu0
        %1475 = vmatprep.mubr.f32.mxu0 0.0
        %1476 = vmatmul.mubr.f32.gmra.mrb[0].mxu0 %v1329
        %v1477 = vpop.f32.mrb[0].mxu0
        %v1478 = vadd.f32 %v364, %v1477
        %v1479 = vpop.f32.mrb[0].mxu0
        %1480 = vmatprep.mubr.f32.mxu0 0.0
        %1481 = vmatmul.mubr.f32.gmra.mrb[0].mxu0 %v1332
        %v1482 = vpop.f32.mrb[0].mxu0
        %v1483 = vadd.f32 %v364, %v1482
        %v1484 = vpop.f32.mrb[0].mxu0
        %1485 = vmatprep.mubr.f32.mxu0 0.0
        %1486 = vmatmul.mubr.f32.gmra.mrb[0].mxu0 %v1335
        %v1487 = vpop.f32.mrb[0].mxu0
        %v1488 = vadd.f32 %v364, %v1487
        %v1489 = vpop.f32.mrb[0].mxu0
        %1490 = vmatprep.mubr.f32.mxu0 0.0
        %1491 = vmatmul.mubr.f32.gmra.mrb[0].mxu0 %v1338
        %v1492 = vpop.f32.mrb[0].mxu0
        %v1493 = vadd.f32 %v364, %v1492
        %v1494 = vpop.f32.mrb[0].mxu0
        %1495 = vmatprep.mubr.f32.mxu0 0.0
        %1496 = vmatmul.mubr.f32.gmra.mrb[0].mxu0 %v1341
        %v1497 = vpop.f32.mrb[0].mxu0
        %v1498 = vadd.f32 %v364, %v1497
        %v1499 = vpop.f32.mrb[0].mxu0
        %1500 = vmatprep.mubr.f32.mxu0 0.0
        %1501 = vmatmul.mubr.f32.gmra.mrb[0].mxu0 %v1344
        %v1502 = vpop.f32.mrb[0].mxu0
        %v1503 = vadd.f32 %v364, %v1502
        %v1504 = vpop.f32.mrb[0].mxu0
        %1505 = vmatprep.mubr.f32.mxu0 0.0
        %1506 = vmatmul.mubr.f32.gmra.mrb[0].mxu0 %v1347
        %v1507 = vpop.f32.mrb[0].mxu0
        %v1508 = vadd.f32 %v364, %v1507
        %v1509 = vpop.f32.mrb[0].mxu0
        %1510 = vmatprep.mubr.f32.mxu0 0.0
        %1511 = vmatmul.mubr.f32.gmra.mrb[0].mxu0 %v1350
        %v1512 = vpop.f32.mrb[0].mxu0
        %v1513 = vadd.f32 %v364, %v1512
        %v1514 = vpop.f32.mrb[0].mxu0
        %1515 = vmatprep.mubr.f32.mxu0 0.0
        %1516 = vmatmul.mubr.f32.gmra.mrb[0].mxu0 %v1353
        %v1517 = vpop.f32.mrb[0].mxu0
        %v1518 = vadd.f32 %v364, %v1517
        %v1519 = vpop.f32.mrb[0].mxu0
        %1520 = vmatprep.mubr.f32.mxu0 0.0
        %1521 = vmatmul.mubr.f32.gmra.mrb[0].mxu0 %v1356
        %v1522 = vpop.f32.mrb[0].mxu0
        %v1523 = vadd.f32 %v364, %v1522
        %v1524 = vpop.f32.mrb[0].mxu0
        %1525 = vmatprep.mubr.f32.mxu0 0.0
        %1526 = vmatmul.mubr.f32.gmra.mrb[0].mxu0 %v1359
        %v1527 = vpop.f32.mrb[0].mxu0
        %v1528 = vadd.f32 %v364, %v1527
        %v1529 = vpop.f32.mrb[0].mxu0
        %1530 = vmatprep.mubr.f32.mxu0 0.0
        %1531 = vmatmul.mubr.f32.gmra.mrb[0].mxu0 %v1362
        %v1532 = vpop.f32.mrb[0].mxu0
        %v1533 = vadd.f32 %v364, %v1532
        %v1534 = vpop.f32.mrb[0].mxu0
        %1535 = vmatprep.mubr.f32.mxu0 0.0
        %1536 = vmatmul.mubr.f32.gmra.mrb[0].mxu0 %v1365
        %v1537 = vpop.f32.mrb[0].mxu0
        %v1538 = vadd.f32 %v364, %v1537
        %v1539 = vpop.f32.mrb[0].mxu0
        %1540 = vmatprep.mubr.f32.mxu0 0.0
        %1541 = vmatmul.mubr.f32.gmra.mrb[0].mxu0 %v1368
        %v1542 = vpop.f32.mrb[0].mxu0
        %v1543 = vadd.f32 %v364, %v1542
        %v1544 = vpop.f32.mrb[0].mxu0
        %1545 = vmatprep.mubr.f32.mxu0 0.0
        %1546 = vmatmul.mubr.f32.gmra.mrb[0].mxu0 %v1371
        %v1547 = vpop.f32.mrb[0].mxu0
        %v1548 = vadd.f32 %v364, %v1547
        %v1549 = vpop.f32.mrb[0].mxu0
        %1550 = vmatprep.mubr.f32.mxu0 0.0
        %1551 = vmatmul.mubr.f32.gmra.mrb[0].mxu0 %v1374
        %v1552 = vpop.f32.mrb[0].mxu0
        %v1553 = vadd.f32 %v364, %v1552
        %v1554 = vpop.f32.mrb[0].mxu0
        %1555 = vmatprep.mubr.f32.mxu0 0.0
        %1556 = vmatmul.mubr.f32.gmra.mrb[0].mxu0 %v1377
        %v1557 = vpop.f32.mrb[0].mxu0
        %v1558 = vadd.f32 %v364, %v1557
        %v1559 = vpop.f32.mrb[0].mxu0
        %1560 = vmatprep.mubr.f32.mxu0 0.0
        %1561 = vmatmul.mubr.f32.gmra.mrb[0].mxu0 %v1380
        %v1562 = vpop.f32.mrb[0].mxu0
        %v1563 = vadd.f32 %v364, %v1562
        %v1564 = vpop.f32.mrb[0].mxu0
        %1565 = vmatprep.mubr.f32.mxu0 0.0
        %1566 = vmatmul.mubr.f32.gmra.mrb[0].mxu0 %v1383
        %v1567 = vpop.f32.mrb[0].mxu0
        %v1568 = vadd.f32 %v364, %v1567
        %v1569 = vpop.f32.mrb[0].mxu0
        %1570 = vmatprep.mubr.f32.mxu0 0.0
        %1571 = vmatmul.mubr.f32.gmra.mrb[0].mxu0 %v1386
        %v1572 = vpop.f32.mrb[0].mxu0
        %v1573 = vadd.f32 %v364, %v1572
        %v1574 = vpop.f32.mrb[0].mxu0
        %1575 = vmatprep.mubr.f32.mxu0 0.0
        %1576 = vmatmul.mubr.f32.gmra.mrb[0].mxu0 %v1389
        %v1577 = vpop.f32.mrb[0].mxu0
        %v1578 = vadd.f32 %v364, %v1577
        %v1579 = vpop.f32.mrb[0].mxu0
        %1580 = vdwg.mxu0
        %v1581 = vmax.f32 %v1458, 0.0
        %v1582 = vmax.f32 %v1463, 0.0
        %v1583 = vmax.f32 %v1468, 0.0
        %v1584 = vmax.f32 %v1473, 0.0
        %v1585 = vmax.f32 %v1478, 0.0
        %v1586 = vmax.f32 %v1483, 0.0
        %v1587 = vmax.f32 %v1488, 0.0
        %v1588 = vmax.f32 %v1493, 0.0
        %v1589 = vmax.f32 %v1498, 0.0
        %v1590 = vmax.f32 %v1503, 0.0
        %v1591 = vmax.f32 %v1508, 0.0
        %v1592 = vmax.f32 %v1513, 0.0
        %v1593 = vmax.f32 %v1518, 0.0
        %v1594 = vmax.f32 %v1523, 0.0
        %v1595 = vmax.f32 %v1528, 0.0
        %v1596 = vmax.f32 %v1533, 0.0
        %v1597 = vmax.f32 %v1538, 0.0
        %v1598 = vmax.f32 %v1543, 0.0
        %v1599 = vmax.f32 %v1548, 0.0
        %v1600 = vmax.f32 %v1553, 0.0
        %v1601 = vmax.f32 %v1558, 0.0
        %v1602 = vmax.f32 %v1563, 0.0
        %v1603 = vmax.f32 %v1568, 0.0
        %v1604 = vmax.f32 %v1573, 0.0
        %v1605 = vmax.f32 %v1578, 0.0
        %v1606 = vmax.f32 %v636, %v951
        %v1607 = vmax.f32 %v637, %v952
        %v1608 = vmax.f32 %v638, %v953
        %v1609 = vmax.f32 %v639, %v954
        %v1610 = vmax.f32 %v640, %v955
        %v1611 = vmax.f32 %v641, %v956
        %v1612 = vmax.f32 %v642, %v957
        %v1613 = vmax.f32 %v643, %v958
        %v1614 = vmax.f32 %v644, %v959
        %v1615 = vmax.f32 %v645, %v960
        %v1616 = vmax.f32 %v646, %v961
        %v1617 = vmax.f32 %v647, %v962
        %v1618 = vmax.f32 %v648, %v963
        %v1619 = vmax.f32 %v649, %v964
        %v1620 = vmax.f32 %v650, %v965
        %v1621 = vmax.f32 %v651, %v966
        %v1622 = vmax.f32 %v652, %v967
        %v1623 = vmax.f32 %v653, %v968
        %v1624 = vmax.f32 %v654, %v969
        %v1625 = vmax.f32 %v655, %v970
        %v1626 = vmax.f32 %v656, %v971
        %v1627 = vmax.f32 %v657, %v972
        %v1628 = vmax.f32 %v658, %v973
        %v1629 = vmax.f32 %v659, %v974
        %v1630 = vmax.f32 %v660, %v975
        %v1631 = vmax.f32 %v1266, %v1581
        %v1632 = vmax.f32 %v1267, %v1582
        %v1633 = vmax.f32 %v1268, %v1583
        %v1634 = vmax.f32 %v1269, %v1584
        %v1635 = vmax.f32 %v1270, %v1585
        %v1636 = vmax.f32 %v1271, %v1586
        %v1637 = vmax.f32 %v1272, %v1587
        %v1638 = vmax.f32 %v1273, %v1588
        %v1639 = vmax.f32 %v1274, %v1589
        %v1640 = vmax.f32 %v1275, %v1590
        %v1641 = vmax.f32 %v1276, %v1591
        %v1642 = vmax.f32 %v1277, %v1592
        %v1643 = vmax.f32 %v1278, %v1593
        %v1644 = vmax.f32 %v1279, %v1594
        %v1645 = vmax.f32 %v1280, %v1595
        %v1646 = vmax.f32 %v1281, %v1596
        %v1647 = vmax.f32 %v1282, %v1597
        %v1648 = vmax.f32 %v1283, %v1598
        %v1649 = vmax.f32 %v1284, %v1599
        %v1650 = vmax.f32 %v1285, %v1600
        %v1651 = vmax.f32 %v1286, %v1601
        %v1652 = vmax.f32 %v1287, %v1602
        %v1653 = vmax.f32 %v1288, %v1603
        %v1654 = vmax.f32 %v1289, %v1604
        %v1655 = vmax.f32 %v1290, %v1605
        %v1656 = vmax.f32 %v1606, %v1631
        %v1657 = vmax.f32 %v1607, %v1632
        %v1658 = vmax.f32 %v1608, %v1633
        %v1659 = vmax.f32 %v1609, %v1634
        %v1660 = vmax.f32 %v1610, %v1635
        %v1661 = vmax.f32 %v1611, %v1636
        %v1662 = vmax.f32 %v1612, %v1637
        %v1663 = vmax.f32 %v1613, %v1638
        %v1664 = vmax.f32 %v1614, %v1639
        %v1665 = vmax.f32 %v1615, %v1640
        %v1666 = vmax.f32 %v1616, %v1641
        %v1667 = vmax.f32 %v1617, %v1642
        %v1668 = vmax.f32 %v1618, %v1643
        %v1669 = vmax.f32 %v1619, %v1644
        %v1670 = vmax.f32 %v1620, %v1645
        %v1671 = vmax.f32 %v1621, %v1646
        %v1672 = vmax.f32 %v1622, %v1647
        %v1673 = vmax.f32 %v1623, %v1648
        %v1674 = vmax.f32 %v1624, %v1649
        %v1675 = vmax.f32 %v1625, %v1650
        %v1676 = vmax.f32 %v1626, %v1651
        %v1677 = vmax.f32 %v1627, %v1652
        %v1678 = vmax.f32 %v1628, %v1653
        %v1679 = vmax.f32 %v1629, %v1654
        %v1680 = vmax.f32 %v1630, %v1655
        %vm1681 = vcmask 162816
        %1682 = vst.msk [vmem:[#allocation2] sm:$0xff] %vm1681, 0.0
        %1683 = vst.msk [vmem:[#allocation2 + $0x8] sm:$0xff] %vm1681, 0.0
        %1684 = vst.msk [vmem:[#allocation2 + $0x10] sm:$0xff] %vm1681, 0.0
        %1685 = vst.msk [vmem:[#allocation2 + $0x18] sm:$0xff] %vm1681, 0.0
        %1686 = vst.msk [vmem:[#allocation2 + $0x20] sm:$0xff] %vm1681, 0.0
        %1687 = vst.msk [vmem:[#allocation2 + $0x28] sm:$0xff] %vm1681, 0.0
        %1688 = vst.msk [vmem:[#allocation2 + $0x30] sm:$0xff] %vm1681, 0.0
        %1689 = vst.msk [vmem:[#allocation2 + $0x38] sm:$0xff] %vm1681, 0.0
        %1690 = vst.msk [vmem:[#allocation2 + $0x40] sm:$0xff] %vm1681, 0.0
        %1691 = vst.msk [vmem:[#allocation2 + $0x48] sm:$0xff] %vm1681, 0.0
        %1692 = vst.msk [vmem:[#allocation2 + $0x50] sm:$0xff] %vm1681, 0.0
        %1693 = vst.msk [vmem:[#allocation2 + $0x58] sm:$0xff] %vm1681, 0.0
        %1694 = vst.msk [vmem:[#allocation2 + $0x60] sm:$0xff] %vm1681, 0.0
        %1695 = vst.msk [vmem:[#allocation2 + $0x68] sm:$0xff] %vm1681, 0.0
        %1696 = vst.msk [vmem:[#allocation2 + $0x70] sm:$0xff] %vm1681, 0.0
        %1697 = vst.msk [vmem:[#allocation2 + $0x78] sm:$0xff] %vm1681, 0.0
        %1698 = vst.msk [vmem:[#allocation2 + $0x80] sm:$0xff] %vm1681, 0.0
        %1699 = vst.msk [vmem:[#allocation2 + $0x88] sm:$0xff] %vm1681, 0.0
        %1700 = vst.msk [vmem:[#allocation2 + $0x90] sm:$0xff] %vm1681, 0.0
        %1701 = vst.msk [vmem:[#allocation2 + $0x98] sm:$0xff] %vm1681, 0.0
        %1702 = vst.msk [vmem:[#allocation2 + $0xa0] sm:$0xff] %vm1681, 0.0
        %1703 = vst.msk [vmem:[#allocation2 + $0xa8] sm:$0xff] %vm1681, 0.0
        %1704 = vst.msk [vmem:[#allocation2 + $0xb0] sm:$0xff] %vm1681, 0.0
        %1705 = vst.msk [vmem:[#allocation2 + $0xb8] sm:$0xff] %vm1681, 0.0
        %1706 = vst.msk [vmem:[#allocation2 + $0xc0] sm:$0xff] %vm1681, 0.0
        %1707 = vst.msk [vmem:[#allocation2 + $0xc8] sm:$0xff] %vm1681, 0.0
        %1708 = vst.msk [vmem:[#allocation2 + $0xd0] sm:$0xff] %vm1681, 0.0
        %1709 = vst.msk [vmem:[#allocation2 + $0xd8] sm:$0xff] %vm1681, 0.0
        %1710 = vst.msk [vmem:[#allocation2 + $0xe0] sm:$0xff] %vm1681, 0.0
        %1711 = vst.msk [vmem:[#allocation2 + $0xe8] sm:$0xff] %vm1681, 0.0
        %1712 = vst.msk [vmem:[#allocation2 + $0xf0] sm:$0xff] %vm1681, 0.0
        %1713 = vst.msk [vmem:[#allocation2 + $0xf8] sm:$0xff] %vm1681, 0.0
        %1714 = vst.msk [vmem:[#allocation2 + $0x100] sm:$0xff] %vm1681, 0.0
        %1715 = vst.msk [vmem:[#allocation2 + $0x108] sm:$0xff] %vm1681, 0.0
        %1716 = vst.msk [vmem:[#allocation2 + $0x110] sm:$0xff] %vm1681, 0.0
        %1717 = vst.msk [vmem:[#allocation2 + $0x118] sm:$0xff] %vm1681, 0.0
        %1718 = vst.msk [vmem:[#allocation2 + $0x120] sm:$0xff] %vm1681, 0.0
        %1719 = vst.msk [vmem:[#allocation2 + $0x128] sm:$0xff] %vm1681, 0.0
        %1720 = vst.msk [vmem:[#allocation2 + $0x130] sm:$0xff] %vm1681, 0.0
        %1721 = vst.msk [vmem:[#allocation2 + $0x138] sm:$0xff] %vm1681, 0.0
        %vm1722 = vcmask 158720
        %1723 = vst.msk [vmem:[#allocation2 + $0x140] sm:$0xf] %vm1722, 0.0
        %1724 = vst.msk [vmem:[#allocation2 + $0x26] sm:$0xff] %vm1681, %v1656
        %vm1725 = vcmask 160768
        %1726 = vst.msk [vmem:[#allocation2 + $0x2e] sm:$0x3f] %vm1725, %v1657
        %vm1727 = vcmask 162822
        %1728 = vst.msk [vmem:[#allocation2 + $0x32] sm:$0xc0] %vm1727, %v1657
        %1729 = vst.msk [vmem:[#allocation2 + $0x3a] sm:$0xff] %vm1681, %v1658
        %1730 = vst.msk [vmem:[#allocation2 + $0x42] sm:$0xf] %vm1722, %v1659
        %vm1731 = vcmask 162820
        %1732 = vst.msk [vmem:[#allocation2 + $0x46] sm:$0xf0] %vm1731, %v1659
        %1733 = vst.msk [vmem:[#allocation2 + $0x4e] sm:$0xff] %vm1681, %v1660
        %vm1734 = vcmask 156672
        %1735 = vst.msk [vmem:[#allocation2 + $0x56] sm:$0x3] %vm1734, %v1661
        %vm1736 = vcmask 162818
        %1737 = vst.msk [vmem:[#allocation2 + $0x5a] sm:$0xfc] %vm1736, %v1661
        %1738 = vst.msk [vmem:[#allocation2 + $0x62] sm:$0xff] %vm1681, %v1662
        %1739 = vst.msk [vmem:[#allocation2 + $0x6e] sm:$0xff] %vm1681, %v1663
        %1740 = vst.msk [vmem:[#allocation2 + $0x76] sm:$0x3f] %vm1725, %v1664
        %1741 = vst.msk [vmem:[#allocation2 + $0x7a] sm:$0xc0] %vm1727, %v1664
        %1742 = vst.msk [vmem:[#allocation2 + $0x82] sm:$0xff] %vm1681, %v1665
        %1743 = vst.msk [vmem:[#allocation2 + $0x8a] sm:$0xf] %vm1722, %v1666
        %1744 = vst.msk [vmem:[#allocation2 + $0x8e] sm:$0xf0] %vm1731, %v1666
        %1745 = vst.msk [vmem:[#allocation2 + $0x96] sm:$0xff] %vm1681, %v1667
        %1746 = vst.msk [vmem:[#allocation2 + $0x9e] sm:$0x3] %vm1734, %v1668
        %1747 = vst.msk [vmem:[#allocation2 + $0xa2] sm:$0xfc] %vm1736, %v1668
        %1748 = vst.msk [vmem:[#allocation2 + $0xaa] sm:$0xff] %vm1681, %v1669
        %1749 = vst.msk [vmem:[#allocation2 + $0xb6] sm:$0xff] %vm1681, %v1670
        %1750 = vst.msk [vmem:[#allocation2 + $0xbe] sm:$0x3f] %vm1725, %v1671
        %1751 = vst.msk [vmem:[#allocation2 + $0xc2] sm:$0xc0] %vm1727, %v1671
        %1752 = vst.msk [vmem:[#allocation2 + $0xca] sm:$0xff] %vm1681, %v1672
        %1753 = vst.msk [vmem:[#allocation2 + $0xd2] sm:$0xf] %vm1722, %v1673
        %1754 = vst.msk [vmem:[#allocation2 + $0xd6] sm:$0xf0] %vm1731, %v1673
        %1755 = vst.msk [vmem:[#allocation2 + $0xde] sm:$0xff] %vm1681, %v1674
        %1756 = vst.msk [vmem:[#allocation2 + $0xe6] sm:$0x3] %vm1734, %v1675
        %1757 = vst.msk [vmem:[#allocation2 + $0xea] sm:$0xfc] %vm1736, %v1675
        %1758 = vst.msk [vmem:[#allocation2 + $0xf2] sm:$0xff] %vm1681, %v1676
        %1759 = vst.msk [vmem:[#allocation2 + $0xfe] sm:$0xff] %vm1681, %v1677
        %1760 = vst.msk [vmem:[#allocation2 + $0x106] sm:$0x3f] %vm1725, %v1678
        %1761 = vst.msk [vmem:[#allocation2 + $0x10a] sm:$0xc0] %vm1727, %v1678
        %1762 = vst.msk [vmem:[#allocation2 + $0x112] sm:$0xff] %vm1681, %v1679
        %1763 = vst.msk [vmem:[#allocation2 + $0x11a] sm:$0xf] %vm1722, %v1680
        %v1764 = vld [vmem:[#allocation2] sm:$0xff]
        %v1765 = vld [vmem:[#allocation2 + $0x8] sm:$0xff]
        %v1766 = vld [vmem:[#allocation2 + $0x10] sm:$0xff]
        %v1767 = vld [vmem:[#allocation2 + $0x18] sm:$0xff]
        %v1768 = vld [vmem:[#allocation2 + $0x20] sm:$0xff]
        %v1769 = vld [vmem:[#allocation2 + $0x28] sm:$0xff]
        %v1770 = vld [vmem:[#allocation2 + $0x30] sm:$0xff]
        %v1771 = vld [vmem:[#allocation2 + $0x38] sm:$0xff]
        %v1772 = vld [vmem:[#allocation2 + $0x40] sm:$0xff]
        %v1773 = vld [vmem:[#allocation2 + $0x48] sm:$0xff]
        %v1774 = vld [vmem:[#allocation2 + $0x50] sm:$0xff]
        %v1775 = vld [vmem:[#allocation2 + $0x58] sm:$0xff]
        %v1776 = vld [vmem:[#allocation2 + $0x60] sm:$0xff]
        %v1777 = vld [vmem:[#allocation2 + $0x68] sm:$0xff]
        %v1778 = vld [vmem:[#allocation2 + $0x70] sm:$0xff]
        %v1779 = vld [vmem:[#allocation2 + $0x78] sm:$0xff]
        %v1780 = vld [vmem:[#allocation2 + $0x80] sm:$0xff]
        %v1781 = vld [vmem:[#allocation2 + $0x88] sm:$0xff]
        %v1782 = vld [vmem:[#allocation2 + $0x90] sm:$0xff]
        %v1783 = vld [vmem:[#allocation2 + $0x98] sm:$0xff]
        %v1784 = vld [vmem:[#allocation2 + $0xa0] sm:$0xff]
        %v1785 = vld [vmem:[#allocation2 + $0xa8] sm:$0xff]
        %v1786 = vld [vmem:[#allocation2 + $0xb0] sm:$0xff]
        %v1787 = vld [vmem:[#allocation2 + $0xb8] sm:$0xff]
        %v1788 = vld [vmem:[#allocation2 + $0xc0] sm:$0xff]
        %v1789 = vld [vmem:[#allocation2 + $0xc8] sm:$0xff]
        %v1790 = vld [vmem:[#allocation2 + $0xd0] sm:$0xff]
        %v1791 = vld [vmem:[#allocation2 + $0xd8] sm:$0xff]
        %v1792 = vld [vmem:[#allocation2 + $0xe0] sm:$0xff]
        %v1793 = vld [vmem:[#allocation2 + $0xe8] sm:$0xff]
        %v1794 = vld [vmem:[#allocation2 + $0xf0] sm:$0xff]
        %1795 = vst.msk [vmem:[#allocation3] sm:$0xff] %vm1681, %v1764
        %1796 = vst.msk [vmem:[#allocation3 + $0x20] sm:$0xff] %vm1681, %v1765
        %1797 = vst.msk [vmem:[#allocation3 + $0x40] sm:$0xff] %vm1681, %v1766
        %1798 = vst.msk [vmem:[#allocation3 + $0x60] sm:$0xff] %vm1681, %v1767
        %1799 = vst.msk [vmem:[#allocation3 + $0x80] sm:$0xff] %vm1681, %v1768
        %1800 = vst.msk [vmem:[#allocation3 + $0xa0] sm:$0xff] %vm1681, %v1769
        %1801 = vst.msk [vmem:[#allocation3 + $0xc0] sm:$0xff] %vm1681, %v1770
        %1802 = vst.msk [vmem:[#allocation3 + $0xe0] sm:$0xff] %vm1681, %v1771
        %1803 = vst.msk [vmem:[#allocation3 + $0x100] sm:$0xff] %vm1681, %v1772
        %1804 = vst.msk [vmem:[#allocation3 + $0x120] sm:$0xff] %vm1681, %v1773
        %1805 = vst.msk [vmem:[#allocation3 + $0x140] sm:$0xff] %vm1681, %v1774
        %1806 = vst.msk [vmem:[#allocation3 + $0x160] sm:$0xff] %vm1681, %v1775
        %1807 = vst.msk [vmem:[#allocation3 + $0x180] sm:$0xff] %vm1681, %v1776
        %1808 = vst.msk [vmem:[#allocation3 + $0x1a0] sm:$0xff] %vm1681, %v1777
        %1809 = vst.msk [vmem:[#allocation3 + $0x1c0] sm:$0xff] %vm1681, %v1778
        %1810 = vst.msk [vmem:[#allocation3 + $0x1e0] sm:$0xff] %vm1681, %v1779
        %1811 = vst.msk [vmem:[#allocation3 + $0x200] sm:$0xff] %vm1681, %v1780
        %1812 = vst.msk [vmem:[#allocation3 + $0x220] sm:$0xff] %vm1681, %v1781
        %1813 = vst.msk [vmem:[#allocation3 + $0x240] sm:$0xff] %vm1681, %v1782
        %1814 = vst.msk [vmem:[#allocation3 + $0x260] sm:$0xff] %vm1681, %v1783
        %1815 = vst.msk [vmem:[#allocation3 + $0x280] sm:$0xff] %vm1681, %v1784
        %1816 = vst.msk [vmem:[#allocation3 + $0x2a0] sm:$0xff] %vm1681, %v1785
        %1817 = vst.msk [vmem:[#allocation3 + $0x2c0] sm:$0xff] %vm1681, %v1786
        %1818 = vst.msk [vmem:[#allocation3 + $0x2e0] sm:$0xff] %vm1681, %v1787
        %1819 = vst.msk [vmem:[#allocation3 + $0x300] sm:$0xff] %vm1681, %v1788
        %1820 = vst.msk [vmem:[#allocation3 + $0x320] sm:$0xff] %vm1681, %v1789
        %1821 = vst.msk [vmem:[#allocation3 + $0x340] sm:$0xff] %vm1681, %v1790
        %1822 = vst.msk [vmem:[#allocation3 + $0x360] sm:$0xff] %vm1681, %v1791
        %1823 = vst.msk [vmem:[#allocation3 + $0x380] sm:$0xff] %vm1681, %v1792
        %1824 = vst.msk [vmem:[#allocation3 + $0x3a0] sm:$0xff] %vm1681, %v1793
        %1825 = vst.msk [vmem:[#allocation3 + $0x3c0] sm:$0xff] %vm1681, %v1794
        %v1826 = vld [vmem:[#allocation2 + $0x1] sm:$0xff]
        %v1827 = vld [vmem:[#allocation2 + $0x9] sm:$0xff]
        %v1828 = vld [vmem:[#allocation2 + $0x11] sm:$0xff]
        %v1829 = vld [vmem:[#allocation2 + $0x19] sm:$0xff]
        %v1830 = vld [vmem:[#allocation2 + $0x21] sm:$0xff]
        %v1831 = vld [vmem:[#allocation2 + $0x29] sm:$0xff]
        %v1832 = vld [vmem:[#allocation2 + $0x31] sm:$0xff]
        %v1833 = vld [vmem:[#allocation2 + $0x39] sm:$0xff]
        %v1834 = vld [vmem:[#allocation2 + $0x41] sm:$0xff]
        %v1835 = vld [vmem:[#allocation2 + $0x49] sm:$0xff]
        %v1836 = vld [vmem:[#allocation2 + $0x51] sm:$0xff]
        %v1837 = vld [vmem:[#allocation2 + $0x59] sm:$0xff]
        %v1838 = vld [vmem:[#allocation2 + $0x61] sm:$0xff]
        %v1839 = vld [vmem:[#allocation2 + $0x69] sm:$0xff]
        %v1840 = vld [vmem:[#allocation2 + $0x71] sm:$0xff]
        %v1841 = vld [vmem:[#allocation2 + $0x79] sm:$0xff]
        %v1842 = vld [vmem:[#allocation2 + $0x81] sm:$0xff]
        %v1843 = vld [vmem:[#allocation2 + $0x89] sm:$0xff]
        %v1844 = vld [vmem:[#allocation2 + $0x91] sm:$0xff]
        %v1845 = vld [vmem:[#allocation2 + $0x99] sm:$0xff]
        %v1846 = vld [vmem:[#allocation2 + $0xa1] sm:$0xff]
        %v1847 = vld [vmem:[#allocation2 + $0xa9] sm:$0xff]
        %v1848 = vld [vmem:[#allocation2 + $0xb1] sm:$0xff]
        %v1849 = vld [vmem:[#allocation2 + $0xb9] sm:$0xff]
        %v1850 = vld [vmem:[#allocation2 + $0xc1] sm:$0xff]
        %v1851 = vld [vmem:[#allocation2 + $0xc9] sm:$0xff]
        %v1852 = vld [vmem:[#allocation2 + $0xd1] sm:$0xff]
        %v1853 = vld [vmem:[#allocation2 + $0xd9] sm:$0xff]
        %v1854 = vld [vmem:[#allocation2 + $0xe1] sm:$0xff]
        %v1855 = vld [vmem:[#allocation2 + $0xe9] sm:$0xff]
        %v1856 = vld [vmem:[#allocation2 + $0xf1] sm:$0xff]
        %1888 = vrot.lane.b32.xlu0 %v1826, 20
        %v1889 = vpop.permute.xlu0 %1888
        %1890 = vrot.lane.b32.xlu0 %v1827, 20
        %v1891 = vpop.permute.xlu0 %1890
        %1892 = vrot.lane.b32.xlu0 %v1828, 20
        %v1893 = vpop.permute.xlu0 %1892
        %1894 = vrot.lane.b32.xlu0 %v1829, 20
        %v1895 = vpop.permute.xlu0 %1894
        %1896 = vrot.lane.b32.xlu0 %v1830, 20
        %v1897 = vpop.permute.xlu0 %1896
        %1898 = vrot.lane.b32.xlu0 %v1831, 20
        %v1899 = vpop.permute.xlu0 %1898
        %1900 = vrot.lane.b32.xlu0 %v1832, 20
        %v1901 = vpop.permute.xlu0 %1900
        %1902 = vrot.lane.b32.xlu0 %v1833, 20
        %v1903 = vpop.permute.xlu0 %1902
        %1904 = vrot.lane.b32.xlu0 %v1834, 20
        %v1905 = vpop.permute.xlu0 %1904
        %1906 = vrot.lane.b32.xlu0 %v1835, 20
        %v1907 = vpop.permute.xlu0 %1906
        %1908 = vrot.lane.b32.xlu0 %v1836, 20
        %v1909 = vpop.permute.xlu0 %1908
        %1910 = vrot.lane.b32.xlu0 %v1837, 20
        %v1911 = vpop.permute.xlu0 %1910
        %1912 = vrot.lane.b32.xlu0 %v1838, 20
        %v1913 = vpop.permute.xlu0 %1912
        %1914 = vrot.lane.b32.xlu0 %v1839, 20
        %v1915 = vpop.permute.xlu0 %1914
        %1916 = vrot.lane.b32.xlu0 %v1840, 20
        %v1917 = vpop.permute.xlu0 %1916
        %1918 = vrot.lane.b32.xlu0 %v1841, 20
        %v1919 = vpop.permute.xlu0 %1918
        %1920 = vrot.lane.b32.xlu0 %v1842, 20
        %v1921 = vpop.permute.xlu0 %1920
        %1922 = vrot.lane.b32.xlu0 %v1843, 20
        %v1923 = vpop.permute.xlu0 %1922
        %1924 = vrot.lane.b32.xlu0 %v1844, 20
        %v1925 = vpop.permute.xlu0 %1924
        %1926 = vrot.lane.b32.xlu0 %v1845, 20
        %v1927 = vpop.permute.xlu0 %1926
        %1928 = vrot.lane.b32.xlu0 %v1846, 20
        %v1929 = vpop.permute.xlu0 %1928
        %1930 = vrot.lane.b32.xlu0 %v1847, 20
        %v1931 = vpop.permute.xlu0 %1930
        %1932 = vrot.lane.b32.xlu0 %v1848, 20
        %v1933 = vpop.permute.xlu0 %1932
        %1934 = vrot.lane.b32.xlu0 %v1849, 20
        %v1935 = vpop.permute.xlu0 %1934
        %1936 = vrot.lane.b32.xlu0 %v1850, 20
        %v1937 = vpop.permute.xlu0 %1936
        %1938 = vrot.lane.b32.xlu0 %v1851, 20
        %v1939 = vpop.permute.xlu0 %1938
        %1940 = vrot.lane.b32.xlu0 %v1852, 20
        %v1941 = vpop.permute.xlu0 %1940
        %1942 = vrot.lane.b32.xlu0 %v1853, 20
        %v1943 = vpop.permute.xlu0 %1942
        %1944 = vrot.lane.b32.xlu0 %v1854, 20
        %v1945 = vpop.permute.xlu0 %1944
        %1946 = vrot.lane.b32.xlu0 %v1855, 20
        %v1947 = vpop.permute.xlu0 %1946
        %1948 = vrot.lane.b32.xlu0 %v1856, 20
        %v1949 = vpop.permute.xlu0 %1948
        %vm1981 = vcmask 326816
        %1982 = vst.msk [vmem:[#allocation3] sm:$0xff] %vm1981, %v1889
        %1983 = vst.msk [vmem:[#allocation3 + $0x20] sm:$0xff] %vm1981, %v1891
        %1984 = vst.msk [vmem:[#allocation3 + $0x40] sm:$0xff] %vm1981, %v1893
        %1985 = vst.msk [vmem:[#allocation3 + $0x60] sm:$0xff] %vm1981, %v1895
        %1986 = vst.msk [vmem:[#allocation3 + $0x80] sm:$0xff] %vm1981, %v1897
        %1987 = vst.msk [vmem:[#allocation3 + $0xa0] sm:$0xff] %vm1981, %v1899
        %1988 = vst.msk [vmem:[#allocation3 + $0xc0] sm:$0xff] %vm1981, %v1901
        %1989 = vst.msk [vmem:[#allocation3 + $0xe0] sm:$0xff] %vm1981, %v1903
        %1990 = vst.msk [vmem:[#allocation3 + $0x100] sm:$0xff] %vm1981, %v1905
        %1991 = vst.msk [vmem:[#allocation3 + $0x120] sm:$0xff] %vm1981, %v1907
        %1992 = vst.msk [vmem:[#allocation3 + $0x140] sm:$0xff] %vm1981, %v1909
        %1993 = vst.msk [vmem:[#allocation3 + $0x160] sm:$0xff] %vm1981, %v1911
        %1994 = vst.msk [vmem:[#allocation3 + $0x180] sm:$0xff] %vm1981, %v1913
        %1995 = vst.msk [vmem:[#allocation3 + $0x1a0] sm:$0xff] %vm1981, %v1915
        %1996 = vst.msk [vmem:[#allocation3 + $0x1c0] sm:$0xff] %vm1981, %v1917
        %1997 = vst.msk [vmem:[#allocation3 + $0x1e0] sm:$0xff] %vm1981, %v1919
        %1998 = vst.msk [vmem:[#allocation3 + $0x200] sm:$0xff] %vm1981, %v1921
        %1999 = vst.msk [vmem:[#allocation3 + $0x220] sm:$0xff] %vm1981, %v1923
        %2000 = vst.msk [vmem:[#allocation3 + $0x240] sm:$0xff] %vm1981, %v1925
        %2001 = vst.msk [vmem:[#allocation3 + $0x260] sm:$0xff] %vm1981, %v1927
        %2002 = vst.msk [vmem:[#allocation3 + $0x280] sm:$0xff] %vm1981, %v1929
        %2003 = vst.msk [vmem:[#allocation3 + $0x2a0] sm:$0xff] %vm1981, %v1931
        %2004 = vst.msk [vmem:[#allocation3 + $0x2c0] sm:$0xff] %vm1981, %v1933
        %2005 = vst.msk [vmem:[#allocation3 + $0x2e0] sm:$0xff] %vm1981, %v1935
        %2006 = vst.msk [vmem:[#allocation3 + $0x300] sm:$0xff] %vm1981, %v1937
        %2007 = vst.msk [vmem:[#allocation3 + $0x320] sm:$0xff] %vm1981, %v1939
        %2008 = vst.msk [vmem:[#allocation3 + $0x340] sm:$0xff] %vm1981, %v1941
        %2009 = vst.msk [vmem:[#allocation3 + $0x360] sm:$0xff] %vm1981, %v1943
        %2010 = vst.msk [vmem:[#allocation3 + $0x380] sm:$0xff] %vm1981, %v1945
        %2011 = vst.msk [vmem:[#allocation3 + $0x3a0] sm:$0xff] %vm1981, %v1947
        %2012 = vst.msk [vmem:[#allocation3 + $0x3c0] sm:$0xff] %vm1981, %v1949
        %v2013 = vld [vmem:[#allocation2 + $0x2] sm:$0xff]
        %v2014 = vld [vmem:[#allocation2 + $0xa] sm:$0xff]
        %v2015 = vld [vmem:[#allocation2 + $0x12] sm:$0xff]
        %v2016 = vld [vmem:[#allocation2 + $0x1a] sm:$0xff]
        %v2017 = vld [vmem:[#allocation2 + $0x22] sm:$0xff]
        %v2018 = vld [vmem:[#allocation2 + $0x2a] sm:$0xff]
        %v2019 = vld [vmem:[#allocation2 + $0x32] sm:$0xff]
        %v2020 = vld [vmem:[#allocation2 + $0x3a] sm:$0xff]
        %v2021 = vld [vmem:[#allocation2 + $0x42] sm:$0xff]
        %v2022 = vld [vmem:[#allocation2 + $0x4a] sm:$0xff]
        %v2023 = vld [vmem:[#allocation2 + $0x52] sm:$0xff]
        %v2024 = vld [vmem:[#allocation2 + $0x5a] sm:$0xff]
        %v2025 = vld [vmem:[#allocation2 + $0x62] sm:$0xff]
        %v2026 = vld [vmem:[#allocation2 + $0x6a] sm:$0xff]
        %v2027 = vld [vmem:[#allocation2 + $0x72] sm:$0xff]
        %v2028 = vld [vmem:[#allocation2 + $0x7a] sm:$0xff]
        %v2029 = vld [vmem:[#allocation2 + $0x82] sm:$0xff]
        %v2030 = vld [vmem:[#allocation2 + $0x8a] sm:$0xff]
        %v2031 = vld [vmem:[#allocation2 + $0x92] sm:$0xff]
        %v2032 = vld [vmem:[#allocation2 + $0x9a] sm:$0xff]
        %v2033 = vld [vmem:[#allocation2 + $0xa2] sm:$0xff]
        %v2034 = vld [vmem:[#allocation2 + $0xaa] sm:$0xff]
        %v2035 = vld [vmem:[#allocation2 + $0xb2] sm:$0xff]
        %v2036 = vld [vmem:[#allocation2 + $0xba] sm:$0xff]
        %v2037 = vld [vmem:[#allocation2 + $0xc2] sm:$0xff]
        %v2038 = vld [vmem:[#allocation2 + $0xca] sm:$0xff]
        %v2039 = vld [vmem:[#allocation2 + $0xd2] sm:$0xff]
        %v2040 = vld [vmem:[#allocation2 + $0xda] sm:$0xff]
        %v2041 = vld [vmem:[#allocation2 + $0xe2] sm:$0xff]
        %v2042 = vld [vmem:[#allocation2 + $0xea] sm:$0xff]
        %v2043 = vld [vmem:[#allocation2 + $0xf2] sm:$0xff]
        %2075 = vrot.lane.b32.xlu0 %v2013, 40
        %v2076 = vpop.permute.xlu0 %2075
        %2077 = vrot.lane.b32.xlu0 %v2014, 40
        %v2078 = vpop.permute.xlu0 %2077
        %2079 = vrot.lane.b32.xlu0 %v2015, 40
        %v2080 = vpop.permute.xlu0 %2079
        %2081 = vrot.lane.b32.xlu0 %v2016, 40
        %v2082 = vpop.permute.xlu0 %2081
        %2083 = vrot.lane.b32.xlu0 %v2017, 40
        %v2084 = vpop.permute.xlu0 %2083
        %2085 = vrot.lane.b32.xlu0 %v2018, 40
        %v2086 = vpop.permute.xlu0 %2085
        %2087 = vrot.lane.b32.xlu0 %v2019, 40
        %v2088 = vpop.permute.xlu0 %2087
        %2089 = vrot.lane.b32.xlu0 %v2020, 40
        %v2090 = vpop.permute.xlu0 %2089
        %2091 = vrot.lane.b32.xlu0 %v2021, 40
        %v2092 = vpop.permute.xlu0 %2091
        %2093 = vrot.lane.b32.xlu0 %v2022, 40
        %v2094 = vpop.permute.xlu0 %2093
        %2095 = vrot.lane.b32.xlu0 %v2023, 40
        %v2096 = vpop.permute.xlu0 %2095
        %2097 = vrot.lane.b32.xlu0 %v2024, 40
        %v2098 = vpop.permute.xlu0 %2097
        %2099 = vrot.lane.b32.xlu0 %v2025, 40
        %v2100 = vpop.permute.xlu0 %2099
        %2101 = vrot.lane.b32.xlu0 %v2026, 40
        %v2102 = vpop.permute.xlu0 %2101
        %2103 = vrot.lane.b32.xlu0 %v2027, 40
        %v2104 = vpop.permute.xlu0 %2103
        %2105 = vrot.lane.b32.xlu0 %v2028, 40
        %v2106 = vpop.permute.xlu0 %2105
        %2107 = vrot.lane.b32.xlu0 %v2029, 40
        %v2108 = vpop.permute.xlu0 %2107
        %2109 = vrot.lane.b32.xlu0 %v2030, 40
        %v2110 = vpop.permute.xlu0 %2109
        %2111 = vrot.lane.b32.xlu0 %v2031, 40
        %v2112 = vpop.permute.xlu0 %2111
        %2113 = vrot.lane.b32.xlu0 %v2032, 40
        %v2114 = vpop.permute.xlu0 %2113
        %2115 = vrot.lane.b32.xlu0 %v2033, 40
        %v2116 = vpop.permute.xlu0 %2115
        %2117 = vrot.lane.b32.xlu0 %v2034, 40
        %v2118 = vpop.permute.xlu0 %2117
        %2119 = vrot.lane.b32.xlu0 %v2035, 40
        %v2120 = vpop.permute.xlu0 %2119
        %2121 = vrot.lane.b32.xlu0 %v2036, 40
        %v2122 = vpop.permute.xlu0 %2121
        %2123 = vrot.lane.b32.xlu0 %v2037, 40
        %v2124 = vpop.permute.xlu0 %2123
        %2125 = vrot.lane.b32.xlu0 %v2038, 40
        %v2126 = vpop.permute.xlu0 %2125
        %2127 = vrot.lane.b32.xlu0 %v2039, 40
        %v2128 = vpop.permute.xlu0 %2127
        %2129 = vrot.lane.b32.xlu0 %v2040, 40
        %v2130 = vpop.permute.xlu0 %2129
        %2131 = vrot.lane.b32.xlu0 %v2041, 40
        %v2132 = vpop.permute.xlu0 %2131
        %2133 = vrot.lane.b32.xlu0 %v2042, 40
        %v2134 = vpop.permute.xlu0 %2133
        %2135 = vrot.lane.b32.xlu0 %v2043, 40
        %v2136 = vpop.permute.xlu0 %2135
        %vm2168 = vcmask 490816
        %2169 = vst.msk [vmem:[#allocation3] sm:$0xff] %vm2168, %v2076
        %2170 = vst.msk [vmem:[#allocation3 + $0x20] sm:$0xff] %vm2168, %v2078
        %2171 = vst.msk [vmem:[#allocation3 + $0x40] sm:$0xff] %vm2168, %v2080
        %2172 = vst.msk [vmem:[#allocation3 + $0x60] sm:$0xff] %vm2168, %v2082
        %2173 = vst.msk [vmem:[#allocation3 + $0x80] sm:$0xff] %vm2168, %v2084
        %2174 = vst.msk [vmem:[#allocation3 + $0xa0] sm:$0xff] %vm2168, %v2086
        %2175 = vst.msk [vmem:[#allocation3 + $0xc0] sm:$0xff] %vm2168, %v2088
        %2176 = vst.msk [vmem:[#allocation3 + $0xe0] sm:$0xff] %vm2168, %v2090
        %2177 = vst.msk [vmem:[#allocation3 + $0x100] sm:$0xff] %vm2168, %v2092
        %2178 = vst.msk [vmem:[#allocation3 + $0x120] sm:$0xff] %vm2168, %v2094
        %2179 = vst.msk [vmem:[#allocation3 + $0x140] sm:$0xff] %vm2168, %v2096
        %2180 = vst.msk [vmem:[#allocation3 + $0x160] sm:$0xff] %vm2168, %v2098
        %2181 = vst.msk [vmem:[#allocation3 + $0x180] sm:$0xff] %vm2168, %v2100
        %2182 = vst.msk [vmem:[#allocation3 + $0x1a0] sm:$0xff] %vm2168, %v2102
        %2183 = vst.msk [vmem:[#allocation3 + $0x1c0] sm:$0xff] %vm2168, %v2104
        %2184 = vst.msk [vmem:[#allocation3 + $0x1e0] sm:$0xff] %vm2168, %v2106
        %2185 = vst.msk [vmem:[#allocation3 + $0x200] sm:$0xff] %vm2168, %v2108
        %2186 = vst.msk [vmem:[#allocation3 + $0x220] sm:$0xff] %vm2168, %v2110
        %2187 = vst.msk [vmem:[#allocation3 + $0x240] sm:$0xff] %vm2168, %v2112
        %2188 = vst.msk [vmem:[#allocation3 + $0x260] sm:$0xff] %vm2168, %v2114
        %2189 = vst.msk [vmem:[#allocation3 + $0x280] sm:$0xff] %vm2168, %v2116
        %2190 = vst.msk [vmem:[#allocation3 + $0x2a0] sm:$0xff] %vm2168, %v2118
        %2191 = vst.msk [vmem:[#allocation3 + $0x2c0] sm:$0xff] %vm2168, %v2120
        %2192 = vst.msk [vmem:[#allocation3 + $0x2e0] sm:$0xff] %vm2168, %v2122
        %2193 = vst.msk [vmem:[#allocation3 + $0x300] sm:$0xff] %vm2168, %v2124
        %2194 = vst.msk [vmem:[#allocation3 + $0x320] sm:$0xff] %vm2168, %v2126
        %2195 = vst.msk [vmem:[#allocation3 + $0x340] sm:$0xff] %vm2168, %v2128
        %2196 = vst.msk [vmem:[#allocation3 + $0x360] sm:$0xff] %vm2168, %v2130
        %2197 = vst.msk [vmem:[#allocation3 + $0x380] sm:$0xff] %vm2168, %v2132
        %2198 = vst.msk [vmem:[#allocation3 + $0x3a0] sm:$0xff] %vm2168, %v2134
        %2199 = vst.msk [vmem:[#allocation3 + $0x3c0] sm:$0xff] %vm2168, %v2136
        %v2200 = vld [vmem:[#allocation2 + $0x3] sm:$0xff]
        %v2201 = vld [vmem:[#allocation2 + $0xb] sm:$0xff]
        %v2202 = vld [vmem:[#allocation2 + $0x13] sm:$0xff]
        %v2203 = vld [vmem:[#allocation2 + $0x1b] sm:$0xff]
        %v2204 = vld [vmem:[#allocation2 + $0x23] sm:$0xff]
        %v2205 = vld [vmem:[#allocation2 + $0x2b] sm:$0xff]
        %v2206 = vld [vmem:[#allocation2 + $0x33] sm:$0xff]
        %v2207 = vld [vmem:[#allocation2 + $0x3b] sm:$0xff]
        %v2208 = vld [vmem:[#allocation2 + $0x43] sm:$0xff]
        %v2209 = vld [vmem:[#allocation2 + $0x4b] sm:$0xff]
        %v2210 = vld [vmem:[#allocation2 + $0x53] sm:$0xff]
        %v2211 = vld [vmem:[#allocation2 + $0x5b] sm:$0xff]
        %v2212 = vld [vmem:[#allocation2 + $0x63] sm:$0xff]
        %v2213 = vld [vmem:[#allocation2 + $0x6b] sm:$0xff]
        %v2214 = vld [vmem:[#allocation2 + $0x73] sm:$0xff]
        %v2215 = vld [vmem:[#allocation2 + $0x7b] sm:$0xff]
        %v2216 = vld [vmem:[#allocation2 + $0x83] sm:$0xff]
        %v2217 = vld [vmem:[#allocation2 + $0x8b] sm:$0xff]
        %v2218 = vld [vmem:[#allocation2 + $0x93] sm:$0xff]
        %v2219 = vld [vmem:[#allocation2 + $0x9b] sm:$0xff]
        %v2220 = vld [vmem:[#allocation2 + $0xa3] sm:$0xff]
        %v2221 = vld [vmem:[#allocation2 + $0xab] sm:$0xff]
        %v2222 = vld [vmem:[#allocation2 + $0xb3] sm:$0xff]
        %v2223 = vld [vmem:[#allocation2 + $0xbb] sm:$0xff]
        %v2224 = vld [vmem:[#allocation2 + $0xc3] sm:$0xff]
        %v2225 = vld [vmem:[#allocation2 + $0xcb] sm:$0xff]
        %v2226 = vld [vmem:[#allocation2 + $0xd3] sm:$0xff]
        %v2227 = vld [vmem:[#allocation2 + $0xdb] sm:$0xff]
        %v2228 = vld [vmem:[#allocation2 + $0xe3] sm:$0xff]
        %v2229 = vld [vmem:[#allocation2 + $0xeb] sm:$0xff]
        %v2230 = vld [vmem:[#allocation2 + $0xf3] sm:$0xff]
        %2262 = vrot.lane.b32.xlu0 %v2200, 60
        %v2263 = vpop.permute.xlu0 %2262
        %2264 = vrot.lane.b32.xlu0 %v2201, 60
        %v2265 = vpop.permute.xlu0 %2264
        %2266 = vrot.lane.b32.xlu0 %v2202, 60
        %v2267 = vpop.permute.xlu0 %2266
        %2268 = vrot.lane.b32.xlu0 %v2203, 60
        %v2269 = vpop.permute.xlu0 %2268
        %2270 = vrot.lane.b32.xlu0 %v2204, 60
        %v2271 = vpop.permute.xlu0 %2270
        %2272 = vrot.lane.b32.xlu0 %v2205, 60
        %v2273 = vpop.permute.xlu0 %2272
        %2274 = vrot.lane.b32.xlu0 %v2206, 60
        %v2275 = vpop.permute.xlu0 %2274
        %2276 = vrot.lane.b32.xlu0 %v2207, 60
        %v2277 = vpop.permute.xlu0 %2276
        %2278 = vrot.lane.b32.xlu0 %v2208, 60
        %v2279 = vpop.permute.xlu0 %2278
        %2280 = vrot.lane.b32.xlu0 %v2209, 60
        %v2281 = vpop.permute.xlu0 %2280
        %2282 = vrot.lane.b32.xlu0 %v2210, 60
        %v2283 = vpop.permute.xlu0 %2282
        %2284 = vrot.lane.b32.xlu0 %v2211, 60
        %v2285 = vpop.permute.xlu0 %2284
        %2286 = vrot.lane.b32.xlu0 %v2212, 60
        %v2287 = vpop.permute.xlu0 %2286
        %2288 = vrot.lane.b32.xlu0 %v2213, 60
        %v2289 = vpop.permute.xlu0 %2288
        %2290 = vrot.lane.b32.xlu0 %v2214, 60
        %v2291 = vpop.permute.xlu0 %2290
        %2292 = vrot.lane.b32.xlu0 %v2215, 60
        %v2293 = vpop.permute.xlu0 %2292
        %2294 = vrot.lane.b32.xlu0 %v2216, 60
        %v2295 = vpop.permute.xlu0 %2294
        %2296 = vrot.lane.b32.xlu0 %v2217, 60
        %v2297 = vpop.permute.xlu0 %2296
        %2298 = vrot.lane.b32.xlu0 %v2218, 60
        %v2299 = vpop.permute.xlu0 %2298
        %2300 = vrot.lane.b32.xlu0 %v2219, 60
        %v2301 = vpop.permute.xlu0 %2300
        %2302 = vrot.lane.b32.xlu0 %v2220, 60
        %v2303 = vpop.permute.xlu0 %2302
        %2304 = vrot.lane.b32.xlu0 %v2221, 60
        %v2305 = vpop.permute.xlu0 %2304
        %2306 = vrot.lane.b32.xlu0 %v2222, 60
        %v2307 = vpop.permute.xlu0 %2306
        %2308 = vrot.lane.b32.xlu0 %v2223, 60
        %v2309 = vpop.permute.xlu0 %2308
        %2310 = vrot.lane.b32.xlu0 %v2224, 60
        %v2311 = vpop.permute.xlu0 %2310
        %2312 = vrot.lane.b32.xlu0 %v2225, 60
        %v2313 = vpop.permute.xlu0 %2312
        %2314 = vrot.lane.b32.xlu0 %v2226, 60
        %v2315 = vpop.permute.xlu0 %2314
        %2316 = vrot.lane.b32.xlu0 %v2227, 60
        %v2317 = vpop.permute.xlu0 %2316
        %2318 = vrot.lane.b32.xlu0 %v2228, 60
        %v2319 = vpop.permute.xlu0 %2318
        %2320 = vrot.lane.b32.xlu0 %v2229, 60
        %v2321 = vpop.permute.xlu0 %2320
        %2322 = vrot.lane.b32.xlu0 %v2230, 60
        %v2323 = vpop.permute.xlu0 %2322
        %vm2355 = vcmask 654816
        %2356 = vst.msk [vmem:[#allocation3] sm:$0xff] %vm2355, %v2263
        %2357 = vst.msk [vmem:[#allocation3 + $0x20] sm:$0xff] %vm2355, %v2265
        %2358 = vst.msk [vmem:[#allocation3 + $0x40] sm:$0xff] %vm2355, %v2267
        %2359 = vst.msk [vmem:[#allocation3 + $0x60] sm:$0xff] %vm2355, %v2269
        %2360 = vst.msk [vmem:[#allocation3 + $0x80] sm:$0xff] %vm2355, %v2271
        %2361 = vst.msk [vmem:[#allocation3 + $0xa0] sm:$0xff] %vm2355, %v2273
        %2362 = vst.msk [vmem:[#allocation3 + $0xc0] sm:$0xff] %vm2355, %v2275
        %2363 = vst.msk [vmem:[#allocation3 + $0xe0] sm:$0xff] %vm2355, %v2277
        %2364 = vst.msk [vmem:[#allocation3 + $0x100] sm:$0xff] %vm2355, %v2279
        %2365 = vst.msk [vmem:[#allocation3 + $0x120] sm:$0xff] %vm2355, %v2281
        %2366 = vst.msk [vmem:[#allocation3 + $0x140] sm:$0xff] %vm2355, %v2283
        %2367 = vst.msk [vmem:[#allocation3 + $0x160] sm:$0xff] %vm2355, %v2285
        %2368 = vst.msk [vmem:[#allocation3 + $0x180] sm:$0xff] %vm2355, %v2287
        %2369 = vst.msk [vmem:[#allocation3 + $0x1a0] sm:$0xff] %vm2355, %v2289
        %2370 = vst.msk [vmem:[#allocation3 + $0x1c0] sm:$0xff] %vm2355, %v2291
        %2371 = vst.msk [vmem:[#allocation3 + $0x1e0] sm:$0xff] %vm2355, %v2293
        %2372 = vst.msk [vmem:[#allocation3 + $0x200] sm:$0xff] %vm2355, %v2295
        %2373 = vst.msk [vmem:[#allocation3 + $0x220] sm:$0xff] %vm2355, %v2297
        %2374 = vst.msk [vmem:[#allocation3 + $0x240] sm:$0xff] %vm2355, %v2299
        %2375 = vst.msk [vmem:[#allocation3 + $0x260] sm:$0xff] %vm2355, %v2301
        %2376 = vst.msk [vmem:[#allocation3 + $0x280] sm:$0xff] %vm2355, %v2303
        %2377 = vst.msk [vmem:[#allocation3 + $0x2a0] sm:$0xff] %vm2355, %v2305
        %2378 = vst.msk [vmem:[#allocation3 + $0x2c0] sm:$0xff] %vm2355, %v2307
        %2379 = vst.msk [vmem:[#allocation3 + $0x2e0] sm:$0xff] %vm2355, %v2309
        %2380 = vst.msk [vmem:[#allocation3 + $0x300] sm:$0xff] %vm2355, %v2311
        %2381 = vst.msk [vmem:[#allocation3 + $0x320] sm:$0xff] %vm2355, %v2313
        %2382 = vst.msk [vmem:[#allocation3 + $0x340] sm:$0xff] %vm2355, %v2315
        %2383 = vst.msk [vmem:[#allocation3 + $0x360] sm:$0xff] %vm2355, %v2317
        %2384 = vst.msk [vmem:[#allocation3 + $0x380] sm:$0xff] %vm2355, %v2319
        %2385 = vst.msk [vmem:[#allocation3 + $0x3a0] sm:$0xff] %vm2355, %v2321
        %2386 = vst.msk [vmem:[#allocation3 + $0x3c0] sm:$0xff] %vm2355, %v2323
        %v2387 = vld [vmem:[#allocation2 + $0x4] sm:$0xff]
        %v2388 = vld [vmem:[#allocation2 + $0xc] sm:$0xff]
        %v2389 = vld [vmem:[#allocation2 + $0x14] sm:$0xff]
        %v2390 = vld [vmem:[#allocation2 + $0x1c] sm:$0xff]
        %v2391 = vld [vmem:[#allocation2 + $0x24] sm:$0xff]
        %v2392 = vld [vmem:[#allocation2 + $0x2c] sm:$0xff]
        %v2393 = vld [vmem:[#allocation2 + $0x34] sm:$0xff]
        %v2394 = vld [vmem:[#allocation2 + $0x3c] sm:$0xff]
        %v2395 = vld [vmem:[#allocation2 + $0x44] sm:$0xff]
        %v2396 = vld [vmem:[#allocation2 + $0x4c] sm:$0xff]
        %v2397 = vld [vmem:[#allocation2 + $0x54] sm:$0xff]
        %v2398 = vld [vmem:[#allocation2 + $0x5c] sm:$0xff]
        %v2399 = vld [vmem:[#allocation2 + $0x64] sm:$0xff]
        %v2400 = vld [vmem:[#allocation2 + $0x6c] sm:$0xff]
        %v2401 = vld [vmem:[#allocation2 + $0x74] sm:$0xff]
        %v2402 = vld [vmem:[#allocation2 + $0x7c] sm:$0xff]
        %v2403 = vld [vmem:[#allocation2 + $0x84] sm:$0xff]
        %v2404 = vld [vmem:[#allocation2 + $0x8c] sm:$0xff]
        %v2405 = vld [vmem:[#allocation2 + $0x94] sm:$0xff]
        %v2406 = vld [vmem:[#allocation2 + $0x9c] sm:$0xff]
        %v2407 = vld [vmem:[#allocation2 + $0xa4] sm:$0xff]
        %v2408 = vld [vmem:[#allocation2 + $0xac] sm:$0xff]
        %v2409 = vld [vmem:[#allocation2 + $0xb4] sm:$0xff]
        %v2410 = vld [vmem:[#allocation2 + $0xbc] sm:$0xff]
        %v2411 = vld [vmem:[#allocation2 + $0xc4] sm:$0xff]
        %v2412 = vld [vmem:[#allocation2 + $0xcc] sm:$0xff]
        %v2413 = vld [vmem:[#allocation2 + $0xd4] sm:$0xff]
        %v2414 = vld [vmem:[#allocation2 + $0xdc] sm:$0xff]
        %v2415 = vld [vmem:[#allocation2 + $0xe4] sm:$0xff]
        %v2416 = vld [vmem:[#allocation2 + $0xec] sm:$0xff]
        %v2417 = vld [vmem:[#allocation2 + $0xf4] sm:$0xff]
        %2449 = vrot.lane.b32.xlu0 %v2387, 80
        %v2450 = vpop.permute.xlu0 %2449
        %2451 = vrot.lane.b32.xlu0 %v2388, 80
        %v2452 = vpop.permute.xlu0 %2451
        %2453 = vrot.lane.b32.xlu0 %v2389, 80
        %v2454 = vpop.permute.xlu0 %2453
        %2455 = vrot.lane.b32.xlu0 %v2390, 80
        %v2456 = vpop.permute.xlu0 %2455
        %2457 = vrot.lane.b32.xlu0 %v2391, 80
        %v2458 = vpop.permute.xlu0 %2457
        %2459 = vrot.lane.b32.xlu0 %v2392, 80
        %v2460 = vpop.permute.xlu0 %2459
        %2461 = vrot.lane.b32.xlu0 %v2393, 80
        %v2462 = vpop.permute.xlu0 %2461
        %2463 = vrot.lane.b32.xlu0 %v2394, 80
        %v2464 = vpop.permute.xlu0 %2463
        %2465 = vrot.lane.b32.xlu0 %v2395, 80
        %v2466 = vpop.permute.xlu0 %2465
        %2467 = vrot.lane.b32.xlu0 %v2396, 80
        %v2468 = vpop.permute.xlu0 %2467
        %2469 = vrot.lane.b32.xlu0 %v2397, 80
        %v2470 = vpop.permute.xlu0 %2469
        %2471 = vrot.lane.b32.xlu0 %v2398, 80
        %v2472 = vpop.permute.xlu0 %2471
        %2473 = vrot.lane.b32.xlu0 %v2399, 80
        %v2474 = vpop.permute.xlu0 %2473
        %2475 = vrot.lane.b32.xlu0 %v2400, 80
        %v2476 = vpop.permute.xlu0 %2475
        %2477 = vrot.lane.b32.xlu0 %v2401, 80
        %v2478 = vpop.permute.xlu0 %2477
        %2479 = vrot.lane.b32.xlu0 %v2402, 80
        %v2480 = vpop.permute.xlu0 %2479
        %2481 = vrot.lane.b32.xlu0 %v2403, 80
        %v2482 = vpop.permute.xlu0 %2481
        %2483 = vrot.lane.b32.xlu0 %v2404, 80
        %v2484 = vpop.permute.xlu0 %2483
        %2485 = vrot.lane.b32.xlu0 %v2405, 80
        %v2486 = vpop.permute.xlu0 %2485
        %2487 = vrot.lane.b32.xlu0 %v2406, 80
        %v2488 = vpop.permute.xlu0 %2487
        %2489 = vrot.lane.b32.xlu0 %v2407, 80
        %v2490 = vpop.permute.xlu0 %2489
        %2491 = vrot.lane.b32.xlu0 %v2408, 80
        %v2492 = vpop.permute.xlu0 %2491
        %2493 = vrot.lane.b32.xlu0 %v2409, 80
        %v2494 = vpop.permute.xlu0 %2493
        %2495 = vrot.lane.b32.xlu0 %v2410, 80
        %v2496 = vpop.permute.xlu0 %2495
        %2497 = vrot.lane.b32.xlu0 %v2411, 80
        %v2498 = vpop.permute.xlu0 %2497
        %2499 = vrot.lane.b32.xlu0 %v2412, 80
        %v2500 = vpop.permute.xlu0 %2499
        %2501 = vrot.lane.b32.xlu0 %v2413, 80
        %v2502 = vpop.permute.xlu0 %2501
        %2503 = vrot.lane.b32.xlu0 %v2414, 80
        %v2504 = vpop.permute.xlu0 %2503
        %2505 = vrot.lane.b32.xlu0 %v2415, 80
        %v2506 = vpop.permute.xlu0 %2505
        %2507 = vrot.lane.b32.xlu0 %v2416, 80
        %v2508 = vpop.permute.xlu0 %2507
        %2509 = vrot.lane.b32.xlu0 %v2417, 80
        %v2510 = vpop.permute.xlu0 %2509
        %vm2542 = vcmask 818816
        %2543 = vst.msk [vmem:[#allocation3] sm:$0xff] %vm2542, %v2450
        %2544 = vst.msk [vmem:[#allocation3 + $0x20] sm:$0xff] %vm2542, %v2452
        %2545 = vst.msk [vmem:[#allocation3 + $0x40] sm:$0xff] %vm2542, %v2454
        %2546 = vst.msk [vmem:[#allocation3 + $0x60] sm:$0xff] %vm2542, %v2456
        %2547 = vst.msk [vmem:[#allocation3 + $0x80] sm:$0xff] %vm2542, %v2458
        %2548 = vst.msk [vmem:[#allocation3 + $0xa0] sm:$0xff] %vm2542, %v2460
        %2549 = vst.msk [vmem:[#allocation3 + $0xc0] sm:$0xff] %vm2542, %v2462
        %2550 = vst.msk [vmem:[#allocation3 + $0xe0] sm:$0xff] %vm2542, %v2464
        %2551 = vst.msk [vmem:[#allocation3 + $0x100] sm:$0xff] %vm2542, %v2466
        %2552 = vst.msk [vmem:[#allocation3 + $0x120] sm:$0xff] %vm2542, %v2468
        %2553 = vst.msk [vmem:[#allocation3 + $0x140] sm:$0xff] %vm2542, %v2470
        %2554 = vst.msk [vmem:[#allocation3 + $0x160] sm:$0xff] %vm2542, %v2472
        %2555 = vst.msk [vmem:[#allocation3 + $0x180] sm:$0xff] %vm2542, %v2474
        %2556 = vst.msk [vmem:[#allocation3 + $0x1a0] sm:$0xff] %vm2542, %v2476
        %2557 = vst.msk [vmem:[#allocation3 + $0x1c0] sm:$0xff] %vm2542, %v2478
        %2558 = vst.msk [vmem:[#allocation3 + $0x1e0] sm:$0xff] %vm2542, %v2480
        %2559 = vst.msk [vmem:[#allocation3 + $0x200] sm:$0xff] %vm2542, %v2482
        %2560 = vst.msk [vmem:[#allocation3 + $0x220] sm:$0xff] %vm2542, %v2484
        %2561 = vst.msk [vmem:[#allocation3 + $0x240] sm:$0xff] %vm2542, %v2486
        %2562 = vst.msk [vmem:[#allocation3 + $0x260] sm:$0xff] %vm2542, %v2488
        %2563 = vst.msk [vmem:[#allocation3 + $0x280] sm:$0xff] %vm2542, %v2490
        %2564 = vst.msk [vmem:[#allocation3 + $0x2a0] sm:$0xff] %vm2542, %v2492
        %2565 = vst.msk [vmem:[#allocation3 + $0x2c0] sm:$0xff] %vm2542, %v2494
        %2566 = vst.msk [vmem:[#allocation3 + $0x2e0] sm:$0xff] %vm2542, %v2496
        %2567 = vst.msk [vmem:[#allocation3 + $0x300] sm:$0xff] %vm2542, %v2498
        %2568 = vst.msk [vmem:[#allocation3 + $0x320] sm:$0xff] %vm2542, %v2500
        %2569 = vst.msk [vmem:[#allocation3 + $0x340] sm:$0xff] %vm2542, %v2502
        %2570 = vst.msk [vmem:[#allocation3 + $0x360] sm:$0xff] %vm2542, %v2504
        %2571 = vst.msk [vmem:[#allocation3 + $0x380] sm:$0xff] %vm2542, %v2506
        %2572 = vst.msk [vmem:[#allocation3 + $0x3a0] sm:$0xff] %vm2542, %v2508
        %2573 = vst.msk [vmem:[#allocation3 + $0x3c0] sm:$0xff] %vm2542, %v2510
        %v2574 = vld [vmem:[#allocation2 + $0x12] sm:$0xff]
        %v2575 = vld [vmem:[#allocation2 + $0x1a] sm:$0xff]
        %v2576 = vld [vmem:[#allocation2 + $0x22] sm:$0xff]
        %v2577 = vld [vmem:[#allocation2 + $0x2a] sm:$0xff]
        %v2578 = vld [vmem:[#allocation2 + $0x32] sm:$0xff]
        %v2579 = vld [vmem:[#allocation2 + $0x3a] sm:$0xff]
        %v2580 = vld [vmem:[#allocation2 + $0x42] sm:$0xff]
        %v2581 = vld [vmem:[#allocation2 + $0x4a] sm:$0xff]
        %v2582 = vld [vmem:[#allocation2 + $0x52] sm:$0xff]
        %v2583 = vld [vmem:[#allocation2 + $0x5a] sm:$0xff]
        %v2584 = vld [vmem:[#allocation2 + $0x62] sm:$0xff]
        %v2585 = vld [vmem:[#allocation2 + $0x6a] sm:$0xff]
        %v2586 = vld [vmem:[#allocation2 + $0x72] sm:$0xff]
        %v2587 = vld [vmem:[#allocation2 + $0x7a] sm:$0xff]
        %v2588 = vld [vmem:[#allocation2 + $0x82] sm:$0xff]
        %v2589 = vld [vmem:[#allocation2 + $0x8a] sm:$0xff]
        %v2590 = vld [vmem:[#allocation2 + $0x92] sm:$0xff]
        %v2591 = vld [vmem:[#allocation2 + $0x9a] sm:$0xff]
        %v2592 = vld [vmem:[#allocation2 + $0xa2] sm:$0xff]
        %v2593 = vld [vmem:[#allocation2 + $0xaa] sm:$0xff]
        %v2594 = vld [vmem:[#allocation2 + $0xb2] sm:$0xff]
        %v2595 = vld [vmem:[#allocation2 + $0xba] sm:$0xff]
        %v2596 = vld [vmem:[#allocation2 + $0xc2] sm:$0xff]
        %v2597 = vld [vmem:[#allocation2 + $0xca] sm:$0xff]
        %v2598 = vld [vmem:[#allocation2 + $0xd2] sm:$0xff]
        %v2599 = vld [vmem:[#allocation2 + $0xda] sm:$0xff]
        %v2600 = vld [vmem:[#allocation2 + $0xe2] sm:$0xff]
        %v2601 = vld [vmem:[#allocation2 + $0xea] sm:$0xff]
        %v2602 = vld [vmem:[#allocation2 + $0xf2] sm:$0xff]
        %v2603 = vld [vmem:[#allocation2 + $0xfa] sm:$0xff]
        %v2604 = vld [vmem:[#allocation2 + $0x102] sm:$0xff]
        %2636 = vrot.lane.b32.xlu0 %v2574, 100
        %v2637 = vpop.permute.xlu0 %2636
        %2638 = vrot.lane.b32.xlu0 %v2575, 100
        %v2639 = vpop.permute.xlu0 %2638
        %2640 = vrot.lane.b32.xlu0 %v2576, 100
        %v2641 = vpop.permute.xlu0 %2640
        %2642 = vrot.lane.b32.xlu0 %v2577, 100
        %v2643 = vpop.permute.xlu0 %2642
        %2644 = vrot.lane.b32.xlu0 %v2578, 100
        %v2645 = vpop.permute.xlu0 %2644
        %2646 = vrot.lane.b32.xlu0 %v2579, 100
        %v2647 = vpop.permute.xlu0 %2646
        %2648 = vrot.lane.b32.xlu0 %v2580, 100
        %v2649 = vpop.permute.xlu0 %2648
        %2650 = vrot.lane.b32.xlu0 %v2581, 100
        %v2651 = vpop.permute.xlu0 %2650
        %2652 = vrot.lane.b32.xlu0 %v2582, 100
        %v2653 = vpop.permute.xlu0 %2652
        %2654 = vrot.lane.b32.xlu0 %v2583, 100
        %v2655 = vpop.permute.xlu0 %2654
        %2656 = vrot.lane.b32.xlu0 %v2584, 100
        %v2657 = vpop.permute.xlu0 %2656
        %2658 = vrot.lane.b32.xlu0 %v2585, 100
        %v2659 = vpop.permute.xlu0 %2658
        %2660 = vrot.lane.b32.xlu0 %v2586, 100
        %v2661 = vpop.permute.xlu0 %2660
        %2662 = vrot.lane.b32.xlu0 %v2587, 100
        %v2663 = vpop.permute.xlu0 %2662
        %2664 = vrot.lane.b32.xlu0 %v2588, 100
        %v2665 = vpop.permute.xlu0 %2664
        %2666 = vrot.lane.b32.xlu0 %v2589, 100
        %v2667 = vpop.permute.xlu0 %2666
        %2668 = vrot.lane.b32.xlu0 %v2590, 100
        %v2669 = vpop.permute.xlu0 %2668
        %2670 = vrot.lane.b32.xlu0 %v2591, 100
        %v2671 = vpop.permute.xlu0 %2670
        %2672 = vrot.lane.b32.xlu0 %v2592, 100
        %v2673 = vpop.permute.xlu0 %2672
        %2674 = vrot.lane.b32.xlu0 %v2593, 100
        %v2675 = vpop.permute.xlu0 %2674
        %2676 = vrot.lane.b32.xlu0 %v2594, 100
        %v2677 = vpop.permute.xlu0 %2676
        %2678 = vrot.lane.b32.xlu0 %v2595, 100
        %v2679 = vpop.permute.xlu0 %2678
        %2680 = vrot.lane.b32.xlu0 %v2596, 100
        %v2681 = vpop.permute.xlu0 %2680
        %2682 = vrot.lane.b32.xlu0 %v2597, 100
        %v2683 = vpop.permute.xlu0 %2682
        %2684 = vrot.lane.b32.xlu0 %v2598, 100
        %v2685 = vpop.permute.xlu0 %2684
        %2686 = vrot.lane.b32.xlu0 %v2599, 100
        %v2687 = vpop.permute.xlu0 %2686
        %2688 = vrot.lane.b32.xlu0 %v2600, 100
        %v2689 = vpop.permute.xlu0 %2688
        %2690 = vrot.lane.b32.xlu0 %v2601, 100
        %v2691 = vpop.permute.xlu0 %2690
        %2692 = vrot.lane.b32.xlu0 %v2602, 100
        %v2693 = vpop.permute.xlu0 %2692
        %2694 = vrot.lane.b32.xlu0 %v2603, 100
        %v2695 = vpop.permute.xlu0 %2694
        %2696 = vrot.lane.b32.xlu0 %v2604, 100
        %v2697 = vpop.permute.xlu0 %2696
        %vm2729 = vcmask 982816
        %2730 = vst.msk [vmem:[#allocation3] sm:$0xff] %vm2729, %v2637
        %2731 = vst.msk [vmem:[#allocation3 + $0x20] sm:$0xff] %vm2729, %v2639
        %2732 = vst.msk [vmem:[#allocation3 + $0x40] sm:$0xff] %vm2729, %v2641
        %2733 = vst.msk [vmem:[#allocation3 + $0x60] sm:$0xff] %vm2729, %v2643
        %2734 = vst.msk [vmem:[#allocation3 + $0x80] sm:$0xff] %vm2729, %v2645
        %2735 = vst.msk [vmem:[#allocation3 + $0xa0] sm:$0xff] %vm2729, %v2647
        %2736 = vst.msk [vmem:[#allocation3 + $0xc0] sm:$0xff] %vm2729, %v2649
        %2737 = vst.msk [vmem:[#allocation3 + $0xe0] sm:$0xff] %vm2729, %v2651
        %2738 = vst.msk [vmem:[#allocation3 + $0x100] sm:$0xff] %vm2729, %v2653
        %2739 = vst.msk [vmem:[#allocation3 + $0x120] sm:$0xff] %vm2729, %v2655
        %2740 = vst.msk [vmem:[#allocation3 + $0x140] sm:$0xff] %vm2729, %v2657
        %2741 = vst.msk [vmem:[#allocation3 + $0x160] sm:$0xff] %vm2729, %v2659
        %2742 = vst.msk [vmem:[#allocation3 + $0x180] sm:$0xff] %vm2729, %v2661
        %2743 = vst.msk [vmem:[#allocation3 + $0x1a0] sm:$0xff] %vm2729, %v2663
        %2744 = vst.msk [vmem:[#allocation3 + $0x1c0] sm:$0xff] %vm2729, %v2665
        %2745 = vst.msk [vmem:[#allocation3 + $0x1e0] sm:$0xff] %vm2729, %v2667
        %2746 = vst.msk [vmem:[#allocation3 + $0x200] sm:$0xff] %vm2729, %v2669
        %2747 = vst.msk [vmem:[#allocation3 + $0x220] sm:$0xff] %vm2729, %v2671
        %2748 = vst.msk [vmem:[#allocation3 + $0x240] sm:$0xff] %vm2729, %v2673
        %2749 = vst.msk [vmem:[#allocation3 + $0x260] sm:$0xff] %vm2729, %v2675
        %2750 = vst.msk [vmem:[#allocation3 + $0x280] sm:$0xff] %vm2729, %v2677
        %2751 = vst.msk [vmem:[#allocation3 + $0x2a0] sm:$0xff] %vm2729, %v2679
        %2752 = vst.msk [vmem:[#allocation3 + $0x2c0] sm:$0xff] %vm2729, %v2681
        %2753 = vst.msk [vmem:[#allocation3 + $0x2e0] sm:$0xff] %vm2729, %v2683
        %2754 = vst.msk [vmem:[#allocation3 + $0x300] sm:$0xff] %vm2729, %v2685
        %2755 = vst.msk [vmem:[#allocation3 + $0x320] sm:$0xff] %vm2729, %v2687
        %2756 = vst.msk [vmem:[#allocation3 + $0x340] sm:$0xff] %vm2729, %v2689
        %2757 = vst.msk [vmem:[#allocation3 + $0x360] sm:$0xff] %vm2729, %v2691
        %2758 = vst.msk [vmem:[#allocation3 + $0x380] sm:$0xff] %vm2729, %v2693
        %2759 = vst.msk [vmem:[#allocation3 + $0x3a0] sm:$0xff] %vm2729, %v2695
        %2760 = vst.msk [vmem:[#allocation3 + $0x3c0] sm:$0xff] %vm2729, %v2697
        %v2761 = vld [vmem:[#allocation2 + $0x13] sm:$0xff]
        %v2762 = vld [vmem:[#allocation2 + $0x1b] sm:$0xff]
        %v2763 = vld [vmem:[#allocation2 + $0x23] sm:$0xff]
        %v2764 = vld [vmem:[#allocation2 + $0x2b] sm:$0xff]
        %v2765 = vld [vmem:[#allocation2 + $0x33] sm:$0xff]
        %v2766 = vld [vmem:[#allocation2 + $0x3b] sm:$0xff]
        %v2767 = vld [vmem:[#allocation2 + $0x43] sm:$0xff]
        %v2768 = vld [vmem:[#allocation2 + $0x4b] sm:$0xff]
        %v2769 = vld [vmem:[#allocation2 + $0x53] sm:$0xff]
        %v2770 = vld [vmem:[#allocation2 + $0x5b] sm:$0xff]
        %v2771 = vld [vmem:[#allocation2 + $0x63] sm:$0xff]
        %v2772 = vld [vmem:[#allocation2 + $0x6b] sm:$0xff]
        %v2773 = vld [vmem:[#allocation2 + $0x73] sm:$0xff]
        %v2774 = vld [vmem:[#allocation2 + $0x7b] sm:$0xff]
        %v2775 = vld [vmem:[#allocation2 + $0x83] sm:$0xff]
        %v2776 = vld [vmem:[#allocation2 + $0x8b] sm:$0xff]
        %v2777 = vld [vmem:[#allocation2 + $0x93] sm:$0xff]
        %v2778 = vld [vmem:[#allocation2 + $0x9b] sm:$0xff]
        %v2779 = vld [vmem:[#allocation2 + $0xa3] sm:$0xff]
        %v2780 = vld [vmem:[#allocation2 + $0xab] sm:$0xff]
        %v2781 = vld [vmem:[#allocation2 + $0xb3] sm:$0xff]
        %v2782 = vld [vmem:[#allocation2 + $0xbb] sm:$0xff]
        %v2783 = vld [vmem:[#allocation2 + $0xc3] sm:$0xff]
        %v2784 = vld [vmem:[#allocation2 + $0xcb] sm:$0xff]
        %v2785 = vld [vmem:[#allocation2 + $0xd3] sm:$0xff]
        %v2786 = vld [vmem:[#allocation2 + $0xdb] sm:$0xff]
        %v2787 = vld [vmem:[#allocation2 + $0xe3] sm:$0xff]
        %v2788 = vld [vmem:[#allocation2 + $0xeb] sm:$0xff]
        %v2789 = vld [vmem:[#allocation2 + $0xf3] sm:$0xff]
        %v2790 = vld [vmem:[#allocation2 + $0xfb] sm:$0xff]
        %v2791 = vld [vmem:[#allocation2 + $0x103] sm:$0xff]
        %2823 = vrot.lane.b32.xlu0 %v2761, 120
        %v2824 = vpop.permute.xlu0 %2823
        %2825 = vrot.lane.b32.xlu0 %v2762, 120
        %v2826 = vpop.permute.xlu0 %2825
        %2827 = vrot.lane.b32.xlu0 %v2763, 120
        %v2828 = vpop.permute.xlu0 %2827
        %2829 = vrot.lane.b32.xlu0 %v2764, 120
        %v2830 = vpop.permute.xlu0 %2829
        %2831 = vrot.lane.b32.xlu0 %v2765, 120
        %v2832 = vpop.permute.xlu0 %2831
        %2833 = vrot.lane.b32.xlu0 %v2766, 120
        %v2834 = vpop.permute.xlu0 %2833
        %2835 = vrot.lane.b32.xlu0 %v2767, 120
        %v2836 = vpop.permute.xlu0 %2835
        %2837 = vrot.lane.b32.xlu0 %v2768, 120
        %v2838 = vpop.permute.xlu0 %2837
        %2839 = vrot.lane.b32.xlu0 %v2769, 120
        %v2840 = vpop.permute.xlu0 %2839
        %2841 = vrot.lane.b32.xlu0 %v2770, 120
        %v2842 = vpop.permute.xlu0 %2841
        %2843 = vrot.lane.b32.xlu0 %v2771, 120
        %v2844 = vpop.permute.xlu0 %2843
        %2845 = vrot.lane.b32.xlu0 %v2772, 120
        %v2846 = vpop.permute.xlu0 %2845
        %2847 = vrot.lane.b32.xlu0 %v2773, 120
        %v2848 = vpop.permute.xlu0 %2847
        %2849 = vrot.lane.b32.xlu0 %v2774, 120
        %v2850 = vpop.permute.xlu0 %2849
        %2851 = vrot.lane.b32.xlu0 %v2775, 120
        %v2852 = vpop.permute.xlu0 %2851
        %2853 = vrot.lane.b32.xlu0 %v2776, 120
        %v2854 = vpop.permute.xlu0 %2853
        %2855 = vrot.lane.b32.xlu0 %v2777, 120
        %v2856 = vpop.permute.xlu0 %2855
        %2857 = vrot.lane.b32.xlu0 %v2778, 120
        %v2858 = vpop.permute.xlu0 %2857
        %2859 = vrot.lane.b32.xlu0 %v2779, 120
        %v2860 = vpop.permute.xlu0 %2859
        %2861 = vrot.lane.b32.xlu0 %v2780, 120
        %v2862 = vpop.permute.xlu0 %2861
        %2863 = vrot.lane.b32.xlu0 %v2781, 120
        %v2864 = vpop.permute.xlu0 %2863
        %2865 = vrot.lane.b32.xlu0 %v2782, 120
        %v2866 = vpop.permute.xlu0 %2865
        %2867 = vrot.lane.b32.xlu0 %v2783, 120
        %v2868 = vpop.permute.xlu0 %2867
        %2869 = vrot.lane.b32.xlu0 %v2784, 120
        %v2870 = vpop.permute.xlu0 %2869
        %2871 = vrot.lane.b32.xlu0 %v2785, 120
        %v2872 = vpop.permute.xlu0 %2871
        %2873 = vrot.lane.b32.xlu0 %v2786, 120
        %v2874 = vpop.permute.xlu0 %2873
        %2875 = vrot.lane.b32.xlu0 %v2787, 120
        %v2876 = vpop.permute.xlu0 %2875
        %2877 = vrot.lane.b32.xlu0 %v2788, 120
        %v2878 = vpop.permute.xlu0 %2877
        %2879 = vrot.lane.b32.xlu0 %v2789, 120
        %v2880 = vpop.permute.xlu0 %2879
        %2881 = vrot.lane.b32.xlu0 %v2790, 120
        %v2882 = vpop.permute.xlu0 %2881
        %2883 = vrot.lane.b32.xlu0 %v2791, 120
        %v2884 = vpop.permute.xlu0 %2883
        %vm2916 = vcmask 1048512
        %2917 = vst.msk [vmem:[#allocation3] sm:$0xff] %vm2916, %v2824
        %vm2918 = vcmask 97280
        %2919 = vst.msk [vmem:[#allocation3 + $0x8] sm:$0xff] %vm2918, %v2824
        %2920 = vst.msk [vmem:[#allocation3 + $0x20] sm:$0xff] %vm2916, %v2826
        %2921 = vst.msk [vmem:[#allocation3 + $0x28] sm:$0xff] %vm2918, %v2826
        %2922 = vst.msk [vmem:[#allocation3 + $0x40] sm:$0xff] %vm2916, %v2828
        %2923 = vst.msk [vmem:[#allocation3 + $0x48] sm:$0xff] %vm2918, %v2828
        %2924 = vst.msk [vmem:[#allocation3 + $0x60] sm:$0xff] %vm2916, %v2830
        %2925 = vst.msk [vmem:[#allocation3 + $0x68] sm:$0xff] %vm2918, %v2830
        %2926 = vst.msk [vmem:[#allocation3 + $0x80] sm:$0xff] %vm2916, %v2832
        %2927 = vst.msk [vmem:[#allocation3 + $0x88] sm:$0xff] %vm2918, %v2832
        %2928 = vst.msk [vmem:[#allocation3 + $0xa0] sm:$0xff] %vm2916, %v2834
        %2929 = vst.msk [vmem:[#allocation3 + $0xa8] sm:$0xff] %vm2918, %v2834
        %2930 = vst.msk [vmem:[#allocation3 + $0xc0] sm:$0xff] %vm2916, %v2836
        %2931 = vst.msk [vmem:[#allocation3 + $0xc8] sm:$0xff] %vm2918, %v2836
        %2932 = vst.msk [vmem:[#allocation3 + $0xe0] sm:$0xff] %vm2916, %v2838
        %2933 = vst.msk [vmem:[#allocation3 + $0xe8] sm:$0xff] %vm2918, %v2838
        %2934 = vst.msk [vmem:[#allocation3 + $0x100] sm:$0xff] %vm2916, %v2840
        %2935 = vst.msk [vmem:[#allocation3 + $0x108] sm:$0xff] %vm2918, %v2840
        %2936 = vst.msk [vmem:[#allocation3 + $0x120] sm:$0xff] %vm2916, %v2842
        %2937 = vst.msk [vmem:[#allocation3 + $0x128] sm:$0xff] %vm2918, %v2842
        %2938 = vst.msk [vmem:[#allocation3 + $0x140] sm:$0xff] %vm2916, %v2844
        %2939 = vst.msk [vmem:[#allocation3 + $0x148] sm:$0xff] %vm2918, %v2844
        %2940 = vst.msk [vmem:[#allocation3 + $0x160] sm:$0xff] %vm2916, %v2846
        %2941 = vst.msk [vmem:[#allocation3 + $0x168] sm:$0xff] %vm2918, %v2846
        %2942 = vst.msk [vmem:[#allocation3 + $0x180] sm:$0xff] %vm2916, %v2848
        %2943 = vst.msk [vmem:[#allocation3 + $0x188] sm:$0xff] %vm2918, %v2848
        %2944 = vst.msk [vmem:[#allocation3 + $0x1a0] sm:$0xff] %vm2916, %v2850
        %2945 = vst.msk [vmem:[#allocation3 + $0x1a8] sm:$0xff] %vm2918, %v2850
        %2946 = vst.msk [vmem:[#allocation3 + $0x1c0] sm:$0xff] %vm2916, %v2852
        %2947 = vst.msk [vmem:[#allocation3 + $0x1c8] sm:$0xff] %vm2918, %v2852
        %2948 = vst.msk [vmem:[#allocation3 + $0x1e0] sm:$0xff] %vm2916, %v2854
        %2949 = vst.msk [vmem:[#allocation3 + $0x1e8] sm:$0xff] %vm2918, %v2854
        %2950 = vst.msk [vmem:[#allocation3 + $0x200] sm:$0xff] %vm2916, %v2856
        %2951 = vst.msk [vmem:[#allocation3 + $0x208] sm:$0xff] %vm2918, %v2856
        %2952 = vst.msk [vmem:[#allocation3 + $0x220] sm:$0xff] %vm2916, %v2858
        %2953 = vst.msk [vmem:[#allocation3 + $0x228] sm:$0xff] %vm2918, %v2858
        %2954 = vst.msk [vmem:[#allocation3 + $0x240] sm:$0xff] %vm2916, %v2860
        %2955 = vst.msk [vmem:[#allocation3 + $0x248] sm:$0xff] %vm2918, %v2860
        %2956 = vst.msk [vmem:[#allocation3 + $0x260] sm:$0xff] %vm2916, %v2862
        %2957 = vst.msk [vmem:[#allocation3 + $0x268] sm:$0xff] %vm2918, %v2862
        %2958 = vst.msk [vmem:[#allocation3 + $0x280] sm:$0xff] %vm2916, %v2864
        %2959 = vst.msk [vmem:[#allocation3 + $0x288] sm:$0xff] %vm2918, %v2864
        %2960 = vst.msk [vmem:[#allocation3 + $0x2a0] sm:$0xff] %vm2916, %v2866
        %2961 = vst.msk [vmem:[#allocation3 + $0x2a8] sm:$0xff] %vm2918, %v2866
        %2962 = vst.msk [vmem:[#allocation3 + $0x2c0] sm:$0xff] %vm2916, %v2868
        %2963 = vst.msk [vmem:[#allocation3 + $0x2c8] sm:$0xff] %vm2918, %v2868
        %2964 = vst.msk [vmem:[#allocation3 + $0x2e0] sm:$0xff] %vm2916, %v2870
        %2965 = vst.msk [vmem:[#allocation3 + $0x2e8] sm:$0xff] %vm2918, %v2870
        %2966 = vst.msk [vmem:[#allocation3 + $0x300] sm:$0xff] %vm2916, %v2872
        %2967 = vst.msk [vmem:[#allocation3 + $0x308] sm:$0xff] %vm2918, %v2872
        %2968 = vst.msk [vmem:[#allocation3 + $0x320] sm:$0xff] %vm2916, %v2874
        %2969 = vst.msk [vmem:[#allocation3 + $0x328] sm:$0xff] %vm2918, %v2874
        %2970 = vst.msk [vmem:[#allocation3 + $0x340] sm:$0xff] %vm2916, %v2876
        %2971 = vst.msk [vmem:[#allocation3 + $0x348] sm:$0xff] %vm2918, %v2876
        %2972 = vst.msk [vmem:[#allocation3 + $0x360] sm:$0xff] %vm2916, %v2878
        %2973 = vst.msk [vmem:[#allocation3 + $0x368] sm:$0xff] %vm2918, %v2878
        %2974 = vst.msk [vmem:[#allocation3 + $0x380] sm:$0xff] %vm2916, %v2880
        %2975 = vst.msk [vmem:[#allocation3 + $0x388] sm:$0xff] %vm2918, %v2880
        %2976 = vst.msk [vmem:[#allocation3 + $0x3a0] sm:$0xff] %vm2916, %v2882
        %2977 = vst.msk [vmem:[#allocation3 + $0x3a8] sm:$0xff] %vm2918, %v2882
        %2978 = vst.msk [vmem:[#allocation3 + $0x3c0] sm:$0xff] %vm2916, %v2884
        %2979 = vst.msk [vmem:[#allocation3 + $0x3c8] sm:$0xff] %vm2918, %v2884
        %v2980 = vld [vmem:[#allocation2 + $0x14] sm:$0xff]
        %v2981 = vld [vmem:[#allocation2 + $0x1c] sm:$0xff]
        %v2982 = vld [vmem:[#allocation2 + $0x24] sm:$0xff]
        %v2983 = vld [vmem:[#allocation2 + $0x2c] sm:$0xff]
        %v2984 = vld [vmem:[#allocation2 + $0x34] sm:$0xff]
        %v2985 = vld [vmem:[#allocation2 + $0x3c] sm:$0xff]
        %v2986 = vld [vmem:[#allocation2 + $0x44] sm:$0xff]
        %v2987 = vld [vmem:[#allocation2 + $0x4c] sm:$0xff]
        %v2988 = vld [vmem:[#allocation2 + $0x54] sm:$0xff]
        %v2989 = vld [vmem:[#allocation2 + $0x5c] sm:$0xff]
        %v2990 = vld [vmem:[#allocation2 + $0x64] sm:$0xff]
        %v2991 = vld [vmem:[#allocation2 + $0x6c] sm:$0xff]
        %v2992 = vld [vmem:[#allocation2 + $0x74] sm:$0xff]
        %v2993 = vld [vmem:[#allocation2 + $0x7c] sm:$0xff]
        %v2994 = vld [vmem:[#allocation2 + $0x84] sm:$0xff]
        %v2995 = vld [vmem:[#allocation2 + $0x8c] sm:$0xff]
        %v2996 = vld [vmem:[#allocation2 + $0x94] sm:$0xff]
        %v2997 = vld [vmem:[#allocation2 + $0x9c] sm:$0xff]
        %v2998 = vld [vmem:[#allocation2 + $0xa4] sm:$0xff]
        %v2999 = vld [vmem:[#allocation2 + $0xac] sm:$0xff]
        %v3000 = vld [vmem:[#allocation2 + $0xb4] sm:$0xff]
        %v3001 = vld [vmem:[#allocation2 + $0xbc] sm:$0xff]
        %v3002 = vld [vmem:[#allocation2 + $0xc4] sm:$0xff]
        %v3003 = vld [vmem:[#allocation2 + $0xcc] sm:$0xff]
        %v3004 = vld [vmem:[#allocation2 + $0xd4] sm:$0xff]
        %v3005 = vld [vmem:[#allocation2 + $0xdc] sm:$0xff]
        %v3006 = vld [vmem:[#allocation2 + $0xe4] sm:$0xff]
        %v3007 = vld [vmem:[#allocation2 + $0xec] sm:$0xff]
        %v3008 = vld [vmem:[#allocation2 + $0xf4] sm:$0xff]
        %v3009 = vld [vmem:[#allocation2 + $0xfc] sm:$0xff]
        %v3010 = vld [vmem:[#allocation2 + $0x104] sm:$0xff]
        %3042 = vrot.lane.b32.xlu0 %v2980, 12
        %v3043 = vpop.permute.xlu0 %3042
        %3044 = vrot.lane.b32.xlu0 %v2981, 12
        %v3045 = vpop.permute.xlu0 %3044
        %3046 = vrot.lane.b32.xlu0 %v2982, 12
        %v3047 = vpop.permute.xlu0 %3046
        %3048 = vrot.lane.b32.xlu0 %v2983, 12
        %v3049 = vpop.permute.xlu0 %3048
        %3050 = vrot.lane.b32.xlu0 %v2984, 12
        %v3051 = vpop.permute.xlu0 %3050
        %3052 = vrot.lane.b32.xlu0 %v2985, 12
        %v3053 = vpop.permute.xlu0 %3052
        %3054 = vrot.lane.b32.xlu0 %v2986, 12
        %v3055 = vpop.permute.xlu0 %3054
        %3056 = vrot.lane.b32.xlu0 %v2987, 12
        %v3057 = vpop.permute.xlu0 %3056
        %3058 = vrot.lane.b32.xlu0 %v2988, 12
        %v3059 = vpop.permute.xlu0 %3058
        %3060 = vrot.lane.b32.xlu0 %v2989, 12
        %v3061 = vpop.permute.xlu0 %3060
        %3062 = vrot.lane.b32.xlu0 %v2990, 12
        %v3063 = vpop.permute.xlu0 %3062
        %3064 = vrot.lane.b32.xlu0 %v2991, 12
        %v3065 = vpop.permute.xlu0 %3064
        %3066 = vrot.lane.b32.xlu0 %v2992, 12
        %v3067 = vpop.permute.xlu0 %3066
        %3068 = vrot.lane.b32.xlu0 %v2993, 12
        %v3069 = vpop.permute.xlu0 %3068
        %3070 = vrot.lane.b32.xlu0 %v2994, 12
        %v3071 = vpop.permute.xlu0 %3070
        %3072 = vrot.lane.b32.xlu0 %v2995, 12
        %v3073 = vpop.permute.xlu0 %3072
        %3074 = vrot.lane.b32.xlu0 %v2996, 12
        %v3075 = vpop.permute.xlu0 %3074
        %3076 = vrot.lane.b32.xlu0 %v2997, 12
        %v3077 = vpop.permute.xlu0 %3076
        %3078 = vrot.lane.b32.xlu0 %v2998, 12
        %v3079 = vpop.permute.xlu0 %3078
        %3080 = vrot.lane.b32.xlu0 %v2999, 12
        %v3081 = vpop.permute.xlu0 %3080
        %3082 = vrot.lane.b32.xlu0 %v3000, 12
        %v3083 = vpop.permute.xlu0 %3082
        %3084 = vrot.lane.b32.xlu0 %v3001, 12
        %v3085 = vpop.permute.xlu0 %3084
        %3086 = vrot.lane.b32.xlu0 %v3002, 12
        %v3087 = vpop.permute.xlu0 %3086
        %3088 = vrot.lane.b32.xlu0 %v3003, 12
        %v3089 = vpop.permute.xlu0 %3088
        %3090 = vrot.lane.b32.xlu0 %v3004, 12
        %v3091 = vpop.permute.xlu0 %3090
        %3092 = vrot.lane.b32.xlu0 %v3005, 12
        %v3093 = vpop.permute.xlu0 %3092
        %3094 = vrot.lane.b32.xlu0 %v3006, 12
        %v3095 = vpop.permute.xlu0 %3094
        %3096 = vrot.lane.b32.xlu0 %v3007, 12
        %v3097 = vpop.permute.xlu0 %3096
        %3098 = vrot.lane.b32.xlu0 %v3008, 12
        %v3099 = vpop.permute.xlu0 %3098
        %3100 = vrot.lane.b32.xlu0 %v3009, 12
        %v3101 = vpop.permute.xlu0 %3100
        %3102 = vrot.lane.b32.xlu0 %v3010, 12
        %v3103 = vpop.permute.xlu0 %3102
        %vm3135 = vcmask 261216
        %3136 = vst.msk [vmem:[#allocation3 + $0x8] sm:$0xff] %vm3135, %v3043
        %3137 = vst.msk [vmem:[#allocation3 + $0x28] sm:$0xff] %vm3135, %v3045
        %3138 = vst.msk [vmem:[#allocation3 + $0x48] sm:$0xff] %vm3135, %v3047
        %3139 = vst.msk [vmem:[#allocation3 + $0x68] sm:$0xff] %vm3135, %v3049
        %3140 = vst.msk [vmem:[#allocation3 + $0x88] sm:$0xff] %vm3135, %v3051
        %3141 = vst.msk [vmem:[#allocation3 + $0xa8] sm:$0xff] %vm3135, %v3053
        %3142 = vst.msk [vmem:[#allocation3 + $0xc8] sm:$0xff] %vm3135, %v3055
        %3143 = vst.msk [vmem:[#allocation3 + $0xe8] sm:$0xff] %vm3135, %v3057
        %3144 = vst.msk [vmem:[#allocation3 + $0x108] sm:$0xff] %vm3135, %v3059
        %3145 = vst.msk [vmem:[#allocation3 + $0x128] sm:$0xff] %vm3135, %v3061
        %3146 = vst.msk [vmem:[#allocation3 + $0x148] sm:$0xff] %vm3135, %v3063
        %3147 = vst.msk [vmem:[#allocation3 + $0x168] sm:$0xff] %vm3135, %v3065
        %3148 = vst.msk [vmem:[#allocation3 + $0x188] sm:$0xff] %vm3135, %v3067
        %3149 = vst.msk [vmem:[#allocation3 + $0x1a8] sm:$0xff] %vm3135, %v3069
        %3150 = vst.msk [vmem:[#allocation3 + $0x1c8] sm:$0xff] %vm3135, %v3071
        %3151 = vst.msk [vmem:[#allocation3 + $0x1e8] sm:$0xff] %vm3135, %v3073
        %3152 = vst.msk [vmem:[#allocation3 + $0x208] sm:$0xff] %vm3135, %v3075
        %3153 = vst.msk [vmem:[#allocation3 + $0x228] sm:$0xff] %vm3135, %v3077
        %3154 = vst.msk [vmem:[#allocation3 + $0x248] sm:$0xff] %vm3135, %v3079
        %3155 = vst.msk [vmem:[#allocation3 + $0x268] sm:$0xff] %vm3135, %v3081
        %3156 = vst.msk [vmem:[#allocation3 + $0x288] sm:$0xff] %vm3135, %v3083
        %3157 = vst.msk [vmem:[#allocation3 + $0x2a8] sm:$0xff] %vm3135, %v3085
        %3158 = vst.msk [vmem:[#allocation3 + $0x2c8] sm:$0xff] %vm3135, %v3087
        %3159 = vst.msk [vmem:[#allocation3 + $0x2e8] sm:$0xff] %vm3135, %v3089
        %3160 = vst.msk [vmem:[#allocation3 + $0x308] sm:$0xff] %vm3135, %v3091
        %3161 = vst.msk [vmem:[#allocation3 + $0x328] sm:$0xff] %vm3135, %v3093
        %3162 = vst.msk [vmem:[#allocation3 + $0x348] sm:$0xff] %vm3135, %v3095
        %3163 = vst.msk [vmem:[#allocation3 + $0x368] sm:$0xff] %vm3135, %v3097
        %3164 = vst.msk [vmem:[#allocation3 + $0x388] sm:$0xff] %vm3135, %v3099
        %3165 = vst.msk [vmem:[#allocation3 + $0x3a8] sm:$0xff] %vm3135, %v3101
        %3166 = vst.msk [vmem:[#allocation3 + $0x3c8] sm:$0xff] %vm3135, %v3103
        %v3167 = vld [vmem:[#allocation2 + $0x15] sm:$0xff]
        %v3168 = vld [vmem:[#allocation2 + $0x1d] sm:$0xff]
        %v3169 = vld [vmem:[#allocation2 + $0x25] sm:$0xff]
        %v3170 = vld [vmem:[#allocation2 + $0x2d] sm:$0xff]
        %v3171 = vld [vmem:[#allocation2 + $0x35] sm:$0xff]
        %v3172 = vld [vmem:[#allocation2 + $0x3d] sm:$0xff]
        %v3173 = vld [vmem:[#allocation2 + $0x45] sm:$0xff]
        %v3174 = vld [vmem:[#allocation2 + $0x4d] sm:$0xff]
        %v3175 = vld [vmem:[#allocation2 + $0x55] sm:$0xff]
        %v3176 = vld [vmem:[#allocation2 + $0x5d] sm:$0xff]
        %v3177 = vld [vmem:[#allocation2 + $0x65] sm:$0xff]
        %v3178 = vld [vmem:[#allocation2 + $0x6d] sm:$0xff]
        %v3179 = vld [vmem:[#allocation2 + $0x75] sm:$0xff]
        %v3180 = vld [vmem:[#allocation2 + $0x7d] sm:$0xff]
        %v3181 = vld [vmem:[#allocation2 + $0x85] sm:$0xff]
        %v3182 = vld [vmem:[#allocation2 + $0x8d] sm:$0xff]
        %v3183 = vld [vmem:[#allocation2 + $0x95] sm:$0xff]
        %v3184 = vld [vmem:[#allocation2 + $0x9d] sm:$0xff]
        %v3185 = vld [vmem:[#allocation2 + $0xa5] sm:$0xff]
        %v3186 = vld [vmem:[#allocation2 + $0xad] sm:$0xff]
        %v3187 = vld [vmem:[#allocation2 + $0xb5] sm:$0xff]
        %v3188 = vld [vmem:[#allocation2 + $0xbd] sm:$0xff]
        %v3189 = vld [vmem:[#allocation2 + $0xc5] sm:$0xff]
        %v3190 = vld [vmem:[#allocation2 + $0xcd] sm:$0xff]
        %v3191 = vld [vmem:[#allocation2 + $0xd5] sm:$0xff]
        %v3192 = vld [vmem:[#allocation2 + $0xdd] sm:$0xff]
        %v3193 = vld [vmem:[#allocation2 + $0xe5] sm:$0xff]
        %v3194 = vld [vmem:[#allocation2 + $0xed] sm:$0xff]
        %v3195 = vld [vmem:[#allocation2 + $0xf5] sm:$0xff]
        %v3196 = vld [vmem:[#allocation2 + $0xfd] sm:$0xff]
        %v3197 = vld [vmem:[#allocation2 + $0x105] sm:$0xff]
        %3229 = vrot.lane.b32.xlu0 %v3167, 32
        %v3230 = vpop.permute.xlu0 %3229
        %3231 = vrot.lane.b32.xlu0 %v3168, 32
        %v3232 = vpop.permute.xlu0 %3231
        %3233 = vrot.lane.b32.xlu0 %v3169, 32
        %v3234 = vpop.permute.xlu0 %3233
        %3235 = vrot.lane.b32.xlu0 %v3170, 32
        %v3236 = vpop.permute.xlu0 %3235
        %3237 = vrot.lane.b32.xlu0 %v3171, 32
        %v3238 = vpop.permute.xlu0 %3237
        %3239 = vrot.lane.b32.xlu0 %v3172, 32
        %v3240 = vpop.permute.xlu0 %3239
        %3241 = vrot.lane.b32.xlu0 %v3173, 32
        %v3242 = vpop.permute.xlu0 %3241
        %3243 = vrot.lane.b32.xlu0 %v3174, 32
        %v3244 = vpop.permute.xlu0 %3243
        %3245 = vrot.lane.b32.xlu0 %v3175, 32
        %v3246 = vpop.permute.xlu0 %3245
        %3247 = vrot.lane.b32.xlu0 %v3176, 32
        %v3248 = vpop.permute.xlu0 %3247
        %3249 = vrot.lane.b32.xlu0 %v3177, 32
        %v3250 = vpop.permute.xlu0 %3249
        %3251 = vrot.lane.b32.xlu0 %v3178, 32
        %v3252 = vpop.permute.xlu0 %3251
        %3253 = vrot.lane.b32.xlu0 %v3179, 32
        %v3254 = vpop.permute.xlu0 %3253
        %3255 = vrot.lane.b32.xlu0 %v3180, 32
        %v3256 = vpop.permute.xlu0 %3255
        %3257 = vrot.lane.b32.xlu0 %v3181, 32
        %v3258 = vpop.permute.xlu0 %3257
        %3259 = vrot.lane.b32.xlu0 %v3182, 32
        %v3260 = vpop.permute.xlu0 %3259
        %3261 = vrot.lane.b32.xlu0 %v3183, 32
        %v3262 = vpop.permute.xlu0 %3261
        %3263 = vrot.lane.b32.xlu0 %v3184, 32
        %v3264 = vpop.permute.xlu0 %3263
        %3265 = vrot.lane.b32.xlu0 %v3185, 32
        %v3266 = vpop.permute.xlu0 %3265
        %3267 = vrot.lane.b32.xlu0 %v3186, 32
        %v3268 = vpop.permute.xlu0 %3267
        %3269 = vrot.lane.b32.xlu0 %v3187, 32
        %v3270 = vpop.permute.xlu0 %3269
        %3271 = vrot.lane.b32.xlu0 %v3188, 32
        %v3272 = vpop.permute.xlu0 %3271
        %3273 = vrot.lane.b32.xlu0 %v3189, 32
        %v3274 = vpop.permute.xlu0 %3273
        %3275 = vrot.lane.b32.xlu0 %v3190, 32
        %v3276 = vpop.permute.xlu0 %3275
        %3277 = vrot.lane.b32.xlu0 %v3191, 32
        %v3278 = vpop.permute.xlu0 %3277
        %3279 = vrot.lane.b32.xlu0 %v3192, 32
        %v3280 = vpop.permute.xlu0 %3279
        %3281 = vrot.lane.b32.xlu0 %v3193, 32
        %v3282 = vpop.permute.xlu0 %3281
        %3283 = vrot.lane.b32.xlu0 %v3194, 32
        %v3284 = vpop.permute.xlu0 %3283
        %3285 = vrot.lane.b32.xlu0 %v3195, 32
        %v3286 = vpop.permute.xlu0 %3285
        %3287 = vrot.lane.b32.xlu0 %v3196, 32
        %v3288 = vpop.permute.xlu0 %3287
        %3289 = vrot.lane.b32.xlu0 %v3197, 32
        %v3290 = vpop.permute.xlu0 %3289
        %vm3322 = vcmask 425216
        %3323 = vst.msk [vmem:[#allocation3 + $0x8] sm:$0xff] %vm3322, %v3230
        %3324 = vst.msk [vmem:[#allocation3 + $0x28] sm:$0xff] %vm3322, %v3232
        %3325 = vst.msk [vmem:[#allocation3 + $0x48] sm:$0xff] %vm3322, %v3234
        %3326 = vst.msk [vmem:[#allocation3 + $0x68] sm:$0xff] %vm3322, %v3236
        %3327 = vst.msk [vmem:[#allocation3 + $0x88] sm:$0xff] %vm3322, %v3238
        %3328 = vst.msk [vmem:[#allocation3 + $0xa8] sm:$0xff] %vm3322, %v3240
        %3329 = vst.msk [vmem:[#allocation3 + $0xc8] sm:$0xff] %vm3322, %v3242
        %3330 = vst.msk [vmem:[#allocation3 + $0xe8] sm:$0xff] %vm3322, %v3244
        %3331 = vst.msk [vmem:[#allocation3 + $0x108] sm:$0xff] %vm3322, %v3246
        %3332 = vst.msk [vmem:[#allocation3 + $0x128] sm:$0xff] %vm3322, %v3248
        %3333 = vst.msk [vmem:[#allocation3 + $0x148] sm:$0xff] %vm3322, %v3250
        %3334 = vst.msk [vmem:[#allocation3 + $0x168] sm:$0xff] %vm3322, %v3252
        %3335 = vst.msk [vmem:[#allocation3 + $0x188] sm:$0xff] %vm3322, %v3254
        %3336 = vst.msk [vmem:[#allocation3 + $0x1a8] sm:$0xff] %vm3322, %v3256
        %3337 = vst.msk [vmem:[#allocation3 + $0x1c8] sm:$0xff] %vm3322, %v3258
        %3338 = vst.msk [vmem:[#allocation3 + $0x1e8] sm:$0xff] %vm3322, %v3260
        %3339 = vst.msk [vmem:[#allocation3 + $0x208] sm:$0xff] %vm3322, %v3262
        %3340 = vst.msk [vmem:[#allocation3 + $0x228] sm:$0xff] %vm3322, %v3264
        %3341 = vst.msk [vmem:[#allocation3 + $0x248] sm:$0xff] %vm3322, %v3266
        %3342 = vst.msk [vmem:[#allocation3 + $0x268] sm:$0xff] %vm3322, %v3268
        %3343 = vst.msk [vmem:[#allocation3 + $0x288] sm:$0xff] %vm3322, %v3270
        %3344 = vst.msk [vmem:[#allocation3 + $0x2a8] sm:$0xff] %vm3322, %v3272
        %3345 = vst.msk [vmem:[#allocation3 + $0x2c8] sm:$0xff] %vm3322, %v3274
        %3346 = vst.msk [vmem:[#allocation3 + $0x2e8] sm:$0xff] %vm3322, %v3276
        %3347 = vst.msk [vmem:[#allocation3 + $0x308] sm:$0xff] %vm3322, %v3278
        %3348 = vst.msk [vmem:[#allocation3 + $0x328] sm:$0xff] %vm3322, %v3280
        %3349 = vst.msk [vmem:[#allocation3 + $0x348] sm:$0xff] %vm3322, %v3282
        %3350 = vst.msk [vmem:[#allocation3 + $0x368] sm:$0xff] %vm3322, %v3284
        %3351 = vst.msk [vmem:[#allocation3 + $0x388] sm:$0xff] %vm3322, %v3286
        %3352 = vst.msk [vmem:[#allocation3 + $0x3a8] sm:$0xff] %vm3322, %v3288
        %3353 = vst.msk [vmem:[#allocation3 + $0x3c8] sm:$0xff] %vm3322, %v3290
        %v3354 = vld [vmem:[#allocation2 + $0x16] sm:$0xff]
        %v3355 = vld [vmem:[#allocation2 + $0x1e] sm:$0xff]
        %v3356 = vld [vmem:[#allocation2 + $0x26] sm:$0xff]
        %v3357 = vld [vmem:[#allocation2 + $0x2e] sm:$0xff]
        %v3358 = vld [vmem:[#allocation2 + $0x36] sm:$0xff]
        %v3359 = vld [vmem:[#allocation2 + $0x3e] sm:$0xff]
        %v3360 = vld [vmem:[#allocation2 + $0x46] sm:$0xff]
        %v3361 = vld [vmem:[#allocation2 + $0x4e] sm:$0xff]
        %v3362 = vld [vmem:[#allocation2 + $0x56] sm:$0xff]
        %v3363 = vld [vmem:[#allocation2 + $0x5e] sm:$0xff]
        %v3364 = vld [vmem:[#allocation2 + $0x66] sm:$0xff]
        %v3365 = vld [vmem:[#allocation2 + $0x6e] sm:$0xff]
        %v3366 = vld [vmem:[#allocation2 + $0x76] sm:$0xff]
        %v3367 = vld [vmem:[#allocation2 + $0x7e] sm:$0xff]
        %v3368 = vld [vmem:[#allocation2 + $0x86] sm:$0xff]
        %v3369 = vld [vmem:[#allocation2 + $0x8e] sm:$0xff]
        %v3370 = vld [vmem:[#allocation2 + $0x96] sm:$0xff]
        %v3371 = vld [vmem:[#allocation2 + $0x9e] sm:$0xff]
        %v3372 = vld [vmem:[#allocation2 + $0xa6] sm:$0xff]
        %v3373 = vld [vmem:[#allocation2 + $0xae] sm:$0xff]
        %v3374 = vld [vmem:[#allocation2 + $0xb6] sm:$0xff]
        %v3375 = vld [vmem:[#allocation2 + $0xbe] sm:$0xff]
        %v3376 = vld [vmem:[#allocation2 + $0xc6] sm:$0xff]
        %v3377 = vld [vmem:[#allocation2 + $0xce] sm:$0xff]
        %v3378 = vld [vmem:[#allocation2 + $0xd6] sm:$0xff]
        %v3379 = vld [vmem:[#allocation2 + $0xde] sm:$0xff]
        %v3380 = vld [vmem:[#allocation2 + $0xe6] sm:$0xff]
        %v3381 = vld [vmem:[#allocation2 + $0xee] sm:$0xff]
        %v3382 = vld [vmem:[#allocation2 + $0xf6] sm:$0xff]
        %v3383 = vld [vmem:[#allocation2 + $0xfe] sm:$0xff]
        %v3384 = vld [vmem:[#allocation2 + $0x106] sm:$0xff]
        %3416 = vrot.lane.b32.xlu0 %v3354, 52
        %v3417 = vpop.permute.xlu0 %3416
        %3418 = vrot.lane.b32.xlu0 %v3355, 52
        %v3419 = vpop.permute.xlu0 %3418
        %3420 = vrot.lane.b32.xlu0 %v3356, 52
        %v3421 = vpop.permute.xlu0 %3420
        %3422 = vrot.lane.b32.xlu0 %v3357, 52
        %v3423 = vpop.permute.xlu0 %3422
        %3424 = vrot.lane.b32.xlu0 %v3358, 52
        %v3425 = vpop.permute.xlu0 %3424
        %3426 = vrot.lane.b32.xlu0 %v3359, 52
        %v3427 = vpop.permute.xlu0 %3426
        %3428 = vrot.lane.b32.xlu0 %v3360, 52
        %v3429 = vpop.permute.xlu0 %3428
        %3430 = vrot.lane.b32.xlu0 %v3361, 52
        %v3431 = vpop.permute.xlu0 %3430
        %3432 = vrot.lane.b32.xlu0 %v3362, 52
        %v3433 = vpop.permute.xlu0 %3432
        %3434 = vrot.lane.b32.xlu0 %v3363, 52
        %v3435 = vpop.permute.xlu0 %3434
        %3436 = vrot.lane.b32.xlu0 %v3364, 52
        %v3437 = vpop.permute.xlu0 %3436
        %3438 = vrot.lane.b32.xlu0 %v3365, 52
        %v3439 = vpop.permute.xlu0 %3438
        %3440 = vrot.lane.b32.xlu0 %v3366, 52
        %v3441 = vpop.permute.xlu0 %3440
        %3442 = vrot.lane.b32.xlu0 %v3367, 52
        %v3443 = vpop.permute.xlu0 %3442
        %3444 = vrot.lane.b32.xlu0 %v3368, 52
        %v3445 = vpop.permute.xlu0 %3444
        %3446 = vrot.lane.b32.xlu0 %v3369, 52
        %v3447 = vpop.permute.xlu0 %3446
        %3448 = vrot.lane.b32.xlu0 %v3370, 52
        %v3449 = vpop.permute.xlu0 %3448
        %3450 = vrot.lane.b32.xlu0 %v3371, 52
        %v3451 = vpop.permute.xlu0 %3450
        %3452 = vrot.lane.b32.xlu0 %v3372, 52
        %v3453 = vpop.permute.xlu0 %3452
        %3454 = vrot.lane.b32.xlu0 %v3373, 52
        %v3455 = vpop.permute.xlu0 %3454
        %3456 = vrot.lane.b32.xlu0 %v3374, 52
        %v3457 = vpop.permute.xlu0 %3456
        %3458 = vrot.lane.b32.xlu0 %v3375, 52
        %v3459 = vpop.permute.xlu0 %3458
        %3460 = vrot.lane.b32.xlu0 %v3376, 52
        %v3461 = vpop.permute.xlu0 %3460
        %3462 = vrot.lane.b32.xlu0 %v3377, 52
        %v3463 = vpop.permute.xlu0 %3462
        %3464 = vrot.lane.b32.xlu0 %v3378, 52
        %v3465 = vpop.permute.xlu0 %3464
        %3466 = vrot.lane.b32.xlu0 %v3379, 52
        %v3467 = vpop.permute.xlu0 %3466
        %3468 = vrot.lane.b32.xlu0 %v3380, 52
        %v3469 = vpop.permute.xlu0 %3468
        %3470 = vrot.lane.b32.xlu0 %v3381, 52
        %v3471 = vpop.permute.xlu0 %3470
        %3472 = vrot.lane.b32.xlu0 %v3382, 52
        %v3473 = vpop.permute.xlu0 %3472
        %3474 = vrot.lane.b32.xlu0 %v3383, 52
        %v3475 = vpop.permute.xlu0 %3474
        %3476 = vrot.lane.b32.xlu0 %v3384, 52
        %v3477 = vpop.permute.xlu0 %3476
        %vm3509 = vcmask 589216
        %3510 = vst.msk [vmem:[#allocation3 + $0x8] sm:$0xff] %vm3509, %v3417
        %3511 = vst.msk [vmem:[#allocation3 + $0x28] sm:$0xff] %vm3509, %v3419
        %3512 = vst.msk [vmem:[#allocation3 + $0x48] sm:$0xff] %vm3509, %v3421
        %3513 = vst.msk [vmem:[#allocation3 + $0x68] sm:$0xff] %vm3509, %v3423
        %3514 = vst.msk [vmem:[#allocation3 + $0x88] sm:$0xff] %vm3509, %v3425
        %3515 = vst.msk [vmem:[#allocation3 + $0xa8] sm:$0xff] %vm3509, %v3427
        %3516 = vst.msk [vmem:[#allocation3 + $0xc8] sm:$0xff] %vm3509, %v3429
        %3517 = vst.msk [vmem:[#allocation3 + $0xe8] sm:$0xff] %vm3509, %v3431
        %3518 = vst.msk [vmem:[#allocation3 + $0x108] sm:$0xff] %vm3509, %v3433
        %3519 = vst.msk [vmem:[#allocation3 + $0x128] sm:$0xff] %vm3509, %v3435
        %3520 = vst.msk [vmem:[#allocation3 + $0x148] sm:$0xff] %vm3509, %v3437
        %3521 = vst.msk [vmem:[#allocation3 + $0x168] sm:$0xff] %vm3509, %v3439
        %3522 = vst.msk [vmem:[#allocation3 + $0x188] sm:$0xff] %vm3509, %v3441
        %3523 = vst.msk [vmem:[#allocation3 + $0x1a8] sm:$0xff] %vm3509, %v3443
        %3524 = vst.msk [vmem:[#allocation3 + $0x1c8] sm:$0xff] %vm3509, %v3445
        %3525 = vst.msk [vmem:[#allocation3 + $0x1e8] sm:$0xff] %vm3509, %v3447
        %3526 = vst.msk [vmem:[#allocation3 + $0x208] sm:$0xff] %vm3509, %v3449
        %3527 = vst.msk [vmem:[#allocation3 + $0x228] sm:$0xff] %vm3509, %v3451
        %3528 = vst.msk [vmem:[#allocation3 + $0x248] sm:$0xff] %vm3509, %v3453
        %3529 = vst.msk [vmem:[#allocation3 + $0x268] sm:$0xff] %vm3509, %v3455
        %3530 = vst.msk [vmem:[#allocation3 + $0x288] sm:$0xff] %vm3509, %v3457
        %3531 = vst.msk [vmem:[#allocation3 + $0x2a8] sm:$0xff] %vm3509, %v3459
        %3532 = vst.msk [vmem:[#allocation3 + $0x2c8] sm:$0xff] %vm3509, %v3461
        %3533 = vst.msk [vmem:[#allocation3 + $0x2e8] sm:$0xff] %vm3509, %v3463
        %3534 = vst.msk [vmem:[#allocation3 + $0x308] sm:$0xff] %vm3509, %v3465
        %3535 = vst.msk [vmem:[#allocation3 + $0x328] sm:$0xff] %vm3509, %v3467
        %3536 = vst.msk [vmem:[#allocation3 + $0x348] sm:$0xff] %vm3509, %v3469
        %3537 = vst.msk [vmem:[#allocation3 + $0x368] sm:$0xff] %vm3509, %v3471
        %3538 = vst.msk [vmem:[#allocation3 + $0x388] sm:$0xff] %vm3509, %v3473
        %3539 = vst.msk [vmem:[#allocation3 + $0x3a8] sm:$0xff] %vm3509, %v3475
        %3540 = vst.msk [vmem:[#allocation3 + $0x3c8] sm:$0xff] %vm3509, %v3477
        %v3541 = vld [vmem:[#allocation2 + $0x24] sm:$0xff]
        %v3542 = vld [vmem:[#allocation2 + $0x2c] sm:$0xff]
        %v3543 = vld [vmem:[#allocation2 + $0x34] sm:$0xff]
        %v3544 = vld [vmem:[#allocation2 + $0x3c] sm:$0xff]
        %v3545 = vld [vmem:[#allocation2 + $0x44] sm:$0xff]
        %v3546 = vld [vmem:[#allocation2 + $0x4c] sm:$0xff]
        %v3547 = vld [vmem:[#allocation2 + $0x54] sm:$0xff]
        %v3548 = vld [vmem:[#allocation2 + $0x5c] sm:$0xff]
        %v3549 = vld [vmem:[#allocation2 + $0x64] sm:$0xff]
        %v3550 = vld [vmem:[#allocation2 + $0x6c] sm:$0xff]
        %v3551 = vld [vmem:[#allocation2 + $0x74] sm:$0xff]
        %v3552 = vld [vmem:[#allocation2 + $0x7c] sm:$0xff]
        %v3553 = vld [vmem:[#allocation2 + $0x84] sm:$0xff]
        %v3554 = vld [vmem:[#allocation2 + $0x8c] sm:$0xff]
        %v3555 = vld [vmem:[#allocation2 + $0x94] sm:$0xff]
        %v3556 = vld [vmem:[#allocation2 + $0x9c] sm:$0xff]
        %v3557 = vld [vmem:[#allocation2 + $0xa4] sm:$0xff]
        %v3558 = vld [vmem:[#allocation2 + $0xac] sm:$0xff]
        %v3559 = vld [vmem:[#allocation2 + $0xb4] sm:$0xff]
        %v3560 = vld [vmem:[#allocation2 + $0xbc] sm:$0xff]
        %v3561 = vld [vmem:[#allocation2 + $0xc4] sm:$0xff]
        %v3562 = vld [vmem:[#allocation2 + $0xcc] sm:$0xff]
        %v3563 = vld [vmem:[#allocation2 + $0xd4] sm:$0xff]
        %v3564 = vld [vmem:[#allocation2 + $0xdc] sm:$0xff]
        %v3565 = vld [vmem:[#allocation2 + $0xe4] sm:$0xff]
        %v3566 = vld [vmem:[#allocation2 + $0xec] sm:$0xff]
        %v3567 = vld [vmem:[#allocation2 + $0xf4] sm:$0xff]
        %v3568 = vld [vmem:[#allocation2 + $0xfc] sm:$0xff]
        %v3569 = vld [vmem:[#allocation2 + $0x104] sm:$0xff]
        %v3570 = vld [vmem:[#allocation2 + $0x10c] sm:$0xff]
        %v3571 = vld [vmem:[#allocation2 + $0x114] sm:$0xff]
        %3603 = vrot.lane.b32.xlu0 %v3541, 72
        %v3604 = vpop.permute.xlu0 %3603
        %3605 = vrot.lane.b32.xlu0 %v3542, 72
        %v3606 = vpop.permute.xlu0 %3605
        %3607 = vrot.lane.b32.xlu0 %v3543, 72
        %v3608 = vpop.permute.xlu0 %3607
        %3609 = vrot.lane.b32.xlu0 %v3544, 72
        %v3610 = vpop.permute.xlu0 %3609
        %3611 = vrot.lane.b32.xlu0 %v3545, 72
        %v3612 = vpop.permute.xlu0 %3611
        %3613 = vrot.lane.b32.xlu0 %v3546, 72
        %v3614 = vpop.permute.xlu0 %3613
        %3615 = vrot.lane.b32.xlu0 %v3547, 72
        %v3616 = vpop.permute.xlu0 %3615
        %3617 = vrot.lane.b32.xlu0 %v3548, 72
        %v3618 = vpop.permute.xlu0 %3617
        %3619 = vrot.lane.b32.xlu0 %v3549, 72
        %v3620 = vpop.permute.xlu0 %3619
        %3621 = vrot.lane.b32.xlu0 %v3550, 72
        %v3622 = vpop.permute.xlu0 %3621
        %3623 = vrot.lane.b32.xlu0 %v3551, 72
        %v3624 = vpop.permute.xlu0 %3623
        %3625 = vrot.lane.b32.xlu0 %v3552, 72
        %v3626 = vpop.permute.xlu0 %3625
        %3627 = vrot.lane.b32.xlu0 %v3553, 72
        %v3628 = vpop.permute.xlu0 %3627
        %3629 = vrot.lane.b32.xlu0 %v3554, 72
        %v3630 = vpop.permute.xlu0 %3629
        %3631 = vrot.lane.b32.xlu0 %v3555, 72
        %v3632 = vpop.permute.xlu0 %3631
        %3633 = vrot.lane.b32.xlu0 %v3556, 72
        %v3634 = vpop.permute.xlu0 %3633
        %3635 = vrot.lane.b32.xlu0 %v3557, 72
        %v3636 = vpop.permute.xlu0 %3635
        %3637 = vrot.lane.b32.xlu0 %v3558, 72
        %v3638 = vpop.permute.xlu0 %3637
        %3639 = vrot.lane.b32.xlu0 %v3559, 72
        %v3640 = vpop.permute.xlu0 %3639
        %3641 = vrot.lane.b32.xlu0 %v3560, 72
        %v3642 = vpop.permute.xlu0 %3641
        %3643 = vrot.lane.b32.xlu0 %v3561, 72
        %v3644 = vpop.permute.xlu0 %3643
        %3645 = vrot.lane.b32.xlu0 %v3562, 72
        %v3646 = vpop.permute.xlu0 %3645
        %3647 = vrot.lane.b32.xlu0 %v3563, 72
        %v3648 = vpop.permute.xlu0 %3647
        %3649 = vrot.lane.b32.xlu0 %v3564, 72
        %v3650 = vpop.permute.xlu0 %3649
        %3651 = vrot.lane.b32.xlu0 %v3565, 72
        %v3652 = vpop.permute.xlu0 %3651
        %3653 = vrot.lane.b32.xlu0 %v3566, 72
        %v3654 = vpop.permute.xlu0 %3653
        %3655 = vrot.lane.b32.xlu0 %v3567, 72
        %v3656 = vpop.permute.xlu0 %3655
        %3657 = vrot.lane.b32.xlu0 %v3568, 72
        %v3658 = vpop.permute.xlu0 %3657
        %3659 = vrot.lane.b32.xlu0 %v3569, 72
        %v3660 = vpop.permute.xlu0 %3659
        %3661 = vrot.lane.b32.xlu0 %v3570, 72
        %v3662 = vpop.permute.xlu0 %3661
        %3663 = vrot.lane.b32.xlu0 %v3571, 72
        %v3664 = vpop.permute.xlu0 %3663
        %vm3696 = vcmask 753216
        %3697 = vst.msk [vmem:[#allocation3 + $0x8] sm:$0xff] %vm3696, %v3604
        %3698 = vst.msk [vmem:[#allocation3 + $0x28] sm:$0xff] %vm3696, %v3606
        %3699 = vst.msk [vmem:[#allocation3 + $0x48] sm:$0xff] %vm3696, %v3608
        %3700 = vst.msk [vmem:[#allocation3 + $0x68] sm:$0xff] %vm3696, %v3610
        %3701 = vst.msk [vmem:[#allocation3 + $0x88] sm:$0xff] %vm3696, %v3612
        %3702 = vst.msk [vmem:[#allocation3 + $0xa8] sm:$0xff] %vm3696, %v3614
        %3703 = vst.msk [vmem:[#allocation3 + $0xc8] sm:$0xff] %vm3696, %v3616
        %3704 = vst.msk [vmem:[#allocation3 + $0xe8] sm:$0xff] %vm3696, %v3618
        %3705 = vst.msk [vmem:[#allocation3 + $0x108] sm:$0xff] %vm3696, %v3620
        %3706 = vst.msk [vmem:[#allocation3 + $0x128] sm:$0xff] %vm3696, %v3622
        %3707 = vst.msk [vmem:[#allocation3 + $0x148] sm:$0xff] %vm3696, %v3624
        %3708 = vst.msk [vmem:[#allocation3 + $0x168] sm:$0xff] %vm3696, %v3626
        %3709 = vst.msk [vmem:[#allocation3 + $0x188] sm:$0xff] %vm3696, %v3628
        %3710 = vst.msk [vmem:[#allocation3 + $0x1a8] sm:$0xff] %vm3696, %v3630
        %3711 = vst.msk [vmem:[#allocation3 + $0x1c8] sm:$0xff] %vm3696, %v3632
        %3712 = vst.msk [vmem:[#allocation3 + $0x1e8] sm:$0xff] %vm3696, %v3634
        %3713 = vst.msk [vmem:[#allocation3 + $0x208] sm:$0xff] %vm3696, %v3636
        %3714 = vst.msk [vmem:[#allocation3 + $0x228] sm:$0xff] %vm3696, %v3638
        %3715 = vst.msk [vmem:[#allocation3 + $0x248] sm:$0xff] %vm3696, %v3640
        %3716 = vst.msk [vmem:[#allocation3 + $0x268] sm:$0xff] %vm3696, %v3642
        %3717 = vst.msk [vmem:[#allocation3 + $0x288] sm:$0xff] %vm3696, %v3644
        %3718 = vst.msk [vmem:[#allocation3 + $0x2a8] sm:$0xff] %vm3696, %v3646
        %3719 = vst.msk [vmem:[#allocation3 + $0x2c8] sm:$0xff] %vm3696, %v3648
        %3720 = vst.msk [vmem:[#allocation3 + $0x2e8] sm:$0xff] %vm3696, %v3650
        %3721 = vst.msk [vmem:[#allocation3 + $0x308] sm:$0xff] %vm3696, %v3652
        %3722 = vst.msk [vmem:[#allocation3 + $0x328] sm:$0xff] %vm3696, %v3654
        %3723 = vst.msk [vmem:[#allocation3 + $0x348] sm:$0xff] %vm3696, %v3656
        %3724 = vst.msk [vmem:[#allocation3 + $0x368] sm:$0xff] %vm3696, %v3658
        %3725 = vst.msk [vmem:[#allocation3 + $0x388] sm:$0xff] %vm3696, %v3660
        %3726 = vst.msk [vmem:[#allocation3 + $0x3a8] sm:$0xff] %vm3696, %v3662
        %3727 = vst.msk [vmem:[#allocation3 + $0x3c8] sm:$0xff] %vm3696, %v3664
        %v3728 = vld [vmem:[#allocation2 + $0x25] sm:$0xff]
        %v3729 = vld [vmem:[#allocation2 + $0x2d] sm:$0xff]
        %v3730 = vld [vmem:[#allocation2 + $0x35] sm:$0xff]
        %v3731 = vld [vmem:[#allocation2 + $0x3d] sm:$0xff]
        %v3732 = vld [vmem:[#allocation2 + $0x45] sm:$0xff]
        %v3733 = vld [vmem:[#allocation2 + $0x4d] sm:$0xff]
        %v3734 = vld [vmem:[#allocation2 + $0x55] sm:$0xff]
        %v3735 = vld [vmem:[#allocation2 + $0x5d] sm:$0xff]
        %v3736 = vld [vmem:[#allocation2 + $0x65] sm:$0xff]
        %v3737 = vld [vmem:[#allocation2 + $0x6d] sm:$0xff]
        %v3738 = vld [vmem:[#allocation2 + $0x75] sm:$0xff]
        %v3739 = vld [vmem:[#allocation2 + $0x7d] sm:$0xff]
        %v3740 = vld [vmem:[#allocation2 + $0x85] sm:$0xff]
        %v3741 = vld [vmem:[#allocation2 + $0x8d] sm:$0xff]
        %v3742 = vld [vmem:[#allocation2 + $0x95] sm:$0xff]
        %v3743 = vld [vmem:[#allocation2 + $0x9d] sm:$0xff]
        %v3744 = vld [vmem:[#allocation2 + $0xa5] sm:$0xff]
        %v3745 = vld [vmem:[#allocation2 + $0xad] sm:$0xff]
        %v3746 = vld [vmem:[#allocation2 + $0xb5] sm:$0xff]
        %v3747 = vld [vmem:[#allocation2 + $0xbd] sm:$0xff]
        %v3748 = vld [vmem:[#allocation2 + $0xc5] sm:$0xff]
        %v3749 = vld [vmem:[#allocation2 + $0xcd] sm:$0xff]
        %v3750 = vld [vmem:[#allocation2 + $0xd5] sm:$0xff]
        %v3751 = vld [vmem:[#allocation2 + $0xdd] sm:$0xff]
        %v3752 = vld [vmem:[#allocation2 + $0xe5] sm:$0xff]
        %v3753 = vld [vmem:[#allocation2 + $0xed] sm:$0xff]
        %v3754 = vld [vmem:[#allocation2 + $0xf5] sm:$0xff]
        %v3755 = vld [vmem:[#allocation2 + $0xfd] sm:$0xff]
        %v3756 = vld [vmem:[#allocation2 + $0x105] sm:$0xff]
        %v3757 = vld [vmem:[#allocation2 + $0x10d] sm:$0xff]
        %v3758 = vld [vmem:[#allocation2 + $0x115] sm:$0xff]
        %3790 = vrot.lane.b32.xlu0 %v3728, 92
        %v3791 = vpop.permute.xlu0 %3790
        %3792 = vrot.lane.b32.xlu0 %v3729, 92
        %v3793 = vpop.permute.xlu0 %3792
        %3794 = vrot.lane.b32.xlu0 %v3730, 92
        %v3795 = vpop.permute.xlu0 %3794
        %3796 = vrot.lane.b32.xlu0 %v3731, 92
        %v3797 = vpop.permute.xlu0 %3796
        %3798 = vrot.lane.b32.xlu0 %v3732, 92
        %v3799 = vpop.permute.xlu0 %3798
        %3800 = vrot.lane.b32.xlu0 %v3733, 92
        %v3801 = vpop.permute.xlu0 %3800
        %3802 = vrot.lane.b32.xlu0 %v3734, 92
        %v3803 = vpop.permute.xlu0 %3802
        %3804 = vrot.lane.b32.xlu0 %v3735, 92
        %v3805 = vpop.permute.xlu0 %3804
        %3806 = vrot.lane.b32.xlu0 %v3736, 92
        %v3807 = vpop.permute.xlu0 %3806
        %3808 = vrot.lane.b32.xlu0 %v3737, 92
        %v3809 = vpop.permute.xlu0 %3808
        %3810 = vrot.lane.b32.xlu0 %v3738, 92
        %v3811 = vpop.permute.xlu0 %3810
        %3812 = vrot.lane.b32.xlu0 %v3739, 92
        %v3813 = vpop.permute.xlu0 %3812
        %3814 = vrot.lane.b32.xlu0 %v3740, 92
        %v3815 = vpop.permute.xlu0 %3814
        %3816 = vrot.lane.b32.xlu0 %v3741, 92
        %v3817 = vpop.permute.xlu0 %3816
        %3818 = vrot.lane.b32.xlu0 %v3742, 92
        %v3819 = vpop.permute.xlu0 %3818
        %3820 = vrot.lane.b32.xlu0 %v3743, 92
        %v3821 = vpop.permute.xlu0 %3820
        %3822 = vrot.lane.b32.xlu0 %v3744, 92
        %v3823 = vpop.permute.xlu0 %3822
        %3824 = vrot.lane.b32.xlu0 %v3745, 92
        %v3825 = vpop.permute.xlu0 %3824
        %3826 = vrot.lane.b32.xlu0 %v3746, 92
        %v3827 = vpop.permute.xlu0 %3826
        %3828 = vrot.lane.b32.xlu0 %v3747, 92
        %v3829 = vpop.permute.xlu0 %3828
        %3830 = vrot.lane.b32.xlu0 %v3748, 92
        %v3831 = vpop.permute.xlu0 %3830
        %3832 = vrot.lane.b32.xlu0 %v3749, 92
        %v3833 = vpop.permute.xlu0 %3832
        %3834 = vrot.lane.b32.xlu0 %v3750, 92
        %v3835 = vpop.permute.xlu0 %3834
        %3836 = vrot.lane.b32.xlu0 %v3751, 92
        %v3837 = vpop.permute.xlu0 %3836
        %3838 = vrot.lane.b32.xlu0 %v3752, 92
        %v3839 = vpop.permute.xlu0 %3838
        %3840 = vrot.lane.b32.xlu0 %v3753, 92
        %v3841 = vpop.permute.xlu0 %3840
        %3842 = vrot.lane.b32.xlu0 %v3754, 92
        %v3843 = vpop.permute.xlu0 %3842
        %3844 = vrot.lane.b32.xlu0 %v3755, 92
        %v3845 = vpop.permute.xlu0 %3844
        %3846 = vrot.lane.b32.xlu0 %v3756, 92
        %v3847 = vpop.permute.xlu0 %3846
        %3848 = vrot.lane.b32.xlu0 %v3757, 92
        %v3849 = vpop.permute.xlu0 %3848
        %3850 = vrot.lane.b32.xlu0 %v3758, 92
        %v3851 = vpop.permute.xlu0 %3850
        %vm3883 = vcmask 917216
        %3884 = vst.msk [vmem:[#allocation3 + $0x8] sm:$0xff] %vm3883, %v3791
        %3885 = vst.msk [vmem:[#allocation3 + $0x28] sm:$0xff] %vm3883, %v3793
        %3886 = vst.msk [vmem:[#allocation3 + $0x48] sm:$0xff] %vm3883, %v3795
        %3887 = vst.msk [vmem:[#allocation3 + $0x68] sm:$0xff] %vm3883, %v3797
        %3888 = vst.msk [vmem:[#allocation3 + $0x88] sm:$0xff] %vm3883, %v3799
        %3889 = vst.msk [vmem:[#allocation3 + $0xa8] sm:$0xff] %vm3883, %v3801
        %3890 = vst.msk [vmem:[#allocation3 + $0xc8] sm:$0xff] %vm3883, %v3803
        %3891 = vst.msk [vmem:[#allocation3 + $0xe8] sm:$0xff] %vm3883, %v3805
        %3892 = vst.msk [vmem:[#allocation3 + $0x108] sm:$0xff] %vm3883, %v3807
        %3893 = vst.msk [vmem:[#allocation3 + $0x128] sm:$0xff] %vm3883, %v3809
        %3894 = vst.msk [vmem:[#allocation3 + $0x148] sm:$0xff] %vm3883, %v3811
        %3895 = vst.msk [vmem:[#allocation3 + $0x168] sm:$0xff] %vm3883, %v3813
        %3896 = vst.msk [vmem:[#allocation3 + $0x188] sm:$0xff] %vm3883, %v3815
        %3897 = vst.msk [vmem:[#allocation3 + $0x1a8] sm:$0xff] %vm3883, %v3817
        %3898 = vst.msk [vmem:[#allocation3 + $0x1c8] sm:$0xff] %vm3883, %v3819
        %3899 = vst.msk [vmem:[#allocation3 + $0x1e8] sm:$0xff] %vm3883, %v3821
        %3900 = vst.msk [vmem:[#allocation3 + $0x208] sm:$0xff] %vm3883, %v3823
        %3901 = vst.msk [vmem:[#allocation3 + $0x228] sm:$0xff] %vm3883, %v3825
        %3902 = vst.msk [vmem:[#allocation3 + $0x248] sm:$0xff] %vm3883, %v3827
        %3903 = vst.msk [vmem:[#allocation3 + $0x268] sm:$0xff] %vm3883, %v3829
        %3904 = vst.msk [vmem:[#allocation3 + $0x288] sm:$0xff] %vm3883, %v3831
        %3905 = vst.msk [vmem:[#allocation3 + $0x2a8] sm:$0xff] %vm3883, %v3833
        %3906 = vst.msk [vmem:[#allocation3 + $0x2c8] sm:$0xff] %vm3883, %v3835
        %3907 = vst.msk [vmem:[#allocation3 + $0x2e8] sm:$0xff] %vm3883, %v3837
        %3908 = vst.msk [vmem:[#allocation3 + $0x308] sm:$0xff] %vm3883, %v3839
        %3909 = vst.msk [vmem:[#allocation3 + $0x328] sm:$0xff] %vm3883, %v3841
        %3910 = vst.msk [vmem:[#allocation3 + $0x348] sm:$0xff] %vm3883, %v3843
        %3911 = vst.msk [vmem:[#allocation3 + $0x368] sm:$0xff] %vm3883, %v3845
        %3912 = vst.msk [vmem:[#allocation3 + $0x388] sm:$0xff] %vm3883, %v3847
        %3913 = vst.msk [vmem:[#allocation3 + $0x3a8] sm:$0xff] %vm3883, %v3849
        %3914 = vst.msk [vmem:[#allocation3 + $0x3c8] sm:$0xff] %vm3883, %v3851
        %v3915 = vld [vmem:[#allocation2 + $0x26] sm:$0xff]
        %v3916 = vld [vmem:[#allocation2 + $0x2e] sm:$0xff]
        %v3917 = vld [vmem:[#allocation2 + $0x36] sm:$0xff]
        %v3918 = vld [vmem:[#allocation2 + $0x3e] sm:$0xff]
        %v3919 = vld [vmem:[#allocation2 + $0x46] sm:$0xff]
        %v3920 = vld [vmem:[#allocation2 + $0x4e] sm:$0xff]
        %v3921 = vld [vmem:[#allocation2 + $0x56] sm:$0xff]
        %v3922 = vld [vmem:[#allocation2 + $0x5e] sm:$0xff]
        %v3923 = vld [vmem:[#allocation2 + $0x66] sm:$0xff]
        %v3924 = vld [vmem:[#allocation2 + $0x6e] sm:$0xff]
        %v3925 = vld [vmem:[#allocation2 + $0x76] sm:$0xff]
        %v3926 = vld [vmem:[#allocation2 + $0x7e] sm:$0xff]
        %v3927 = vld [vmem:[#allocation2 + $0x86] sm:$0xff]
        %v3928 = vld [vmem:[#allocation2 + $0x8e] sm:$0xff]
        %v3929 = vld [vmem:[#allocation2 + $0x96] sm:$0xff]
        %v3930 = vld [vmem:[#allocation2 + $0x9e] sm:$0xff]
        %v3931 = vld [vmem:[#allocation2 + $0xa6] sm:$0xff]
        %v3932 = vld [vmem:[#allocation2 + $0xae] sm:$0xff]
        %v3933 = vld [vmem:[#allocation2 + $0xb6] sm:$0xff]
        %v3934 = vld [vmem:[#allocation2 + $0xbe] sm:$0xff]
        %v3935 = vld [vmem:[#allocation2 + $0xc6] sm:$0xff]
        %v3936 = vld [vmem:[#allocation2 + $0xce] sm:$0xff]
        %v3937 = vld [vmem:[#allocation2 + $0xd6] sm:$0xff]
        %v3938 = vld [vmem:[#allocation2 + $0xde] sm:$0xff]
        %v3939 = vld [vmem:[#allocation2 + $0xe6] sm:$0xff]
        %v3940 = vld [vmem:[#allocation2 + $0xee] sm:$0xff]
        %v3941 = vld [vmem:[#allocation2 + $0xf6] sm:$0xff]
        %v3942 = vld [vmem:[#allocation2 + $0xfe] sm:$0xff]
        %v3943 = vld [vmem:[#allocation2 + $0x106] sm:$0xff]
        %v3944 = vld [vmem:[#allocation2 + $0x10e] sm:$0xff]
        %v3945 = vld [vmem:[#allocation2 + $0x116] sm:$0xff]
        %3977 = vrot.lane.b32.xlu0 %v3915, 112
        %v3978 = vpop.permute.xlu0 %3977
        %3979 = vrot.lane.b32.xlu0 %v3916, 112
        %v3980 = vpop.permute.xlu0 %3979
        %3981 = vrot.lane.b32.xlu0 %v3917, 112
        %v3982 = vpop.permute.xlu0 %3981
        %3983 = vrot.lane.b32.xlu0 %v3918, 112
        %v3984 = vpop.permute.xlu0 %3983
        %3985 = vrot.lane.b32.xlu0 %v3919, 112
        %v3986 = vpop.permute.xlu0 %3985
        %3987 = vrot.lane.b32.xlu0 %v3920, 112
        %v3988 = vpop.permute.xlu0 %3987
        %3989 = vrot.lane.b32.xlu0 %v3921, 112
        %v3990 = vpop.permute.xlu0 %3989
        %3991 = vrot.lane.b32.xlu0 %v3922, 112
        %v3992 = vpop.permute.xlu0 %3991
        %3993 = vrot.lane.b32.xlu0 %v3923, 112
        %v3994 = vpop.permute.xlu0 %3993
        %3995 = vrot.lane.b32.xlu0 %v3924, 112
        %v3996 = vpop.permute.xlu0 %3995
        %3997 = vrot.lane.b32.xlu0 %v3925, 112
        %v3998 = vpop.permute.xlu0 %3997
        %3999 = vrot.lane.b32.xlu0 %v3926, 112
        %v4000 = vpop.permute.xlu0 %3999
        %4001 = vrot.lane.b32.xlu0 %v3927, 112
        %v4002 = vpop.permute.xlu0 %4001
        %4003 = vrot.lane.b32.xlu0 %v3928, 112
        %v4004 = vpop.permute.xlu0 %4003
        %4005 = vrot.lane.b32.xlu0 %v3929, 112
        %v4006 = vpop.permute.xlu0 %4005
        %4007 = vrot.lane.b32.xlu0 %v3930, 112
        %v4008 = vpop.permute.xlu0 %4007
        %4009 = vrot.lane.b32.xlu0 %v3931, 112
        %v4010 = vpop.permute.xlu0 %4009
        %4011 = vrot.lane.b32.xlu0 %v3932, 112
        %v4012 = vpop.permute.xlu0 %4011
        %4013 = vrot.lane.b32.xlu0 %v3933, 112
        %v4014 = vpop.permute.xlu0 %4013
        %4015 = vrot.lane.b32.xlu0 %v3934, 112
        %v4016 = vpop.permute.xlu0 %4015
        %4017 = vrot.lane.b32.xlu0 %v3935, 112
        %v4018 = vpop.permute.xlu0 %4017
        %4019 = vrot.lane.b32.xlu0 %v3936, 112
        %v4020 = vpop.permute.xlu0 %4019
        %4021 = vrot.lane.b32.xlu0 %v3937, 112
        %v4022 = vpop.permute.xlu0 %4021
        %4023 = vrot.lane.b32.xlu0 %v3938, 112
        %v4024 = vpop.permute.xlu0 %4023
        %4025 = vrot.lane.b32.xlu0 %v3939, 112
        %v4026 = vpop.permute.xlu0 %4025
        %4027 = vrot.lane.b32.xlu0 %v3940, 112
        %v4028 = vpop.permute.xlu0 %4027
        %4029 = vrot.lane.b32.xlu0 %v3941, 112
        %v4030 = vpop.permute.xlu0 %4029
        %4031 = vrot.lane.b32.xlu0 %v3942, 112
        %v4032 = vpop.permute.xlu0 %4031
        %4033 = vrot.lane.b32.xlu0 %v3943, 112
        %v4034 = vpop.permute.xlu0 %4033
        %4035 = vrot.lane.b32.xlu0 %v3944, 112
        %v4036 = vpop.permute.xlu0 %4035
        %4037 = vrot.lane.b32.xlu0 %v3945, 112
        %v4038 = vpop.permute.xlu0 %4037
        %vm4070 = vcmask 1048448
        %4071 = vst.msk [vmem:[#allocation3 + $0x8] sm:$0xff] %vm4070, %v3978
        %vm4072 = vcmask 31744
        %4073 = vst.msk [vmem:[#allocation3 + $0x10] sm:$0xff] %vm4072, %v3978
        %4074 = vst.msk [vmem:[#allocation3 + $0x28] sm:$0xff] %vm4070, %v3980
        %4075 = vst.msk [vmem:[#allocation3 + $0x30] sm:$0xff] %vm4072, %v3980
        %4076 = vst.msk [vmem:[#allocation3 + $0x48] sm:$0xff] %vm4070, %v3982
        %4077 = vst.msk [vmem:[#allocation3 + $0x50] sm:$0xff] %vm4072, %v3982
        %4078 = vst.msk [vmem:[#allocation3 + $0x68] sm:$0xff] %vm4070, %v3984
        %4079 = vst.msk [vmem:[#allocation3 + $0x70] sm:$0xff] %vm4072, %v3984
        %4080 = vst.msk [vmem:[#allocation3 + $0x88] sm:$0xff] %vm4070, %v3986
        %4081 = vst.msk [vmem:[#allocation3 + $0x90] sm:$0xff] %vm4072, %v3986
        %4082 = vst.msk [vmem:[#allocation3 + $0xa8] sm:$0xff] %vm4070, %v3988
        %4083 = vst.msk [vmem:[#allocation3 + $0xb0] sm:$0xff] %vm4072, %v3988
        %4084 = vst.msk [vmem:[#allocation3 + $0xc8] sm:$0xff] %vm4070, %v3990
        %4085 = vst.msk [vmem:[#allocation3 + $0xd0] sm:$0xff] %vm4072, %v3990
        %4086 = vst.msk [vmem:[#allocation3 + $0xe8] sm:$0xff] %vm4070, %v3992
        %4087 = vst.msk [vmem:[#allocation3 + $0xf0] sm:$0xff] %vm4072, %v3992
        %4088 = vst.msk [vmem:[#allocation3 + $0x108] sm:$0xff] %vm4070, %v3994
        %4089 = vst.msk [vmem:[#allocation3 + $0x110] sm:$0xff] %vm4072, %v3994
        %4090 = vst.msk [vmem:[#allocation3 + $0x128] sm:$0xff] %vm4070, %v3996
        %4091 = vst.msk [vmem:[#allocation3 + $0x130] sm:$0xff] %vm4072, %v3996
        %4092 = vst.msk [vmem:[#allocation3 + $0x148] sm:$0xff] %vm4070, %v3998
        %4093 = vst.msk [vmem:[#allocation3 + $0x150] sm:$0xff] %vm4072, %v3998
        %4094 = vst.msk [vmem:[#allocation3 + $0x168] sm:$0xff] %vm4070, %v4000
        %4095 = vst.msk [vmem:[#allocation3 + $0x170] sm:$0xff] %vm4072, %v4000
        %4096 = vst.msk [vmem:[#allocation3 + $0x188] sm:$0xff] %vm4070, %v4002
        %4097 = vst.msk [vmem:[#allocation3 + $0x190] sm:$0xff] %vm4072, %v4002
        %4098 = vst.msk [vmem:[#allocation3 + $0x1a8] sm:$0xff] %vm4070, %v4004
        %4099 = vst.msk [vmem:[#allocation3 + $0x1b0] sm:$0xff] %vm4072, %v4004
        %4100 = vst.msk [vmem:[#allocation3 + $0x1c8] sm:$0xff] %vm4070, %v4006
        %4101 = vst.msk [vmem:[#allocation3 + $0x1d0] sm:$0xff] %vm4072, %v4006
        %4102 = vst.msk [vmem:[#allocation3 + $0x1e8] sm:$0xff] %vm4070, %v4008
        %4103 = vst.msk [vmem:[#allocation3 + $0x1f0] sm:$0xff] %vm4072, %v4008
        %4104 = vst.msk [vmem:[#allocation3 + $0x208] sm:$0xff] %vm4070, %v4010
        %4105 = vst.msk [vmem:[#allocation3 + $0x210] sm:$0xff] %vm4072, %v4010
        %4106 = vst.msk [vmem:[#allocation3 + $0x228] sm:$0xff] %vm4070, %v4012
        %4107 = vst.msk [vmem:[#allocation3 + $0x230] sm:$0xff] %vm4072, %v4012
        %4108 = vst.msk [vmem:[#allocation3 + $0x248] sm:$0xff] %vm4070, %v4014
        %4109 = vst.msk [vmem:[#allocation3 + $0x250] sm:$0xff] %vm4072, %v4014
        %4110 = vst.msk [vmem:[#allocation3 + $0x268] sm:$0xff] %vm4070, %v4016
        %4111 = vst.msk [vmem:[#allocation3 + $0x270] sm:$0xff] %vm4072, %v4016
        %4112 = vst.msk [vmem:[#allocation3 + $0x288] sm:$0xff] %vm4070, %v4018
        %4113 = vst.msk [vmem:[#allocation3 + $0x290] sm:$0xff] %vm4072, %v4018
        %4114 = vst.msk [vmem:[#allocation3 + $0x2a8] sm:$0xff] %vm4070, %v4020
        %4115 = vst.msk [vmem:[#allocation3 + $0x2b0] sm:$0xff] %vm4072, %v4020
        %4116 = vst.msk [vmem:[#allocation3 + $0x2c8] sm:$0xff] %vm4070, %v4022
        %4117 = vst.msk [vmem:[#allocation3 + $0x2d0] sm:$0xff] %vm4072, %v4022
        %4118 = vst.msk [vmem:[#allocation3 + $0x2e8] sm:$0xff] %vm4070, %v4024
        %4119 = vst.msk [vmem:[#allocation3 + $0x2f0] sm:$0xff] %vm4072, %v4024
        %4120 = vst.msk [vmem:[#allocation3 + $0x308] sm:$0xff] %vm4070, %v4026
        %4121 = vst.msk [vmem:[#allocation3 + $0x310] sm:$0xff] %vm4072, %v4026
        %4122 = vst.msk [vmem:[#allocation3 + $0x328] sm:$0xff] %vm4070, %v4028
        %4123 = vst.msk [vmem:[#allocation3 + $0x330] sm:$0xff] %vm4072, %v4028
        %4124 = vst.msk [vmem:[#allocation3 + $0x348] sm:$0xff] %vm4070, %v4030
        %4125 = vst.msk [vmem:[#allocation3 + $0x350] sm:$0xff] %vm4072, %v4030
        %4126 = vst.msk [vmem:[#allocation3 + $0x368] sm:$0xff] %vm4070, %v4032
        %4127 = vst.msk [vmem:[#allocation3 + $0x370] sm:$0xff] %vm4072, %v4032
        %4128 = vst.msk [vmem:[#allocation3 + $0x388] sm:$0xff] %vm4070, %v4034
        %4129 = vst.msk [vmem:[#allocation3 + $0x390] sm:$0xff] %vm4072, %v4034
        %4130 = vst.msk [vmem:[#allocation3 + $0x3a8] sm:$0xff] %vm4070, %v4036
        %4131 = vst.msk [vmem:[#allocation3 + $0x3b0] sm:$0xff] %vm4072, %v4036
        %4132 = vst.msk [vmem:[#allocation3 + $0x3c8] sm:$0xff] %vm4070, %v4038
        %4133 = vst.msk [vmem:[#allocation3 + $0x3d0] sm:$0xff] %vm4072, %v4038
        %v4134 = vld [vmem:[#allocation2 + $0x27] sm:$0xff]
        %v4135 = vld [vmem:[#allocation2 + $0x2f] sm:$0xff]
        %v4136 = vld [vmem:[#allocation2 + $0x37] sm:$0xff]
        %v4137 = vld [vmem:[#allocation2 + $0x3f] sm:$0xff]
        %v4138 = vld [vmem:[#allocation2 + $0x47] sm:$0xff]
        %v4139 = vld [vmem:[#allocation2 + $0x4f] sm:$0xff]
        %v4140 = vld [vmem:[#allocation2 + $0x57] sm:$0xff]
        %v4141 = vld [vmem:[#allocation2 + $0x5f] sm:$0xff]
        %v4142 = vld [vmem:[#allocation2 + $0x67] sm:$0xff]
        %v4143 = vld [vmem:[#allocation2 + $0x6f] sm:$0xff]
        %v4144 = vld [vmem:[#allocation2 + $0x77] sm:$0xff]
        %v4145 = vld [vmem:[#allocation2 + $0x7f] sm:$0xff]
        %v4146 = vld [vmem:[#allocation2 + $0x87] sm:$0xff]
        %v4147 = vld [vmem:[#allocation2 + $0x8f] sm:$0xff]
        %v4148 = vld [vmem:[#allocation2 + $0x97] sm:$0xff]
        %v4149 = vld [vmem:[#allocation2 + $0x9f] sm:$0xff]
        %v4150 = vld [vmem:[#allocation2 + $0xa7] sm:$0xff]
        %v4151 = vld [vmem:[#allocation2 + $0xaf] sm:$0xff]
        %v4152 = vld [vmem:[#allocation2 + $0xb7] sm:$0xff]
        %v4153 = vld [vmem:[#allocation2 + $0xbf] sm:$0xff]
        %v4154 = vld [vmem:[#allocation2 + $0xc7] sm:$0xff]
        %v4155 = vld [vmem:[#allocation2 + $0xcf] sm:$0xff]
        %v4156 = vld [vmem:[#allocation2 + $0xd7] sm:$0xff]
        %v4157 = vld [vmem:[#allocation2 + $0xdf] sm:$0xff]
        %v4158 = vld [vmem:[#allocation2 + $0xe7] sm:$0xff]
        %v4159 = vld [vmem:[#allocation2 + $0xef] sm:$0xff]
        %v4160 = vld [vmem:[#allocation2 + $0xf7] sm:$0xff]
        %v4161 = vld [vmem:[#allocation2 + $0xff] sm:$0xff]
        %v4162 = vld [vmem:[#allocation2 + $0x107] sm:$0xff]
        %v4163 = vld [vmem:[#allocation2 + $0x10f] sm:$0xff]
        %v4164 = vld [vmem:[#allocation2 + $0x117] sm:$0xff]
        %4196 = vrot.lane.b32.xlu0 %v4134, 4
        %v4197 = vpop.permute.xlu0 %4196
        %4198 = vrot.lane.b32.xlu0 %v4135, 4
        %v4199 = vpop.permute.xlu0 %4198
        %4200 = vrot.lane.b32.xlu0 %v4136, 4
        %v4201 = vpop.permute.xlu0 %4200
        %4202 = vrot.lane.b32.xlu0 %v4137, 4
        %v4203 = vpop.permute.xlu0 %4202
        %4204 = vrot.lane.b32.xlu0 %v4138, 4
        %v4205 = vpop.permute.xlu0 %4204
        %4206 = vrot.lane.b32.xlu0 %v4139, 4
        %v4207 = vpop.permute.xlu0 %4206
        %4208 = vrot.lane.b32.xlu0 %v4140, 4
        %v4209 = vpop.permute.xlu0 %4208
        %4210 = vrot.lane.b32.xlu0 %v4141, 4
        %v4211 = vpop.permute.xlu0 %4210
        %4212 = vrot.lane.b32.xlu0 %v4142, 4
        %v4213 = vpop.permute.xlu0 %4212
        %4214 = vrot.lane.b32.xlu0 %v4143, 4
        %v4215 = vpop.permute.xlu0 %4214
        %4216 = vrot.lane.b32.xlu0 %v4144, 4
        %v4217 = vpop.permute.xlu0 %4216
        %4218 = vrot.lane.b32.xlu0 %v4145, 4
        %v4219 = vpop.permute.xlu0 %4218
        %4220 = vrot.lane.b32.xlu0 %v4146, 4
        %v4221 = vpop.permute.xlu0 %4220
        %4222 = vrot.lane.b32.xlu0 %v4147, 4
        %v4223 = vpop.permute.xlu0 %4222
        %4224 = vrot.lane.b32.xlu0 %v4148, 4
        %v4225 = vpop.permute.xlu0 %4224
        %4226 = vrot.lane.b32.xlu0 %v4149, 4
        %v4227 = vpop.permute.xlu0 %4226
        %4228 = vrot.lane.b32.xlu0 %v4150, 4
        %v4229 = vpop.permute.xlu0 %4228
        %4230 = vrot.lane.b32.xlu0 %v4151, 4
        %v4231 = vpop.permute.xlu0 %4230
        %4232 = vrot.lane.b32.xlu0 %v4152, 4
        %v4233 = vpop.permute.xlu0 %4232
        %4234 = vrot.lane.b32.xlu0 %v4153, 4
        %v4235 = vpop.permute.xlu0 %4234
        %4236 = vrot.lane.b32.xlu0 %v4154, 4
        %v4237 = vpop.permute.xlu0 %4236
        %4238 = vrot.lane.b32.xlu0 %v4155, 4
        %v4239 = vpop.permute.xlu0 %4238
        %4240 = vrot.lane.b32.xlu0 %v4156, 4
        %v4241 = vpop.permute.xlu0 %4240
        %4242 = vrot.lane.b32.xlu0 %v4157, 4
        %v4243 = vpop.permute.xlu0 %4242
        %4244 = vrot.lane.b32.xlu0 %v4158, 4
        %v4245 = vpop.permute.xlu0 %4244
        %4246 = vrot.lane.b32.xlu0 %v4159, 4
        %v4247 = vpop.permute.xlu0 %4246
        %4248 = vrot.lane.b32.xlu0 %v4160, 4
        %v4249 = vpop.permute.xlu0 %4248
        %4250 = vrot.lane.b32.xlu0 %v4161, 4
        %v4251 = vpop.permute.xlu0 %4250
        %4252 = vrot.lane.b32.xlu0 %v4162, 4
        %v4253 = vpop.permute.xlu0 %4252
        %4254 = vrot.lane.b32.xlu0 %v4163, 4
        %v4255 = vpop.permute.xlu0 %4254
        %4256 = vrot.lane.b32.xlu0 %v4164, 4
        %v4257 = vpop.permute.xlu0 %4256
        %vm4289 = vcmask 195616
        %4290 = vst.msk [vmem:[#allocation3 + $0x10] sm:$0xff] %vm4289, %v4197
        %4291 = vst.msk [vmem:[#allocation3 + $0x30] sm:$0xff] %vm4289, %v4199
        %4292 = vst.msk [vmem:[#allocation3 + $0x50] sm:$0xff] %vm4289, %v4201
        %4293 = vst.msk [vmem:[#allocation3 + $0x70] sm:$0xff] %vm4289, %v4203
        %4294 = vst.msk [vmem:[#allocation3 + $0x90] sm:$0xff] %vm4289, %v4205
        %4295 = vst.msk [vmem:[#allocation3 + $0xb0] sm:$0xff] %vm4289, %v4207
        %4296 = vst.msk [vmem:[#allocation3 + $0xd0] sm:$0xff] %vm4289, %v4209
        %4297 = vst.msk [vmem:[#allocation3 + $0xf0] sm:$0xff] %vm4289, %v4211
        %4298 = vst.msk [vmem:[#allocation3 + $0x110] sm:$0xff] %vm4289, %v4213
        %4299 = vst.msk [vmem:[#allocation3 + $0x130] sm:$0xff] %vm4289, %v4215
        %4300 = vst.msk [vmem:[#allocation3 + $0x150] sm:$0xff] %vm4289, %v4217
        %4301 = vst.msk [vmem:[#allocation3 + $0x170] sm:$0xff] %vm4289, %v4219
        %4302 = vst.msk [vmem:[#allocation3 + $0x190] sm:$0xff] %vm4289, %v4221
        %4303 = vst.msk [vmem:[#allocation3 + $0x1b0] sm:$0xff] %vm4289, %v4223
        %4304 = vst.msk [vmem:[#allocation3 + $0x1d0] sm:$0xff] %vm4289, %v4225
        %4305 = vst.msk [vmem:[#allocation3 + $0x1f0] sm:$0xff] %vm4289, %v4227
        %4306 = vst.msk [vmem:[#allocation3 + $0x210] sm:$0xff] %vm4289, %v4229
        %4307 = vst.msk [vmem:[#allocation3 + $0x230] sm:$0xff] %vm4289, %v4231
        %4308 = vst.msk [vmem:[#allocation3 + $0x250] sm:$0xff] %vm4289, %v4233
        %4309 = vst.msk [vmem:[#allocation3 + $0x270] sm:$0xff] %vm4289, %v4235
        %4310 = vst.msk [vmem:[#allocation3 + $0x290] sm:$0xff] %vm4289, %v4237
        %4311 = vst.msk [vmem:[#allocation3 + $0x2b0] sm:$0xff] %vm4289, %v4239
        %4312 = vst.msk [vmem:[#allocation3 + $0x2d0] sm:$0xff] %vm4289, %v4241
        %4313 = vst.msk [vmem:[#allocation3 + $0x2f0] sm:$0xff] %vm4289, %v4243
        %4314 = vst.msk [vmem:[#allocation3 + $0x310] sm:$0xff] %vm4289, %v4245
        %4315 = vst.msk [vmem:[#allocation3 + $0x330] sm:$0xff] %vm4289, %v4247
        %4316 = vst.msk [vmem:[#allocation3 + $0x350] sm:$0xff] %vm4289, %v4249
        %4317 = vst.msk [vmem:[#allocation3 + $0x370] sm:$0xff] %vm4289, %v4251
        %4318 = vst.msk [vmem:[#allocation3 + $0x390] sm:$0xff] %vm4289, %v4253
        %4319 = vst.msk [vmem:[#allocation3 + $0x3b0] sm:$0xff] %vm4289, %v4255
        %4320 = vst.msk [vmem:[#allocation3 + $0x3d0] sm:$0xff] %vm4289, %v4257
        %v4321 = vld [vmem:[#allocation2 + $0x28] sm:$0xff]
        %v4322 = vld [vmem:[#allocation2 + $0x30] sm:$0xff]
        %v4323 = vld [vmem:[#allocation2 + $0x38] sm:$0xff]
        %v4324 = vld [vmem:[#allocation2 + $0x40] sm:$0xff]
        %v4325 = vld [vmem:[#allocation2 + $0x48] sm:$0xff]
        %v4326 = vld [vmem:[#allocation2 + $0x50] sm:$0xff]
        %v4327 = vld [vmem:[#allocation2 + $0x58] sm:$0xff]
        %v4328 = vld [vmem:[#allocation2 + $0x60] sm:$0xff]
        %v4329 = vld [vmem:[#allocation2 + $0x68] sm:$0xff]
        %v4330 = vld [vmem:[#allocation2 + $0x70] sm:$0xff]
        %v4331 = vld [vmem:[#allocation2 + $0x78] sm:$0xff]
        %v4332 = vld [vmem:[#allocation2 + $0x80] sm:$0xff]
        %v4333 = vld [vmem:[#allocation2 + $0x88] sm:$0xff]
        %v4334 = vld [vmem:[#allocation2 + $0x90] sm:$0xff]
        %v4335 = vld [vmem:[#allocation2 + $0x98] sm:$0xff]
        %v4336 = vld [vmem:[#allocation2 + $0xa0] sm:$0xff]
        %v4337 = vld [vmem:[#allocation2 + $0xa8] sm:$0xff]
        %v4338 = vld [vmem:[#allocation2 + $0xb0] sm:$0xff]
        %v4339 = vld [vmem:[#allocation2 + $0xb8] sm:$0xff]
        %v4340 = vld [vmem:[#allocation2 + $0xc0] sm:$0xff]
        %v4341 = vld [vmem:[#allocation2 + $0xc8] sm:$0xff]
        %v4342 = vld [vmem:[#allocation2 + $0xd0] sm:$0xff]
        %v4343 = vld [vmem:[#allocation2 + $0xd8] sm:$0xff]
        %v4344 = vld [vmem:[#allocation2 + $0xe0] sm:$0xff]
        %v4345 = vld [vmem:[#allocation2 + $0xe8] sm:$0xff]
        %v4346 = vld [vmem:[#allocation2 + $0xf0] sm:$0xff]
        %v4347 = vld [vmem:[#allocation2 + $0xf8] sm:$0xff]
        %v4348 = vld [vmem:[#allocation2 + $0x100] sm:$0xff]
        %v4349 = vld [vmem:[#allocation2 + $0x108] sm:$0xff]
        %v4350 = vld [vmem:[#allocation2 + $0x110] sm:$0xff]
        %v4351 = vld [vmem:[#allocation2 + $0x118] sm:$0xff]
        %4383 = vrot.lane.b32.xlu0 %v4321, 24
        %v4384 = vpop.permute.xlu0 %4383
        %4385 = vrot.lane.b32.xlu0 %v4322, 24
        %v4386 = vpop.permute.xlu0 %4385
        %4387 = vrot.lane.b32.xlu0 %v4323, 24
        %v4388 = vpop.permute.xlu0 %4387
        %4389 = vrot.lane.b32.xlu0 %v4324, 24
        %v4390 = vpop.permute.xlu0 %4389
        %4391 = vrot.lane.b32.xlu0 %v4325, 24
        %v4392 = vpop.permute.xlu0 %4391
        %4393 = vrot.lane.b32.xlu0 %v4326, 24
        %v4394 = vpop.permute.xlu0 %4393
        %4395 = vrot.lane.b32.xlu0 %v4327, 24
        %v4396 = vpop.permute.xlu0 %4395
        %4397 = vrot.lane.b32.xlu0 %v4328, 24
        %v4398 = vpop.permute.xlu0 %4397
        %4399 = vrot.lane.b32.xlu0 %v4329, 24
        %v4400 = vpop.permute.xlu0 %4399
        %4401 = vrot.lane.b32.xlu0 %v4330, 24
        %v4402 = vpop.permute.xlu0 %4401
        %4403 = vrot.lane.b32.xlu0 %v4331, 24
        %v4404 = vpop.permute.xlu0 %4403
        %4405 = vrot.lane.b32.xlu0 %v4332, 24
        %v4406 = vpop.permute.xlu0 %4405
        %4407 = vrot.lane.b32.xlu0 %v4333, 24
        %v4408 = vpop.permute.xlu0 %4407
        %4409 = vrot.lane.b32.xlu0 %v4334, 24
        %v4410 = vpop.permute.xlu0 %4409
        %4411 = vrot.lane.b32.xlu0 %v4335, 24
        %v4412 = vpop.permute.xlu0 %4411
        %4413 = vrot.lane.b32.xlu0 %v4336, 24
        %v4414 = vpop.permute.xlu0 %4413
        %4415 = vrot.lane.b32.xlu0 %v4337, 24
        %v4416 = vpop.permute.xlu0 %4415
        %4417 = vrot.lane.b32.xlu0 %v4338, 24
        %v4418 = vpop.permute.xlu0 %4417
        %4419 = vrot.lane.b32.xlu0 %v4339, 24
        %v4420 = vpop.permute.xlu0 %4419
        %4421 = vrot.lane.b32.xlu0 %v4340, 24
        %v4422 = vpop.permute.xlu0 %4421
        %4423 = vrot.lane.b32.xlu0 %v4341, 24
        %v4424 = vpop.permute.xlu0 %4423
        %4425 = vrot.lane.b32.xlu0 %v4342, 24
        %v4426 = vpop.permute.xlu0 %4425
        %4427 = vrot.lane.b32.xlu0 %v4343, 24
        %v4428 = vpop.permute.xlu0 %4427
        %4429 = vrot.lane.b32.xlu0 %v4344, 24
        %v4430 = vpop.permute.xlu0 %4429
        %4431 = vrot.lane.b32.xlu0 %v4345, 24
        %v4432 = vpop.permute.xlu0 %4431
        %4433 = vrot.lane.b32.xlu0 %v4346, 24
        %v4434 = vpop.permute.xlu0 %4433
        %4435 = vrot.lane.b32.xlu0 %v4347, 24
        %v4436 = vpop.permute.xlu0 %4435
        %4437 = vrot.lane.b32.xlu0 %v4348, 24
        %v4438 = vpop.permute.xlu0 %4437
        %4439 = vrot.lane.b32.xlu0 %v4349, 24
        %v4440 = vpop.permute.xlu0 %4439
        %4441 = vrot.lane.b32.xlu0 %v4350, 24
        %v4442 = vpop.permute.xlu0 %4441
        %4443 = vrot.lane.b32.xlu0 %v4351, 24
        %v4444 = vpop.permute.xlu0 %4443
        %vm4476 = vcmask 359616
        %4477 = vst.msk [vmem:[#allocation3 + $0x10] sm:$0xff] %vm4476, %v4384
        %4478 = vst.msk [vmem:[#allocation3 + $0x30] sm:$0xff] %vm4476, %v4386
        %4479 = vst.msk [vmem:[#allocation3 + $0x50] sm:$0xff] %vm4476, %v4388
        %4480 = vst.msk [vmem:[#allocation3 + $0x70] sm:$0xff] %vm4476, %v4390
        %4481 = vst.msk [vmem:[#allocation3 + $0x90] sm:$0xff] %vm4476, %v4392
        %4482 = vst.msk [vmem:[#allocation3 + $0xb0] sm:$0xff] %vm4476, %v4394
        %4483 = vst.msk [vmem:[#allocation3 + $0xd0] sm:$0xff] %vm4476, %v4396
        %4484 = vst.msk [vmem:[#allocation3 + $0xf0] sm:$0xff] %vm4476, %v4398
        %4485 = vst.msk [vmem:[#allocation3 + $0x110] sm:$0xff] %vm4476, %v4400
        %4486 = vst.msk [vmem:[#allocation3 + $0x130] sm:$0xff] %vm4476, %v4402
        %4487 = vst.msk [vmem:[#allocation3 + $0x150] sm:$0xff] %vm4476, %v4404
        %4488 = vst.msk [vmem:[#allocation3 + $0x170] sm:$0xff] %vm4476, %v4406
        %4489 = vst.msk [vmem:[#allocation3 + $0x190] sm:$0xff] %vm4476, %v4408
        %4490 = vst.msk [vmem:[#allocation3 + $0x1b0] sm:$0xff] %vm4476, %v4410
        %4491 = vst.msk [vmem:[#allocation3 + $0x1d0] sm:$0xff] %vm4476, %v4412
        %4492 = vst.msk [vmem:[#allocation3 + $0x1f0] sm:$0xff] %vm4476, %v4414
        %4493 = vst.msk [vmem:[#allocation3 + $0x210] sm:$0xff] %vm4476, %v4416
        %4494 = vst.msk [vmem:[#allocation3 + $0x230] sm:$0xff] %vm4476, %v4418
        %4495 = vst.msk [vmem:[#allocation3 + $0x250] sm:$0xff] %vm4476, %v4420
        %4496 = vst.msk [vmem:[#allocation3 + $0x270] sm:$0xff] %vm4476, %v4422
        %4497 = vst.msk [vmem:[#allocation3 + $0x290] sm:$0xff] %vm4476, %v4424
        %4498 = vst.msk [vmem:[#allocation3 + $0x2b0] sm:$0xff] %vm4476, %v4426
        %4499 = vst.msk [vmem:[#allocation3 + $0x2d0] sm:$0xff] %vm4476, %v4428
        %4500 = vst.msk [vmem:[#allocation3 + $0x2f0] sm:$0xff] %vm4476, %v4430
        %4501 = vst.msk [vmem:[#allocation3 + $0x310] sm:$0xff] %vm4476, %v4432
        %4502 = vst.msk [vmem:[#allocation3 + $0x330] sm:$0xff] %vm4476, %v4434
        %4503 = vst.msk [vmem:[#allocation3 + $0x350] sm:$0xff] %vm4476, %v4436
        %4504 = vst.msk [vmem:[#allocation3 + $0x370] sm:$0xff] %vm4476, %v4438
        %4505 = vst.msk [vmem:[#allocation3 + $0x390] sm:$0xff] %vm4476, %v4440
        %4506 = vst.msk [vmem:[#allocation3 + $0x3b0] sm:$0xff] %vm4476, %v4442
        %4507 = vst.msk [vmem:[#allocation3 + $0x3d0] sm:$0xff] %vm4476, %v4444
        %v4508 = vld [vmem:[#allocation2 + $0x36] sm:$0xff]
        %v4509 = vld [vmem:[#allocation2 + $0x3e] sm:$0xff]
        %v4510 = vld [vmem:[#allocation2 + $0x46] sm:$0xff]
        %v4511 = vld [vmem:[#allocation2 + $0x4e] sm:$0xff]
        %v4512 = vld [vmem:[#allocation2 + $0x56] sm:$0xff]
        %v4513 = vld [vmem:[#allocation2 + $0x5e] sm:$0xff]
        %v4514 = vld [vmem:[#allocation2 + $0x66] sm:$0xff]
        %v4515 = vld [vmem:[#allocation2 + $0x6e] sm:$0xff]
        %v4516 = vld [vmem:[#allocation2 + $0x76] sm:$0xff]
        %v4517 = vld [vmem:[#allocation2 + $0x7e] sm:$0xff]
        %v4518 = vld [vmem:[#allocation2 + $0x86] sm:$0xff]
        %v4519 = vld [vmem:[#allocation2 + $0x8e] sm:$0xff]
        %v4520 = vld [vmem:[#allocation2 + $0x96] sm:$0xff]
        %v4521 = vld [vmem:[#allocation2 + $0x9e] sm:$0xff]
        %v4522 = vld [vmem:[#allocation2 + $0xa6] sm:$0xff]
        %v4523 = vld [vmem:[#allocation2 + $0xae] sm:$0xff]
        %v4524 = vld [vmem:[#allocation2 + $0xb6] sm:$0xff]
        %v4525 = vld [vmem:[#allocation2 + $0xbe] sm:$0xff]
        %v4526 = vld [vmem:[#allocation2 + $0xc6] sm:$0xff]
        %v4527 = vld [vmem:[#allocation2 + $0xce] sm:$0xff]
        %v4528 = vld [vmem:[#allocation2 + $0xd6] sm:$0xff]
        %v4529 = vld [vmem:[#allocation2 + $0xde] sm:$0xff]
        %v4530 = vld [vmem:[#allocation2 + $0xe6] sm:$0xff]
        %v4531 = vld [vmem:[#allocation2 + $0xee] sm:$0xff]
        %v4532 = vld [vmem:[#allocation2 + $0xf6] sm:$0xff]
        %v4533 = vld [vmem:[#allocation2 + $0xfe] sm:$0xff]
        %v4534 = vld [vmem:[#allocation2 + $0x106] sm:$0xff]
        %v4535 = vld [vmem:[#allocation2 + $0x10e] sm:$0xff]
        %v4536 = vld [vmem:[#allocation2 + $0x116] sm:$0xff]
        %v4537 = vld [vmem:[#allocation2 + $0x11e] sm:$0xff]
        %v4538 = vld [vmem:[#allocation2 + $0x126] sm:$0xff]
        %4570 = vrot.lane.b32.xlu0 %v4508, 44
        %v4571 = vpop.permute.xlu0 %4570
        %4572 = vrot.lane.b32.xlu0 %v4509, 44
        %v4573 = vpop.permute.xlu0 %4572
        %4574 = vrot.lane.b32.xlu0 %v4510, 44
        %v4575 = vpop.permute.xlu0 %4574
        %4576 = vrot.lane.b32.xlu0 %v4511, 44
        %v4577 = vpop.permute.xlu0 %4576
        %4578 = vrot.lane.b32.xlu0 %v4512, 44
        %v4579 = vpop.permute.xlu0 %4578
        %4580 = vrot.lane.b32.xlu0 %v4513, 44
        %v4581 = vpop.permute.xlu0 %4580
        %4582 = vrot.lane.b32.xlu0 %v4514, 44
        %v4583 = vpop.permute.xlu0 %4582
        %4584 = vrot.lane.b32.xlu0 %v4515, 44
        %v4585 = vpop.permute.xlu0 %4584
        %4586 = vrot.lane.b32.xlu0 %v4516, 44
        %v4587 = vpop.permute.xlu0 %4586
        %4588 = vrot.lane.b32.xlu0 %v4517, 44
        %v4589 = vpop.permute.xlu0 %4588
        %4590 = vrot.lane.b32.xlu0 %v4518, 44
        %v4591 = vpop.permute.xlu0 %4590
        %4592 = vrot.lane.b32.xlu0 %v4519, 44
        %v4593 = vpop.permute.xlu0 %4592
        %4594 = vrot.lane.b32.xlu0 %v4520, 44
        %v4595 = vpop.permute.xlu0 %4594
        %4596 = vrot.lane.b32.xlu0 %v4521, 44
        %v4597 = vpop.permute.xlu0 %4596
        %4598 = vrot.lane.b32.xlu0 %v4522, 44
        %v4599 = vpop.permute.xlu0 %4598
        %4600 = vrot.lane.b32.xlu0 %v4523, 44
        %v4601 = vpop.permute.xlu0 %4600
        %4602 = vrot.lane.b32.xlu0 %v4524, 44
        %v4603 = vpop.permute.xlu0 %4602
        %4604 = vrot.lane.b32.xlu0 %v4525, 44
        %v4605 = vpop.permute.xlu0 %4604
        %4606 = vrot.lane.b32.xlu0 %v4526, 44
        %v4607 = vpop.permute.xlu0 %4606
        %4608 = vrot.lane.b32.xlu0 %v4527, 44
        %v4609 = vpop.permute.xlu0 %4608
        %4610 = vrot.lane.b32.xlu0 %v4528, 44
        %v4611 = vpop.permute.xlu0 %4610
        %4612 = vrot.lane.b32.xlu0 %v4529, 44
        %v4613 = vpop.permute.xlu0 %4612
        %4614 = vrot.lane.b32.xlu0 %v4530, 44
        %v4615 = vpop.permute.xlu0 %4614
        %4616 = vrot.lane.b32.xlu0 %v4531, 44
        %v4617 = vpop.permute.xlu0 %4616
        %4618 = vrot.lane.b32.xlu0 %v4532, 44
        %v4619 = vpop.permute.xlu0 %4618
        %4620 = vrot.lane.b32.xlu0 %v4533, 44
        %v4621 = vpop.permute.xlu0 %4620
        %4622 = vrot.lane.b32.xlu0 %v4534, 44
        %v4623 = vpop.permute.xlu0 %4622
        %4624 = vrot.lane.b32.xlu0 %v4535, 44
        %v4625 = vpop.permute.xlu0 %4624
        %4626 = vrot.lane.b32.xlu0 %v4536, 44
        %v4627 = vpop.permute.xlu0 %4626
        %4628 = vrot.lane.b32.xlu0 %v4537, 44
        %v4629 = vpop.permute.xlu0 %4628
        %4630 = vrot.lane.b32.xlu0 %v4538, 44
        %v4631 = vpop.permute.xlu0 %4630
        %vm4663 = vcmask 523616
        %4664 = vst.msk [vmem:[#allocation3 + $0x10] sm:$0xff] %vm4663, %v4571
        %4665 = vst.msk [vmem:[#allocation3 + $0x30] sm:$0xff] %vm4663, %v4573
        %4666 = vst.msk [vmem:[#allocation3 + $0x50] sm:$0xff] %vm4663, %v4575
        %4667 = vst.msk [vmem:[#allocation3 + $0x70] sm:$0xff] %vm4663, %v4577
        %4668 = vst.msk [vmem:[#allocation3 + $0x90] sm:$0xff] %vm4663, %v4579
        %4669 = vst.msk [vmem:[#allocation3 + $0xb0] sm:$0xff] %vm4663, %v4581
        %4670 = vst.msk [vmem:[#allocation3 + $0xd0] sm:$0xff] %vm4663, %v4583
        %4671 = vst.msk [vmem:[#allocation3 + $0xf0] sm:$0xff] %vm4663, %v4585
        %4672 = vst.msk [vmem:[#allocation3 + $0x110] sm:$0xff] %vm4663, %v4587
        %4673 = vst.msk [vmem:[#allocation3 + $0x130] sm:$0xff] %vm4663, %v4589
        %4674 = vst.msk [vmem:[#allocation3 + $0x150] sm:$0xff] %vm4663, %v4591
        %4675 = vst.msk [vmem:[#allocation3 + $0x170] sm:$0xff] %vm4663, %v4593
        %4676 = vst.msk [vmem:[#allocation3 + $0x190] sm:$0xff] %vm4663, %v4595
        %4677 = vst.msk [vmem:[#allocation3 + $0x1b0] sm:$0xff] %vm4663, %v4597
        %4678 = vst.msk [vmem:[#allocation3 + $0x1d0] sm:$0xff] %vm4663, %v4599
        %4679 = vst.msk [vmem:[#allocation3 + $0x1f0] sm:$0xff] %vm4663, %v4601
        %4680 = vst.msk [vmem:[#allocation3 + $0x210] sm:$0xff] %vm4663, %v4603
        %4681 = vst.msk [vmem:[#allocation3 + $0x230] sm:$0xff] %vm4663, %v4605
        %4682 = vst.msk [vmem:[#allocation3 + $0x250] sm:$0xff] %vm4663, %v4607
        %4683 = vst.msk [vmem:[#allocation3 + $0x270] sm:$0xff] %vm4663, %v4609
        %4684 = vst.msk [vmem:[#allocation3 + $0x290] sm:$0xff] %vm4663, %v4611
        %4685 = vst.msk [vmem:[#allocation3 + $0x2b0] sm:$0xff] %vm4663, %v4613
        %4686 = vst.msk [vmem:[#allocation3 + $0x2d0] sm:$0xff] %vm4663, %v4615
        %4687 = vst.msk [vmem:[#allocation3 + $0x2f0] sm:$0xff] %vm4663, %v4617
        %4688 = vst.msk [vmem:[#allocation3 + $0x310] sm:$0xff] %vm4663, %v4619
        %4689 = vst.msk [vmem:[#allocation3 + $0x330] sm:$0xff] %vm4663, %v4621
        %4690 = vst.msk [vmem:[#allocation3 + $0x350] sm:$0xff] %vm4663, %v4623
        %4691 = vst.msk [vmem:[#allocation3 + $0x370] sm:$0xff] %vm4663, %v4625
        %4692 = vst.msk [vmem:[#allocation3 + $0x390] sm:$0xff] %vm4663, %v4627
        %4693 = vst.msk [vmem:[#allocation3 + $0x3b0] sm:$0xff] %vm4663, %v4629
        %4694 = vst.msk [vmem:[#allocation3 + $0x3d0] sm:$0xff] %vm4663, %v4631
        %v4695 = vld [vmem:[#allocation2 + $0x37] sm:$0xff]
        %v4696 = vld [vmem:[#allocation2 + $0x3f] sm:$0xff]
        %v4697 = vld [vmem:[#allocation2 + $0x47] sm:$0xff]
        %v4698 = vld [vmem:[#allocation2 + $0x4f] sm:$0xff]
        %v4699 = vld [vmem:[#allocation2 + $0x57] sm:$0xff]
        %v4700 = vld [vmem:[#allocation2 + $0x5f] sm:$0xff]
        %v4701 = vld [vmem:[#allocation2 + $0x67] sm:$0xff]
        %v4702 = vld [vmem:[#allocation2 + $0x6f] sm:$0xff]
        %v4703 = vld [vmem:[#allocation2 + $0x77] sm:$0xff]
        %v4704 = vld [vmem:[#allocation2 + $0x7f] sm:$0xff]
        %v4705 = vld [vmem:[#allocation2 + $0x87] sm:$0xff]
        %v4706 = vld [vmem:[#allocation2 + $0x8f] sm:$0xff]
        %v4707 = vld [vmem:[#allocation2 + $0x97] sm:$0xff]
        %v4708 = vld [vmem:[#allocation2 + $0x9f] sm:$0xff]
        %v4709 = vld [vmem:[#allocation2 + $0xa7] sm:$0xff]
        %v4710 = vld [vmem:[#allocation2 + $0xaf] sm:$0xff]
        %v4711 = vld [vmem:[#allocation2 + $0xb7] sm:$0xff]
        %v4712 = vld [vmem:[#allocation2 + $0xbf] sm:$0xff]
        %v4713 = vld [vmem:[#allocation2 + $0xc7] sm:$0xff]
        %v4714 = vld [vmem:[#allocation2 + $0xcf] sm:$0xff]
        %v4715 = vld [vmem:[#allocation2 + $0xd7] sm:$0xff]
        %v4716 = vld [vmem:[#allocation2 + $0xdf] sm:$0xff]
        %v4717 = vld [vmem:[#allocation2 + $0xe7] sm:$0xff]
        %v4718 = vld [vmem:[#allocation2 + $0xef] sm:$0xff]
        %v4719 = vld [vmem:[#allocation2 + $0xf7] sm:$0xff]
        %v4720 = vld [vmem:[#allocation2 + $0xff] sm:$0xff]
        %v4721 = vld [vmem:[#allocation2 + $0x107] sm:$0xff]
        %v4722 = vld [vmem:[#allocation2 + $0x10f] sm:$0xff]
        %v4723 = vld [vmem:[#allocation2 + $0x117] sm:$0xff]
        %v4724 = vld [vmem:[#allocation2 + $0x11f] sm:$0xff]
        %v4725 = vld [vmem:[#allocation2 + $0x127] sm:$0xff]
        %4757 = vrot.lane.b32.xlu0 %v4695, 64
        %v4758 = vpop.permute.xlu0 %4757
        %4759 = vrot.lane.b32.xlu0 %v4696, 64
        %v4760 = vpop.permute.xlu0 %4759
        %4761 = vrot.lane.b32.xlu0 %v4697, 64
        %v4762 = vpop.permute.xlu0 %4761
        %4763 = vrot.lane.b32.xlu0 %v4698, 64
        %v4764 = vpop.permute.xlu0 %4763
        %4765 = vrot.lane.b32.xlu0 %v4699, 64
        %v4766 = vpop.permute.xlu0 %4765
        %4767 = vrot.lane.b32.xlu0 %v4700, 64
        %v4768 = vpop.permute.xlu0 %4767
        %4769 = vrot.lane.b32.xlu0 %v4701, 64
        %v4770 = vpop.permute.xlu0 %4769
        %4771 = vrot.lane.b32.xlu0 %v4702, 64
        %v4772 = vpop.permute.xlu0 %4771
        %4773 = vrot.lane.b32.xlu0 %v4703, 64
        %v4774 = vpop.permute.xlu0 %4773
        %4775 = vrot.lane.b32.xlu0 %v4704, 64
        %v4776 = vpop.permute.xlu0 %4775
        %4777 = vrot.lane.b32.xlu0 %v4705, 64
        %v4778 = vpop.permute.xlu0 %4777
        %4779 = vrot.lane.b32.xlu0 %v4706, 64
        %v4780 = vpop.permute.xlu0 %4779
        %4781 = vrot.lane.b32.xlu0 %v4707, 64
        %v4782 = vpop.permute.xlu0 %4781
        %4783 = vrot.lane.b32.xlu0 %v4708, 64
        %v4784 = vpop.permute.xlu0 %4783
        %4785 = vrot.lane.b32.xlu0 %v4709, 64
        %v4786 = vpop.permute.xlu0 %4785
        %4787 = vrot.lane.b32.xlu0 %v4710, 64
        %v4788 = vpop.permute.xlu0 %4787
        %4789 = vrot.lane.b32.xlu0 %v4711, 64
        %v4790 = vpop.permute.xlu0 %4789
        %4791 = vrot.lane.b32.xlu0 %v4712, 64
        %v4792 = vpop.permute.xlu0 %4791
        %4793 = vrot.lane.b32.xlu0 %v4713, 64
        %v4794 = vpop.permute.xlu0 %4793
        %4795 = vrot.lane.b32.xlu0 %v4714, 64
        %v4796 = vpop.permute.xlu0 %4795
        %4797 = vrot.lane.b32.xlu0 %v4715, 64
        %v4798 = vpop.permute.xlu0 %4797
        %4799 = vrot.lane.b32.xlu0 %v4716, 64
        %v4800 = vpop.permute.xlu0 %4799
        %4801 = vrot.lane.b32.xlu0 %v4717, 64
        %v4802 = vpop.permute.xlu0 %4801
        %4803 = vrot.lane.b32.xlu0 %v4718, 64
        %v4804 = vpop.permute.xlu0 %4803
        %4805 = vrot.lane.b32.xlu0 %v4719, 64
        %v4806 = vpop.permute.xlu0 %4805
        %4807 = vrot.lane.b32.xlu0 %v4720, 64
        %v4808 = vpop.permute.xlu0 %4807
        %4809 = vrot.lane.b32.xlu0 %v4721, 64
        %v4810 = vpop.permute.xlu0 %4809
        %4811 = vrot.lane.b32.xlu0 %v4722, 64
        %v4812 = vpop.permute.xlu0 %4811
        %4813 = vrot.lane.b32.xlu0 %v4723, 64
        %v4814 = vpop.permute.xlu0 %4813
        %4815 = vrot.lane.b32.xlu0 %v4724, 64
        %v4816 = vpop.permute.xlu0 %4815
        %4817 = vrot.lane.b32.xlu0 %v4725, 64
        %v4818 = vpop.permute.xlu0 %4817
        %vm4850 = vcmask 687616
        %4851 = vst.msk [vmem:[#allocation3 + $0x10] sm:$0xff] %vm4850, %v4758
        %4852 = vst.msk [vmem:[#allocation3 + $0x30] sm:$0xff] %vm4850, %v4760
        %4853 = vst.msk [vmem:[#allocation3 + $0x50] sm:$0xff] %vm4850, %v4762
        %4854 = vst.msk [vmem:[#allocation3 + $0x70] sm:$0xff] %vm4850, %v4764
        %4855 = vst.msk [vmem:[#allocation3 + $0x90] sm:$0xff] %vm4850, %v4766
        %4856 = vst.msk [vmem:[#allocation3 + $0xb0] sm:$0xff] %vm4850, %v4768
        %4857 = vst.msk [vmem:[#allocation3 + $0xd0] sm:$0xff] %vm4850, %v4770
        %4858 = vst.msk [vmem:[#allocation3 + $0xf0] sm:$0xff] %vm4850, %v4772
        %4859 = vst.msk [vmem:[#allocation3 + $0x110] sm:$0xff] %vm4850, %v4774
        %4860 = vst.msk [vmem:[#allocation3 + $0x130] sm:$0xff] %vm4850, %v4776
        %4861 = vst.msk [vmem:[#allocation3 + $0x150] sm:$0xff] %vm4850, %v4778
        %4862 = vst.msk [vmem:[#allocation3 + $0x170] sm:$0xff] %vm4850, %v4780
        %4863 = vst.msk [vmem:[#allocation3 + $0x190] sm:$0xff] %vm4850, %v4782
        %4864 = vst.msk [vmem:[#allocation3 + $0x1b0] sm:$0xff] %vm4850, %v4784
        %4865 = vst.msk [vmem:[#allocation3 + $0x1d0] sm:$0xff] %vm4850, %v4786
        %4866 = vst.msk [vmem:[#allocation3 + $0x1f0] sm:$0xff] %vm4850, %v4788
        %4867 = vst.msk [vmem:[#allocation3 + $0x210] sm:$0xff] %vm4850, %v4790
        %4868 = vst.msk [vmem:[#allocation3 + $0x230] sm:$0xff] %vm4850, %v4792
        %4869 = vst.msk [vmem:[#allocation3 + $0x250] sm:$0xff] %vm4850, %v4794
        %4870 = vst.msk [vmem:[#allocation3 + $0x270] sm:$0xff] %vm4850, %v4796
        %4871 = vst.msk [vmem:[#allocation3 + $0x290] sm:$0xff] %vm4850, %v4798
        %4872 = vst.msk [vmem:[#allocation3 + $0x2b0] sm:$0xff] %vm4850, %v4800
        %4873 = vst.msk [vmem:[#allocation3 + $0x2d0] sm:$0xff] %vm4850, %v4802
        %4874 = vst.msk [vmem:[#allocation3 + $0x2f0] sm:$0xff] %vm4850, %v4804
        %4875 = vst.msk [vmem:[#allocation3 + $0x310] sm:$0xff] %vm4850, %v4806
        %4876 = vst.msk [vmem:[#allocation3 + $0x330] sm:$0xff] %vm4850, %v4808
        %4877 = vst.msk [vmem:[#allocation3 + $0x350] sm:$0xff] %vm4850, %v4810
        %4878 = vst.msk [vmem:[#allocation3 + $0x370] sm:$0xff] %vm4850, %v4812
        %4879 = vst.msk [vmem:[#allocation3 + $0x390] sm:$0xff] %vm4850, %v4814
        %4880 = vst.msk [vmem:[#allocation3 + $0x3b0] sm:$0xff] %vm4850, %v4816
        %4881 = vst.msk [vmem:[#allocation3 + $0x3d0] sm:$0xff] %vm4850, %v4818
        %v4882 = vld [vmem:[#allocation2 + $0x38] sm:$0xff]
        %v4883 = vld [vmem:[#allocation2 + $0x40] sm:$0xff]
        %v4884 = vld [vmem:[#allocation2 + $0x48] sm:$0xff]
        %v4885 = vld [vmem:[#allocation2 + $0x50] sm:$0xff]
        %v4886 = vld [vmem:[#allocation2 + $0x58] sm:$0xff]
        %v4887 = vld [vmem:[#allocation2 + $0x60] sm:$0xff]
        %v4888 = vld [vmem:[#allocation2 + $0x68] sm:$0xff]
        %v4889 = vld [vmem:[#allocation2 + $0x70] sm:$0xff]
        %v4890 = vld [vmem:[#allocation2 + $0x78] sm:$0xff]
        %v4891 = vld [vmem:[#allocation2 + $0x80] sm:$0xff]
        %v4892 = vld [vmem:[#allocation2 + $0x88] sm:$0xff]
        %v4893 = vld [vmem:[#allocation2 + $0x90] sm:$0xff]
        %v4894 = vld [vmem:[#allocation2 + $0x98] sm:$0xff]
        %v4895 = vld [vmem:[#allocation2 + $0xa0] sm:$0xff]
        %v4896 = vld [vmem:[#allocation2 + $0xa8] sm:$0xff]
        %v4897 = vld [vmem:[#allocation2 + $0xb0] sm:$0xff]
        %v4898 = vld [vmem:[#allocation2 + $0xb8] sm:$0xff]
        %v4899 = vld [vmem:[#allocation2 + $0xc0] sm:$0xff]
        %v4900 = vld [vmem:[#allocation2 + $0xc8] sm:$0xff]
        %v4901 = vld [vmem:[#allocation2 + $0xd0] sm:$0xff]
        %v4902 = vld [vmem:[#allocation2 + $0xd8] sm:$0xff]
        %v4903 = vld [vmem:[#allocation2 + $0xe0] sm:$0xff]
        %v4904 = vld [vmem:[#allocation2 + $0xe8] sm:$0xff]
        %v4905 = vld [vmem:[#allocation2 + $0xf0] sm:$0xff]
        %v4906 = vld [vmem:[#allocation2 + $0xf8] sm:$0xff]
        %v4907 = vld [vmem:[#allocation2 + $0x100] sm:$0xff]
        %v4908 = vld [vmem:[#allocation2 + $0x108] sm:$0xff]
        %v4909 = vld [vmem:[#allocation2 + $0x110] sm:$0xff]
        %v4910 = vld [vmem:[#allocation2 + $0x118] sm:$0xff]
        %v4911 = vld [vmem:[#allocation2 + $0x120] sm:$0xff]
        %v4912 = vld [vmem:[#allocation2 + $0x128] sm:$0xff]
        %4944 = vrot.lane.b32.xlu0 %v4882, 84
        %v4945 = vpop.permute.xlu0 %4944
        %4946 = vrot.lane.b32.xlu0 %v4883, 84
        %v4947 = vpop.permute.xlu0 %4946
        %4948 = vrot.lane.b32.xlu0 %v4884, 84
        %v4949 = vpop.permute.xlu0 %4948
        %4950 = vrot.lane.b32.xlu0 %v4885, 84
        %v4951 = vpop.permute.xlu0 %4950
        %4952 = vrot.lane.b32.xlu0 %v4886, 84
        %v4953 = vpop.permute.xlu0 %4952
        %4954 = vrot.lane.b32.xlu0 %v4887, 84
        %v4955 = vpop.permute.xlu0 %4954
        %4956 = vrot.lane.b32.xlu0 %v4888, 84
        %v4957 = vpop.permute.xlu0 %4956
        %4958 = vrot.lane.b32.xlu0 %v4889, 84
        %v4959 = vpop.permute.xlu0 %4958
        %4960 = vrot.lane.b32.xlu0 %v4890, 84
        %v4961 = vpop.permute.xlu0 %4960
        %4962 = vrot.lane.b32.xlu0 %v4891, 84
        %v4963 = vpop.permute.xlu0 %4962
        %4964 = vrot.lane.b32.xlu0 %v4892, 84
        %v4965 = vpop.permute.xlu0 %4964
        %4966 = vrot.lane.b32.xlu0 %v4893, 84
        %v4967 = vpop.permute.xlu0 %4966
        %4968 = vrot.lane.b32.xlu0 %v4894, 84
        %v4969 = vpop.permute.xlu0 %4968
        %4970 = vrot.lane.b32.xlu0 %v4895, 84
        %v4971 = vpop.permute.xlu0 %4970
        %4972 = vrot.lane.b32.xlu0 %v4896, 84
        %v4973 = vpop.permute.xlu0 %4972
        %4974 = vrot.lane.b32.xlu0 %v4897, 84
        %v4975 = vpop.permute.xlu0 %4974
        %4976 = vrot.lane.b32.xlu0 %v4898, 84
        %v4977 = vpop.permute.xlu0 %4976
        %4978 = vrot.lane.b32.xlu0 %v4899, 84
        %v4979 = vpop.permute.xlu0 %4978
        %4980 = vrot.lane.b32.xlu0 %v4900, 84
        %v4981 = vpop.permute.xlu0 %4980
        %4982 = vrot.lane.b32.xlu0 %v4901, 84
        %v4983 = vpop.permute.xlu0 %4982
        %4984 = vrot.lane.b32.xlu0 %v4902, 84
        %v4985 = vpop.permute.xlu0 %4984
        %4986 = vrot.lane.b32.xlu0 %v4903, 84
        %v4987 = vpop.permute.xlu0 %4986
        %4988 = vrot.lane.b32.xlu0 %v4904, 84
        %v4989 = vpop.permute.xlu0 %4988
        %4990 = vrot.lane.b32.xlu0 %v4905, 84
        %v4991 = vpop.permute.xlu0 %4990
        %4992 = vrot.lane.b32.xlu0 %v4906, 84
        %v4993 = vpop.permute.xlu0 %4992
        %4994 = vrot.lane.b32.xlu0 %v4907, 84
        %v4995 = vpop.permute.xlu0 %4994
        %4996 = vrot.lane.b32.xlu0 %v4908, 84
        %v4997 = vpop.permute.xlu0 %4996
        %4998 = vrot.lane.b32.xlu0 %v4909, 84
        %v4999 = vpop.permute.xlu0 %4998
        %5000 = vrot.lane.b32.xlu0 %v4910, 84
        %v5001 = vpop.permute.xlu0 %5000
        %5002 = vrot.lane.b32.xlu0 %v4911, 84
        %v5003 = vpop.permute.xlu0 %5002
        %5004 = vrot.lane.b32.xlu0 %v4912, 84
        %v5005 = vpop.permute.xlu0 %5004
        %vm5037 = vcmask 851616
        %5038 = vst.msk [vmem:[#allocation3 + $0x10] sm:$0xff] %vm5037, %v4945
        %5039 = vst.msk [vmem:[#allocation3 + $0x30] sm:$0xff] %vm5037, %v4947
        %5040 = vst.msk [vmem:[#allocation3 + $0x50] sm:$0xff] %vm5037, %v4949
        %5041 = vst.msk [vmem:[#allocation3 + $0x70] sm:$0xff] %vm5037, %v4951
        %5042 = vst.msk [vmem:[#allocation3 + $0x90] sm:$0xff] %vm5037, %v4953
        %5043 = vst.msk [vmem:[#allocation3 + $0xb0] sm:$0xff] %vm5037, %v4955
        %5044 = vst.msk [vmem:[#allocation3 + $0xd0] sm:$0xff] %vm5037, %v4957
        %5045 = vst.msk [vmem:[#allocation3 + $0xf0] sm:$0xff] %vm5037, %v4959
        %5046 = vst.msk [vmem:[#allocation3 + $0x110] sm:$0xff] %vm5037, %v4961
        %5047 = vst.msk [vmem:[#allocation3 + $0x130] sm:$0xff] %vm5037, %v4963
        %5048 = vst.msk [vmem:[#allocation3 + $0x150] sm:$0xff] %vm5037, %v4965
        %5049 = vst.msk [vmem:[#allocation3 + $0x170] sm:$0xff] %vm5037, %v4967
        %5050 = vst.msk [vmem:[#allocation3 + $0x190] sm:$0xff] %vm5037, %v4969
        %5051 = vst.msk [vmem:[#allocation3 + $0x1b0] sm:$0xff] %vm5037, %v4971
        %5052 = vst.msk [vmem:[#allocation3 + $0x1d0] sm:$0xff] %vm5037, %v4973
        %5053 = vst.msk [vmem:[#allocation3 + $0x1f0] sm:$0xff] %vm5037, %v4975
        %5054 = vst.msk [vmem:[#allocation3 + $0x210] sm:$0xff] %vm5037, %v4977
        %5055 = vst.msk [vmem:[#allocation3 + $0x230] sm:$0xff] %vm5037, %v4979
        %5056 = vst.msk [vmem:[#allocation3 + $0x250] sm:$0xff] %vm5037, %v4981
        %5057 = vst.msk [vmem:[#allocation3 + $0x270] sm:$0xff] %vm5037, %v4983
        %5058 = vst.msk [vmem:[#allocation3 + $0x290] sm:$0xff] %vm5037, %v4985
        %5059 = vst.msk [vmem:[#allocation3 + $0x2b0] sm:$0xff] %vm5037, %v4987
        %5060 = vst.msk [vmem:[#allocation3 + $0x2d0] sm:$0xff] %vm5037, %v4989
        %5061 = vst.msk [vmem:[#allocation3 + $0x2f0] sm:$0xff] %vm5037, %v4991
        %5062 = vst.msk [vmem:[#allocation3 + $0x310] sm:$0xff] %vm5037, %v4993
        %5063 = vst.msk [vmem:[#allocation3 + $0x330] sm:$0xff] %vm5037, %v4995
        %5064 = vst.msk [vmem:[#allocation3 + $0x350] sm:$0xff] %vm5037, %v4997
        %5065 = vst.msk [vmem:[#allocation3 + $0x370] sm:$0xff] %vm5037, %v4999
        %5066 = vst.msk [vmem:[#allocation3 + $0x390] sm:$0xff] %vm5037, %v5001
        %5067 = vst.msk [vmem:[#allocation3 + $0x3b0] sm:$0xff] %vm5037, %v5003
        %5068 = vst.msk [vmem:[#allocation3 + $0x3d0] sm:$0xff] %vm5037, %v5005
        %v5069 = vld [vmem:[#allocation2 + $0x39] sm:$0xff]
        %v5070 = vld [vmem:[#allocation2 + $0x41] sm:$0xff]
        %v5071 = vld [vmem:[#allocation2 + $0x49] sm:$0xff]
        %v5072 = vld [vmem:[#allocation2 + $0x51] sm:$0xff]
        %v5073 = vld [vmem:[#allocation2 + $0x59] sm:$0xff]
        %v5074 = vld [vmem:[#allocation2 + $0x61] sm:$0xff]
        %v5075 = vld [vmem:[#allocation2 + $0x69] sm:$0xff]
        %v5076 = vld [vmem:[#allocation2 + $0x71] sm:$0xff]
        %v5077 = vld [vmem:[#allocation2 + $0x79] sm:$0xff]
        %v5078 = vld [vmem:[#allocation2 + $0x81] sm:$0xff]
        %v5079 = vld [vmem:[#allocation2 + $0x89] sm:$0xff]
        %v5080 = vld [vmem:[#allocation2 + $0x91] sm:$0xff]
        %v5081 = vld [vmem:[#allocation2 + $0x99] sm:$0xff]
        %v5082 = vld [vmem:[#allocation2 + $0xa1] sm:$0xff]
        %v5083 = vld [vmem:[#allocation2 + $0xa9] sm:$0xff]
        %v5084 = vld [vmem:[#allocation2 + $0xb1] sm:$0xff]
        %v5085 = vld [vmem:[#allocation2 + $0xb9] sm:$0xff]
        %v5086 = vld [vmem:[#allocation2 + $0xc1] sm:$0xff]
        %v5087 = vld [vmem:[#allocation2 + $0xc9] sm:$0xff]
        %v5088 = vld [vmem:[#allocation2 + $0xd1] sm:$0xff]
        %v5089 = vld [vmem:[#allocation2 + $0xd9] sm:$0xff]
        %v5090 = vld [vmem:[#allocation2 + $0xe1] sm:$0xff]
        %v5091 = vld [vmem:[#allocation2 + $0xe9] sm:$0xff]
        %v5092 = vld [vmem:[#allocation2 + $0xf1] sm:$0xff]
        %v5093 = vld [vmem:[#allocation2 + $0xf9] sm:$0xff]
        %v5094 = vld [vmem:[#allocation2 + $0x101] sm:$0xff]
        %v5095 = vld [vmem:[#allocation2 + $0x109] sm:$0xff]
        %v5096 = vld [vmem:[#allocation2 + $0x111] sm:$0xff]
        %v5097 = vld [vmem:[#allocation2 + $0x119] sm:$0xff]
        %v5098 = vld [vmem:[#allocation2 + $0x121] sm:$0xff]
        %v5099 = vld [vmem:[#allocation2 + $0x129] sm:$0xff]
        %5131 = vrot.lane.b32.xlu0 %v5069, 104
        %v5132 = vpop.permute.xlu0 %5131
        %5133 = vrot.lane.b32.xlu0 %v5070, 104
        %v5134 = vpop.permute.xlu0 %5133
        %5135 = vrot.lane.b32.xlu0 %v5071, 104
        %v5136 = vpop.permute.xlu0 %5135
        %5137 = vrot.lane.b32.xlu0 %v5072, 104
        %v5138 = vpop.permute.xlu0 %5137
        %5139 = vrot.lane.b32.xlu0 %v5073, 104
        %v5140 = vpop.permute.xlu0 %5139
        %5141 = vrot.lane.b32.xlu0 %v5074, 104
        %v5142 = vpop.permute.xlu0 %5141
        %5143 = vrot.lane.b32.xlu0 %v5075, 104
        %v5144 = vpop.permute.xlu0 %5143
        %5145 = vrot.lane.b32.xlu0 %v5076, 104
        %v5146 = vpop.permute.xlu0 %5145
        %5147 = vrot.lane.b32.xlu0 %v5077, 104
        %v5148 = vpop.permute.xlu0 %5147
        %5149 = vrot.lane.b32.xlu0 %v5078, 104
        %v5150 = vpop.permute.xlu0 %5149
        %5151 = vrot.lane.b32.xlu0 %v5079, 104
        %v5152 = vpop.permute.xlu0 %5151
        %5153 = vrot.lane.b32.xlu0 %v5080, 104
        %v5154 = vpop.permute.xlu0 %5153
        %5155 = vrot.lane.b32.xlu0 %v5081, 104
        %v5156 = vpop.permute.xlu0 %5155
        %5157 = vrot.lane.b32.xlu0 %v5082, 104
        %v5158 = vpop.permute.xlu0 %5157
        %5159 = vrot.lane.b32.xlu0 %v5083, 104
        %v5160 = vpop.permute.xlu0 %5159
        %5161 = vrot.lane.b32.xlu0 %v5084, 104
        %v5162 = vpop.permute.xlu0 %5161
        %5163 = vrot.lane.b32.xlu0 %v5085, 104
        %v5164 = vpop.permute.xlu0 %5163
        %5165 = vrot.lane.b32.xlu0 %v5086, 104
        %v5166 = vpop.permute.xlu0 %5165
        %5167 = vrot.lane.b32.xlu0 %v5087, 104
        %v5168 = vpop.permute.xlu0 %5167
        %5169 = vrot.lane.b32.xlu0 %v5088, 104
        %v5170 = vpop.permute.xlu0 %5169
        %5171 = vrot.lane.b32.xlu0 %v5089, 104
        %v5172 = vpop.permute.xlu0 %5171
        %5173 = vrot.lane.b32.xlu0 %v5090, 104
        %v5174 = vpop.permute.xlu0 %5173
        %5175 = vrot.lane.b32.xlu0 %v5091, 104
        %v5176 = vpop.permute.xlu0 %5175
        %5177 = vrot.lane.b32.xlu0 %v5092, 104
        %v5178 = vpop.permute.xlu0 %5177
        %5179 = vrot.lane.b32.xlu0 %v5093, 104
        %v5180 = vpop.permute.xlu0 %5179
        %5181 = vrot.lane.b32.xlu0 %v5094, 104
        %v5182 = vpop.permute.xlu0 %5181
        %5183 = vrot.lane.b32.xlu0 %v5095, 104
        %v5184 = vpop.permute.xlu0 %5183
        %5185 = vrot.lane.b32.xlu0 %v5096, 104
        %v5186 = vpop.permute.xlu0 %5185
        %5187 = vrot.lane.b32.xlu0 %v5097, 104
        %v5188 = vpop.permute.xlu0 %5187
        %5189 = vrot.lane.b32.xlu0 %v5098, 104
        %v5190 = vpop.permute.xlu0 %5189
        %5191 = vrot.lane.b32.xlu0 %v5099, 104
        %v5192 = vpop.permute.xlu0 %5191
        %vm5224 = vcmask 1015616
        %5225 = vst.msk [vmem:[#allocation3 + $0x10] sm:$0xff] %vm5224, %v5132
        %5226 = vst.msk [vmem:[#allocation3 + $0x30] sm:$0xff] %vm5224, %v5134
        %5227 = vst.msk [vmem:[#allocation3 + $0x50] sm:$0xff] %vm5224, %v5136
        %5228 = vst.msk [vmem:[#allocation3 + $0x70] sm:$0xff] %vm5224, %v5138
        %5229 = vst.msk [vmem:[#allocation3 + $0x90] sm:$0xff] %vm5224, %v5140
        %5230 = vst.msk [vmem:[#allocation3 + $0xb0] sm:$0xff] %vm5224, %v5142
        %5231 = vst.msk [vmem:[#allocation3 + $0xd0] sm:$0xff] %vm5224, %v5144
        %5232 = vst.msk [vmem:[#allocation3 + $0xf0] sm:$0xff] %vm5224, %v5146
        %5233 = vst.msk [vmem:[#allocation3 + $0x110] sm:$0xff] %vm5224, %v5148
        %5234 = vst.msk [vmem:[#allocation3 + $0x130] sm:$0xff] %vm5224, %v5150
        %5235 = vst.msk [vmem:[#allocation3 + $0x150] sm:$0xff] %vm5224, %v5152
        %5236 = vst.msk [vmem:[#allocation3 + $0x170] sm:$0xff] %vm5224, %v5154
        %5237 = vst.msk [vmem:[#allocation3 + $0x190] sm:$0xff] %vm5224, %v5156
        %5238 = vst.msk [vmem:[#allocation3 + $0x1b0] sm:$0xff] %vm5224, %v5158
        %5239 = vst.msk [vmem:[#allocation3 + $0x1d0] sm:$0xff] %vm5224, %v5160
        %5240 = vst.msk [vmem:[#allocation3 + $0x1f0] sm:$0xff] %vm5224, %v5162
        %5241 = vst.msk [vmem:[#allocation3 + $0x210] sm:$0xff] %vm5224, %v5164
        %5242 = vst.msk [vmem:[#allocation3 + $0x230] sm:$0xff] %vm5224, %v5166
        %5243 = vst.msk [vmem:[#allocation3 + $0x250] sm:$0xff] %vm5224, %v5168
        %5244 = vst.msk [vmem:[#allocation3 + $0x270] sm:$0xff] %vm5224, %v5170
        %5245 = vst.msk [vmem:[#allocation3 + $0x290] sm:$0xff] %vm5224, %v5172
        %5246 = vst.msk [vmem:[#allocation3 + $0x2b0] sm:$0xff] %vm5224, %v5174
        %5247 = vst.msk [vmem:[#allocation3 + $0x2d0] sm:$0xff] %vm5224, %v5176
        %5248 = vst.msk [vmem:[#allocation3 + $0x2f0] sm:$0xff] %vm5224, %v5178
        %5249 = vst.msk [vmem:[#allocation3 + $0x310] sm:$0xff] %vm5224, %v5180
        %5250 = vst.msk [vmem:[#allocation3 + $0x330] sm:$0xff] %vm5224, %v5182
        %5251 = vst.msk [vmem:[#allocation3 + $0x350] sm:$0xff] %vm5224, %v5184
        %5252 = vst.msk [vmem:[#allocation3 + $0x370] sm:$0xff] %vm5224, %v5186
        %5253 = vst.msk [vmem:[#allocation3 + $0x390] sm:$0xff] %vm5224, %v5188
        %5254 = vst.msk [vmem:[#allocation3 + $0x3b0] sm:$0xff] %vm5224, %v5190
        %5255 = vst.msk [vmem:[#allocation3 + $0x3d0] sm:$0xff] %vm5224, %v5192
        %v5256 = vld [vmem:[#allocation2 + $0x3a] sm:$0xff]
        %v5257 = vld [vmem:[#allocation2 + $0x42] sm:$0xff]
        %v5258 = vld [vmem:[#allocation2 + $0x4a] sm:$0xff]
        %v5259 = vld [vmem:[#allocation2 + $0x52] sm:$0xff]
        %v5260 = vld [vmem:[#allocation2 + $0x5a] sm:$0xff]
        %v5261 = vld [vmem:[#allocation2 + $0x62] sm:$0xff]
        %v5262 = vld [vmem:[#allocation2 + $0x6a] sm:$0xff]
        %v5263 = vld [vmem:[#allocation2 + $0x72] sm:$0xff]
        %v5264 = vld [vmem:[#allocation2 + $0x7a] sm:$0xff]
        %v5265 = vld [vmem:[#allocation2 + $0x82] sm:$0xff]
        %v5266 = vld [vmem:[#allocation2 + $0x8a] sm:$0xff]
        %v5267 = vld [vmem:[#allocation2 + $0x92] sm:$0xff]
        %v5268 = vld [vmem:[#allocation2 + $0x9a] sm:$0xff]
        %v5269 = vld [vmem:[#allocation2 + $0xa2] sm:$0xff]
        %v5270 = vld [vmem:[#allocation2 + $0xaa] sm:$0xff]
        %v5271 = vld [vmem:[#allocation2 + $0xb2] sm:$0xff]
        %v5272 = vld [vmem:[#allocation2 + $0xba] sm:$0xff]
        %v5273 = vld [vmem:[#allocation2 + $0xc2] sm:$0xff]
        %v5274 = vld [vmem:[#allocation2 + $0xca] sm:$0xff]
        %v5275 = vld [vmem:[#allocation2 + $0xd2] sm:$0xff]
        %v5276 = vld [vmem:[#allocation2 + $0xda] sm:$0xff]
        %v5277 = vld [vmem:[#allocation2 + $0xe2] sm:$0xff]
        %v5278 = vld [vmem:[#allocation2 + $0xea] sm:$0xff]
        %v5279 = vld [vmem:[#allocation2 + $0xf2] sm:$0xff]
        %v5280 = vld [vmem:[#allocation2 + $0xfa] sm:$0xff]
        %v5281 = vld [vmem:[#allocation2 + $0x102] sm:$0xff]
        %v5282 = vld [vmem:[#allocation2 + $0x10a] sm:$0xff]
        %v5283 = vld [vmem:[#allocation2 + $0x112] sm:$0xff]
        %v5284 = vld [vmem:[#allocation2 + $0x11a] sm:$0xff]
        %v5285 = vld [vmem:[#allocation2 + $0x122] sm:$0xff]
        %v5286 = vld [vmem:[#allocation2 + $0x12a] sm:$0xff]
        %5318 = vrot.lane.b32.xlu0 %v5256, 124
        %v5319 = vpop.permute.xlu0 %5318
        %5320 = vrot.lane.b32.xlu0 %v5257, 124
        %v5321 = vpop.permute.xlu0 %5320
        %5322 = vrot.lane.b32.xlu0 %v5258, 124
        %v5323 = vpop.permute.xlu0 %5322
        %5324 = vrot.lane.b32.xlu0 %v5259, 124
        %v5325 = vpop.permute.xlu0 %5324
        %5326 = vrot.lane.b32.xlu0 %v5260, 124
        %v5327 = vpop.permute.xlu0 %5326
        %5328 = vrot.lane.b32.xlu0 %v5261, 124
        %v5329 = vpop.permute.xlu0 %5328
        %5330 = vrot.lane.b32.xlu0 %v5262, 124
        %v5331 = vpop.permute.xlu0 %5330
        %5332 = vrot.lane.b32.xlu0 %v5263, 124
        %v5333 = vpop.permute.xlu0 %5332
        %5334 = vrot.lane.b32.xlu0 %v5264, 124
        %v5335 = vpop.permute.xlu0 %5334
        %5336 = vrot.lane.b32.xlu0 %v5265, 124
        %v5337 = vpop.permute.xlu0 %5336
        %5338 = vrot.lane.b32.xlu0 %v5266, 124
        %v5339 = vpop.permute.xlu0 %5338
        %5340 = vrot.lane.b32.xlu0 %v5267, 124
        %v5341 = vpop.permute.xlu0 %5340
        %5342 = vrot.lane.b32.xlu0 %v5268, 124
        %v5343 = vpop.permute.xlu0 %5342
        %5344 = vrot.lane.b32.xlu0 %v5269, 124
        %v5345 = vpop.permute.xlu0 %5344
        %5346 = vrot.lane.b32.xlu0 %v5270, 124
        %v5347 = vpop.permute.xlu0 %5346
        %5348 = vrot.lane.b32.xlu0 %v5271, 124
        %v5349 = vpop.permute.xlu0 %5348
        %5350 = vrot.lane.b32.xlu0 %v5272, 124
        %v5351 = vpop.permute.xlu0 %5350
        %5352 = vrot.lane.b32.xlu0 %v5273, 124
        %v5353 = vpop.permute.xlu0 %5352
        %5354 = vrot.lane.b32.xlu0 %v5274, 124
        %v5355 = vpop.permute.xlu0 %5354
        %5356 = vrot.lane.b32.xlu0 %v5275, 124
        %v5357 = vpop.permute.xlu0 %5356
        %5358 = vrot.lane.b32.xlu0 %v5276, 124
        %v5359 = vpop.permute.xlu0 %5358
        %5360 = vrot.lane.b32.xlu0 %v5277, 124
        %v5361 = vpop.permute.xlu0 %5360
        %5362 = vrot.lane.b32.xlu0 %v5278, 124
        %v5363 = vpop.permute.xlu0 %5362
        %5364 = vrot.lane.b32.xlu0 %v5279, 124
        %v5365 = vpop.permute.xlu0 %5364
        %5366 = vrot.lane.b32.xlu0 %v5280, 124
        %v5367 = vpop.permute.xlu0 %5366
        %5368 = vrot.lane.b32.xlu0 %v5281, 124
        %v5369 = vpop.permute.xlu0 %5368
        %5370 = vrot.lane.b32.xlu0 %v5282, 124
        %v5371 = vpop.permute.xlu0 %5370
        %5372 = vrot.lane.b32.xlu0 %v5283, 124
        %v5373 = vpop.permute.xlu0 %5372
        %5374 = vrot.lane.b32.xlu0 %v5284, 124
        %v5375 = vpop.permute.xlu0 %5374
        %5376 = vrot.lane.b32.xlu0 %v5285, 124
        %v5377 = vpop.permute.xlu0 %5376
        %5378 = vrot.lane.b32.xlu0 %v5286, 124
        %v5379 = vpop.permute.xlu0 %5378
        %vm5411 = vcmask 1048544
        %5412 = vst.msk [vmem:[#allocation3 + $0x10] sm:$0xff] %vm5411, %v5319
        %vm5413 = vcmask 130048
        %5414 = vst.msk [vmem:[#allocation3 + $0x18] sm:$0xff] %vm5413, %v5319
        %5415 = vst.msk [vmem:[#allocation3 + $0x30] sm:$0xff] %vm5411, %v5321
        %5416 = vst.msk [vmem:[#allocation3 + $0x38] sm:$0xff] %vm5413, %v5321
        %5417 = vst.msk [vmem:[#allocation3 + $0x50] sm:$0xff] %vm5411, %v5323
        %5418 = vst.msk [vmem:[#allocation3 + $0x58] sm:$0xff] %vm5413, %v5323
        %5419 = vst.msk [vmem:[#allocation3 + $0x70] sm:$0xff] %vm5411, %v5325
        %5420 = vst.msk [vmem:[#allocation3 + $0x78] sm:$0xff] %vm5413, %v5325
        %5421 = vst.msk [vmem:[#allocation3 + $0x90] sm:$0xff] %vm5411, %v5327
        %5422 = vst.msk [vmem:[#allocation3 + $0x98] sm:$0xff] %vm5413, %v5327
        %5423 = vst.msk [vmem:[#allocation3 + $0xb0] sm:$0xff] %vm5411, %v5329
        %5424 = vst.msk [vmem:[#allocation3 + $0xb8] sm:$0xff] %vm5413, %v5329
        %5425 = vst.msk [vmem:[#allocation3 + $0xd0] sm:$0xff] %vm5411, %v5331
        %5426 = vst.msk [vmem:[#allocation3 + $0xd8] sm:$0xff] %vm5413, %v5331
        %5427 = vst.msk [vmem:[#allocation3 + $0xf0] sm:$0xff] %vm5411, %v5333
        %5428 = vst.msk [vmem:[#allocation3 + $0xf8] sm:$0xff] %vm5413, %v5333
        %5429 = vst.msk [vmem:[#allocation3 + $0x110] sm:$0xff] %vm5411, %v5335
        %5430 = vst.msk [vmem:[#allocation3 + $0x118] sm:$0xff] %vm5413, %v5335
        %5431 = vst.msk [vmem:[#allocation3 + $0x130] sm:$0xff] %vm5411, %v5337
        %5432 = vst.msk [vmem:[#allocation3 + $0x138] sm:$0xff] %vm5413, %v5337
        %5433 = vst.msk [vmem:[#allocation3 + $0x150] sm:$0xff] %vm5411, %v5339
        %5434 = vst.msk [vmem:[#allocation3 + $0x158] sm:$0xff] %vm5413, %v5339
        %5435 = vst.msk [vmem:[#allocation3 + $0x170] sm:$0xff] %vm5411, %v5341
        %5436 = vst.msk [vmem:[#allocation3 + $0x178] sm:$0xff] %vm5413, %v5341
        %5437 = vst.msk [vmem:[#allocation3 + $0x190] sm:$0xff] %vm5411, %v5343
        %5438 = vst.msk [vmem:[#allocation3 + $0x198] sm:$0xff] %vm5413, %v5343
        %5439 = vst.msk [vmem:[#allocation3 + $0x1b0] sm:$0xff] %vm5411, %v5345
        %5440 = vst.msk [vmem:[#allocation3 + $0x1b8] sm:$0xff] %vm5413, %v5345
        %5441 = vst.msk [vmem:[#allocation3 + $0x1d0] sm:$0xff] %vm5411, %v5347
        %5442 = vst.msk [vmem:[#allocation3 + $0x1d8] sm:$0xff] %vm5413, %v5347
        %5443 = vst.msk [vmem:[#allocation3 + $0x1f0] sm:$0xff] %vm5411, %v5349
        %5444 = vst.msk [vmem:[#allocation3 + $0x1f8] sm:$0xff] %vm5413, %v5349
        %5445 = vst.msk [vmem:[#allocation3 + $0x210] sm:$0xff] %vm5411, %v5351
        %5446 = vst.msk [vmem:[#allocation3 + $0x218] sm:$0xff] %vm5413, %v5351
        %5447 = vst.msk [vmem:[#allocation3 + $0x230] sm:$0xff] %vm5411, %v5353
        %5448 = vst.msk [vmem:[#allocation3 + $0x238] sm:$0xff] %vm5413, %v5353
        %5449 = vst.msk [vmem:[#allocation3 + $0x250] sm:$0xff] %vm5411, %v5355
        %5450 = vst.msk [vmem:[#allocation3 + $0x258] sm:$0xff] %vm5413, %v5355
        %5451 = vst.msk [vmem:[#allocation3 + $0x270] sm:$0xff] %vm5411, %v5357
        %5452 = vst.msk [vmem:[#allocation3 + $0x278] sm:$0xff] %vm5413, %v5357
        %5453 = vst.msk [vmem:[#allocation3 + $0x290] sm:$0xff] %vm5411, %v5359
        %5454 = vst.msk [vmem:[#allocation3 + $0x298] sm:$0xff] %vm5413, %v5359
        %5455 = vst.msk [vmem:[#allocation3 + $0x2b0] sm:$0xff] %vm5411, %v5361
        %5456 = vst.msk [vmem:[#allocation3 + $0x2b8] sm:$0xff] %vm5413, %v5361
        %5457 = vst.msk [vmem:[#allocation3 + $0x2d0] sm:$0xff] %vm5411, %v5363
        %5458 = vst.msk [vmem:[#allocation3 + $0x2d8] sm:$0xff] %vm5413, %v5363
        %5459 = vst.msk [vmem:[#allocation3 + $0x2f0] sm:$0xff] %vm5411, %v5365
        %5460 = vst.msk [vmem:[#allocation3 + $0x2f8] sm:$0xff] %vm5413, %v5365
        %5461 = vst.msk [vmem:[#allocation3 + $0x310] sm:$0xff] %vm5411, %v5367
        %5462 = vst.msk [vmem:[#allocation3 + $0x318] sm:$0xff] %vm5413, %v5367
        %5463 = vst.msk [vmem:[#allocation3 + $0x330] sm:$0xff] %vm5411, %v5369
        %5464 = vst.msk [vmem:[#allocation3 + $0x338] sm:$0xff] %vm5413, %v5369
        %5465 = vst.msk [vmem:[#allocation3 + $0x350] sm:$0xff] %vm5411, %v5371
        %5466 = vst.msk [vmem:[#allocation3 + $0x358] sm:$0xff] %vm5413, %v5371
        %5467 = vst.msk [vmem:[#allocation3 + $0x370] sm:$0xff] %vm5411, %v5373
        %5468 = vst.msk [vmem:[#allocation3 + $0x378] sm:$0xff] %vm5413, %v5373
        %5469 = vst.msk [vmem:[#allocation3 + $0x390] sm:$0xff] %vm5411, %v5375
        %5470 = vst.msk [vmem:[#allocation3 + $0x398] sm:$0xff] %vm5413, %v5375
        %5471 = vst.msk [vmem:[#allocation3 + $0x3b0] sm:$0xff] %vm5411, %v5377
        %5472 = vst.msk [vmem:[#allocation3 + $0x3b8] sm:$0xff] %vm5413, %v5377
        %5473 = vst.msk [vmem:[#allocation3 + $0x3d0] sm:$0xff] %vm5411, %v5379
        %5474 = vst.msk [vmem:[#allocation3 + $0x3d8] sm:$0xff] %vm5413, %v5379
        %v5475 = vld [vmem:[#allocation2 + $0x48] sm:$0xff]
        %v5476 = vld [vmem:[#allocation2 + $0x50] sm:$0xff]
        %v5477 = vld [vmem:[#allocation2 + $0x58] sm:$0xff]
        %v5478 = vld [vmem:[#allocation2 + $0x60] sm:$0xff]
        %v5479 = vld [vmem:[#allocation2 + $0x68] sm:$0xff]
        %v5480 = vld [vmem:[#allocation2 + $0x70] sm:$0xff]
        %v5481 = vld [vmem:[#allocation2 + $0x78] sm:$0xff]
        %v5482 = vld [vmem:[#allocation2 + $0x80] sm:$0xff]
        %v5483 = vld [vmem:[#allocation2 + $0x88] sm:$0xff]
        %v5484 = vld [vmem:[#allocation2 + $0x90] sm:$0xff]
        %v5485 = vld [vmem:[#allocation2 + $0x98] sm:$0xff]
        %v5486 = vld [vmem:[#allocation2 + $0xa0] sm:$0xff]
        %v5487 = vld [vmem:[#allocation2 + $0xa8] sm:$0xff]
        %v5488 = vld [vmem:[#allocation2 + $0xb0] sm:$0xff]
        %v5489 = vld [vmem:[#allocation2 + $0xb8] sm:$0xff]
        %v5490 = vld [vmem:[#allocation2 + $0xc0] sm:$0xff]
        %v5491 = vld [vmem:[#allocation2 + $0xc8] sm:$0xff]
        %v5492 = vld [vmem:[#allocation2 + $0xd0] sm:$0xff]
        %v5493 = vld [vmem:[#allocation2 + $0xd8] sm:$0xff]
        %v5494 = vld [vmem:[#allocation2 + $0xe0] sm:$0xff]
        %v5495 = vld [vmem:[#allocation2 + $0xe8] sm:$0xff]
        %v5496 = vld [vmem:[#allocation2 + $0xf0] sm:$0xff]
        %v5497 = vld [vmem:[#allocation2 + $0xf8] sm:$0xff]
        %v5498 = vld [vmem:[#allocation2 + $0x100] sm:$0xff]
        %v5499 = vld [vmem:[#allocation2 + $0x108] sm:$0xff]
        %v5500 = vld [vmem:[#allocation2 + $0x110] sm:$0xff]
        %v5501 = vld [vmem:[#allocation2 + $0x118] sm:$0xff]
        %v5502 = vld [vmem:[#allocation2 + $0x120] sm:$0xff]
        %v5503 = vld [vmem:[#allocation2 + $0x128] sm:$0xff]
        %v5504 = vld [vmem:[#allocation2 + $0x130] sm:$0xff]
        %v5505 = vld [vmem:[#allocation2 + $0x138] sm:$0xff]
        %5537 = vrot.lane.b32.xlu0 %v5475, 16
        %v5538 = vpop.permute.xlu0 %5537
        %5539 = vrot.lane.b32.xlu0 %v5476, 16
        %v5540 = vpop.permute.xlu0 %5539
        %5541 = vrot.lane.b32.xlu0 %v5477, 16
        %v5542 = vpop.permute.xlu0 %5541
        %5543 = vrot.lane.b32.xlu0 %v5478, 16
        %v5544 = vpop.permute.xlu0 %5543
        %5545 = vrot.lane.b32.xlu0 %v5479, 16
        %v5546 = vpop.permute.xlu0 %5545
        %5547 = vrot.lane.b32.xlu0 %v5480, 16
        %v5548 = vpop.permute.xlu0 %5547
        %5549 = vrot.lane.b32.xlu0 %v5481, 16
        %v5550 = vpop.permute.xlu0 %5549
        %5551 = vrot.lane.b32.xlu0 %v5482, 16
        %v5552 = vpop.permute.xlu0 %5551
        %5553 = vrot.lane.b32.xlu0 %v5483, 16
        %v5554 = vpop.permute.xlu0 %5553
        %5555 = vrot.lane.b32.xlu0 %v5484, 16
        %v5556 = vpop.permute.xlu0 %5555
        %5557 = vrot.lane.b32.xlu0 %v5485, 16
        %v5558 = vpop.permute.xlu0 %5557
        %5559 = vrot.lane.b32.xlu0 %v5486, 16
        %v5560 = vpop.permute.xlu0 %5559
        %5561 = vrot.lane.b32.xlu0 %v5487, 16
        %v5562 = vpop.permute.xlu0 %5561
        %5563 = vrot.lane.b32.xlu0 %v5488, 16
        %v5564 = vpop.permute.xlu0 %5563
        %5565 = vrot.lane.b32.xlu0 %v5489, 16
        %v5566 = vpop.permute.xlu0 %5565
        %5567 = vrot.lane.b32.xlu0 %v5490, 16
        %v5568 = vpop.permute.xlu0 %5567
        %5569 = vrot.lane.b32.xlu0 %v5491, 16
        %v5570 = vpop.permute.xlu0 %5569
        %5571 = vrot.lane.b32.xlu0 %v5492, 16
        %v5572 = vpop.permute.xlu0 %5571
        %5573 = vrot.lane.b32.xlu0 %v5493, 16
        %v5574 = vpop.permute.xlu0 %5573
        %5575 = vrot.lane.b32.xlu0 %v5494, 16
        %v5576 = vpop.permute.xlu0 %5575
        %5577 = vrot.lane.b32.xlu0 %v5495, 16
        %v5578 = vpop.permute.xlu0 %5577
        %5579 = vrot.lane.b32.xlu0 %v5496, 16
        %v5580 = vpop.permute.xlu0 %5579
        %5581 = vrot.lane.b32.xlu0 %v5497, 16
        %v5582 = vpop.permute.xlu0 %5581
        %5583 = vrot.lane.b32.xlu0 %v5498, 16
        %v5584 = vpop.permute.xlu0 %5583
        %5585 = vrot.lane.b32.xlu0 %v5499, 16
        %v5586 = vpop.permute.xlu0 %5585
        %5587 = vrot.lane.b32.xlu0 %v5500, 16
        %v5588 = vpop.permute.xlu0 %5587
        %5589 = vrot.lane.b32.xlu0 %v5501, 16
        %v5590 = vpop.permute.xlu0 %5589
        %5591 = vrot.lane.b32.xlu0 %v5502, 16
        %v5592 = vpop.permute.xlu0 %5591
        %5593 = vrot.lane.b32.xlu0 %v5503, 16
        %v5594 = vpop.permute.xlu0 %5593
        %5595 = vrot.lane.b32.xlu0 %v5504, 16
        %v5596 = vpop.permute.xlu0 %5595
        %5597 = vrot.lane.b32.xlu0 %v5505, 16
        %v5598 = vpop.permute.xlu0 %5597
        %vm5630 = vcmask 294016
        %5631 = vst.msk [vmem:[#allocation3 + $0x18] sm:$0xff] %vm5630, %v5538
        %5632 = vst.msk [vmem:[#allocation3 + $0x38] sm:$0xff] %vm5630, %v5540
        %5633 = vst.msk [vmem:[#allocation3 + $0x58] sm:$0xff] %vm5630, %v5542
        %5634 = vst.msk [vmem:[#allocation3 + $0x78] sm:$0xff] %vm5630, %v5544
        %5635 = vst.msk [vmem:[#allocation3 + $0x98] sm:$0xff] %vm5630, %v5546
        %5636 = vst.msk [vmem:[#allocation3 + $0xb8] sm:$0xff] %vm5630, %v5548
        %5637 = vst.msk [vmem:[#allocation3 + $0xd8] sm:$0xff] %vm5630, %v5550
        %5638 = vst.msk [vmem:[#allocation3 + $0xf8] sm:$0xff] %vm5630, %v5552
        %5639 = vst.msk [vmem:[#allocation3 + $0x118] sm:$0xff] %vm5630, %v5554
        %5640 = vst.msk [vmem:[#allocation3 + $0x138] sm:$0xff] %vm5630, %v5556
        %5641 = vst.msk [vmem:[#allocation3 + $0x158] sm:$0xff] %vm5630, %v5558
        %5642 = vst.msk [vmem:[#allocation3 + $0x178] sm:$0xff] %vm5630, %v5560
        %5643 = vst.msk [vmem:[#allocation3 + $0x198] sm:$0xff] %vm5630, %v5562
        %5644 = vst.msk [vmem:[#allocation3 + $0x1b8] sm:$0xff] %vm5630, %v5564
        %5645 = vst.msk [vmem:[#allocation3 + $0x1d8] sm:$0xff] %vm5630, %v5566
        %5646 = vst.msk [vmem:[#allocation3 + $0x1f8] sm:$0xff] %vm5630, %v5568
        %5647 = vst.msk [vmem:[#allocation3 + $0x218] sm:$0xff] %vm5630, %v5570
        %5648 = vst.msk [vmem:[#allocation3 + $0x238] sm:$0xff] %vm5630, %v5572
        %5649 = vst.msk [vmem:[#allocation3 + $0x258] sm:$0xff] %vm5630, %v5574
        %5650 = vst.msk [vmem:[#allocation3 + $0x278] sm:$0xff] %vm5630, %v5576
        %5651 = vst.msk [vmem:[#allocation3 + $0x298] sm:$0xff] %vm5630, %v5578
        %5652 = vst.msk [vmem:[#allocation3 + $0x2b8] sm:$0xff] %vm5630, %v5580
        %5653 = vst.msk [vmem:[#allocation3 + $0x2d8] sm:$0xff] %vm5630, %v5582
        %5654 = vst.msk [vmem:[#allocation3 + $0x2f8] sm:$0xff] %vm5630, %v5584
        %5655 = vst.msk [vmem:[#allocation3 + $0x318] sm:$0xff] %vm5630, %v5586
        %5656 = vst.msk [vmem:[#allocation3 + $0x338] sm:$0xff] %vm5630, %v5588
        %5657 = vst.msk [vmem:[#allocation3 + $0x358] sm:$0xff] %vm5630, %v5590
        %5658 = vst.msk [vmem:[#allocation3 + $0x378] sm:$0xff] %vm5630, %v5592
        %5659 = vst.msk [vmem:[#allocation3 + $0x398] sm:$0xff] %vm5630, %v5594
        %5660 = vst.msk [vmem:[#allocation3 + $0x3b8] sm:$0xff] %vm5630, %v5596
        %5661 = vst.msk [vmem:[#allocation3 + $0x3d8] sm:$0xff] %vm5630, %v5598
        %v5662 = vld [vmem:[#allocation2 + $0x49] sm:$0xff]
        %v5663 = vld [vmem:[#allocation2 + $0x51] sm:$0xff]
        %v5664 = vld [vmem:[#allocation2 + $0x59] sm:$0xff]
        %v5665 = vld [vmem:[#allocation2 + $0x61] sm:$0xff]
        %v5666 = vld [vmem:[#allocation2 + $0x69] sm:$0xff]
        %v5667 = vld [vmem:[#allocation2 + $0x71] sm:$0xff]
        %v5668 = vld [vmem:[#allocation2 + $0x79] sm:$0xff]
        %v5669 = vld [vmem:[#allocation2 + $0x81] sm:$0xff]
        %v5670 = vld [vmem:[#allocation2 + $0x89] sm:$0xff]
        %v5671 = vld [vmem:[#allocation2 + $0x91] sm:$0xff]
        %v5672 = vld [vmem:[#allocation2 + $0x99] sm:$0xff]
        %v5673 = vld [vmem:[#allocation2 + $0xa1] sm:$0xff]
        %v5674 = vld [vmem:[#allocation2 + $0xa9] sm:$0xff]
        %v5675 = vld [vmem:[#allocation2 + $0xb1] sm:$0xff]
        %v5676 = vld [vmem:[#allocation2 + $0xb9] sm:$0xff]
        %v5677 = vld [vmem:[#allocation2 + $0xc1] sm:$0xff]
        %v5678 = vld [vmem:[#allocation2 + $0xc9] sm:$0xff]
        %v5679 = vld [vmem:[#allocation2 + $0xd1] sm:$0xff]
        %v5680 = vld [vmem:[#allocation2 + $0xd9] sm:$0xff]
        %v5681 = vld [vmem:[#allocation2 + $0xe1] sm:$0xff]
        %v5682 = vld [vmem:[#allocation2 + $0xe9] sm:$0xff]
        %v5683 = vld [vmem:[#allocation2 + $0xf1] sm:$0xff]
        %v5684 = vld [vmem:[#allocation2 + $0xf9] sm:$0xff]
        %v5685 = vld [vmem:[#allocation2 + $0x101] sm:$0xff]
        %v5686 = vld [vmem:[#allocation2 + $0x109] sm:$0xff]
        %v5687 = vld [vmem:[#allocation2 + $0x111] sm:$0xff]
        %v5688 = vld [vmem:[#allocation2 + $0x119] sm:$0xff]
        %v5689 = vld [vmem:[#allocation2 + $0x121] sm:$0xff]
        %v5690 = vld [vmem:[#allocation2 + $0x129] sm:$0xff]
        %v5691 = vld [vmem:[#allocation2 + $0x131] sm:$0xff]
        %v5692 = vld [vmem:[#allocation2 + $0x139] sm:$0xff]
        %5724 = vrot.lane.b32.xlu0 %v5662, 36
        %v5725 = vpop.permute.xlu0 %5724
        %5726 = vrot.lane.b32.xlu0 %v5663, 36
        %v5727 = vpop.permute.xlu0 %5726
        %5728 = vrot.lane.b32.xlu0 %v5664, 36
        %v5729 = vpop.permute.xlu0 %5728
        %5730 = vrot.lane.b32.xlu0 %v5665, 36
        %v5731 = vpop.permute.xlu0 %5730
        %5732 = vrot.lane.b32.xlu0 %v5666, 36
        %v5733 = vpop.permute.xlu0 %5732
        %5734 = vrot.lane.b32.xlu0 %v5667, 36
        %v5735 = vpop.permute.xlu0 %5734
        %5736 = vrot.lane.b32.xlu0 %v5668, 36
        %v5737 = vpop.permute.xlu0 %5736
        %5738 = vrot.lane.b32.xlu0 %v5669, 36
        %v5739 = vpop.permute.xlu0 %5738
        %5740 = vrot.lane.b32.xlu0 %v5670, 36
        %v5741 = vpop.permute.xlu0 %5740
        %5742 = vrot.lane.b32.xlu0 %v5671, 36
        %v5743 = vpop.permute.xlu0 %5742
        %5744 = vrot.lane.b32.xlu0 %v5672, 36
        %v5745 = vpop.permute.xlu0 %5744
        %5746 = vrot.lane.b32.xlu0 %v5673, 36
        %v5747 = vpop.permute.xlu0 %5746
        %5748 = vrot.lane.b32.xlu0 %v5674, 36
        %v5749 = vpop.permute.xlu0 %5748
        %5750 = vrot.lane.b32.xlu0 %v5675, 36
        %v5751 = vpop.permute.xlu0 %5750
        %5752 = vrot.lane.b32.xlu0 %v5676, 36
        %v5753 = vpop.permute.xlu0 %5752
        %5754 = vrot.lane.b32.xlu0 %v5677, 36
        %v5755 = vpop.permute.xlu0 %5754
        %5756 = vrot.lane.b32.xlu0 %v5678, 36
        %v5757 = vpop.permute.xlu0 %5756
        %5758 = vrot.lane.b32.xlu0 %v5679, 36
        %v5759 = vpop.permute.xlu0 %5758
        %5760 = vrot.lane.b32.xlu0 %v5680, 36
        %v5761 = vpop.permute.xlu0 %5760
        %5762 = vrot.lane.b32.xlu0 %v5681, 36
        %v5763 = vpop.permute.xlu0 %5762
        %5764 = vrot.lane.b32.xlu0 %v5682, 36
        %v5765 = vpop.permute.xlu0 %5764
        %5766 = vrot.lane.b32.xlu0 %v5683, 36
        %v5767 = vpop.permute.xlu0 %5766
        %5768 = vrot.lane.b32.xlu0 %v5684, 36
        %v5769 = vpop.permute.xlu0 %5768
        %5770 = vrot.lane.b32.xlu0 %v5685, 36
        %v5771 = vpop.permute.xlu0 %5770
        %5772 = vrot.lane.b32.xlu0 %v5686, 36
        %v5773 = vpop.permute.xlu0 %5772
        %5774 = vrot.lane.b32.xlu0 %v5687, 36
        %v5775 = vpop.permute.xlu0 %5774
        %5776 = vrot.lane.b32.xlu0 %v5688, 36
        %v5777 = vpop.permute.xlu0 %5776
        %5778 = vrot.lane.b32.xlu0 %v5689, 36
        %v5779 = vpop.permute.xlu0 %5778
        %5780 = vrot.lane.b32.xlu0 %v5690, 36
        %v5781 = vpop.permute.xlu0 %5780
        %5782 = vrot.lane.b32.xlu0 %v5691, 36
        %v5783 = vpop.permute.xlu0 %5782
        %5784 = vrot.lane.b32.xlu0 %v5692, 36
        %v5785 = vpop.permute.xlu0 %5784
        %vm5817 = vcmask 458016
        %5818 = vst.msk [vmem:[#allocation3 + $0x18] sm:$0xff] %vm5817, %v5725
        %5819 = vst.msk [vmem:[#allocation3 + $0x38] sm:$0xff] %vm5817, %v5727
        %5820 = vst.msk [vmem:[#allocation3 + $0x58] sm:$0xff] %vm5817, %v5729
        %5821 = vst.msk [vmem:[#allocation3 + $0x78] sm:$0xff] %vm5817, %v5731
        %5822 = vst.msk [vmem:[#allocation3 + $0x98] sm:$0xff] %vm5817, %v5733
        %5823 = vst.msk [vmem:[#allocation3 + $0xb8] sm:$0xff] %vm5817, %v5735
        %5824 = vst.msk [vmem:[#allocation3 + $0xd8] sm:$0xff] %vm5817, %v5737
        %5825 = vst.msk [vmem:[#allocation3 + $0xf8] sm:$0xff] %vm5817, %v5739
        %5826 = vst.msk [vmem:[#allocation3 + $0x118] sm:$0xff] %vm5817, %v5741
        %5827 = vst.msk [vmem:[#allocation3 + $0x138] sm:$0xff] %vm5817, %v5743
        %5828 = vst.msk [vmem:[#allocation3 + $0x158] sm:$0xff] %vm5817, %v5745
        %5829 = vst.msk [vmem:[#allocation3 + $0x178] sm:$0xff] %vm5817, %v5747
        %5830 = vst.msk [vmem:[#allocation3 + $0x198] sm:$0xff] %vm5817, %v5749
        %5831 = vst.msk [vmem:[#allocation3 + $0x1b8] sm:$0xff] %vm5817, %v5751
        %5832 = vst.msk [vmem:[#allocation3 + $0x1d8] sm:$0xff] %vm5817, %v5753
        %5833 = vst.msk [vmem:[#allocation3 + $0x1f8] sm:$0xff] %vm5817, %v5755
        %5834 = vst.msk [vmem:[#allocation3 + $0x218] sm:$0xff] %vm5817, %v5757
        %5835 = vst.msk [vmem:[#allocation3 + $0x238] sm:$0xff] %vm5817, %v5759
        %5836 = vst.msk [vmem:[#allocation3 + $0x258] sm:$0xff] %vm5817, %v5761
        %5837 = vst.msk [vmem:[#allocation3 + $0x278] sm:$0xff] %vm5817, %v5763
        %5838 = vst.msk [vmem:[#allocation3 + $0x298] sm:$0xff] %vm5817, %v5765
        %5839 = vst.msk [vmem:[#allocation3 + $0x2b8] sm:$0xff] %vm5817, %v5767
        %5840 = vst.msk [vmem:[#allocation3 + $0x2d8] sm:$0xff] %vm5817, %v5769
        %5841 = vst.msk [vmem:[#allocation3 + $0x2f8] sm:$0xff] %vm5817, %v5771
        %5842 = vst.msk [vmem:[#allocation3 + $0x318] sm:$0xff] %vm5817, %v5773
        %5843 = vst.msk [vmem:[#allocation3 + $0x338] sm:$0xff] %vm5817, %v5775
        %5844 = vst.msk [vmem:[#allocation3 + $0x358] sm:$0xff] %vm5817, %v5777
        %5845 = vst.msk [vmem:[#allocation3 + $0x378] sm:$0xff] %vm5817, %v5779
        %5846 = vst.msk [vmem:[#allocation3 + $0x398] sm:$0xff] %vm5817, %v5781
        %5847 = vst.msk [vmem:[#allocation3 + $0x3b8] sm:$0xff] %vm5817, %v5783
        %5848 = vst.msk [vmem:[#allocation3 + $0x3d8] sm:$0xff] %vm5817, %v5785
        %v5849 = vld [vmem:[#allocation2 + $0x4a] sm:$0xff]
        %v5850 = vld [vmem:[#allocation2 + $0x52] sm:$0xff]
        %v5851 = vld [vmem:[#allocation2 + $0x5a] sm:$0xff]
        %v5852 = vld [vmem:[#allocation2 + $0x62] sm:$0xff]
        %v5853 = vld [vmem:[#allocation2 + $0x6a] sm:$0xff]
        %v5854 = vld [vmem:[#allocation2 + $0x72] sm:$0xff]
        %v5855 = vld [vmem:[#allocation2 + $0x7a] sm:$0xff]
        %v5856 = vld [vmem:[#allocation2 + $0x82] sm:$0xff]
        %v5857 = vld [vmem:[#allocation2 + $0x8a] sm:$0xff]
        %v5858 = vld [vmem:[#allocation2 + $0x92] sm:$0xff]
        %v5859 = vld [vmem:[#allocation2 + $0x9a] sm:$0xff]
        %v5860 = vld [vmem:[#allocation2 + $0xa2] sm:$0xff]
        %v5861 = vld [vmem:[#allocation2 + $0xaa] sm:$0xff]
        %v5862 = vld [vmem:[#allocation2 + $0xb2] sm:$0xff]
        %v5863 = vld [vmem:[#allocation2 + $0xba] sm:$0xff]
        %v5864 = vld [vmem:[#allocation2 + $0xc2] sm:$0xff]
        %v5865 = vld [vmem:[#allocation2 + $0xca] sm:$0xff]
        %v5866 = vld [vmem:[#allocation2 + $0xd2] sm:$0xff]
        %v5867 = vld [vmem:[#allocation2 + $0xda] sm:$0xff]
        %v5868 = vld [vmem:[#allocation2 + $0xe2] sm:$0xff]
        %v5869 = vld [vmem:[#allocation2 + $0xea] sm:$0xff]
        %v5870 = vld [vmem:[#allocation2 + $0xf2] sm:$0xff]
        %v5871 = vld [vmem:[#allocation2 + $0xfa] sm:$0xff]
        %v5872 = vld [vmem:[#allocation2 + $0x102] sm:$0xff]
        %v5873 = vld [vmem:[#allocation2 + $0x10a] sm:$0xff]
        %v5874 = vld [vmem:[#allocation2 + $0x112] sm:$0xff]
        %v5875 = vld [vmem:[#allocation2 + $0x11a] sm:$0xff]
        %v5876 = vld [vmem:[#allocation2 + $0x122] sm:$0xff]
        %v5877 = vld [vmem:[#allocation2 + $0x12a] sm:$0xff]
        %v5878 = vld [vmem:[#allocation2 + $0x132] sm:$0xff]
        %v5879 = vld [vmem:[#allocation2 + $0x13a] sm:$0xff]
        %5911 = vrot.lane.b32.xlu0 %v5849, 56
        %v5912 = vpop.permute.xlu0 %5911
        %5913 = vrot.lane.b32.xlu0 %v5850, 56
        %v5914 = vpop.permute.xlu0 %5913
        %5915 = vrot.lane.b32.xlu0 %v5851, 56
        %v5916 = vpop.permute.xlu0 %5915
        %5917 = vrot.lane.b32.xlu0 %v5852, 56
        %v5918 = vpop.permute.xlu0 %5917
        %5919 = vrot.lane.b32.xlu0 %v5853, 56
        %v5920 = vpop.permute.xlu0 %5919
        %5921 = vrot.lane.b32.xlu0 %v5854, 56
        %v5922 = vpop.permute.xlu0 %5921
        %5923 = vrot.lane.b32.xlu0 %v5855, 56
        %v5924 = vpop.permute.xlu0 %5923
        %5925 = vrot.lane.b32.xlu0 %v5856, 56
        %v5926 = vpop.permute.xlu0 %5925
        %5927 = vrot.lane.b32.xlu0 %v5857, 56
        %v5928 = vpop.permute.xlu0 %5927
        %5929 = vrot.lane.b32.xlu0 %v5858, 56
        %v5930 = vpop.permute.xlu0 %5929
        %5931 = vrot.lane.b32.xlu0 %v5859, 56
        %v5932 = vpop.permute.xlu0 %5931
        %5933 = vrot.lane.b32.xlu0 %v5860, 56
        %v5934 = vpop.permute.xlu0 %5933
        %5935 = vrot.lane.b32.xlu0 %v5861, 56
        %v5936 = vpop.permute.xlu0 %5935
        %5937 = vrot.lane.b32.xlu0 %v5862, 56
        %v5938 = vpop.permute.xlu0 %5937
        %5939 = vrot.lane.b32.xlu0 %v5863, 56
        %v5940 = vpop.permute.xlu0 %5939
        %5941 = vrot.lane.b32.xlu0 %v5864, 56
        %v5942 = vpop.permute.xlu0 %5941
        %5943 = vrot.lane.b32.xlu0 %v5865, 56
        %v5944 = vpop.permute.xlu0 %5943
        %5945 = vrot.lane.b32.xlu0 %v5866, 56
        %v5946 = vpop.permute.xlu0 %5945
        %5947 = vrot.lane.b32.xlu0 %v5867, 56
        %v5948 = vpop.permute.xlu0 %5947
        %5949 = vrot.lane.b32.xlu0 %v5868, 56
        %v5950 = vpop.permute.xlu0 %5949
        %5951 = vrot.lane.b32.xlu0 %v5869, 56
        %v5952 = vpop.permute.xlu0 %5951
        %5953 = vrot.lane.b32.xlu0 %v5870, 56
        %v5954 = vpop.permute.xlu0 %5953
        %5955 = vrot.lane.b32.xlu0 %v5871, 56
        %v5956 = vpop.permute.xlu0 %5955
        %5957 = vrot.lane.b32.xlu0 %v5872, 56
        %v5958 = vpop.permute.xlu0 %5957
        %5959 = vrot.lane.b32.xlu0 %v5873, 56
        %v5960 = vpop.permute.xlu0 %5959
        %5961 = vrot.lane.b32.xlu0 %v5874, 56
        %v5962 = vpop.permute.xlu0 %5961
        %5963 = vrot.lane.b32.xlu0 %v5875, 56
        %v5964 = vpop.permute.xlu0 %5963
        %5965 = vrot.lane.b32.xlu0 %v5876, 56
        %v5966 = vpop.permute.xlu0 %5965
        %5967 = vrot.lane.b32.xlu0 %v5877, 56
        %v5968 = vpop.permute.xlu0 %5967
        %5969 = vrot.lane.b32.xlu0 %v5878, 56
        %v5970 = vpop.permute.xlu0 %5969
        %5971 = vrot.lane.b32.xlu0 %v5879, 56
        %v5972 = vpop.permute.xlu0 %5971
        %vm6004 = vcmask 622016
        %6005 = vst.msk [vmem:[#allocation3 + $0x18] sm:$0xff] %vm6004, %v5912
        %6006 = vst.msk [vmem:[#allocation3 + $0x38] sm:$0xff] %vm6004, %v5914
        %6007 = vst.msk [vmem:[#allocation3 + $0x58] sm:$0xff] %vm6004, %v5916
        %6008 = vst.msk [vmem:[#allocation3 + $0x78] sm:$0xff] %vm6004, %v5918
        %6009 = vst.msk [vmem:[#allocation3 + $0x98] sm:$0xff] %vm6004, %v5920
        %6010 = vst.msk [vmem:[#allocation3 + $0xb8] sm:$0xff] %vm6004, %v5922
        %6011 = vst.msk [vmem:[#allocation3 + $0xd8] sm:$0xff] %vm6004, %v5924
        %6012 = vst.msk [vmem:[#allocation3 + $0xf8] sm:$0xff] %vm6004, %v5926
        %6013 = vst.msk [vmem:[#allocation3 + $0x118] sm:$0xff] %vm6004, %v5928
        %6014 = vst.msk [vmem:[#allocation3 + $0x138] sm:$0xff] %vm6004, %v5930
        %6015 = vst.msk [vmem:[#allocation3 + $0x158] sm:$0xff] %vm6004, %v5932
        %6016 = vst.msk [vmem:[#allocation3 + $0x178] sm:$0xff] %vm6004, %v5934
        %6017 = vst.msk [vmem:[#allocation3 + $0x198] sm:$0xff] %vm6004, %v5936
        %6018 = vst.msk [vmem:[#allocation3 + $0x1b8] sm:$0xff] %vm6004, %v5938
        %6019 = vst.msk [vmem:[#allocation3 + $0x1d8] sm:$0xff] %vm6004, %v5940
        %6020 = vst.msk [vmem:[#allocation3 + $0x1f8] sm:$0xff] %vm6004, %v5942
        %6021 = vst.msk [vmem:[#allocation3 + $0x218] sm:$0xff] %vm6004, %v5944
        %6022 = vst.msk [vmem:[#allocation3 + $0x238] sm:$0xff] %vm6004, %v5946
        %6023 = vst.msk [vmem:[#allocation3 + $0x258] sm:$0xff] %vm6004, %v5948
        %6024 = vst.msk [vmem:[#allocation3 + $0x278] sm:$0xff] %vm6004, %v5950
        %6025 = vst.msk [vmem:[#allocation3 + $0x298] sm:$0xff] %vm6004, %v5952
        %6026 = vst.msk [vmem:[#allocation3 + $0x2b8] sm:$0xff] %vm6004, %v5954
        %6027 = vst.msk [vmem:[#allocation3 + $0x2d8] sm:$0xff] %vm6004, %v5956
        %6028 = vst.msk [vmem:[#allocation3 + $0x2f8] sm:$0xff] %vm6004, %v5958
        %6029 = vst.msk [vmem:[#allocation3 + $0x318] sm:$0xff] %vm6004, %v5960
        %6030 = vst.msk [vmem:[#allocation3 + $0x338] sm:$0xff] %vm6004, %v5962
        %6031 = vst.msk [vmem:[#allocation3 + $0x358] sm:$0xff] %vm6004, %v5964
        %6032 = vst.msk [vmem:[#allocation3 + $0x378] sm:$0xff] %vm6004, %v5966
        %6033 = vst.msk [vmem:[#allocation3 + $0x398] sm:$0xff] %vm6004, %v5968
        %6034 = vst.msk [vmem:[#allocation3 + $0x3b8] sm:$0xff] %vm6004, %v5970
        %6035 = vst.msk [vmem:[#allocation3 + $0x3d8] sm:$0xff] %vm6004, %v5972
        %v6036 = vld [vmem:[#allocation2 + $0x4b] sm:$0xff]
        %v6037 = vld [vmem:[#allocation2 + $0x53] sm:$0xff]
        %v6038 = vld [vmem:[#allocation2 + $0x5b] sm:$0xff]
        %v6039 = vld [vmem:[#allocation2 + $0x63] sm:$0xff]
        %v6040 = vld [vmem:[#allocation2 + $0x6b] sm:$0xff]
        %v6041 = vld [vmem:[#allocation2 + $0x73] sm:$0xff]
        %v6042 = vld [vmem:[#allocation2 + $0x7b] sm:$0xff]
        %v6043 = vld [vmem:[#allocation2 + $0x83] sm:$0xff]
        %v6044 = vld [vmem:[#allocation2 + $0x8b] sm:$0xff]
        %v6045 = vld [vmem:[#allocation2 + $0x93] sm:$0xff]
        %v6046 = vld [vmem:[#allocation2 + $0x9b] sm:$0xff]
        %v6047 = vld [vmem:[#allocation2 + $0xa3] sm:$0xff]
        %v6048 = vld [vmem:[#allocation2 + $0xab] sm:$0xff]
        %v6049 = vld [vmem:[#allocation2 + $0xb3] sm:$0xff]
        %v6050 = vld [vmem:[#allocation2 + $0xbb] sm:$0xff]
        %v6051 = vld [vmem:[#allocation2 + $0xc3] sm:$0xff]
        %v6052 = vld [vmem:[#allocation2 + $0xcb] sm:$0xff]
        %v6053 = vld [vmem:[#allocation2 + $0xd3] sm:$0xff]
        %v6054 = vld [vmem:[#allocation2 + $0xdb] sm:$0xff]
        %v6055 = vld [vmem:[#allocation2 + $0xe3] sm:$0xff]
        %v6056 = vld [vmem:[#allocation2 + $0xeb] sm:$0xff]
        %v6057 = vld [vmem:[#allocation2 + $0xf3] sm:$0xff]
        %v6058 = vld [vmem:[#allocation2 + $0xfb] sm:$0xff]
        %v6059 = vld [vmem:[#allocation2 + $0x103] sm:$0xff]
        %v6060 = vld [vmem:[#allocation2 + $0x10b] sm:$0xff]
        %v6061 = vld [vmem:[#allocation2 + $0x113] sm:$0xff]
        %v6062 = vld [vmem:[#allocation2 + $0x11b] sm:$0xff]
        %v6063 = vld [vmem:[#allocation2 + $0x123] sm:$0xff]
        %v6064 = vld [vmem:[#allocation2 + $0x12b] sm:$0xff]
        %v6065 = vld [vmem:[#allocation2 + $0x133] sm:$0xff]
        %v6066 = vld [vmem:[#allocation2 + $0x13b] sm:$0xff]
        %6098 = vrot.lane.b32.xlu0 %v6036, 76
        %v6099 = vpop.permute.xlu0 %6098
        %6100 = vrot.lane.b32.xlu0 %v6037, 76
        %v6101 = vpop.permute.xlu0 %6100
        %6102 = vrot.lane.b32.xlu0 %v6038, 76
        %v6103 = vpop.permute.xlu0 %6102
        %6104 = vrot.lane.b32.xlu0 %v6039, 76
        %v6105 = vpop.permute.xlu0 %6104
        %6106 = vrot.lane.b32.xlu0 %v6040, 76
        %v6107 = vpop.permute.xlu0 %6106
        %6108 = vrot.lane.b32.xlu0 %v6041, 76
        %v6109 = vpop.permute.xlu0 %6108
        %6110 = vrot.lane.b32.xlu0 %v6042, 76
        %v6111 = vpop.permute.xlu0 %6110
        %6112 = vrot.lane.b32.xlu0 %v6043, 76
        %v6113 = vpop.permute.xlu0 %6112
        %6114 = vrot.lane.b32.xlu0 %v6044, 76
        %v6115 = vpop.permute.xlu0 %6114
        %6116 = vrot.lane.b32.xlu0 %v6045, 76
        %v6117 = vpop.permute.xlu0 %6116
        %6118 = vrot.lane.b32.xlu0 %v6046, 76
        %v6119 = vpop.permute.xlu0 %6118
        %6120 = vrot.lane.b32.xlu0 %v6047, 76
        %v6121 = vpop.permute.xlu0 %6120
        %6122 = vrot.lane.b32.xlu0 %v6048, 76
        %v6123 = vpop.permute.xlu0 %6122
        %6124 = vrot.lane.b32.xlu0 %v6049, 76
        %v6125 = vpop.permute.xlu0 %6124
        %6126 = vrot.lane.b32.xlu0 %v6050, 76
        %v6127 = vpop.permute.xlu0 %6126
        %6128 = vrot.lane.b32.xlu0 %v6051, 76
        %v6129 = vpop.permute.xlu0 %6128
        %6130 = vrot.lane.b32.xlu0 %v6052, 76
        %v6131 = vpop.permute.xlu0 %6130
        %6132 = vrot.lane.b32.xlu0 %v6053, 76
        %v6133 = vpop.permute.xlu0 %6132
        %6134 = vrot.lane.b32.xlu0 %v6054, 76
        %v6135 = vpop.permute.xlu0 %6134
        %6136 = vrot.lane.b32.xlu0 %v6055, 76
        %v6137 = vpop.permute.xlu0 %6136
        %6138 = vrot.lane.b32.xlu0 %v6056, 76
        %v6139 = vpop.permute.xlu0 %6138
        %6140 = vrot.lane.b32.xlu0 %v6057, 76
        %v6141 = vpop.permute.xlu0 %6140
        %6142 = vrot.lane.b32.xlu0 %v6058, 76
        %v6143 = vpop.permute.xlu0 %6142
        %6144 = vrot.lane.b32.xlu0 %v6059, 76
        %v6145 = vpop.permute.xlu0 %6144
        %6146 = vrot.lane.b32.xlu0 %v6060, 76
        %v6147 = vpop.permute.xlu0 %6146
        %6148 = vrot.lane.b32.xlu0 %v6061, 76
        %v6149 = vpop.permute.xlu0 %6148
        %6150 = vrot.lane.b32.xlu0 %v6062, 76
        %v6151 = vpop.permute.xlu0 %6150
        %6152 = vrot.lane.b32.xlu0 %v6063, 76
        %v6153 = vpop.permute.xlu0 %6152
        %6154 = vrot.lane.b32.xlu0 %v6064, 76
        %v6155 = vpop.permute.xlu0 %6154
        %6156 = vrot.lane.b32.xlu0 %v6065, 76
        %v6157 = vpop.permute.xlu0 %6156
        %6158 = vrot.lane.b32.xlu0 %v6066, 76
        %v6159 = vpop.permute.xlu0 %6158
        %vm6191 = vcmask 786016
        %6192 = vst.msk [vmem:[#allocation3 + $0x18] sm:$0xff] %vm6191, %v6099
        %6193 = vst.msk [vmem:[#allocation3 + $0x38] sm:$0xff] %vm6191, %v6101
        %6194 = vst.msk [vmem:[#allocation3 + $0x58] sm:$0xff] %vm6191, %v6103
        %6195 = vst.msk [vmem:[#allocation3 + $0x78] sm:$0xff] %vm6191, %v6105
        %6196 = vst.msk [vmem:[#allocation3 + $0x98] sm:$0xff] %vm6191, %v6107
        %6197 = vst.msk [vmem:[#allocation3 + $0xb8] sm:$0xff] %vm6191, %v6109
        %6198 = vst.msk [vmem:[#allocation3 + $0xd8] sm:$0xff] %vm6191, %v6111
        %6199 = vst.msk [vmem:[#allocation3 + $0xf8] sm:$0xff] %vm6191, %v6113
        %6200 = vst.msk [vmem:[#allocation3 + $0x118] sm:$0xff] %vm6191, %v6115
        %6201 = vst.msk [vmem:[#allocation3 + $0x138] sm:$0xff] %vm6191, %v6117
        %6202 = vst.msk [vmem:[#allocation3 + $0x158] sm:$0xff] %vm6191, %v6119
        %6203 = vst.msk [vmem:[#allocation3 + $0x178] sm:$0xff] %vm6191, %v6121
        %6204 = vst.msk [vmem:[#allocation3 + $0x198] sm:$0xff] %vm6191, %v6123
        %6205 = vst.msk [vmem:[#allocation3 + $0x1b8] sm:$0xff] %vm6191, %v6125
        %6206 = vst.msk [vmem:[#allocation3 + $0x1d8] sm:$0xff] %vm6191, %v6127
        %6207 = vst.msk [vmem:[#allocation3 + $0x1f8] sm:$0xff] %vm6191, %v6129
        %6208 = vst.msk [vmem:[#allocation3 + $0x218] sm:$0xff] %vm6191, %v6131
        %6209 = vst.msk [vmem:[#allocation3 + $0x238] sm:$0xff] %vm6191, %v6133
        %6210 = vst.msk [vmem:[#allocation3 + $0x258] sm:$0xff] %vm6191, %v6135
        %6211 = vst.msk [vmem:[#allocation3 + $0x278] sm:$0xff] %vm6191, %v6137
        %6212 = vst.msk [vmem:[#allocation3 + $0x298] sm:$0xff] %vm6191, %v6139
        %6213 = vst.msk [vmem:[#allocation3 + $0x2b8] sm:$0xff] %vm6191, %v6141
        %6214 = vst.msk [vmem:[#allocation3 + $0x2d8] sm:$0xff] %vm6191, %v6143
        %6215 = vst.msk [vmem:[#allocation3 + $0x2f8] sm:$0xff] %vm6191, %v6145
        %6216 = vst.msk [vmem:[#allocation3 + $0x318] sm:$0xff] %vm6191, %v6147
        %6217 = vst.msk [vmem:[#allocation3 + $0x338] sm:$0xff] %vm6191, %v6149
        %6218 = vst.msk [vmem:[#allocation3 + $0x358] sm:$0xff] %vm6191, %v6151
        %6219 = vst.msk [vmem:[#allocation3 + $0x378] sm:$0xff] %vm6191, %v6153
        %6220 = vst.msk [vmem:[#allocation3 + $0x398] sm:$0xff] %vm6191, %v6155
        %6221 = vst.msk [vmem:[#allocation3 + $0x3b8] sm:$0xff] %vm6191, %v6157
        %6222 = vst.msk [vmem:[#allocation3 + $0x3d8] sm:$0xff] %vm6191, %v6159
        %v6223 = vld [vmem:[#allocation2 + $0x4c] sm:$0xff]
        %v6224 = vld [vmem:[#allocation2 + $0x54] sm:$0xff]
        %v6225 = vld [vmem:[#allocation2 + $0x5c] sm:$0xff]
        %v6226 = vld [vmem:[#allocation2 + $0x64] sm:$0xff]
        %v6227 = vld [vmem:[#allocation2 + $0x6c] sm:$0xff]
        %v6228 = vld [vmem:[#allocation2 + $0x74] sm:$0xff]
        %v6229 = vld [vmem:[#allocation2 + $0x7c] sm:$0xff]
        %v6230 = vld [vmem:[#allocation2 + $0x84] sm:$0xff]
        %v6231 = vld [vmem:[#allocation2 + $0x8c] sm:$0xff]
        %v6232 = vld [vmem:[#allocation2 + $0x94] sm:$0xff]
        %v6233 = vld [vmem:[#allocation2 + $0x9c] sm:$0xff]
        %v6234 = vld [vmem:[#allocation2 + $0xa4] sm:$0xff]
        %v6235 = vld [vmem:[#allocation2 + $0xac] sm:$0xff]
        %v6236 = vld [vmem:[#allocation2 + $0xb4] sm:$0xff]
        %v6237 = vld [vmem:[#allocation2 + $0xbc] sm:$0xff]
        %v6238 = vld [vmem:[#allocation2 + $0xc4] sm:$0xff]
        %v6239 = vld [vmem:[#allocation2 + $0xcc] sm:$0xff]
        %v6240 = vld [vmem:[#allocation2 + $0xd4] sm:$0xff]
        %v6241 = vld [vmem:[#allocation2 + $0xdc] sm:$0xff]
        %v6242 = vld [vmem:[#allocation2 + $0xe4] sm:$0xff]
        %v6243 = vld [vmem:[#allocation2 + $0xec] sm:$0xff]
        %v6244 = vld [vmem:[#allocation2 + $0xf4] sm:$0xff]
        %v6245 = vld [vmem:[#allocation2 + $0xfc] sm:$0xff]
        %v6246 = vld [vmem:[#allocation2 + $0x104] sm:$0xff]
        %v6247 = vld [vmem:[#allocation2 + $0x10c] sm:$0xff]
        %v6248 = vld [vmem:[#allocation2 + $0x114] sm:$0xff]
        %v6249 = vld [vmem:[#allocation2 + $0x11c] sm:$0xff]
        %v6250 = vld [vmem:[#allocation2 + $0x124] sm:$0xff]
        %v6251 = vld [vmem:[#allocation2 + $0x12c] sm:$0xff]
        %v6252 = vld [vmem:[#allocation2 + $0x134] sm:$0xff]
        %v6253 = vld [vmem:[#allocation2 + $0x13c] sm:$0xff]
        %6285 = vrot.lane.b32.xlu0 %v6223, 96
        %v6286 = vpop.permute.xlu0 %6285
        %6287 = vrot.lane.b32.xlu0 %v6224, 96
        %v6288 = vpop.permute.xlu0 %6287
        %6289 = vrot.lane.b32.xlu0 %v6225, 96
        %v6290 = vpop.permute.xlu0 %6289
        %6291 = vrot.lane.b32.xlu0 %v6226, 96
        %v6292 = vpop.permute.xlu0 %6291
        %6293 = vrot.lane.b32.xlu0 %v6227, 96
        %v6294 = vpop.permute.xlu0 %6293
        %6295 = vrot.lane.b32.xlu0 %v6228, 96
        %v6296 = vpop.permute.xlu0 %6295
        %6297 = vrot.lane.b32.xlu0 %v6229, 96
        %v6298 = vpop.permute.xlu0 %6297
        %6299 = vrot.lane.b32.xlu0 %v6230, 96
        %v6300 = vpop.permute.xlu0 %6299
        %6301 = vrot.lane.b32.xlu0 %v6231, 96
        %v6302 = vpop.permute.xlu0 %6301
        %6303 = vrot.lane.b32.xlu0 %v6232, 96
        %v6304 = vpop.permute.xlu0 %6303
        %6305 = vrot.lane.b32.xlu0 %v6233, 96
        %v6306 = vpop.permute.xlu0 %6305
        %6307 = vrot.lane.b32.xlu0 %v6234, 96
        %v6308 = vpop.permute.xlu0 %6307
        %6309 = vrot.lane.b32.xlu0 %v6235, 96
        %v6310 = vpop.permute.xlu0 %6309
        %6311 = vrot.lane.b32.xlu0 %v6236, 96
        %v6312 = vpop.permute.xlu0 %6311
        %6313 = vrot.lane.b32.xlu0 %v6237, 96
        %v6314 = vpop.permute.xlu0 %6313
        %6315 = vrot.lane.b32.xlu0 %v6238, 96
        %v6316 = vpop.permute.xlu0 %6315
        %6317 = vrot.lane.b32.xlu0 %v6239, 96
        %v6318 = vpop.permute.xlu0 %6317
        %6319 = vrot.lane.b32.xlu0 %v6240, 96
        %v6320 = vpop.permute.xlu0 %6319
        %6321 = vrot.lane.b32.xlu0 %v6241, 96
        %v6322 = vpop.permute.xlu0 %6321
        %6323 = vrot.lane.b32.xlu0 %v6242, 96
        %v6324 = vpop.permute.xlu0 %6323
        %6325 = vrot.lane.b32.xlu0 %v6243, 96
        %v6326 = vpop.permute.xlu0 %6325
        %6327 = vrot.lane.b32.xlu0 %v6244, 96
        %v6328 = vpop.permute.xlu0 %6327
        %6329 = vrot.lane.b32.xlu0 %v6245, 96
        %v6330 = vpop.permute.xlu0 %6329
        %6331 = vrot.lane.b32.xlu0 %v6246, 96
        %v6332 = vpop.permute.xlu0 %6331
        %6333 = vrot.lane.b32.xlu0 %v6247, 96
        %v6334 = vpop.permute.xlu0 %6333
        %6335 = vrot.lane.b32.xlu0 %v6248, 96
        %v6336 = vpop.permute.xlu0 %6335
        %6337 = vrot.lane.b32.xlu0 %v6249, 96
        %v6338 = vpop.permute.xlu0 %6337
        %6339 = vrot.lane.b32.xlu0 %v6250, 96
        %v6340 = vpop.permute.xlu0 %6339
        %6341 = vrot.lane.b32.xlu0 %v6251, 96
        %v6342 = vpop.permute.xlu0 %6341
        %6343 = vrot.lane.b32.xlu0 %v6252, 96
        %v6344 = vpop.permute.xlu0 %6343
        %6345 = vrot.lane.b32.xlu0 %v6253, 96
        %v6346 = vpop.permute.xlu0 %6345
        %vm6378 = vcmask 950016
        %6379 = vst.msk [vmem:[#allocation3 + $0x18] sm:$0xff] %vm6378, %v6286
        %6380 = vst.msk [vmem:[#allocation3 + $0x38] sm:$0xff] %vm6378, %v6288
        %6381 = vst.msk [vmem:[#allocation3 + $0x58] sm:$0xff] %vm6378, %v6290
        %6382 = vst.msk [vmem:[#allocation3 + $0x78] sm:$0xff] %vm6378, %v6292
        %6383 = vst.msk [vmem:[#allocation3 + $0x98] sm:$0xff] %vm6378, %v6294
        %6384 = vst.msk [vmem:[#allocation3 + $0xb8] sm:$0xff] %vm6378, %v6296
        %6385 = vst.msk [vmem:[#allocation3 + $0xd8] sm:$0xff] %vm6378, %v6298
        %6386 = vst.msk [vmem:[#allocation3 + $0xf8] sm:$0xff] %vm6378, %v6300
        %6387 = vst.msk [vmem:[#allocation3 + $0x118] sm:$0xff] %vm6378, %v6302
        %6388 = vst.msk [vmem:[#allocation3 + $0x138] sm:$0xff] %vm6378, %v6304
        %6389 = vst.msk [vmem:[#allocation3 + $0x158] sm:$0xff] %vm6378, %v6306
        %6390 = vst.msk [vmem:[#allocation3 + $0x178] sm:$0xff] %vm6378, %v6308
        %6391 = vst.msk [vmem:[#allocation3 + $0x198] sm:$0xff] %vm6378, %v6310
        %6392 = vst.msk [vmem:[#allocation3 + $0x1b8] sm:$0xff] %vm6378, %v6312
        %6393 = vst.msk [vmem:[#allocation3 + $0x1d8] sm:$0xff] %vm6378, %v6314
        %6394 = vst.msk [vmem:[#allocation3 + $0x1f8] sm:$0xff] %vm6378, %v6316
        %6395 = vst.msk [vmem:[#allocation3 + $0x218] sm:$0xff] %vm6378, %v6318
        %6396 = vst.msk [vmem:[#allocation3 + $0x238] sm:$0xff] %vm6378, %v6320
        %6397 = vst.msk [vmem:[#allocation3 + $0x258] sm:$0xff] %vm6378, %v6322
        %6398 = vst.msk [vmem:[#allocation3 + $0x278] sm:$0xff] %vm6378, %v6324
        %6399 = vst.msk [vmem:[#allocation3 + $0x298] sm:$0xff] %vm6378, %v6326
        %6400 = vst.msk [vmem:[#allocation3 + $0x2b8] sm:$0xff] %vm6378, %v6328
        %6401 = vst.msk [vmem:[#allocation3 + $0x2d8] sm:$0xff] %vm6378, %v6330
        %6402 = vst.msk [vmem:[#allocation3 + $0x2f8] sm:$0xff] %vm6378, %v6332
        %6403 = vst.msk [vmem:[#allocation3 + $0x318] sm:$0xff] %vm6378, %v6334
        %6404 = vst.msk [vmem:[#allocation3 + $0x338] sm:$0xff] %vm6378, %v6336
        %6405 = vst.msk [vmem:[#allocation3 + $0x358] sm:$0xff] %vm6378, %v6338
        %6406 = vst.msk [vmem:[#allocation3 + $0x378] sm:$0xff] %vm6378, %v6340
        %6407 = vst.msk [vmem:[#allocation3 + $0x398] sm:$0xff] %vm6378, %v6342
        %6408 = vst.msk [vmem:[#allocation3 + $0x3b8] sm:$0xff] %vm6378, %v6344
        %6409 = vst.msk [vmem:[#allocation3 + $0x3d8] sm:$0xff] %vm6378, %v6346
        %v6410 = vld [vmem:[#allocation3] sm:$0xff]
        %v6411 = vld [vmem:[#allocation3 + $0x8] sm:$0xff]
        %v6412 = vld [vmem:[#allocation3 + $0x10] sm:$0xff]
        %v6413 = vld [vmem:[#allocation3 + $0x18] sm:$0xff]
        %v6414 = vld [vmem:[#allocation3 + $0x20] sm:$0xff]
        %v6415 = vld [vmem:[#allocation3 + $0x28] sm:$0xff]
        %v6416 = vld [vmem:[#allocation3 + $0x30] sm:$0xff]
        %v6417 = vld [vmem:[#allocation3 + $0x38] sm:$0xff]
        %v6418 = vld [vmem:[#allocation3 + $0x40] sm:$0xff]
        %v6419 = vld [vmem:[#allocation3 + $0x48] sm:$0xff]
        %v6420 = vld [vmem:[#allocation3 + $0x50] sm:$0xff]
        %v6421 = vld [vmem:[#allocation3 + $0x58] sm:$0xff]
        %v6422 = vld [vmem:[#allocation3 + $0x60] sm:$0xff]
        %v6423 = vld [vmem:[#allocation3 + $0x68] sm:$0xff]
        %v6424 = vld [vmem:[#allocation3 + $0x70] sm:$0xff]
        %v6425 = vld [vmem:[#allocation3 + $0x78] sm:$0xff]
        %v6426 = vld [vmem:[#allocation3 + $0x80] sm:$0xff]
        %v6427 = vld [vmem:[#allocation3 + $0x88] sm:$0xff]
        %v6428 = vld [vmem:[#allocation3 + $0x90] sm:$0xff]
        %v6429 = vld [vmem:[#allocation3 + $0x98] sm:$0xff]
        %v6430 = vld [vmem:[#allocation3 + $0xa0] sm:$0xff]
        %v6431 = vld [vmem:[#allocation3 + $0xa8] sm:$0xff]
        %v6432 = vld [vmem:[#allocation3 + $0xb0] sm:$0xff]
        %v6433 = vld [vmem:[#allocation3 + $0xb8] sm:$0xff]
        %v6434 = vld [vmem:[#allocation3 + $0xc0] sm:$0xff]
        %v6435 = vld [vmem:[#allocation3 + $0xc8] sm:$0xff]
        %v6436 = vld [vmem:[#allocation3 + $0xd0] sm:$0xff]
        %v6437 = vld [vmem:[#allocation3 + $0xd8] sm:$0xff]
        %v6438 = vld [vmem:[#allocation3 + $0xe0] sm:$0xff]
        %v6439 = vld [vmem:[#allocation3 + $0xe8] sm:$0xff]
        %v6440 = vld [vmem:[#allocation3 + $0xf0] sm:$0xff]
        %v6441 = vld [vmem:[#allocation3 + $0xf8] sm:$0xff]
        %v6442 = vld [vmem:[#allocation3 + $0x100] sm:$0xff]
        %v6443 = vld [vmem:[#allocation3 + $0x108] sm:$0xff]
        %v6444 = vld [vmem:[#allocation3 + $0x110] sm:$0xff]
        %v6445 = vld [vmem:[#allocation3 + $0x118] sm:$0xff]
        %v6446 = vld [vmem:[#allocation3 + $0x120] sm:$0xff]
        %v6447 = vld [vmem:[#allocation3 + $0x128] sm:$0xff]
        %v6448 = vld [vmem:[#allocation3 + $0x130] sm:$0xff]
        %v6449 = vld [vmem:[#allocation3 + $0x138] sm:$0xff]
        %v6450 = vld [vmem:[#allocation3 + $0x140] sm:$0xff]
        %v6451 = vld [vmem:[#allocation3 + $0x148] sm:$0xff]
        %v6452 = vld [vmem:[#allocation3 + $0x150] sm:$0xff]
        %v6453 = vld [vmem:[#allocation3 + $0x158] sm:$0xff]
        %v6454 = vld [vmem:[#allocation3 + $0x160] sm:$0xff]
        %v6455 = vld [vmem:[#allocation3 + $0x168] sm:$0xff]
        %v6456 = vld [vmem:[#allocation3 + $0x170] sm:$0xff]
        %v6457 = vld [vmem:[#allocation3 + $0x178] sm:$0xff]
        %v6458 = vld [vmem:[#allocation3 + $0x180] sm:$0xff]
        %v6459 = vld [vmem:[#allocation3 + $0x188] sm:$0xff]
        %v6460 = vld [vmem:[#allocation3 + $0x190] sm:$0xff]
        %v6461 = vld [vmem:[#allocation3 + $0x198] sm:$0xff]
        %v6462 = vld [vmem:[#allocation3 + $0x1a0] sm:$0xff]
        %v6463 = vld [vmem:[#allocation3 + $0x1a8] sm:$0xff]
        %v6464 = vld [vmem:[#allocation3 + $0x1b0] sm:$0xff]
        %v6465 = vld [vmem:[#allocation3 + $0x1b8] sm:$0xff]
        %v6466 = vld [vmem:[#allocation3 + $0x1c0] sm:$0xff]
        %v6467 = vld [vmem:[#allocation3 + $0x1c8] sm:$0xff]
        %v6468 = vld [vmem:[#allocation3 + $0x1d0] sm:$0xff]
        %v6469 = vld [vmem:[#allocation3 + $0x1d8] sm:$0xff]
        %v6470 = vld [vmem:[#allocation3 + $0x1e0] sm:$0xff]
        %v6471 = vld [vmem:[#allocation3 + $0x1e8] sm:$0xff]
        %v6472 = vld [vmem:[#allocation3 + $0x1f0] sm:$0xff]
        %v6473 = vld [vmem:[#allocation3 + $0x1f8] sm:$0xff]
        %v6474 = vld [vmem:[#allocation3 + $0x200] sm:$0xff]
        %v6475 = vld [vmem:[#allocation3 + $0x208] sm:$0xff]
        %v6476 = vld [vmem:[#allocation3 + $0x210] sm:$0xff]
        %v6477 = vld [vmem:[#allocation3 + $0x218] sm:$0xff]
        %v6478 = vld [vmem:[#allocation3 + $0x220] sm:$0xff]
        %v6479 = vld [vmem:[#allocation3 + $0x228] sm:$0xff]
        %v6480 = vld [vmem:[#allocation3 + $0x230] sm:$0xff]
        %v6481 = vld [vmem:[#allocation3 + $0x238] sm:$0xff]
        %v6482 = vld [vmem:[#allocation3 + $0x240] sm:$0xff]
        %v6483 = vld [vmem:[#allocation3 + $0x248] sm:$0xff]
        %v6484 = vld [vmem:[#allocation3 + $0x250] sm:$0xff]
        %v6485 = vld [vmem:[#allocation3 + $0x258] sm:$0xff]
        %v6486 = vld [vmem:[#allocation3 + $0x260] sm:$0xff]
        %v6487 = vld [vmem:[#allocation3 + $0x268] sm:$0xff]
        %v6488 = vld [vmem:[#allocation3 + $0x270] sm:$0xff]
        %v6489 = vld [vmem:[#allocation3 + $0x278] sm:$0xff]
        %v6490 = vld [vmem:[#allocation3 + $0x280] sm:$0xff]
        %v6491 = vld [vmem:[#allocation3 + $0x288] sm:$0xff]
        %v6492 = vld [vmem:[#allocation3 + $0x290] sm:$0xff]
        %v6493 = vld [vmem:[#allocation3 + $0x298] sm:$0xff]
        %v6494 = vld [vmem:[#allocation3 + $0x2a0] sm:$0xff]
        %v6495 = vld [vmem:[#allocation3 + $0x2a8] sm:$0xff]
        %v6496 = vld [vmem:[#allocation3 + $0x2b0] sm:$0xff]
        %v6497 = vld [vmem:[#allocation3 + $0x2b8] sm:$0xff]
        %v6498 = vld [vmem:[#allocation3 + $0x2c0] sm:$0xff]
        %v6499 = vld [vmem:[#allocation3 + $0x2c8] sm:$0xff]
        %v6500 = vld [vmem:[#allocation3 + $0x2d0] sm:$0xff]
        %v6501 = vld [vmem:[#allocation3 + $0x2d8] sm:$0xff]
        %v6502 = vld [vmem:[#allocation3 + $0x2e0] sm:$0xff]
        %v6503 = vld [vmem:[#allocation3 + $0x2e8] sm:$0xff]
        %v6504 = vld [vmem:[#allocation3 + $0x2f0] sm:$0xff]
        %v6505 = vld [vmem:[#allocation3 + $0x2f8] sm:$0xff]
        %v6506 = vld [vmem:[#allocation3 + $0x300] sm:$0xff]
        %v6507 = vld [vmem:[#allocation3 + $0x308] sm:$0xff]
        %v6508 = vld [vmem:[#allocation3 + $0x310] sm:$0xff]
        %v6509 = vld [vmem:[#allocation3 + $0x318] sm:$0xff]
        %v6510 = vld [vmem:[#allocation3 + $0x320] sm:$0xff]
        %v6511 = vld [vmem:[#allocation3 + $0x328] sm:$0xff]
        %v6512 = vld [vmem:[#allocation3 + $0x330] sm:$0xff]
        %v6513 = vld [vmem:[#allocation3 + $0x338] sm:$0xff]
        %v6514 = vld [vmem:[#allocation3 + $0x340] sm:$0xff]
        %v6515 = vld [vmem:[#allocation3 + $0x348] sm:$0xff]
        %v6516 = vld [vmem:[#allocation3 + $0x350] sm:$0xff]
        %v6517 = vld [vmem:[#allocation3 + $0x358] sm:$0xff]
        %v6518 = vld [vmem:[#allocation3 + $0x360] sm:$0xff]
        %v6519 = vld [vmem:[#allocation3 + $0x368] sm:$0xff]
        %v6520 = vld [vmem:[#allocation3 + $0x370] sm:$0xff]
        %v6521 = vld [vmem:[#allocation3 + $0x378] sm:$0xff]
        %v6522 = vld [vmem:[#allocation3 + $0x380] sm:$0xff]
        %v6523 = vld [vmem:[#allocation3 + $0x388] sm:$0xff]
        %v6524 = vld [vmem:[#allocation3 + $0x390] sm:$0xff]
        %v6525 = vld [vmem:[#allocation3 + $0x398] sm:$0xff]
        %v6526 = vld [vmem:[#allocation3 + $0x3a0] sm:$0xff]
        %v6527 = vld [vmem:[#allocation3 + $0x3a8] sm:$0xff]
        %v6528 = vld [vmem:[#allocation3 + $0x3b0] sm:$0xff]
        %v6529 = vld [vmem:[#allocation3 + $0x3b8] sm:$0xff]
        %v6530 = vld [vmem:[#allocation3 + $0x3c0] sm:$0xff]
        %v6531 = vld [vmem:[#allocation3 + $0x3c8] sm:$0xff]
        %v6532 = vld [vmem:[#allocation3 + $0x3d0] sm:$0xff]
        %v6533 = vld [vmem:[#allocation3 + $0x3d8] sm:$0xff]
        %v6534 = vld [vmem:[%s3] sm:$0xff]
        %v6535 = vld [vmem:[%s3 + $0x8] sm:$0xff]
        %v6536 = vld [vmem:[%s3 + $0x10] sm:$0xff]
        %v6537 = vld [vmem:[%s3 + $0x18] sm:$0xff]
        %v6538 = vld [vmem:[%s3 + $0x20] sm:$0xff]
        %v6539 = vld [vmem:[%s3 + $0x28] sm:$0xff]
        %v6540 = vld [vmem:[%s3 + $0x30] sm:$0xff]
        %v6541 = vld [vmem:[%s3 + $0x38] sm:$0xff]
        %v6542 = vld [vmem:[%s3 + $0x40] sm:$0xff]
        %v6543 = vld [vmem:[%s3 + $0x48] sm:$0xff]
        %v6544 = vld [vmem:[%s3 + $0x50] sm:$0xff]
        %v6545 = vld [vmem:[%s3 + $0x58] sm:$0xff]
        %v6546 = vld [vmem:[%s3 + $0x60] sm:$0xff]
        %v6547 = vld [vmem:[%s3 + $0x68] sm:$0xff]
        %v6548 = vld [vmem:[%s3 + $0x70] sm:$0xff]
        %v6549 = vld [vmem:[%s3 + $0x78] sm:$0xff]
        %v6550 = vld [vmem:[%s3 + $0x80] sm:$0xff]
        %v6551 = vld [vmem:[%s3 + $0x88] sm:$0xff]
        %v6552 = vld [vmem:[%s3 + $0x90] sm:$0xff]
        %v6553 = vld [vmem:[%s3 + $0x98] sm:$0xff]
        %v6554 = vld [vmem:[%s3 + $0xa0] sm:$0xff]
        %v6555 = vld [vmem:[%s3 + $0xa8] sm:$0xff]
        %v6556 = vld [vmem:[%s3 + $0xb0] sm:$0xff]
        %v6557 = vld [vmem:[%s3 + $0xb8] sm:$0xff]
        %v6558 = vld [vmem:[%s3 + $0xc0] sm:$0xff]
        %v6559 = vld [vmem:[%s3 + $0xc8] sm:$0xff]
        %v6560 = vld [vmem:[%s3 + $0xd0] sm:$0xff]
        %v6561 = vld [vmem:[%s3 + $0xd8] sm:$0xff]
        %v6562 = vld [vmem:[%s3 + $0xe0] sm:$0xff]
        %v6563 = vld [vmem:[%s3 + $0xe8] sm:$0xff]
        %v6564 = vld [vmem:[%s3 + $0xf0] sm:$0xff]
        %v6565 = vld [vmem:[%s3 + $0xf8] sm:$0xff]
        %v6566 = vld [vmem:[%s3 + $0x100] sm:$0xff]
        %v6567 = vld [vmem:[%s3 + $0x108] sm:$0xff]
        %v6568 = vld [vmem:[%s3 + $0x110] sm:$0xff]
        %v6569 = vld [vmem:[%s3 + $0x118] sm:$0xff]
        %v6570 = vld [vmem:[%s3 + $0x120] sm:$0xff]
        %v6571 = vld [vmem:[%s3 + $0x128] sm:$0xff]
        %v6572 = vld [vmem:[%s3 + $0x130] sm:$0xff]
        %v6573 = vld [vmem:[%s3 + $0x138] sm:$0xff]
        %v6574 = vld [vmem:[%s3 + $0x140] sm:$0xff]
        %v6575 = vld [vmem:[%s3 + $0x148] sm:$0xff]
        %v6576 = vld [vmem:[%s3 + $0x150] sm:$0xff]
        %v6577 = vld [vmem:[%s3 + $0x158] sm:$0xff]
        %v6578 = vld [vmem:[%s3 + $0x160] sm:$0xff]
        %v6579 = vld [vmem:[%s3 + $0x168] sm:$0xff]
        %v6580 = vld [vmem:[%s3 + $0x170] sm:$0xff]
        %v6581 = vld [vmem:[%s3 + $0x178] sm:$0xff]
        %v6582 = vld [vmem:[%s3 + $0x180] sm:$0xff]
        %v6583 = vld [vmem:[%s3 + $0x188] sm:$0xff]
        %v6584 = vld [vmem:[%s3 + $0x190] sm:$0xff]
        %v6585 = vld [vmem:[%s3 + $0x198] sm:$0xff]
        %v6586 = vld [vmem:[%s3 + $0x1a0] sm:$0xff]
        %v6587 = vld [vmem:[%s3 + $0x1a8] sm:$0xff]
        %v6588 = vld [vmem:[%s3 + $0x1b0] sm:$0xff]
        %v6589 = vld [vmem:[%s3 + $0x1b8] sm:$0xff]
        %v6590 = vld [vmem:[%s3 + $0x1c0] sm:$0xff]
        %v6591 = vld [vmem:[%s3 + $0x1c8] sm:$0xff]
        %v6592 = vld [vmem:[%s3 + $0x1d0] sm:$0xff]
        %v6593 = vld [vmem:[%s3 + $0x1d8] sm:$0xff]
        %v6594 = vld [vmem:[%s3 + $0x1e0] sm:$0xff]
        %v6595 = vld [vmem:[%s3 + $0x1e8] sm:$0xff]
        %v6596 = vld [vmem:[%s3 + $0x1f0] sm:$0xf]
        %v6597 = vld [vmem:[%s4] sm:$0x1]
        %v6599 = vlaneseq
        %v6600 = vshrl.u32 %v6599, 7
        %v6601 = vsub.s32 0, %v6600
        %v6602 = vrot.slane %v6597, %v6601
        %vm6604 = vcmask 949248
        %v6606 = vsel %vm6604, %v6413, 0
        %v6609 = vsel %vm6604, %v6417, 0
        %v6612 = vsel %vm6604, %v6421, 0
        %v6615 = vsel %vm6604, %v6425, 0
        %v6618 = vsel %vm6604, %v6429, 0
        %v6621 = vsel %vm6604, %v6433, 0
        %v6624 = vsel %vm6604, %v6437, 0
        %v6627 = vsel %vm6604, %v6441, 0
        %v6630 = vsel %vm6604, %v6445, 0
        %v6633 = vsel %vm6604, %v6449, 0
        %v6636 = vsel %vm6604, %v6453, 0
        %v6639 = vsel %vm6604, %v6457, 0
        %v6642 = vsel %vm6604, %v6461, 0
        %v6645 = vsel %vm6604, %v6465, 0
        %v6648 = vsel %vm6604, %v6469, 0
        %v6651 = vsel %vm6604, %v6473, 0
        %v6654 = vsel %vm6604, %v6477, 0
        %v6657 = vsel %vm6604, %v6481, 0
        %v6660 = vsel %vm6604, %v6485, 0
        %v6663 = vsel %vm6604, %v6489, 0
        %v6666 = vsel %vm6604, %v6493, 0
        %v6669 = vsel %vm6604, %v6497, 0
        %v6672 = vsel %vm6604, %v6501, 0
        %v6675 = vsel %vm6604, %v6505, 0
        %v6678 = vsel %vm6604, %v6509, 0
        %v6681 = vsel %vm6604, %v6513, 0
        %v6684 = vsel %vm6604, %v6517, 0
        %v6687 = vsel %vm6604, %v6521, 0
        %v6690 = vsel %vm6604, %v6525, 0
        %v6693 = vsel %vm6604, %v6529, 0
        %v6696 = vsel %vm6604, %v6533, 0
        %vm6698 = vcmask 1043456
        %v6700 = vsel %vm6698, %v6596, 0
        %6702 = vmatprep.subr.mxu0 0.0
        %6703 = vmatpush1.msra.mxu0 %v6534
        %6704 = vmatprep.subr.mxu0 0.0
        %6705 = vmatpush1.msra.mxu0 %v6535
        %6706 = vmatprep.subr.mxu0 0.0
        %6707 = vmatpush1.msra.mxu0 %v6536
        %6708 = vmatprep.subr.mxu0 0.0
        %6709 = vmatpush1.msra.mxu0 %v6537
        %6710 = vmatprep.subr.mxu0 0.0
        %6711 = vmatpush1.msra.mxu0 %v6538
        %6712 = vmatprep.subr.mxu0 0.0
        %6713 = vmatpush1.msra.mxu0 %v6539
        %6714 = vmatprep.subr.mxu0 0.0
        %6715 = vmatpush1.msra.mxu0 %v6540
        %6716 = vmatprep.subr.mxu0 0.0
        %6717 = vmatpush1.msra.mxu0 %v6541
        %6718 = vmatprep.subr.mxu0 0.0
        %6719 = vmatpush1.msra.mxu0 %v6542
        %6720 = vmatprep.subr.mxu0 0.0
        %6721 = vmatpush1.msra.mxu0 %v6543
        %6722 = vmatprep.subr.mxu0 0.0
        %6723 = vmatpush1.msra.mxu0 %v6544
        %6724 = vmatprep.subr.mxu0 0.0
        %6725 = vmatpush1.msra.mxu0 %v6545
        %6726 = vmatprep.subr.mxu0 0.0
        %6727 = vmatpush1.msra.mxu0 %v6546
        %6728 = vmatprep.subr.mxu0 0.0
        %6729 = vmatpush1.msra.mxu0 %v6547
        %6730 = vmatprep.subr.mxu0 0.0
        %6731 = vmatpush1.msra.mxu0 %v6548
        %6732 = vmatprep.subr.mxu0 0.0
        %6733 = vmatpush1.msra.mxu0 %v6549
        %6734 = vmatprep.subr.mxu0 0.0
        %6735 = vmatpush1.msra.mxu0 %v6550
        %6736 = vmatprep.subr.mxu0 0.0
        %6737 = vmatpush1.msra.mxu0 %v6551
        %6738 = vmatprep.subr.mxu0 0.0
        %6739 = vmatpush1.msra.mxu0 %v6552
        %6740 = vmatprep.subr.mxu0 0.0
        %6741 = vmatpush1.msra.mxu0 %v6553
        %6742 = vmatprep.subr.mxu0 0.0
        %6743 = vmatpush1.msra.mxu0 %v6554
        %6744 = vmatprep.subr.mxu0 0.0
        %6745 = vmatpush1.msra.mxu0 %v6555
        %6746 = vmatprep.subr.mxu0 0.0
        %6747 = vmatpush1.msra.mxu0 %v6556
        %6748 = vmatprep.subr.mxu0 0.0
        %6749 = vmatpush1.msra.mxu0 %v6557
        %6750 = vmatprep.subr.mxu0 0.0
        %6751 = vmatpush1.msra.mxu0 %v6558
        %6752 = vmatprep.subr.mxu0 0.0
        %6753 = vmatpush1.msra.mxu0 %v6559
        %6754 = vmatprep.subr.mxu0 0.0
        %6755 = vmatpush1.msra.mxu0 %v6560
        %6756 = vmatprep.subr.mxu0 0.0
        %6757 = vmatpush1.msra.mxu0 %v6561
        %6758 = vmatprep.subr.mxu0 0.0
        %6759 = vmatpush1.msra.mxu0 %v6562
        %6760 = vmatprep.subr.mxu0 0.0
        %6761 = vmatpush1.msra.mxu0 %v6563
        %6762 = vmatprep.subr.mxu0 0.0
        %6763 = vmatpush1.msra.mxu0 %v6564
        %6764 = vmatprep.subr.mxu0 0.0
        %6765 = vmatpush1.msra.mxu0 %v6565
        %6766 = vmatprep.mubr.f32.mxu0 %v6411
        %6767 = vmatmul.mubr.f32.gmra.mrb[0].mxu0 %v6410
        %v6768 = vpop.f32.mrb[0].mxu0
        %v6769 = vadd.f32 %v6602, %v6768
        %v6770 = vpop.f32.mrb[0].mxu0
        %6771 = vmatprep.mubr.f32.mxu0 %v6415
        %6772 = vmatmul.mubr.f32.gmra.mrb[0].mxu0 %v6414
        %v6773 = vpop.f32.mrb[0].mxu0
        %v6774 = vadd.f32 %v6602, %v6773
        %v6775 = vpop.f32.mrb[0].mxu0
        %6776 = vmatprep.mubr.f32.mxu0 %v6419
        %6777 = vmatmul.mubr.f32.gmra.mrb[0].mxu0 %v6418
        %v6778 = vpop.f32.mrb[0].mxu0
        %v6779 = vadd.f32 %v6602, %v6778
        %v6780 = vpop.f32.mrb[0].mxu0
        %6781 = vmatprep.mubr.f32.mxu0 %v6423
        %6782 = vmatmul.mubr.f32.gmra.mrb[0].mxu0 %v6422
        %v6783 = vpop.f32.mrb[0].mxu0
        %v6784 = vadd.f32 %v6602, %v6783
        %v6785 = vpop.f32.mrb[0].mxu0
        %6786 = vmatprep.mubr.f32.mxu0 %v6427
        %6787 = vmatmul.mubr.f32.gmra.mrb[0].mxu0 %v6426
        %v6788 = vpop.f32.mrb[0].mxu0
        %v6789 = vadd.f32 %v6602, %v6788
        %v6790 = vpop.f32.mrb[0].mxu0
        %6791 = vmatprep.mubr.f32.mxu0 %v6431
        %6792 = vmatmul.mubr.f32.gmra.mrb[0].mxu0 %v6430
        %v6793 = vpop.f32.mrb[0].mxu0
        %v6794 = vadd.f32 %v6602, %v6793
        %v6795 = vpop.f32.mrb[0].mxu0
        %6796 = vmatprep.mubr.f32.mxu0 %v6435
        %6797 = vmatmul.mubr.f32.gmra.mrb[0].mxu0 %v6434
        %v6798 = vpop.f32.mrb[0].mxu0
        %v6799 = vadd.f32 %v6602, %v6798
        %v6800 = vpop.f32.mrb[0].mxu0
        %6801 = vmatprep.mubr.f32.mxu0 %v6439
        %6802 = vmatmul.mubr.f32.gmra.mrb[0].mxu0 %v6438
        %v6803 = vpop.f32.mrb[0].mxu0
        %v6804 = vadd.f32 %v6602, %v6803
        %v6805 = vpop.f32.mrb[0].mxu0
        %6806 = vmatprep.mubr.f32.mxu0 %v6443
        %6807 = vmatmul.mubr.f32.gmra.mrb[0].mxu0 %v6442
        %v6808 = vpop.f32.mrb[0].mxu0
        %v6809 = vadd.f32 %v6602, %v6808
        %v6810 = vpop.f32.mrb[0].mxu0
        %6811 = vmatprep.mubr.f32.mxu0 %v6447
        %6812 = vmatmul.mubr.f32.gmra.mrb[0].mxu0 %v6446
        %v6813 = vpop.f32.mrb[0].mxu0
        %v6814 = vadd.f32 %v6602, %v6813
        %v6815 = vpop.f32.mrb[0].mxu0
        %6816 = vmatprep.mubr.f32.mxu0 %v6451
        %6817 = vmatmul.mubr.f32.gmra.mrb[0].mxu0 %v6450
        %v6818 = vpop.f32.mrb[0].mxu0
        %v6819 = vadd.f32 %v6602, %v6818
        %v6820 = vpop.f32.mrb[0].mxu0
        %6821 = vmatprep.mubr.f32.mxu0 %v6455
        %6822 = vmatmul.mubr.f32.gmra.mrb[0].mxu0 %v6454
        %v6823 = vpop.f32.mrb[0].mxu0
        %v6824 = vadd.f32 %v6602, %v6823
        %v6825 = vpop.f32.mrb[0].mxu0
        %6826 = vmatprep.mubr.f32.mxu0 %v6459
        %6827 = vmatmul.mubr.f32.gmra.mrb[0].mxu0 %v6458
        %v6828 = vpop.f32.mrb[0].mxu0
        %v6829 = vadd.f32 %v6602, %v6828
        %v6830 = vpop.f32.mrb[0].mxu0
        %6831 = vmatprep.mubr.f32.mxu0 %v6463
        %6832 = vmatmul.mubr.f32.gmra.mrb[0].mxu0 %v6462
        %v6833 = vpop.f32.mrb[0].mxu0
        %v6834 = vadd.f32 %v6602, %v6833
        %v6835 = vpop.f32.mrb[0].mxu0
        %6836 = vmatprep.mubr.f32.mxu0 %v6467
        %6837 = vmatmul.mubr.f32.gmra.mrb[0].mxu0 %v6466
        %v6838 = vpop.f32.mrb[0].mxu0
        %v6839 = vadd.f32 %v6602, %v6838
        %v6840 = vpop.f32.mrb[0].mxu0
        %6841 = vmatprep.mubr.f32.mxu0 %v6471
        %6842 = vmatmul.mubr.f32.gmra.mrb[0].mxu0 %v6470
        %v6843 = vpop.f32.mrb[0].mxu0
        %v6844 = vadd.f32 %v6602, %v6843
        %v6845 = vpop.f32.mrb[0].mxu0
        %6846 = vmatprep.mubr.f32.mxu0 %v6475
        %6847 = vmatmul.mubr.f32.gmra.mrb[0].mxu0 %v6474
        %v6848 = vpop.f32.mrb[0].mxu0
        %v6849 = vadd.f32 %v6602, %v6848
        %v6850 = vpop.f32.mrb[0].mxu0
        %6851 = vmatprep.mubr.f32.mxu0 %v6479
        %6852 = vmatmul.mubr.f32.gmra.mrb[0].mxu0 %v6478
        %v6853 = vpop.f32.mrb[0].mxu0
        %v6854 = vadd.f32 %v6602, %v6853
        %v6855 = vpop.f32.mrb[0].mxu0
        %6856 = vmatprep.mubr.f32.mxu0 %v6483
        %6857 = vmatmul.mubr.f32.gmra.mrb[0].mxu0 %v6482
        %v6858 = vpop.f32.mrb[0].mxu0
        %v6859 = vadd.f32 %v6602, %v6858
        %v6860 = vpop.f32.mrb[0].mxu0
        %6861 = vmatprep.mubr.f32.mxu0 %v6487
        %6862 = vmatmul.mubr.f32.gmra.mrb[0].mxu0 %v6486
        %v6863 = vpop.f32.mrb[0].mxu0
        %v6864 = vadd.f32 %v6602, %v6863
        %v6865 = vpop.f32.mrb[0].mxu0
        %6866 = vmatprep.mubr.f32.mxu0 %v6491
        %6867 = vmatmul.mubr.f32.gmra.mrb[0].mxu0 %v6490
        %v6868 = vpop.f32.mrb[0].mxu0
        %v6869 = vadd.f32 %v6602, %v6868
        %v6870 = vpop.f32.mrb[0].mxu0
        %6871 = vmatprep.mubr.f32.mxu0 %v6495
        %6872 = vmatmul.mubr.f32.gmra.mrb[0].mxu0 %v6494
        %v6873 = vpop.f32.mrb[0].mxu0
        %v6874 = vadd.f32 %v6602, %v6873
        %v6875 = vpop.f32.mrb[0].mxu0
        %6876 = vmatprep.mubr.f32.mxu0 %v6499
        %6877 = vmatmul.mubr.f32.gmra.mrb[0].mxu0 %v6498
        %v6878 = vpop.f32.mrb[0].mxu0
        %v6879 = vadd.f32 %v6602, %v6878
        %v6880 = vpop.f32.mrb[0].mxu0
        %6881 = vmatprep.mubr.f32.mxu0 %v6503
        %6882 = vmatmul.mubr.f32.gmra.mrb[0].mxu0 %v6502
        %v6883 = vpop.f32.mrb[0].mxu0
        %v6884 = vadd.f32 %v6602, %v6883
        %v6885 = vpop.f32.mrb[0].mxu0
        %6886 = vmatprep.mubr.f32.mxu0 %v6507
        %6887 = vmatmul.mubr.f32.gmra.mrb[0].mxu0 %v6506
        %v6888 = vpop.f32.mrb[0].mxu0
        %v6889 = vadd.f32 %v6602, %v6888
        %v6890 = vpop.f32.mrb[0].mxu0
        %6891 = vmatprep.mubr.f32.mxu0 %v6511
        %6892 = vmatmul.mubr.f32.gmra.mrb[0].mxu0 %v6510
        %v6893 = vpop.f32.mrb[0].mxu0
        %v6894 = vadd.f32 %v6602, %v6893
        %v6895 = vpop.f32.mrb[0].mxu0
        %6896 = vmatprep.mubr.f32.mxu0 %v6515
        %6897 = vmatmul.mubr.f32.gmra.mrb[0].mxu0 %v6514
        %v6898 = vpop.f32.mrb[0].mxu0
        %v6899 = vadd.f32 %v6602, %v6898
        %v6900 = vpop.f32.mrb[0].mxu0
        %6901 = vmatprep.mubr.f32.mxu0 %v6519
        %6902 = vmatmul.mubr.f32.gmra.mrb[0].mxu0 %v6518
        %v6903 = vpop.f32.mrb[0].mxu0
        %v6904 = vadd.f32 %v6602, %v6903
        %v6905 = vpop.f32.mrb[0].mxu0
        %6906 = vmatprep.mubr.f32.mxu0 %v6523
        %6907 = vmatmul.mubr.f32.gmra.mrb[0].mxu0 %v6522
        %v6908 = vpop.f32.mrb[0].mxu0
        %v6909 = vadd.f32 %v6602, %v6908
        %v6910 = vpop.f32.mrb[0].mxu0
        %6911 = vmatprep.mubr.f32.mxu0 %v6527
        %6912 = vmatmul.mubr.f32.gmra.mrb[0].mxu0 %v6526
        %v6913 = vpop.f32.mrb[0].mxu0
        %v6914 = vadd.f32 %v6602, %v6913
        %v6915 = vpop.f32.mrb[0].mxu0
        %6916 = vmatprep.mubr.f32.mxu0 %v6531
        %6917 = vmatmul.mubr.f32.gmra.mrb[0].mxu0 %v6530
        %v6918 = vpop.f32.mrb[0].mxu0
        %v6919 = vadd.f32 %v6602, %v6918
        %v6920 = vpop.f32.mrb[0].mxu0
        %6921 = vdwg.mxu0
        %6922 = vmatprep.subr.mxu0 0.0
        %6923 = vmatpush1.msra.mxu0 %v6566
        %6924 = vmatprep.subr.mxu0 0.0
        %6925 = vmatpush1.msra.mxu0 %v6567
        %6926 = vmatprep.subr.mxu0 0.0
        %6927 = vmatpush1.msra.mxu0 %v6568
        %6928 = vmatprep.subr.mxu0 0.0
        %6929 = vmatpush1.msra.mxu0 %v6569
        %6930 = vmatprep.subr.mxu0 0.0
        %6931 = vmatpush1.msra.mxu0 %v6570
        %6932 = vmatprep.subr.mxu0 0.0
        %6933 = vmatpush1.msra.mxu0 %v6571
        %6934 = vmatprep.subr.mxu0 0.0
        %6935 = vmatpush1.msra.mxu0 %v6572
        %6936 = vmatprep.subr.mxu0 0.0
        %6937 = vmatpush1.msra.mxu0 %v6573
        %6938 = vmatprep.subr.mxu0 0.0
        %6939 = vmatpush1.msra.mxu0 %v6574
        %6940 = vmatprep.subr.mxu0 0.0
        %6941 = vmatpush1.msra.mxu0 %v6575
        %6942 = vmatprep.subr.mxu0 0.0
        %6943 = vmatpush1.msra.mxu0 %v6576
        %6944 = vmatprep.subr.mxu0 0.0
        %6945 = vmatpush1.msra.mxu0 %v6577
        %6946 = vmatprep.subr.mxu0 0.0
        %6947 = vmatpush1.msra.mxu0 %v6578
        %6948 = vmatprep.subr.mxu0 0.0
        %6949 = vmatpush1.msra.mxu0 %v6579
        %6950 = vmatprep.subr.mxu0 0.0
        %6951 = vmatpush1.msra.mxu0 %v6580
        %6952 = vmatprep.subr.mxu0 0.0
        %6953 = vmatpush1.msra.mxu0 %v6581
        %6954 = vmatprep.subr.mxu0 0.0
        %6955 = vmatpush1.msra.mxu0 %v6582
        %6956 = vmatprep.subr.mxu0 0.0
        %6957 = vmatpush1.msra.mxu0 %v6583
        %6958 = vmatprep.subr.mxu0 0.0
        %6959 = vmatpush1.msra.mxu0 %v6584
        %6960 = vmatprep.subr.mxu0 0.0
        %6961 = vmatpush1.msra.mxu0 %v6585
        %6962 = vmatprep.subr.mxu0 0.0
        %6963 = vmatpush1.msra.mxu0 %v6586
        %6964 = vmatprep.subr.mxu0 0.0
        %6965 = vmatpush1.msra.mxu0 %v6587
        %6966 = vmatprep.subr.mxu0 0.0
        %6967 = vmatpush1.msra.mxu0 %v6588
        %6968 = vmatprep.subr.mxu0 0.0
        %6969 = vmatpush1.msra.mxu0 %v6589
        %6970 = vmatprep.subr.mxu0 0.0
        %6971 = vmatpush1.msra.mxu0 %v6590
        %6972 = vmatprep.subr.mxu0 0.0
        %6973 = vmatpush1.msra.mxu0 %v6591
        %6974 = vmatprep.subr.mxu0 0.0
        %6975 = vmatpush1.msra.mxu0 %v6592
        %6976 = vmatprep.subr.mxu0 0.0
        %6977 = vmatpush1.msra.mxu0 %v6593
        %6978 = vmatprep.subr.mxu0 0.0
        %6979 = vmatpush1.msra.mxu0 %v6594
        %6980 = vmatprep.subr.mxu0 0.0
        %6981 = vmatpush1.msra.mxu0 %v6595
        %6982 = vmatprep.subr.mxu0 0.0
        %6983 = vmatpush1.msra.mxu0 %v6700
        %6984 = vmatprep.subr.mxu0 0.0
        %6985 = vmatpush1.msra.mxu0 0.0
        %6986 = vmatprep.mubr.f32.mxu0 %v6606
        %6987 = vmatmul.mubr.f32.gmra.mrb[0].mxu0 %v6412
        %v6988 = vpop.f32.mrb[0].mxu0
        %v6989 = vadd.f32 %v6769, %v6988
        %v6990 = vpop.f32.mrb[0].mxu0
        %6991 = vmatprep.mubr.f32.mxu0 %v6609
        %6992 = vmatmul.mubr.f32.gmra.mrb[0].mxu0 %v6416
        %v6993 = vpop.f32.mrb[0].mxu0
        %v6994 = vadd.f32 %v6774, %v6993
        %v6995 = vpop.f32.mrb[0].mxu0
        %6996 = vmatprep.mubr.f32.mxu0 %v6612
        %6997 = vmatmul.mubr.f32.gmra.mrb[0].mxu0 %v6420
        %v6998 = vpop.f32.mrb[0].mxu0
        %v6999 = vadd.f32 %v6779, %v6998
        %v7000 = vpop.f32.mrb[0].mxu0
        %7001 = vmatprep.mubr.f32.mxu0 %v6615
        %7002 = vmatmul.mubr.f32.gmra.mrb[0].mxu0 %v6424
        %v7003 = vpop.f32.mrb[0].mxu0
        %v7004 = vadd.f32 %v6784, %v7003
        %v7005 = vpop.f32.mrb[0].mxu0
        %7006 = vmatprep.mubr.f32.mxu0 %v6618
        %7007 = vmatmul.mubr.f32.gmra.mrb[0].mxu0 %v6428
        %v7008 = vpop.f32.mrb[0].mxu0
        %v7009 = vadd.f32 %v6789, %v7008
        %v7010 = vpop.f32.mrb[0].mxu0
        %7011 = vmatprep.mubr.f32.mxu0 %v6621
        %7012 = vmatmul.mubr.f32.gmra.mrb[0].mxu0 %v6432
        %v7013 = vpop.f32.mrb[0].mxu0
        %v7014 = vadd.f32 %v6794, %v7013
        %v7015 = vpop.f32.mrb[0].mxu0
        %7016 = vmatprep.mubr.f32.mxu0 %v6624
        %7017 = vmatmul.mubr.f32.gmra.mrb[0].mxu0 %v6436
        %v7018 = vpop.f32.mrb[0].mxu0
        %v7019 = vadd.f32 %v6799, %v7018
        %v7020 = vpop.f32.mrb[0].mxu0
        %7021 = vmatprep.mubr.f32.mxu0 %v6627
        %7022 = vmatmul.mubr.f32.gmra.mrb[0].mxu0 %v6440
        %v7023 = vpop.f32.mrb[0].mxu0
        %v7024 = vadd.f32 %v6804, %v7023
        %v7025 = vpop.f32.mrb[0].mxu0
        %7026 = vmatprep.mubr.f32.mxu0 %v6630
        %7027 = vmatmul.mubr.f32.gmra.mrb[0].mxu0 %v6444
        %v7028 = vpop.f32.mrb[0].mxu0
        %v7029 = vadd.f32 %v6809, %v7028
        %v7030 = vpop.f32.mrb[0].mxu0
        %7031 = vmatprep.mubr.f32.mxu0 %v6633
        %7032 = vmatmul.mubr.f32.gmra.mrb[0].mxu0 %v6448
        %v7033 = vpop.f32.mrb[0].mxu0
        %v7034 = vadd.f32 %v6814, %v7033
        %v7035 = vpop.f32.mrb[0].mxu0
        %7036 = vmatprep.mubr.f32.mxu0 %v6636
        %7037 = vmatmul.mubr.f32.gmra.mrb[0].mxu0 %v6452
        %v7038 = vpop.f32.mrb[0].mxu0
        %v7039 = vadd.f32 %v6819, %v7038
        %v7040 = vpop.f32.mrb[0].mxu0
        %7041 = vmatprep.mubr.f32.mxu0 %v6639
        %7042 = vmatmul.mubr.f32.gmra.mrb[0].mxu0 %v6456
        %v7043 = vpop.f32.mrb[0].mxu0
        %v7044 = vadd.f32 %v6824, %v7043
        %v7045 = vpop.f32.mrb[0].mxu0
        %7046 = vmatprep.mubr.f32.mxu0 %v6642
        %7047 = vmatmul.mubr.f32.gmra.mrb[0].mxu0 %v6460
        %v7048 = vpop.f32.mrb[0].mxu0
        %v7049 = vadd.f32 %v6829, %v7048
        %v7050 = vpop.f32.mrb[0].mxu0
        %7051 = vmatprep.mubr.f32.mxu0 %v6645
        %7052 = vmatmul.mubr.f32.gmra.mrb[0].mxu0 %v6464
        %v7053 = vpop.f32.mrb[0].mxu0
        %v7054 = vadd.f32 %v6834, %v7053
        %v7055 = vpop.f32.mrb[0].mxu0
        %7056 = vmatprep.mubr.f32.mxu0 %v6648
        %7057 = vmatmul.mubr.f32.gmra.mrb[0].mxu0 %v6468
        %v7058 = vpop.f32.mrb[0].mxu0
        %v7059 = vadd.f32 %v6839, %v7058
        %v7060 = vpop.f32.mrb[0].mxu0
        %7061 = vmatprep.mubr.f32.mxu0 %v6651
        %7062 = vmatmul.mubr.f32.gmra.mrb[0].mxu0 %v6472
        %v7063 = vpop.f32.mrb[0].mxu0
        %v7064 = vadd.f32 %v6844, %v7063
        %v7065 = vpop.f32.mrb[0].mxu0
        %7066 = vmatprep.mubr.f32.mxu0 %v6654
        %7067 = vmatmul.mubr.f32.gmra.mrb[0].mxu0 %v6476
        %v7068 = vpop.f32.mrb[0].mxu0
        %v7069 = vadd.f32 %v6849, %v7068
        %v7070 = vpop.f32.mrb[0].mxu0
        %7071 = vmatprep.mubr.f32.mxu0 %v6657
        %7072 = vmatmul.mubr.f32.gmra.mrb[0].mxu0 %v6480
        %v7073 = vpop.f32.mrb[0].mxu0
        %v7074 = vadd.f32 %v6854, %v7073
        %v7075 = vpop.f32.mrb[0].mxu0
        %7076 = vmatprep.mubr.f32.mxu0 %v6660
        %7077 = vmatmul.mubr.f32.gmra.mrb[0].mxu0 %v6484
        %v7078 = vpop.f32.mrb[0].mxu0
        %v7079 = vadd.f32 %v6859, %v7078
        %v7080 = vpop.f32.mrb[0].mxu0
        %7081 = vmatprep.mubr.f32.mxu0 %v6663
        %7082 = vmatmul.mubr.f32.gmra.mrb[0].mxu0 %v6488
        %v7083 = vpop.f32.mrb[0].mxu0
        %v7084 = vadd.f32 %v6864, %v7083
        %v7085 = vpop.f32.mrb[0].mxu0
        %7086 = vmatprep.mubr.f32.mxu0 %v6666
        %7087 = vmatmul.mubr.f32.gmra.mrb[0].mxu0 %v6492
        %v7088 = vpop.f32.mrb[0].mxu0
        %v7089 = vadd.f32 %v6869, %v7088
        %v7090 = vpop.f32.mrb[0].mxu0
        %7091 = vmatprep.mubr.f32.mxu0 %v6669
        %7092 = vmatmul.mubr.f32.gmra.mrb[0].mxu0 %v6496
        %v7093 = vpop.f32.mrb[0].mxu0
        %v7094 = vadd.f32 %v6874, %v7093
        %v7095 = vpop.f32.mrb[0].mxu0
        %7096 = vmatprep.mubr.f32.mxu0 %v6672
        %7097 = vmatmul.mubr.f32.gmra.mrb[0].mxu0 %v6500
        %v7098 = vpop.f32.mrb[0].mxu0
        %v7099 = vadd.f32 %v6879, %v7098
        %v7100 = vpop.f32.mrb[0].mxu0
        %7101 = vmatprep.mubr.f32.mxu0 %v6675
        %7102 = vmatmul.mubr.f32.gmra.mrb[0].mxu0 %v6504
        %v7103 = vpop.f32.mrb[0].mxu0
        %v7104 = vadd.f32 %v6884, %v7103
        %v7105 = vpop.f32.mrb[0].mxu0
        %7106 = vmatprep.mubr.f32.mxu0 %v6678
        %7107 = vmatmul.mubr.f32.gmra.mrb[0].mxu0 %v6508
        %v7108 = vpop.f32.mrb[0].mxu0
        %v7109 = vadd.f32 %v6889, %v7108
        %v7110 = vpop.f32.mrb[0].mxu0
        %7111 = vmatprep.mubr.f32.mxu0 %v6681
        %7112 = vmatmul.mubr.f32.gmra.mrb[0].mxu0 %v6512
        %v7113 = vpop.f32.mrb[0].mxu0
        %v7114 = vadd.f32 %v6894, %v7113
        %v7115 = vpop.f32.mrb[0].mxu0
        %7116 = vmatprep.mubr.f32.mxu0 %v6684
        %7117 = vmatmul.mubr.f32.gmra.mrb[0].mxu0 %v6516
        %v7118 = vpop.f32.mrb[0].mxu0
        %v7119 = vadd.f32 %v6899, %v7118
        %v7120 = vpop.f32.mrb[0].mxu0
        %7121 = vmatprep.mubr.f32.mxu0 %v6687
        %7122 = vmatmul.mubr.f32.gmra.mrb[0].mxu0 %v6520
        %v7123 = vpop.f32.mrb[0].mxu0
        %v7124 = vadd.f32 %v6904, %v7123
        %v7125 = vpop.f32.mrb[0].mxu0
        %7126 = vmatprep.mubr.f32.mxu0 %v6690
        %7127 = vmatmul.mubr.f32.gmra.mrb[0].mxu0 %v6524
        %v7128 = vpop.f32.mrb[0].mxu0
        %v7129 = vadd.f32 %v6909, %v7128
        %v7130 = vpop.f32.mrb[0].mxu0
        %7131 = vmatprep.mubr.f32.mxu0 %v6693
        %7132 = vmatmul.mubr.f32.gmra.mrb[0].mxu0 %v6528
        %v7133 = vpop.f32.mrb[0].mxu0
        %v7134 = vadd.f32 %v6914, %v7133
        %v7135 = vpop.f32.mrb[0].mxu0
        %7136 = vmatprep.mubr.f32.mxu0 %v6696
        %7137 = vmatmul.mubr.f32.gmra.mrb[0].mxu0 %v6532
        %v7138 = vpop.f32.mrb[0].mxu0
        %v7139 = vadd.f32 %v6919, %v7138
        %v7140 = vpop.f32.mrb[0].mxu0
        %7141 = vdwg.mxu0
        %v7142 = vmax.f32 %v6989, 0.0
        %v7143 = vmax.f32 %v6994, 0.0
        %v7144 = vmax.f32 %v6999, 0.0
        %v7145 = vmax.f32 %v7004, 0.0
        %v7146 = vmax.f32 %v7009, 0.0
        %v7147 = vmax.f32 %v7014, 0.0
        %v7148 = vmax.f32 %v7019, 0.0
        %v7149 = vmax.f32 %v7024, 0.0
        %v7150 = vmax.f32 %v7029, 0.0
        %v7151 = vmax.f32 %v7034, 0.0
        %v7152 = vmax.f32 %v7039, 0.0
        %v7153 = vmax.f32 %v7044, 0.0
        %v7154 = vmax.f32 %v7049, 0.0
        %v7155 = vmax.f32 %v7054, 0.0
        %v7156 = vmax.f32 %v7059, 0.0
        %v7157 = vmax.f32 %v7064, 0.0
        %v7158 = vmax.f32 %v7069, 0.0
        %v7159 = vmax.f32 %v7074, 0.0
        %v7160 = vmax.f32 %v7079, 0.0
        %v7161 = vmax.f32 %v7084, 0.0
        %v7162 = vmax.f32 %v7089, 0.0
        %v7163 = vmax.f32 %v7094, 0.0
        %v7164 = vmax.f32 %v7099, 0.0
        %v7165 = vmax.f32 %v7104, 0.0
        %v7166 = vmax.f32 %v7109, 0.0
        %v7167 = vmax.f32 %v7114, 0.0
        %v7168 = vmax.f32 %v7119, 0.0
        %v7169 = vmax.f32 %v7124, 0.0
        %v7170 = vmax.f32 %v7129, 0.0
        %v7171 = vmax.f32 %v7134, 0.0
        %v7172 = vmax.f32 %v7139, 0.0
        %vm7173 = vcmask 408576
        %7174 = vst.msk [vmem:[#allocation4] sm:$0xff] %vm7173, %v7142
        %7175 = vst.msk [vmem:[#allocation4 + $0x8] sm:$0xff] %vm7173, %v7143
        %7176 = vst.msk [vmem:[#allocation4 + $0x10] sm:$0xff] %vm7173, %v7144
        %7177 = vst.msk [vmem:[#allocation4 + $0x18] sm:$0xff] %vm7173, %v7145
        %7178 = vst.msk [vmem:[#allocation4 + $0x20] sm:$0xff] %vm7173, %v7146
        %7179 = vst.msk [vmem:[#allocation4 + $0x28] sm:$0xff] %vm7173, %v7147
        %7180 = vst.msk [vmem:[#allocation4 + $0x30] sm:$0xff] %vm7173, %v7148
        %7181 = vst.msk [vmem:[#allocation4 + $0x38] sm:$0xff] %vm7173, %v7149
        %7182 = vst.msk [vmem:[#allocation4 + $0x40] sm:$0xff] %vm7173, %v7150
        %7183 = vst.msk [vmem:[#allocation4 + $0x48] sm:$0xff] %vm7173, %v7151
        %7184 = vst.msk [vmem:[#allocation4 + $0x50] sm:$0xff] %vm7173, %v7152
        %7185 = vst.msk [vmem:[#allocation4 + $0x58] sm:$0xff] %vm7173, %v7153
        %7186 = vst.msk [vmem:[#allocation4 + $0x60] sm:$0xff] %vm7173, %v7154
        %7187 = vst.msk [vmem:[#allocation4 + $0x68] sm:$0xff] %vm7173, %v7155
        %7188 = vst.msk [vmem:[#allocation4 + $0x70] sm:$0xff] %vm7173, %v7156
        %7189 = vst.msk [vmem:[#allocation4 + $0x78] sm:$0xff] %vm7173, %v7157
        %7190 = vst.msk [vmem:[#allocation4 + $0x80] sm:$0xff] %vm7173, %v7158
        %7191 = vst.msk [vmem:[#allocation4 + $0x88] sm:$0xff] %vm7173, %v7159
        %7192 = vst.msk [vmem:[#allocation4 + $0x90] sm:$0xff] %vm7173, %v7160
        %7193 = vst.msk [vmem:[#allocation4 + $0x98] sm:$0xff] %vm7173, %v7161
        %7194 = vst.msk [vmem:[#allocation4 + $0xa0] sm:$0xff] %vm7173, %v7162
        %7195 = vst.msk [vmem:[#allocation4 + $0xa8] sm:$0xff] %vm7173, %v7163
        %7196 = vst.msk [vmem:[#allocation4 + $0xb0] sm:$0xff] %vm7173, %v7164
        %7197 = vst.msk [vmem:[#allocation4 + $0xb8] sm:$0xff] %vm7173, %v7165
        %7198 = vst.msk [vmem:[#allocation4 + $0xc0] sm:$0xff] %vm7173, %v7166
        %7199 = vst.msk [vmem:[#allocation4 + $0xc8] sm:$0xff] %vm7173, %v7167
        %7200 = vst.msk [vmem:[#allocation4 + $0xd0] sm:$0xff] %vm7173, %v7168
        %7201 = vst.msk [vmem:[#allocation4 + $0xd8] sm:$0xff] %vm7173, %v7169
        %7202 = vst.msk [vmem:[#allocation4 + $0xe0] sm:$0xff] %vm7173, %v7170
        %7203 = vst.msk [vmem:[#allocation4 + $0xe8] sm:$0xff] %vm7173, %v7171
        %7204 = vst.msk [vmem:[#allocation4 + $0xf0] sm:$0xff] %vm7173, %v7172
        %v7205 = vld [vmem:[#allocation4] sm:$0x1]
        %v7206 = vld [vmem:[#allocation4 + $0x1] sm:$0x1]
        %v7207 = vmax.f32 %v7205, %v7206
        %v7208 = vld [vmem:[#allocation4 + $0x12] sm:$0x1]
        %v7209 = vld [vmem:[#allocation4 + $0x13] sm:$0x1]
        %v7210 = vmax.f32 %v7208, %v7209
        %v7211 = vmax.f32 %v7207, %v7210
        %v7212 = vlaneseq
        %vm7213 = vcmp.ge.s32.totalorder %v7212, 0
        %vm7214 = vcmp.lt.s32.totalorder %v7212, 50
        %vm7215 = vmand %vm7213, %vm7214
        %7216 = vst.msk [vmem:[#allocation5] sm:$0x1] %vm7215, %v7211
        %v7217 = vld [vmem:[#allocation4 + $0x4] sm:$0x1]
        %v7218 = vld [vmem:[#allocation4 + $0x5] sm:$0x1]
        %v7219 = vmax.f32 %v7217, %v7218
        %v7220 = vld [vmem:[#allocation4 + $0x16] sm:$0x1]
        %v7221 = vld [vmem:[#allocation4 + $0x17] sm:$0x1]
        %v7222 = vmax.f32 %v7220, %v7221
        %v7223 = vmax.f32 %v7219, %v7222
        %v7226 = vunpack.c.l.s4 1966171168
        %v7227 = vunpack.c.0.s8 %v7226
        %v7228 = vlaneseq
        %v7229 = vshrl.u32 %v7228, 7
        %v7230 = vsub.s32 %v7227, %v7229
        %v7231 = vrot.slane %v7223, %v7230
        %v7233 = vunpack.c.l.s4 1966171168
        %v7234 = vunpack.c.0.s8 %v7233
        %v7235 = vlaneseq
        %v7236 = vshrl.u32 %v7235, 7
        %v7237 = vsub.s32 %v7234, %v7236
        %v7238 = vrot.slane %v7231, %v7237
        %7239 = vrot.lane.b32.xlu0 %v7238, 50
        %v7240 = vpop.permute.xlu0 %7239
        %vm7242 = vcmp.ge.s32.totalorder %v7212, 50
        %vm7243 = vcmp.lt.s32.totalorder %v7212, 100
        %vm7244 = vmand %vm7242, %vm7243
        %7245 = vst.msk [vmem:[#allocation5] sm:$0x1] %vm7244, %v7240
        %v7246 = vld [vmem:[#allocation4 + $0x8] sm:$0x1]
        %v7247 = vld [vmem:[#allocation4 + $0x9] sm:$0x1]
        %v7248 = vmax.f32 %v7246, %v7247
        %v7249 = vld [vmem:[#allocation4 + $0x1a] sm:$0x1]
        %v7250 = vld [vmem:[#allocation4 + $0x1b] sm:$0x1]
        %v7251 = vmax.f32 %v7249, %v7250
        %v7252 = vmax.f32 %v7248, %v7251
        %v7255 = vunpack.c.l.s4 1966171168
        %v7256 = vunpack.c.0.s8 %v7255
        %v7257 = vlaneseq
        %v7258 = vshrl.u32 %v7257, 7
        %v7259 = vsub.s32 %v7256, %v7258
        %v7260 = vrot.slane %v7252, %v7259
        %v7262 = vunpack.c.l.s4 1966171168
        %v7263 = vunpack.c.0.s8 %v7262
        %v7264 = vlaneseq
        %v7265 = vshrl.u32 %v7264, 7
        %v7266 = vsub.s32 %v7263, %v7265
        %v7267 = vrot.slane %v7260, %v7266
        %7268 = vrot.lane.b32.xlu0 %v7267, 100
        %v7269 = vpop.permute.xlu0 %7268
        %v7270 = vrot.slane %v7269, 7
        %vm7271 = vcmask 818176
        %v7272 = vsel %vm7271, %v7270, %v7269
        %vm7274 = vcmp.ge.s32.totalorder %v7212, 100
        %vm7275 = vcmp.lt.s32.totalorder %v7212, 150
        %vm7276 = vmand %vm7274, %vm7275
        %7277 = vst.msk [vmem:[#allocation5] sm:$0x3] %vm7276, %v7272
        %v7278 = vld [vmem:[#allocation4 + $0xc] sm:$0x1]
        %v7279 = vld [vmem:[#allocation4 + $0xd] sm:$0x1]
        %v7280 = vmax.f32 %v7278, %v7279
        %v7281 = vld [vmem:[#allocation4 + $0x1e] sm:$0x1]
        %v7282 = vld [vmem:[#allocation4 + $0x1f] sm:$0x1]
        %v7283 = vmax.f32 %v7281, %v7282
        %v7284 = vmax.f32 %v7280, %v7283
        %v7287 = vunpack.c.l.s4 1966171168
        %v7288 = vunpack.c.0.s8 %v7287
        %v7289 = vlaneseq
        %v7290 = vshrl.u32 %v7289, 7
        %v7291 = vsub.s32 %v7288, %v7290
        %v7292 = vrot.slane %v7284, %v7291
        %v7294 = vunpack.c.l.s4 1966171168
        %v7295 = vunpack.c.0.s8 %v7294
        %v7296 = vlaneseq
        %v7297 = vshrl.u32 %v7296, 7
        %v7298 = vsub.s32 %v7295, %v7297
        %v7299 = vrot.slane %v7292, %v7298
        %7300 = vrot.lane.b32.xlu0 %v7299, 22
        %v7301 = vpop.permute.xlu0 %7300
        %vm7303 = vcmp.ge.s32.totalorder %v7212, 22
        %vm7304 = vcmp.lt.s32.totalorder %v7212, 72
        %vm7305 = vmand %vm7303, %vm7304
        %7306 = vst.msk [vmem:[#allocation5 + $0x1] sm:$0x1] %vm7305, %v7301
        %v7307 = vld [vmem:[#allocation4 + $0x48] sm:$0x1]
        %v7308 = vld [vmem:[#allocation4 + $0x49] sm:$0x1]
        %v7309 = vmax.f32 %v7307, %v7308
        %v7310 = vld [vmem:[#allocation4 + $0x5a] sm:$0x1]
        %v7311 = vld [vmem:[#allocation4 + $0x5b] sm:$0x1]
        %v7312 = vmax.f32 %v7310, %v7311
        %v7313 = vmax.f32 %v7309, %v7312
        %v7316 = vunpack.c.l.s4 1966171168
        %v7317 = vunpack.c.0.s8 %v7316
        %v7318 = vlaneseq
        %v7319 = vshrl.u32 %v7318, 7
        %v7320 = vsub.s32 %v7317, %v7319
        %v7321 = vrot.slane %v7313, %v7320
        %v7323 = vunpack.c.l.s4 1966171168
        %v7324 = vunpack.c.0.s8 %v7323
        %v7325 = vlaneseq
        %v7326 = vshrl.u32 %v7325, 7
        %v7327 = vsub.s32 %v7324, %v7326
        %v7328 = vrot.slane %v7321, %v7327
        %7329 = vrot.lane.b32.xlu0 %v7328, 72
        %v7330 = vpop.permute.xlu0 %7329
        %vm7332 = vcmp.ge.s32.totalorder %v7212, 72
        %vm7333 = vcmp.lt.s32.totalorder %v7212, 122
        %vm7334 = vmand %vm7332, %vm7333
        %7335 = vst.msk [vmem:[#allocation5 + $0x1] sm:$0x1] %vm7334, %v7330
        %v7336 = vld [vmem:[#allocation4 + $0x4c] sm:$0x1]
        %v7337 = vld [vmem:[#allocation4 + $0x4d] sm:$0x1]
        %v7338 = vmax.f32 %v7336, %v7337
        %v7339 = vld [vmem:[#allocation4 + $0x5e] sm:$0x1]
        %v7340 = vld [vmem:[#allocation4 + $0x5f] sm:$0x1]
        %v7341 = vmax.f32 %v7339, %v7340
        %v7342 = vmax.f32 %v7338, %v7341
        %v7345 = vunpack.c.l.s4 1966171168
        %v7346 = vunpack.c.0.s8 %v7345
        %v7347 = vlaneseq
        %v7348 = vshrl.u32 %v7347, 7
        %v7349 = vsub.s32 %v7346, %v7348
        %v7350 = vrot.slane %v7342, %v7349
        %v7352 = vunpack.c.l.s4 1966171168
        %v7353 = vunpack.c.0.s8 %v7352
        %v7354 = vlaneseq
        %v7355 = vshrl.u32 %v7354, 7
        %v7356 = vsub.s32 %v7353, %v7355
        %v7357 = vrot.slane %v7350, %v7356
        %7358 = vrot.lane.b32.xlu0 %v7357, 122
        %v7359 = vpop.permute.xlu0 %7358
        %v7360 = vrot.slane %v7359, 7
        %vm7361 = vcmask 998400
        %v7362 = vsel %vm7361, %v7360, %v7359
        %vm7364 = vcmp.ge.s32.totalorder %v7212, 122
        %vm7365 = vcmp.lt.s32.totalorder %v7212, 172
        %vm7366 = vmand %vm7364, %vm7365
        %7367 = vst.msk [vmem:[#allocation5 + $0x1] sm:$0x3] %vm7366, %v7362
        %v7368 = vld [vmem:[#allocation4 + $0x50] sm:$0x1]
        %v7369 = vld [vmem:[#allocation4 + $0x51] sm:$0x1]
        %v7370 = vmax.f32 %v7368, %v7369
        %v7371 = vld [vmem:[#allocation4 + $0x62] sm:$0x1]
        %v7372 = vld [vmem:[#allocation4 + $0x63] sm:$0x1]
        %v7373 = vmax.f32 %v7371, %v7372
        %v7374 = vmax.f32 %v7370, %v7373
        %v7377 = vunpack.c.l.s4 1966171168
        %v7378 = vunpack.c.0.s8 %v7377
        %v7379 = vlaneseq
        %v7380 = vshrl.u32 %v7379, 7
        %v7381 = vsub.s32 %v7378, %v7380
        %v7382 = vrot.slane %v7374, %v7381
        %v7384 = vunpack.c.l.s4 1966171168
        %v7385 = vunpack.c.0.s8 %v7384
        %v7386 = vlaneseq
        %v7387 = vshrl.u32 %v7386, 7
        %v7388 = vsub.s32 %v7385, %v7387
        %v7389 = vrot.slane %v7382, %v7388
        %7390 = vrot.lane.b32.xlu0 %v7389, 44
        %v7391 = vpop.permute.xlu0 %7390
        %vm7393 = vcmp.ge.s32.totalorder %v7212, 44
        %vm7394 = vcmp.lt.s32.totalorder %v7212, 94
        %vm7395 = vmand %vm7393, %vm7394
        %7396 = vst.msk [vmem:[#allocation5 + $0x2] sm:$0x1] %vm7395, %v7391
        %v7397 = vld [vmem:[#allocation4 + $0x54] sm:$0x1]
        %v7398 = vld [vmem:[#allocation4 + $0x55] sm:$0x1]
        %v7399 = vmax.f32 %v7397, %v7398
        %v7400 = vld [vmem:[#allocation4 + $0x66] sm:$0x1]
        %v7401 = vld [vmem:[#allocation4 + $0x67] sm:$0x1]
        %v7402 = vmax.f32 %v7400, %v7401
        %v7403 = vmax.f32 %v7399, %v7402
        %v7406 = vunpack.c.l.s4 1966171168
        %v7407 = vunpack.c.0.s8 %v7406
        %v7408 = vlaneseq
        %v7409 = vshrl.u32 %v7408, 7
        %v7410 = vsub.s32 %v7407, %v7409
        %v7411 = vrot.slane %v7403, %v7410
        %v7413 = vunpack.c.l.s4 1966171168
        %v7414 = vunpack.c.0.s8 %v7413
        %v7415 = vlaneseq
        %v7416 = vshrl.u32 %v7415, 7
        %v7417 = vsub.s32 %v7414, %v7416
        %v7418 = vrot.slane %v7411, %v7417
        %7419 = vrot.lane.b32.xlu0 %v7418, 94
        %v7420 = vpop.permute.xlu0 %7419
        %v7421 = vrot.slane %v7420, 7
        %vm7422 = vcmask 769024
        %v7423 = vsel %vm7422, %v7421, %v7420
        %vm7425 = vcmp.ge.s32.totalorder %v7212, 94
        %vm7426 = vcmp.lt.s32.totalorder %v7212, 144
        %vm7427 = vmand %vm7425, %vm7426
        %7428 = vst.msk [vmem:[#allocation5 + $0x2] sm:$0x3] %vm7427, %v7423
        %v7429 = vld [vmem:[#allocation4 + $0x90] sm:$0x1]
        %v7430 = vld [vmem:[#allocation4 + $0x91] sm:$0x1]
        %v7431 = vmax.f32 %v7429, %v7430
        %v7432 = vld [vmem:[#allocation4 + $0xa2] sm:$0x1]
        %v7433 = vld [vmem:[#allocation4 + $0xa3] sm:$0x1]
        %v7434 = vmax.f32 %v7432, %v7433
        %v7435 = vmax.f32 %v7431, %v7434
        %v7438 = vunpack.c.l.s4 1966171168
        %v7439 = vunpack.c.0.s8 %v7438
        %v7440 = vlaneseq
        %v7441 = vshrl.u32 %v7440, 7
        %v7442 = vsub.s32 %v7439, %v7441
        %v7443 = vrot.slane %v7435, %v7442
        %v7445 = vunpack.c.l.s4 1966171168
        %v7446 = vunpack.c.0.s8 %v7445
        %v7447 = vlaneseq
        %v7448 = vshrl.u32 %v7447, 7
        %v7449 = vsub.s32 %v7446, %v7448
        %v7450 = vrot.slane %v7443, %v7449
        %7451 = vrot.lane.b32.xlu0 %v7450, 16
        %v7452 = vpop.permute.xlu0 %7451
        %vm7454 = vcmp.ge.s32.totalorder %v7212, 16
        %vm7455 = vcmp.lt.s32.totalorder %v7212, 66
        %vm7456 = vmand %vm7454, %vm7455
        %7457 = vst.msk [vmem:[#allocation5 + $0x3] sm:$0x1] %vm7456, %v7452
        %v7458 = vld [vmem:[#allocation4 + $0x94] sm:$0x1]
        %v7459 = vld [vmem:[#allocation4 + $0x95] sm:$0x1]
        %v7460 = vmax.f32 %v7458, %v7459
        %v7461 = vld [vmem:[#allocation4 + $0xa6] sm:$0x1]
        %v7462 = vld [vmem:[#allocation4 + $0xa7] sm:$0x1]
        %v7463 = vmax.f32 %v7461, %v7462
        %v7464 = vmax.f32 %v7460, %v7463
        %v7467 = vunpack.c.l.s4 1966171168
        %v7468 = vunpack.c.0.s8 %v7467
        %v7469 = vlaneseq
        %v7470 = vshrl.u32 %v7469, 7
        %v7471 = vsub.s32 %v7468, %v7470
        %v7472 = vrot.slane %v7464, %v7471
        %v7474 = vunpack.c.l.s4 1966171168
        %v7475 = vunpack.c.0.s8 %v7474
        %v7476 = vlaneseq
        %v7477 = vshrl.u32 %v7476, 7
        %v7478 = vsub.s32 %v7475, %v7477
        %v7479 = vrot.slane %v7472, %v7478
        %7480 = vrot.lane.b32.xlu0 %v7479, 66
        %v7481 = vpop.permute.xlu0 %7480
        %vm7483 = vcmp.ge.s32.totalorder %v7212, 66
        %vm7484 = vcmp.lt.s32.totalorder %v7212, 116
        %vm7485 = vmand %vm7483, %vm7484
        %7486 = vst.msk [vmem:[#allocation5 + $0x3] sm:$0x1] %vm7485, %v7481
        %v7487 = vld [vmem:[#allocation4 + $0x98] sm:$0x1]
        %v7488 = vld [vmem:[#allocation4 + $0x99] sm:$0x1]
        %v7489 = vmax.f32 %v7487, %v7488
        %v7490 = vld [vmem:[#allocation4 + $0xaa] sm:$0x1]
        %v7491 = vld [vmem:[#allocation4 + $0xab] sm:$0x1]
        %v7492 = vmax.f32 %v7490, %v7491
        %v7493 = vmax.f32 %v7489, %v7492
        %v7496 = vunpack.c.l.s4 1966171168
        %v7497 = vunpack.c.0.s8 %v7496
        %v7498 = vlaneseq
        %v7499 = vshrl.u32 %v7498, 7
        %v7500 = vsub.s32 %v7497, %v7499
        %v7501 = vrot.slane %v7493, %v7500
        %v7503 = vunpack.c.l.s4 1966171168
        %v7504 = vunpack.c.0.s8 %v7503
        %v7505 = vlaneseq
        %v7506 = vshrl.u32 %v7505, 7
        %v7507 = vsub.s32 %v7504, %v7506
        %v7508 = vrot.slane %v7501, %v7507
        %7509 = vrot.lane.b32.xlu0 %v7508, 116
        %v7510 = vpop.permute.xlu0 %7509
        %v7511 = vrot.slane %v7510, 7
        %v7512 = vsel %vm6604, %v7511, %v7510
        %vm7514 = vcmp.ge.s32.totalorder %v7212, 116
        %vm7515 = vcmp.lt.s32.totalorder %v7212, 166
        %vm7516 = vmand %vm7514, %vm7515
        %7517 = vst.msk [vmem:[#allocation5 + $0x3] sm:$0x3] %vm7516, %v7512
        %v7518 = vld [vmem:[#allocation4 + $0x9c] sm:$0x1]
        %v7519 = vld [vmem:[#allocation4 + $0x9d] sm:$0x1]
        %v7520 = vmax.f32 %v7518, %v7519
        %v7521 = vld [vmem:[#allocation4 + $0xae] sm:$0x1]
        %v7522 = vld [vmem:[#allocation4 + $0xaf] sm:$0x1]
        %v7523 = vmax.f32 %v7521, %v7522
        %v7524 = vmax.f32 %v7520, %v7523
        %v7527 = vunpack.c.l.s4 1966171168
        %v7528 = vunpack.c.0.s8 %v7527
        %v7529 = vlaneseq
        %v7530 = vshrl.u32 %v7529, 7
        %v7531 = vsub.s32 %v7528, %v7530
        %v7532 = vrot.slane %v7524, %v7531
        %v7534 = vunpack.c.l.s4 1966171168
        %v7535 = vunpack.c.0.s8 %v7534
        %v7536 = vlaneseq
        %v7537 = vshrl.u32 %v7536, 7
        %v7538 = vsub.s32 %v7535, %v7537
        %v7539 = vrot.slane %v7532, %v7538
        %7540 = vrot.lane.b32.xlu0 %v7539, 38
        %v7541 = vpop.permute.xlu0 %7540
        %vm7543 = vcmp.ge.s32.totalorder %v7212, 38
        %vm7544 = vcmp.lt.s32.totalorder %v7212, 88
        %vm7545 = vmand %vm7543, %vm7544
        %7546 = vst.msk [vmem:[#allocation5 + $0x4] sm:$0x1] %vm7545, %v7541
        %v7547 = vld [vmem:[#allocation4 + $0xd8] sm:$0x1]
        %v7548 = vld [vmem:[#allocation4 + $0xd9] sm:$0x1]
        %v7549 = vmax.f32 %v7547, %v7548
        %v7550 = vld [vmem:[#allocation4 + $0xea] sm:$0x1]
        %v7551 = vld [vmem:[#allocation4 + $0xeb] sm:$0x1]
        %v7552 = vmax.f32 %v7550, %v7551
        %v7553 = vmax.f32 %v7549, %v7552
        %v7556 = vunpack.c.l.s4 1966171168
        %v7557 = vunpack.c.0.s8 %v7556
        %v7558 = vlaneseq
        %v7559 = vshrl.u32 %v7558, 7
        %v7560 = vsub.s32 %v7557, %v7559
        %v7561 = vrot.slane %v7553, %v7560
        %v7563 = vunpack.c.l.s4 1966171168
        %v7564 = vunpack.c.0.s8 %v7563
        %v7565 = vlaneseq
        %v7566 = vshrl.u32 %v7565, 7
        %v7567 = vsub.s32 %v7564, %v7566
        %v7568 = vrot.slane %v7561, %v7567
        %7569 = vrot.lane.b32.xlu0 %v7568, 88
        %v7570 = vpop.permute.xlu0 %7569
        %v7571 = vrot.slane %v7570, 7
        %vm7572 = vcmask 719872
        %v7573 = vsel %vm7572, %v7571, %v7570
        %vm7575 = vcmp.ge.s32.totalorder %v7212, 88
        %vm7576 = vcmp.lt.s32.totalorder %v7212, 138
        %vm7577 = vmand %vm7575, %vm7576
        %7578 = vst.msk [vmem:[#allocation5 + $0x4] sm:$0x3] %vm7577, %v7573
        %v7579 = vld [vmem:[#allocation4 + $0xdc] sm:$0x1]
        %v7580 = vld [vmem:[#allocation4 + $0xdd] sm:$0x1]
        %v7581 = vmax.f32 %v7579, %v7580
        %v7582 = vld [vmem:[#allocation4 + $0xee] sm:$0x1]
        %v7583 = vld [vmem:[#allocation4 + $0xef] sm:$0x1]
        %v7584 = vmax.f32 %v7582, %v7583
        %v7585 = vmax.f32 %v7581, %v7584
        %v7588 = vunpack.c.l.s4 1966171168
        %v7589 = vunpack.c.0.s8 %v7588
        %v7590 = vlaneseq
        %v7591 = vshrl.u32 %v7590, 7
        %v7592 = vsub.s32 %v7589, %v7591
        %v7593 = vrot.slane %v7585, %v7592
        %v7595 = vunpack.c.l.s4 1966171168
        %v7596 = vunpack.c.0.s8 %v7595
        %v7597 = vlaneseq
        %v7598 = vshrl.u32 %v7597, 7
        %v7599 = vsub.s32 %v7596, %v7598
        %v7600 = vrot.slane %v7593, %v7599
        %7601 = vrot.lane.b32.xlu0 %v7600, 10
        %v7602 = vpop.permute.xlu0 %7601
        %vm7604 = vcmp.ge.s32.totalorder %v7212, 10
        %vm7605 = vcmp.lt.s32.totalorder %v7212, 60
        %vm7606 = vmand %vm7604, %vm7605
        %7607 = vst.msk [vmem:[#allocation5 + $0x5] sm:$0x1] %vm7606, %v7602
        %v7608 = vld [vmem:[#allocation4 + $0xe0] sm:$0x1]
        %v7609 = vld [vmem:[#allocation4 + $0xe1] sm:$0x1]
        %v7610 = vmax.f32 %v7608, %v7609
        %v7611 = vld [vmem:[#allocation4 + $0xf2] sm:$0x1]
        %v7612 = vld [vmem:[#allocation4 + $0xf3] sm:$0x1]
        %v7613 = vmax.f32 %v7611, %v7612
        %v7614 = vmax.f32 %v7610, %v7613
        %v7617 = vunpack.c.l.s4 1966171168
        %v7618 = vunpack.c.0.s8 %v7617
        %v7619 = vlaneseq
        %v7620 = vshrl.u32 %v7619, 7
        %v7621 = vsub.s32 %v7618, %v7620
        %v7622 = vrot.slane %v7614, %v7621
        %v7624 = vunpack.c.l.s4 1966171168
        %v7625 = vunpack.c.0.s8 %v7624
        %v7626 = vlaneseq
        %v7627 = vshrl.u32 %v7626, 7
        %v7628 = vsub.s32 %v7625, %v7627
        %v7629 = vrot.slane %v7622, %v7628
        %7630 = vrot.lane.b32.xlu0 %v7629, 60
        %v7631 = vpop.permute.xlu0 %7630
        %vm7633 = vcmp.ge.s32.totalorder %v7212, 60
        %vm7634 = vcmp.lt.s32.totalorder %v7212, 110
        %vm7635 = vmand %vm7633, %vm7634
        %7636 = vst.msk [vmem:[#allocation5 + $0x5] sm:$0x1] %vm7635, %v7631
        %v7637 = vld [vmem:[#allocation4 + $0xe4] sm:$0x1]
        %v7638 = vld [vmem:[#allocation4 + $0xe5] sm:$0x1]
        %v7639 = vmax.f32 %v7637, %v7638
        %v7640 = vld [vmem:[#allocation4 + $0xf6] sm:$0x1]
        %v7641 = vld [vmem:[#allocation4 + $0xf7] sm:$0x1]
        %v7642 = vmax.f32 %v7640, %v7641
        %v7643 = vmax.f32 %v7639, %v7642
        %v7646 = vunpack.c.l.s4 1966171168
        %v7647 = vunpack.c.0.s8 %v7646
        %v7648 = vlaneseq
        %v7649 = vshrl.u32 %v7648, 7
        %v7650 = vsub.s32 %v7647, %v7649
        %v7651 = vrot.slane %v7643, %v7650
        %v7653 = vunpack.c.l.s4 1966171168
        %v7654 = vunpack.c.0.s8 %v7653
        %v7655 = vlaneseq
        %v7656 = vshrl.u32 %v7655, 7
        %v7657 = vsub.s32 %v7654, %v7656
        %v7658 = vrot.slane %v7651, %v7657
        %7659 = vrot.lane.b32.xlu0 %v7658, 110
        %v7660 = vpop.permute.xlu0 %7659
        %v7661 = vrot.slane %v7660, 7
        %vm7662 = vcmask 900096
        %v7663 = vsel %vm7662, %v7661, %v7660
        %vm7665 = vcmp.ge.s32.totalorder %v7212, 110
        %vm7666 = vcmp.lt.s32.totalorder %v7212, 160
        %vm7667 = vmand %vm7665, %vm7666
        %7668 = vst.msk [vmem:[#allocation5 + $0x5] sm:$0x3] %vm7667, %v7663
        %v7669 = vld [vmem:[#allocation5] sm:$0x7f]
        %v7670 = vld [vmem:[%s5] sm:$0xff]
        %v7671 = vld [vmem:[%s5 + $0x8] sm:$0xff]
        %v7672 = vld [vmem:[%s5 + $0x10] sm:$0xff]
        %v7673 = vld [vmem:[%s5 + $0x18] sm:$0xff]
        %v7674 = vld [vmem:[%s5 + $0x20] sm:$0xff]
        %v7675 = vld [vmem:[%s5 + $0x28] sm:$0xff]
        %v7676 = vld [vmem:[%s5 + $0x30] sm:$0xff]
        %v7677 = vld [vmem:[%s5 + $0x38] sm:$0xff]
        %v7678 = vld [vmem:[%s5 + $0x40] sm:$0xff]
        %v7679 = vld [vmem:[%s5 + $0x48] sm:$0xff]
        %v7680 = vld [vmem:[%s5 + $0x50] sm:$0xff]
        %v7681 = vld [vmem:[%s5 + $0x58] sm:$0xff]
        %v7682 = vld [vmem:[%s5 + $0x60] sm:$0xff]
        %v7683 = vld [vmem:[%s5 + $0x68] sm:$0xff]
        %v7684 = vld [vmem:[%s5 + $0x70] sm:$0xff]
        %v7685 = vld [vmem:[%s5 + $0x78] sm:$0xff]
        %v7686 = vld [vmem:[%s5 + $0x80] sm:$0xff]
        %v7687 = vld [vmem:[%s5 + $0x88] sm:$0xff]
        %v7688 = vld [vmem:[%s5 + $0x90] sm:$0xff]
        %v7689 = vld [vmem:[%s5 + $0x98] sm:$0xff]
        %v7690 = vld [vmem:[%s5 + $0xa0] sm:$0xff]
        %v7691 = vld [vmem:[%s5 + $0xa8] sm:$0xff]
        %v7692 = vld [vmem:[%s5 + $0xb0] sm:$0xff]
        %v7693 = vld [vmem:[%s5 + $0xb8] sm:$0xff]
        %v7694 = vld [vmem:[%s5 + $0xc0] sm:$0xff]
        %v7695 = vld [vmem:[%s5 + $0xc8] sm:$0xff]
        %v7696 = vld [vmem:[%s5 + $0xd0] sm:$0xff]
        %v7697 = vld [vmem:[%s5 + $0xd8] sm:$0xff]
        %v7698 = vld [vmem:[%s5 + $0xe0] sm:$0xff]
        %v7699 = vld [vmem:[%s5 + $0xe8] sm:$0xff]
        %v7700 = vld [vmem:[%s5 + $0xf0] sm:$0xff]
        %v7701 = vld [vmem:[%s5 + $0xf8] sm:$0xff]
        %v7702 = vld [vmem:[%s5 + $0x100] sm:$0xff]
        %v7703 = vld [vmem:[%s5 + $0x108] sm:$0xff]
        %v7704 = vld [vmem:[%s5 + $0x110] sm:$0xff]
        %v7705 = vld [vmem:[%s5 + $0x118] sm:$0xff]
        %v7706 = vld [vmem:[%s5 + $0x120] sm:$0xff]
        %v7707 = vld [vmem:[%s5 + $0x128] sm:$0xff]
        %v7708 = vld [vmem:[%s5 + $0x130] sm:$0xff]
        %v7709 = vld [vmem:[%s5 + $0x138] sm:$0xff]
        %v7710 = vld [vmem:[%s5 + $0x140] sm:$0xff]
        %v7711 = vld [vmem:[%s5 + $0x148] sm:$0xff]
        %v7712 = vld [vmem:[%s5 + $0x150] sm:$0xff]
        %v7713 = vld [vmem:[%s5 + $0x158] sm:$0xff]
        %v7714 = vld [vmem:[%s5 + $0x160] sm:$0xff]
        %v7715 = vld [vmem:[%s5 + $0x168] sm:$0xff]
        %v7716 = vld [vmem:[%s5 + $0x170] sm:$0xff]
        %v7717 = vld [vmem:[%s5 + $0x178] sm:$0xff]
        %v7718 = vld [vmem:[%s5 + $0x180] sm:$0xff]
        %v7719 = vld [vmem:[%s5 + $0x188] sm:$0xff]
        %v7720 = vld [vmem:[%s5 + $0x190] sm:$0xff]
        %v7721 = vld [vmem:[%s5 + $0x198] sm:$0xff]
        %v7722 = vld [vmem:[%s5 + $0x1a0] sm:$0xff]
        %v7723 = vld [vmem:[%s5 + $0x1a8] sm:$0xff]
        %v7724 = vld [vmem:[%s5 + $0x1b0] sm:$0xff]
        %v7725 = vld [vmem:[%s5 + $0x1b8] sm:$0xff]
        %v7726 = vld [vmem:[%s5 + $0x1c0] sm:$0xff]
        %v7727 = vld [vmem:[%s5 + $0x1c8] sm:$0xff]
        %v7728 = vld [vmem:[%s5 + $0x1d0] sm:$0xff]
        %v7729 = vld [vmem:[%s5 + $0x1d8] sm:$0xff]
        %v7730 = vld [vmem:[%s5 + $0x1e0] sm:$0xff]
        %v7731 = vld [vmem:[%s5 + $0x1e8] sm:$0xff]
        %v7732 = vld [vmem:[%s5 + $0x1f0] sm:$0xff]
        %v7733 = vld [vmem:[%s5 + $0x1f8] sm:$0xff]
        %v7734 = vld [vmem:[%s5 + $0x200] sm:$0xff]
        %v7735 = vld [vmem:[%s5 + $0x208] sm:$0xff]
        %v7736 = vld [vmem:[%s5 + $0x210] sm:$0xff]
        %v7737 = vld [vmem:[%s5 + $0x218] sm:$0xff]
        %v7738 = vld [vmem:[%s5 + $0x220] sm:$0xff]
        %v7739 = vld [vmem:[%s5 + $0x228] sm:$0xff]
        %v7740 = vld [vmem:[%s5 + $0x230] sm:$0xff]
        %v7741 = vld [vmem:[%s5 + $0x238] sm:$0xff]
        %v7742 = vld [vmem:[%s5 + $0x240] sm:$0xff]
        %v7743 = vld [vmem:[%s5 + $0x248] sm:$0xff]
        %v7744 = vld [vmem:[%s5 + $0x250] sm:$0xff]
        %v7745 = vld [vmem:[%s5 + $0x258] sm:$0xff]
        %v7746 = vld [vmem:[%s5 + $0x260] sm:$0xff]
        %v7747 = vld [vmem:[%s5 + $0x268] sm:$0xff]
        %v7748 = vld [vmem:[%s5 + $0x270] sm:$0xff]
        %v7749 = vld [vmem:[%s5 + $0x278] sm:$0xff]
        %v7750 = vld [vmem:[%s5 + $0x280] sm:$0xff]
        %v7751 = vld [vmem:[%s5 + $0x288] sm:$0xff]
        %v7752 = vld [vmem:[%s5 + $0x290] sm:$0xff]
        %v7753 = vld [vmem:[%s5 + $0x298] sm:$0xff]
        %v7754 = vld [vmem:[%s5 + $0x2a0] sm:$0xff]
        %v7755 = vld [vmem:[%s5 + $0x2a8] sm:$0xff]
        %v7756 = vld [vmem:[%s5 + $0x2b0] sm:$0xff]
        %v7757 = vld [vmem:[%s5 + $0x2b8] sm:$0xff]
        %v7758 = vld [vmem:[%s5 + $0x2c0] sm:$0xff]
        %v7759 = vld [vmem:[%s5 + $0x2c8] sm:$0xff]
        %v7760 = vld [vmem:[%s5 + $0x2d0] sm:$0xff]
        %v7761 = vld [vmem:[%s5 + $0x2d8] sm:$0xff]
        %v7762 = vld [vmem:[%s5 + $0x2e0] sm:$0xff]
        %v7763 = vld [vmem:[%s5 + $0x2e8] sm:$0xff]
        %v7764 = vld [vmem:[%s5 + $0x2f0] sm:$0xff]
        %v7765 = vld [vmem:[%s5 + $0x2f8] sm:$0xff]
        %v7766 = vld [vmem:[%s5 + $0x300] sm:$0xff]
        %v7767 = vld [vmem:[%s5 + $0x308] sm:$0xff]
        %v7768 = vld [vmem:[%s5 + $0x310] sm:$0xff]
        %v7769 = vld [vmem:[%s5 + $0x318] sm:$0xff]
        %v7770 = vld [vmem:[%s5 + $0x320] sm:$0xff]
        %v7771 = vld [vmem:[%s5 + $0x328] sm:$0xff]
        %v7772 = vld [vmem:[%s5 + $0x330] sm:$0xff]
        %v7773 = vld [vmem:[%s5 + $0x338] sm:$0xff]
        %v7774 = vld [vmem:[%s5 + $0x340] sm:$0xff]
        %v7775 = vld [vmem:[%s5 + $0x348] sm:$0xff]
        %v7776 = vld [vmem:[%s5 + $0x350] sm:$0xff]
        %v7777 = vld [vmem:[%s5 + $0x358] sm:$0xff]
        %v7778 = vld [vmem:[%s5 + $0x360] sm:$0xff]
        %v7779 = vld [vmem:[%s5 + $0x368] sm:$0xff]
        %v7780 = vld [vmem:[%s5 + $0x370] sm:$0xff]
        %v7781 = vld [vmem:[%s5 + $0x378] sm:$0xff]
        %v7782 = vld [vmem:[%s5 + $0x380] sm:$0xff]
        %v7783 = vld [vmem:[%s5 + $0x388] sm:$0xff]
        %v7784 = vld [vmem:[%s5 + $0x390] sm:$0xff]
        %v7785 = vld [vmem:[%s5 + $0x398] sm:$0xff]
        %v7786 = vld [vmem:[%s5 + $0x3a0] sm:$0xff]
        %v7787 = vld [vmem:[%s5 + $0x3a8] sm:$0xff]
        %v7788 = vld [vmem:[%s5 + $0x3b0] sm:$0xff]
        %v7789 = vld [vmem:[%s5 + $0x3b8] sm:$0xff]
        %v7790 = vld [vmem:[%s5 + $0x3c0] sm:$0xff]
        %v7791 = vld [vmem:[%s5 + $0x3c8] sm:$0xff]
        %v7792 = vld [vmem:[%s5 + $0x3d0] sm:$0xff]
        %v7793 = vld [vmem:[%s5 + $0x3d8] sm:$0xff]
        %v7794 = vld [vmem:[%s5 + $0x3e0] sm:$0xff]
        %v7795 = vld [vmem:[%s5 + $0x3e8] sm:$0xff]
        %v7796 = vld [vmem:[%s5 + $0x3f0] sm:$0xff]
        %v7797 = vld [vmem:[%s5 + $0x3f8] sm:$0xff]
        %v7798 = vld [vmem:[%s5 + $0x400] sm:$0xff]
        %v7799 = vld [vmem:[%s5 + $0x408] sm:$0xff]
        %v7800 = vld [vmem:[%s5 + $0x410] sm:$0xff]
        %v7801 = vld [vmem:[%s5 + $0x418] sm:$0xff]
        %v7802 = vld [vmem:[%s5 + $0x420] sm:$0xff]
        %v7803 = vld [vmem:[%s5 + $0x428] sm:$0xff]
        %v7804 = vld [vmem:[%s5 + $0x430] sm:$0xff]
        %v7805 = vld [vmem:[%s5 + $0x438] sm:$0xff]
        %v7806 = vld [vmem:[%s5 + $0x440] sm:$0xff]
        %v7807 = vld [vmem:[%s5 + $0x448] sm:$0xff]
        %v7808 = vld [vmem:[%s5 + $0x450] sm:$0xff]
        %v7809 = vld [vmem:[%s5 + $0x458] sm:$0xff]
        %v7810 = vld [vmem:[%s5 + $0x460] sm:$0xff]
        %v7811 = vld [vmem:[%s5 + $0x468] sm:$0xff]
        %v7812 = vld [vmem:[%s5 + $0x470] sm:$0xff]
        %v7813 = vld [vmem:[%s5 + $0x478] sm:$0xff]
        %v7814 = vld [vmem:[%s5 + $0x480] sm:$0xff]
        %v7815 = vld [vmem:[%s5 + $0x488] sm:$0xff]
        %v7816 = vld [vmem:[%s5 + $0x490] sm:$0xff]
        %v7817 = vld [vmem:[%s5 + $0x498] sm:$0xff]
        %v7818 = vld [vmem:[%s5 + $0x4a0] sm:$0xff]
        %v7819 = vld [vmem:[%s5 + $0x4a8] sm:$0xff]
        %v7820 = vld [vmem:[%s5 + $0x4b0] sm:$0xff]
        %v7821 = vld [vmem:[%s5 + $0x4b8] sm:$0xff]
        %v7822 = vld [vmem:[%s5 + $0x4c0] sm:$0xff]
        %v7823 = vld [vmem:[%s5 + $0x4c8] sm:$0xff]
        %v7824 = vld [vmem:[%s5 + $0x4d0] sm:$0xff]
        %v7825 = vld [vmem:[%s5 + $0x4d8] sm:$0xff]
        %v7826 = vld [vmem:[%s5 + $0x4e0] sm:$0xff]
        %v7827 = vld [vmem:[%s5 + $0x4e8] sm:$0xff]
        %v7828 = vld [vmem:[%s5 + $0x4f0] sm:$0xff]
        %v7829 = vld [vmem:[%s5 + $0x4f8] sm:$0xff]
        %v7830 = vld [vmem:[%s5 + $0x500] sm:$0xff]
        %v7831 = vld [vmem:[%s5 + $0x508] sm:$0xff]
        %v7832 = vld [vmem:[%s5 + $0x510] sm:$0xff]
        %v7833 = vld [vmem:[%s5 + $0x518] sm:$0xff]
        %v7834 = vld [vmem:[%s5 + $0x520] sm:$0xff]
        %v7835 = vld [vmem:[%s5 + $0x528] sm:$0xff]
        %v7836 = vld [vmem:[%s5 + $0x530] sm:$0xff]
        %v7837 = vld [vmem:[%s5 + $0x538] sm:$0xff]
        %v7838 = vld [vmem:[%s5 + $0x540] sm:$0xff]
        %v7839 = vld [vmem:[%s5 + $0x548] sm:$0xff]
        %v7840 = vld [vmem:[%s5 + $0x550] sm:$0xff]
        %v7841 = vld [vmem:[%s5 + $0x558] sm:$0xff]
        %v7842 = vld [vmem:[%s5 + $0x560] sm:$0xff]
        %v7843 = vld [vmem:[%s5 + $0x568] sm:$0xff]
        %v7844 = vld [vmem:[%s5 + $0x570] sm:$0xff]
        %v7845 = vld [vmem:[%s5 + $0x578] sm:$0xff]
        %v7846 = vld [vmem:[%s5 + $0x580] sm:$0xff]
        %v7847 = vld [vmem:[%s5 + $0x588] sm:$0xff]
        %v7848 = vld [vmem:[%s5 + $0x590] sm:$0xff]
        %v7849 = vld [vmem:[%s5 + $0x598] sm:$0xff]
        %v7850 = vld [vmem:[%s5 + $0x5a0] sm:$0xff]
        %v7851 = vld [vmem:[%s5 + $0x5a8] sm:$0xff]
        %v7852 = vld [vmem:[%s5 + $0x5b0] sm:$0xff]
        %v7853 = vld [vmem:[%s5 + $0x5b8] sm:$0xff]
        %v7854 = vld [vmem:[%s5 + $0x5c0] sm:$0xff]
        %v7855 = vld [vmem:[%s5 + $0x5c8] sm:$0xff]
        %v7856 = vld [vmem:[%s5 + $0x5d0] sm:$0xff]
        %v7857 = vld [vmem:[%s5 + $0x5d8] sm:$0xff]
        %v7858 = vld [vmem:[%s5 + $0x5e0] sm:$0xff]
        %v7859 = vld [vmem:[%s5 + $0x5e8] sm:$0xff]
        %v7860 = vld [vmem:[%s5 + $0x5f0] sm:$0xff]
        %v7861 = vld [vmem:[%s5 + $0x5f8] sm:$0xff]
        %v7862 = vld [vmem:[%s5 + $0x600] sm:$0xff]
        %v7863 = vld [vmem:[%s5 + $0x608] sm:$0xff]
        %v7864 = vld [vmem:[%s5 + $0x610] sm:$0xff]
        %v7865 = vld [vmem:[%s5 + $0x618] sm:$0xff]
        %v7866 = vld [vmem:[%s5 + $0x620] sm:$0xff]
        %v7867 = vld [vmem:[%s5 + $0x628] sm:$0xff]
        %v7868 = vld [vmem:[%s5 + $0x630] sm:$0xff]
        %v7869 = vld [vmem:[%s5 + $0x638] sm:$0xff]
        %v7870 = vld [vmem:[%s5 + $0x640] sm:$0xff]
        %v7871 = vld [vmem:[%s5 + $0x648] sm:$0xff]
        %v7872 = vld [vmem:[%s5 + $0x650] sm:$0xff]
        %v7873 = vld [vmem:[%s5 + $0x658] sm:$0xff]
        %v7874 = vld [vmem:[%s5 + $0x660] sm:$0xff]
        %v7875 = vld [vmem:[%s5 + $0x668] sm:$0xff]
        %v7876 = vld [vmem:[%s5 + $0x670] sm:$0xff]
        %v7877 = vld [vmem:[%s5 + $0x678] sm:$0xff]
        %v7878 = vld [vmem:[%s5 + $0x680] sm:$0xff]
        %v7879 = vld [vmem:[%s5 + $0x688] sm:$0xff]
        %v7880 = vld [vmem:[%s5 + $0x690] sm:$0xff]
        %v7881 = vld [vmem:[%s5 + $0x698] sm:$0xff]
        %v7882 = vld [vmem:[%s5 + $0x6a0] sm:$0xff]
        %v7883 = vld [vmem:[%s5 + $0x6a8] sm:$0xff]
        %v7884 = vld [vmem:[%s5 + $0x6b0] sm:$0xff]
        %v7885 = vld [vmem:[%s5 + $0x6b8] sm:$0xff]
        %v7886 = vld [vmem:[%s5 + $0x6c0] sm:$0xff]
        %v7887 = vld [vmem:[%s5 + $0x6c8] sm:$0xff]
        %v7888 = vld [vmem:[%s5 + $0x6d0] sm:$0xff]
        %v7889 = vld [vmem:[%s5 + $0x6d8] sm:$0xff]
        %v7890 = vld [vmem:[%s5 + $0x6e0] sm:$0xff]
        %v7891 = vld [vmem:[%s5 + $0x6e8] sm:$0xff]
        %v7892 = vld [vmem:[%s5 + $0x6f0] sm:$0xff]
        %v7893 = vld [vmem:[%s5 + $0x6f8] sm:$0xff]
        %v7894 = vld [vmem:[%s5 + $0x700] sm:$0xff]
        %v7895 = vld [vmem:[%s5 + $0x708] sm:$0xff]
        %v7896 = vld [vmem:[%s5 + $0x710] sm:$0xff]
        %v7897 = vld [vmem:[%s5 + $0x718] sm:$0xff]
        %v7898 = vld [vmem:[%s5 + $0x720] sm:$0xff]
        %v7899 = vld [vmem:[%s5 + $0x728] sm:$0xff]
        %v7900 = vld [vmem:[%s5 + $0x730] sm:$0xff]
        %v7901 = vld [vmem:[%s5 + $0x738] sm:$0xff]
        %v7902 = vld [vmem:[%s5 + $0x740] sm:$0xff]
        %v7903 = vld [vmem:[%s5 + $0x748] sm:$0xff]
        %v7904 = vld [vmem:[%s5 + $0x750] sm:$0xff]
        %v7905 = vld [vmem:[%s5 + $0x758] sm:$0xff]
        %v7906 = vld [vmem:[%s5 + $0x760] sm:$0xff]
        %v7907 = vld [vmem:[%s5 + $0x768] sm:$0xff]
        %v7908 = vld [vmem:[%s5 + $0x770] sm:$0xff]
        %v7909 = vld [vmem:[%s5 + $0x778] sm:$0xff]
        %v7910 = vld [vmem:[%s5 + $0x780] sm:$0xff]
        %v7911 = vld [vmem:[%s5 + $0x788] sm:$0xff]
        %v7912 = vld [vmem:[%s5 + $0x790] sm:$0xff]
        %v7913 = vld [vmem:[%s5 + $0x798] sm:$0xff]
        %v7914 = vld [vmem:[%s5 + $0x7a0] sm:$0xff]
        %v7915 = vld [vmem:[%s5 + $0x7a8] sm:$0xff]
        %v7916 = vld [vmem:[%s5 + $0x7b0] sm:$0xff]
        %v7917 = vld [vmem:[%s5 + $0x7b8] sm:$0xff]
        %v7918 = vld [vmem:[%s5 + $0x7c0] sm:$0xff]
        %v7919 = vld [vmem:[%s5 + $0x7c8] sm:$0xff]
        %v7920 = vld [vmem:[%s5 + $0x7d0] sm:$0xff]
        %v7921 = vld [vmem:[%s5 + $0x7d8] sm:$0xff]
        %v7922 = vld [vmem:[%s5 + $0x7e0] sm:$0xff]
        %v7923 = vld [vmem:[%s5 + $0x7e8] sm:$0xff]
        %v7924 = vld [vmem:[%s5 + $0x7f0] sm:$0xff]
        %v7925 = vld [vmem:[%s5 + $0x7f8] sm:$0xff]
        %v7926 = vld [vmem:[%s5 + $0x800] sm:$0xff]
        %v7927 = vld [vmem:[%s5 + $0x808] sm:$0xff]
        %v7928 = vld [vmem:[%s5 + $0x810] sm:$0xff]
        %v7929 = vld [vmem:[%s5 + $0x818] sm:$0xff]
        %v7930 = vld [vmem:[%s5 + $0x820] sm:$0xff]
        %v7931 = vld [vmem:[%s5 + $0x828] sm:$0xff]
        %v7932 = vld [vmem:[%s5 + $0x830] sm:$0xff]
        %v7933 = vld [vmem:[%s5 + $0x838] sm:$0xff]
        %v7934 = vld [vmem:[%s5 + $0x840] sm:$0xff]
        %v7935 = vld [vmem:[%s5 + $0x848] sm:$0xff]
        %v7936 = vld [vmem:[%s5 + $0x850] sm:$0xff]
        %v7937 = vld [vmem:[%s5 + $0x858] sm:$0xff]
        %v7938 = vld [vmem:[%s5 + $0x860] sm:$0xff]
        %v7939 = vld [vmem:[%s5 + $0x868] sm:$0xff]
        %v7940 = vld [vmem:[%s5 + $0x870] sm:$0xff]
        %v7941 = vld [vmem:[%s5 + $0x878] sm:$0xff]
        %v7942 = vld [vmem:[%s5 + $0x880] sm:$0xff]
        %v7943 = vld [vmem:[%s5 + $0x888] sm:$0xff]
        %v7944 = vld [vmem:[%s5 + $0x890] sm:$0xff]
        %v7945 = vld [vmem:[%s5 + $0x898] sm:$0xff]
        %v7946 = vld [vmem:[%s5 + $0x8a0] sm:$0xff]
        %v7947 = vld [vmem:[%s5 + $0x8a8] sm:$0xff]
        %v7948 = vld [vmem:[%s5 + $0x8b0] sm:$0xff]
        %v7949 = vld [vmem:[%s5 + $0x8b8] sm:$0xff]
        %v7950 = vld [vmem:[%s5 + $0x8c0] sm:$0xff]
        %v7951 = vld [vmem:[%s5 + $0x8c8] sm:$0xff]
        %v7952 = vld [vmem:[%s5 + $0x8d0] sm:$0xff]
        %v7953 = vld [vmem:[%s5 + $0x8d8] sm:$0xff]
        %v7954 = vld [vmem:[%s5 + $0x8e0] sm:$0xff]
        %v7955 = vld [vmem:[%s5 + $0x8e8] sm:$0xff]
        %v7956 = vld [vmem:[%s5 + $0x8f0] sm:$0xff]
        %v7957 = vld [vmem:[%s5 + $0x8f8] sm:$0xff]
        %v7958 = vld [vmem:[%s5 + $0x900] sm:$0xff]
        %v7959 = vld [vmem:[%s5 + $0x908] sm:$0xff]
        %v7960 = vld [vmem:[%s5 + $0x910] sm:$0xff]
        %v7961 = vld [vmem:[%s5 + $0x918] sm:$0xff]
        %v7962 = vld [vmem:[%s5 + $0x920] sm:$0xff]
        %v7963 = vld [vmem:[%s5 + $0x928] sm:$0xff]
        %v7964 = vld [vmem:[%s5 + $0x930] sm:$0xff]
        %v7965 = vld [vmem:[%s5 + $0x938] sm:$0xff]
        %v7966 = vld [vmem:[%s5 + $0x940] sm:$0xff]
        %v7967 = vld [vmem:[%s5 + $0x948] sm:$0xff]
        %v7968 = vld [vmem:[%s5 + $0x950] sm:$0xff]
        %v7969 = vld [vmem:[%s5 + $0x958] sm:$0xff]
        %v7970 = vld [vmem:[%s5 + $0x960] sm:$0xff]
        %v7971 = vld [vmem:[%s5 + $0x968] sm:$0xff]
        %v7972 = vld [vmem:[%s5 + $0x970] sm:$0xff]
        %v7973 = vld [vmem:[%s5 + $0x978] sm:$0xff]
        %v7974 = vld [vmem:[%s5 + $0x980] sm:$0xff]
        %v7975 = vld [vmem:[%s5 + $0x988] sm:$0xff]
        %v7976 = vld [vmem:[%s5 + $0x990] sm:$0xff]
        %v7977 = vld [vmem:[%s5 + $0x998] sm:$0xff]
        %v7978 = vld [vmem:[%s5 + $0x9a0] sm:$0xff]
        %v7979 = vld [vmem:[%s5 + $0x9a8] sm:$0xff]
        %v7980 = vld [vmem:[%s5 + $0x9b0] sm:$0xff]
        %v7981 = vld [vmem:[%s5 + $0x9b8] sm:$0xff]
        %v7982 = vld [vmem:[%s5 + $0x9c0] sm:$0xff]
        %v7983 = vld [vmem:[%s5 + $0x9c8] sm:$0xff]
        %v7984 = vld [vmem:[%s5 + $0x9d0] sm:$0xff]
        %v7985 = vld [vmem:[%s5 + $0x9d8] sm:$0xff]
        %v7986 = vld [vmem:[%s5 + $0x9e0] sm:$0xff]
        %v7987 = vld [vmem:[%s5 + $0x9e8] sm:$0xff]
        %v7988 = vld [vmem:[%s5 + $0x9f0] sm:$0xff]
        %v7989 = vld [vmem:[%s5 + $0x9f8] sm:$0xff]
        %v7990 = vld [vmem:[%s5 + $0xa00] sm:$0xff]
        %v7991 = vld [vmem:[%s5 + $0xa08] sm:$0xff]
        %v7992 = vld [vmem:[%s5 + $0xa10] sm:$0xff]
        %v7993 = vld [vmem:[%s5 + $0xa18] sm:$0xff]
        %v7994 = vld [vmem:[%s5 + $0xa20] sm:$0xff]
        %v7995 = vld [vmem:[%s5 + $0xa28] sm:$0xff]
        %v7996 = vld [vmem:[%s5 + $0xa30] sm:$0xff]
        %v7997 = vld [vmem:[%s5 + $0xa38] sm:$0xff]
        %v7998 = vld [vmem:[%s5 + $0xa40] sm:$0xff]
        %v7999 = vld [vmem:[%s5 + $0xa48] sm:$0xff]
        %v8000 = vld [vmem:[%s5 + $0xa50] sm:$0xff]
        %v8001 = vld [vmem:[%s5 + $0xa58] sm:$0xff]
        %v8002 = vld [vmem:[%s5 + $0xa60] sm:$0xff]
        %v8003 = vld [vmem:[%s5 + $0xa68] sm:$0xff]
        %v8004 = vld [vmem:[%s5 + $0xa70] sm:$0xff]
        %v8005 = vld [vmem:[%s5 + $0xa78] sm:$0xff]
        %v8006 = vld [vmem:[%s5 + $0xa80] sm:$0xff]
        %v8007 = vld [vmem:[%s5 + $0xa88] sm:$0xff]
        %v8008 = vld [vmem:[%s5 + $0xa90] sm:$0xff]
        %v8009 = vld [vmem:[%s5 + $0xa98] sm:$0xff]
        %v8010 = vld [vmem:[%s5 + $0xaa0] sm:$0xff]
        %v8011 = vld [vmem:[%s5 + $0xaa8] sm:$0xff]
        %v8012 = vld [vmem:[%s5 + $0xab0] sm:$0xff]
        %v8013 = vld [vmem:[%s5 + $0xab8] sm:$0xff]
        %v8014 = vld [vmem:[%s5 + $0xac0] sm:$0xff]
        %v8015 = vld [vmem:[%s5 + $0xac8] sm:$0xff]
        %v8016 = vld [vmem:[%s5 + $0xad0] sm:$0xff]
        %v8017 = vld [vmem:[%s5 + $0xad8] sm:$0xff]
        %v8018 = vld [vmem:[%s5 + $0xae0] sm:$0xff]
        %v8019 = vld [vmem:[%s5 + $0xae8] sm:$0xff]
        %v8020 = vld [vmem:[%s5 + $0xaf0] sm:$0xff]
        %v8021 = vld [vmem:[%s5 + $0xaf8] sm:$0xff]
        %v8022 = vld [vmem:[%s5 + $0xb00] sm:$0xff]
        %v8023 = vld [vmem:[%s5 + $0xb08] sm:$0xff]
        %v8024 = vld [vmem:[%s5 + $0xb10] sm:$0xff]
        %v8025 = vld [vmem:[%s5 + $0xb18] sm:$0xff]
        %v8026 = vld [vmem:[%s5 + $0xb20] sm:$0xff]
        %v8027 = vld [vmem:[%s5 + $0xb28] sm:$0xff]
        %v8028 = vld [vmem:[%s5 + $0xb30] sm:$0xff]
        %v8029 = vld [vmem:[%s5 + $0xb38] sm:$0xff]
        %v8030 = vld [vmem:[%s5 + $0xb40] sm:$0xff]
        %v8031 = vld [vmem:[%s5 + $0xb48] sm:$0xff]
        %v8032 = vld [vmem:[%s5 + $0xb50] sm:$0xff]
        %v8033 = vld [vmem:[%s5 + $0xb58] sm:$0xff]
        %v8034 = vld [vmem:[%s5 + $0xb60] sm:$0xff]
        %v8035 = vld [vmem:[%s5 + $0xb68] sm:$0xff]
        %v8036 = vld [vmem:[%s5 + $0xb70] sm:$0xff]
        %v8037 = vld [vmem:[%s5 + $0xb78] sm:$0xff]
        %v8038 = vld [vmem:[%s5 + $0xb80] sm:$0xff]
        %v8039 = vld [vmem:[%s5 + $0xb88] sm:$0xff]
        %v8040 = vld [vmem:[%s5 + $0xb90] sm:$0xff]
        %v8041 = vld [vmem:[%s5 + $0xb98] sm:$0xff]
        %v8042 = vld [vmem:[%s5 + $0xba0] sm:$0xff]
        %v8043 = vld [vmem:[%s5 + $0xba8] sm:$0xff]
        %v8044 = vld [vmem:[%s5 + $0xbb0] sm:$0xff]
        %v8045 = vld [vmem:[%s5 + $0xbb8] sm:$0xff]
        %v8046 = vld [vmem:[%s5 + $0xbc0] sm:$0xff]
        %v8047 = vld [vmem:[%s5 + $0xbc8] sm:$0xff]
        %v8048 = vld [vmem:[%s5 + $0xbd0] sm:$0xff]
        %v8049 = vld [vmem:[%s5 + $0xbd8] sm:$0xff]
        %v8050 = vld [vmem:[%s5 + $0xbe0] sm:$0xff]
        %v8051 = vld [vmem:[%s5 + $0xbe8] sm:$0xff]
        %v8052 = vld [vmem:[%s5 + $0xbf0] sm:$0xff]
        %v8053 = vld [vmem:[%s5 + $0xbf8] sm:$0xff]
        %v8054 = vld [vmem:[%s5 + $0xc00] sm:$0xff]
        %v8055 = vld [vmem:[%s5 + $0xc08] sm:$0xff]
        %v8056 = vld [vmem:[%s5 + $0xc10] sm:$0xff]
        %v8057 = vld [vmem:[%s5 + $0xc18] sm:$0xff]
        %v8058 = vld [vmem:[%s5 + $0xc20] sm:$0xff]
        %v8059 = vld [vmem:[%s5 + $0xc28] sm:$0xff]
        %v8060 = vld [vmem:[%s5 + $0xc30] sm:$0xff]
        %v8061 = vld [vmem:[%s5 + $0xc38] sm:$0xff]
        %v8062 = vld [vmem:[%s5 + $0xc40] sm:$0xff]
        %v8063 = vld [vmem:[%s5 + $0xc48] sm:$0xff]
        %v8064 = vld [vmem:[%s5 + $0xc50] sm:$0xff]
        %v8065 = vld [vmem:[%s5 + $0xc58] sm:$0xff]
        %v8066 = vld [vmem:[%s5 + $0xc60] sm:$0xff]
        %v8067 = vld [vmem:[%s5 + $0xc68] sm:$0xff]
        %v8068 = vld [vmem:[%s5 + $0xc70] sm:$0xff]
        %v8069 = vld [vmem:[%s5 + $0xc78] sm:$0xff]
        %v8070 = vld [vmem:[%s6] sm:$0xf]
        %v8072 = vlaneseq
        %v8073 = vshrl.u32 %v8072, 7
        %v8074 = vsub.s32 0, %v8073
        %v8075 = vrot.slane %v7669, %v8074
        %v8076 = vlaneseq
        %v8077 = vshrl.u32 %v8076, 7
        %v8078 = vsub.s32 1, %v8077
        %v8079 = vrot.slane %v7669, %v8078
        %v8080 = vlaneseq
        %v8081 = vshrl.u32 %v8080, 7
        %v8082 = vsub.s32 2, %v8081
        %v8083 = vrot.slane %v7669, %v8082
        %v8084 = vlaneseq
        %v8085 = vshrl.u32 %v8084, 7
        %v8086 = vsub.s32 3, %v8085
        %v8087 = vrot.slane %v7669, %v8086
        %v8088 = vlaneseq
        %v8089 = vshrl.u32 %v8088, 7
        %v8090 = vsub.s32 4, %v8089
        %v8091 = vrot.slane %v7669, %v8090
        %v8092 = vlaneseq
        %v8093 = vshrl.u32 %v8092, 7
        %v8094 = vsub.s32 5, %v8093
        %v8095 = vrot.slane %v7669, %v8094
        %v8096 = vlaneseq
        %v8097 = vshrl.u32 %v8096, 7
        %v8098 = vsub.s32 6, %v8097
        %v8099 = vrot.slane %v7669, %v8098
        %v8107 = vlaneseq
        %v8108 = vshrl.u32 %v8107, 7
        %v8109 = vsub.s32 0, %v8108
        %v8110 = vrot.slane %v8070, %v8109
        %v8111 = vlaneseq
        %v8112 = vshrl.u32 %v8111, 7
        %v8113 = vsub.s32 1, %v8112
        %v8114 = vrot.slane %v8070, %v8113
        %v8115 = vlaneseq
        %v8116 = vshrl.u32 %v8115, 7
        %v8117 = vsub.s32 2, %v8116
        %v8118 = vrot.slane %v8070, %v8117
        %v8119 = vlaneseq
        %v8120 = vshrl.u32 %v8119, 7
        %v8121 = vsub.s32 3, %v8120
        %v8122 = vrot.slane %v8070, %v8121
        %vm8127 = vcmask 261120
        %v8128 = vsel %vm8127, %v8099, 0
        %8130 = vmatprep.subr.mxu0 %v7671
        %8131 = vmatpush1.msra.mxu0 %v7670
        %8132 = vmatprep.subr.mxu0 %v7675
        %8133 = vmatpush1.msra.mxu0 %v7674
        %8134 = vmatprep.subr.mxu0 %v7679
        %8135 = vmatpush1.msra.mxu0 %v7678
        %8136 = vmatprep.subr.mxu0 %v7683
        %8137 = vmatpush1.msra.mxu0 %v7682
        %8138 = vmatprep.subr.mxu0 %v7687
        %8139 = vmatpush1.msra.mxu0 %v7686
        %8140 = vmatprep.subr.mxu0 %v7691
        %8141 = vmatpush1.msra.mxu0 %v7690
        %8142 = vmatprep.subr.mxu0 %v7695
        %8143 = vmatpush1.msra.mxu0 %v7694
        %8144 = vmatprep.subr.mxu0 %v7699
        %8145 = vmatpush1.msra.mxu0 %v7698
        %8146 = vmatprep.subr.mxu0 %v7703
        %8147 = vmatpush1.msra.mxu0 %v7702
        %8148 = vmatprep.subr.mxu0 %v7707
        %8149 = vmatpush1.msra.mxu0 %v7706
        %8150 = vmatprep.subr.mxu0 %v7711
        %8151 = vmatpush1.msra.mxu0 %v7710
        %8152 = vmatprep.subr.mxu0 %v7715
        %8153 = vmatpush1.msra.mxu0 %v7714
        %8154 = vmatprep.subr.mxu0 %v7719
        %8155 = vmatpush1.msra.mxu0 %v7718
        %8156 = vmatprep.subr.mxu0 %v7723
        %8157 = vmatpush1.msra.mxu0 %v7722
        %8158 = vmatprep.subr.mxu0 %v7727
        %8159 = vmatpush1.msra.mxu0 %v7726
        %8160 = vmatprep.subr.mxu0 %v7731
        %8161 = vmatpush1.msra.mxu0 %v7730
        %8162 = vmatprep.subr.mxu0 %v7735
        %8163 = vmatpush1.msra.mxu0 %v7734
        %8164 = vmatprep.subr.mxu0 %v7739
        %8165 = vmatpush1.msra.mxu0 %v7738
        %8166 = vmatprep.subr.mxu0 %v7743
        %8167 = vmatpush1.msra.mxu0 %v7742
        %8168 = vmatprep.subr.mxu0 %v7747
        %8169 = vmatpush1.msra.mxu0 %v7746
        %8170 = vmatprep.subr.mxu0 %v7751
        %8171 = vmatpush1.msra.mxu0 %v7750
        %8172 = vmatprep.subr.mxu0 %v7755
        %8173 = vmatpush1.msra.mxu0 %v7754
        %8174 = vmatprep.subr.mxu0 %v7759
        %8175 = vmatpush1.msra.mxu0 %v7758
        %8176 = vmatprep.subr.mxu0 %v7763
        %8177 = vmatpush1.msra.mxu0 %v7762
        %8178 = vmatprep.subr.mxu0 %v7767
        %8179 = vmatpush1.msra.mxu0 %v7766
        %8180 = vmatprep.subr.mxu0 %v7771
        %8181 = vmatpush1.msra.mxu0 %v7770
        %8182 = vmatprep.subr.mxu0 %v7775
        %8183 = vmatpush1.msra.mxu0 %v7774
        %8184 = vmatprep.subr.mxu0 %v7779
        %8185 = vmatpush1.msra.mxu0 %v7778
        %8186 = vmatprep.subr.mxu0 %v7783
        %8187 = vmatpush1.msra.mxu0 %v7782
        %8188 = vmatprep.subr.mxu0 %v7787
        %8189 = vmatpush1.msra.mxu0 %v7786
        %8190 = vmatprep.subr.mxu0 %v7791
        %8191 = vmatpush1.msra.mxu0 %v7790
        %8192 = vmatprep.subr.mxu0 %v7795
        %8193 = vmatpush1.msra.mxu0 %v7794
        %8194 = vmatprep.mubr.f32.mxu0 %v8079
        %8195 = vmatmul.mubr.f32.gmra.mrb[0].mxu0 %v8075
        %v8196 = vpop.f32.mrb[0].mxu0
        %v8197 = vadd.f32 %v8110, %v8196
        %v8198 = vpop.f32.mrb[0].mxu0
        %v8199 = vadd.f32 %v8114, %v8198
        %8200 = vdwg.mxu0
        %8201 = vmatprep.subr.mxu0 %v7799
        %8202 = vmatpush1.msra.mxu0 %v7798
        %8203 = vmatprep.subr.mxu0 %v7803
        %8204 = vmatpush1.msra.mxu0 %v7802
        %8205 = vmatprep.subr.mxu0 %v7807
        %8206 = vmatpush1.msra.mxu0 %v7806
        %8207 = vmatprep.subr.mxu0 %v7811
        %8208 = vmatpush1.msra.mxu0 %v7810
        %8209 = vmatprep.subr.mxu0 %v7815
        %8210 = vmatpush1.msra.mxu0 %v7814
        %8211 = vmatprep.subr.mxu0 %v7819
        %8212 = vmatpush1.msra.mxu0 %v7818
        %8213 = vmatprep.subr.mxu0 %v7823
        %8214 = vmatpush1.msra.mxu0 %v7822
        %8215 = vmatprep.subr.mxu0 %v7827
        %8216 = vmatpush1.msra.mxu0 %v7826
        %8217 = vmatprep.subr.mxu0 %v7831
        %8218 = vmatpush1.msra.mxu0 %v7830
        %8219 = vmatprep.subr.mxu0 %v7835
        %8220 = vmatpush1.msra.mxu0 %v7834
        %8221 = vmatprep.subr.mxu0 %v7839
        %8222 = vmatpush1.msra.mxu0 %v7838
        %8223 = vmatprep.subr.mxu0 %v7843
        %8224 = vmatpush1.msra.mxu0 %v7842
        %8225 = vmatprep.subr.mxu0 %v7847
        %8226 = vmatpush1.msra.mxu0 %v7846
        %8227 = vmatprep.subr.mxu0 %v7851
        %8228 = vmatpush1.msra.mxu0 %v7850
        %8229 = vmatprep.subr.mxu0 %v7855
        %8230 = vmatpush1.msra.mxu0 %v7854
        %8231 = vmatprep.subr.mxu0 %v7859
        %8232 = vmatpush1.msra.mxu0 %v7858
        %8233 = vmatprep.subr.mxu0 %v7863
        %8234 = vmatpush1.msra.mxu0 %v7862
        %8235 = vmatprep.subr.mxu0 %v7867
        %8236 = vmatpush1.msra.mxu0 %v7866
        %8237 = vmatprep.subr.mxu0 %v7871
        %8238 = vmatpush1.msra.mxu0 %v7870
        %8239 = vmatprep.subr.mxu0 %v7875
        %8240 = vmatpush1.msra.mxu0 %v7874
        %8241 = vmatprep.subr.mxu0 %v7879
        %8242 = vmatpush1.msra.mxu0 %v7878
        %8243 = vmatprep.subr.mxu0 %v7883
        %8244 = vmatpush1.msra.mxu0 %v7882
        %8245 = vmatprep.subr.mxu0 %v7887
        %8246 = vmatpush1.msra.mxu0 %v7886
        %8247 = vmatprep.subr.mxu0 %v7891
        %8248 = vmatpush1.msra.mxu0 %v7890
        %8249 = vmatprep.subr.mxu0 %v7895
        %8250 = vmatpush1.msra.mxu0 %v7894
        %8251 = vmatprep.subr.mxu0 %v7899
        %8252 = vmatpush1.msra.mxu0 %v7898
        %8253 = vmatprep.subr.mxu0 %v7903
        %8254 = vmatpush1.msra.mxu0 %v7902
        %8255 = vmatprep.subr.mxu0 %v7907
        %8256 = vmatpush1.msra.mxu0 %v7906
        %8257 = vmatprep.subr.mxu0 %v7911
        %8258 = vmatpush1.msra.mxu0 %v7910
        %8259 = vmatprep.subr.mxu0 %v7915
        %8260 = vmatpush1.msra.mxu0 %v7914
        %8261 = vmatprep.subr.mxu0 %v7919
        %8262 = vmatpush1.msra.mxu0 %v7918
        %8263 = vmatprep.subr.mxu0 %v7923
        %8264 = vmatpush1.msra.mxu0 %v7922
        %8265 = vmatprep.mubr.f32.mxu0 %v8087
        %8266 = vmatmul.mubr.f32.gmra.mrb[0].mxu0 %v8083
        %v8267 = vpop.f32.mrb[0].mxu0
        %v8268 = vadd.f32 %v8197, %v8267
        %v8269 = vpop.f32.mrb[0].mxu0
        %v8270 = vadd.f32 %v8199, %v8269
        %8271 = vdwg.mxu0
        %8272 = vmatprep.subr.mxu0 %v7927
        %8273 = vmatpush1.msra.mxu0 %v7926
        %8274 = vmatprep.subr.mxu0 %v7931
        %8275 = vmatpush1.msra.mxu0 %v7930
        %8276 = vmatprep.subr.mxu0 %v7935
        %8277 = vmatpush1.msra.mxu0 %v7934
        %8278 = vmatprep.subr.mxu0 %v7939
        %8279 = vmatpush1.msra.mxu0 %v7938
        %8280 = vmatprep.subr.mxu0 %v7943
        %8281 = vmatpush1.msra.mxu0 %v7942
        %8282 = vmatprep.subr.mxu0 %v7947
        %8283 = vmatpush1.msra.mxu0 %v7946
        %8284 = vmatprep.subr.mxu0 %v7951
        %8285 = vmatpush1.msra.mxu0 %v7950
        %8286 = vmatprep.subr.mxu0 %v7955
        %8287 = vmatpush1.msra.mxu0 %v7954
        %8288 = vmatprep.subr.mxu0 %v7959
        %8289 = vmatpush1.msra.mxu0 %v7958
        %8290 = vmatprep.subr.mxu0 %v7963
        %8291 = vmatpush1.msra.mxu0 %v7962
        %8292 = vmatprep.subr.mxu0 %v7967
        %8293 = vmatpush1.msra.mxu0 %v7966
        %8294 = vmatprep.subr.mxu0 %v7971
        %8295 = vmatpush1.msra.mxu0 %v7970
        %8296 = vmatprep.subr.mxu0 %v7975
        %8297 = vmatpush1.msra.mxu0 %v7974
        %8298 = vmatprep.subr.mxu0 %v7979
        %8299 = vmatpush1.msra.mxu0 %v7978
        %8300 = vmatprep.subr.mxu0 %v7983
        %8301 = vmatpush1.msra.mxu0 %v7982
        %8302 = vmatprep.subr.mxu0 %v7987
        %8303 = vmatpush1.msra.mxu0 %v7986
        %8304 = vmatprep.subr.mxu0 %v7991
        %8305 = vmatpush1.msra.mxu0 %v7990
        %8306 = vmatprep.subr.mxu0 %v7995
        %8307 = vmatpush1.msra.mxu0 %v7994
        %8308 = vmatprep.subr.mxu0 %v7999
        %8309 = vmatpush1.msra.mxu0 %v7998
        %8310 = vmatprep.subr.mxu0 %v8003
        %8311 = vmatpush1.msra.mxu0 %v8002
        %8312 = vmatprep.subr.mxu0 %v8007
        %8313 = vmatpush1.msra.mxu0 %v8006
        %8314 = vmatprep.subr.mxu0 %v8011
        %8315 = vmatpush1.msra.mxu0 %v8010
        %8316 = vmatprep.subr.mxu0 %v8015
        %8317 = vmatpush1.msra.mxu0 %v8014
        %8318 = vmatprep.subr.mxu0 %v8019
        %8319 = vmatpush1.msra.mxu0 %v8018
        %8320 = vmatprep.subr.mxu0 %v8023
        %8321 = vmatpush1.msra.mxu0 %v8022
        %8322 = vmatprep.subr.mxu0 %v8027
        %8323 = vmatpush1.msra.mxu0 %v8026
        %8324 = vmatprep.subr.mxu0 %v8031
        %8325 = vmatpush1.msra.mxu0 %v8030
        %8326 = vmatprep.subr.mxu0 %v8035
        %8327 = vmatpush1.msra.mxu0 %v8034
        %8328 = vmatprep.subr.mxu0 %v8039
        %8329 = vmatpush1.msra.mxu0 %v8038
        %8330 = vmatprep.subr.mxu0 %v8043
        %8331 = vmatpush1.msra.mxu0 %v8042
        %8332 = vmatprep.subr.mxu0 %v8047
        %8333 = vmatpush1.msra.mxu0 %v8046
        %8334 = vmatprep.subr.mxu0 %v8051
        %8335 = vmatpush1.msra.mxu0 %v8050
        %8336 = vmatprep.mubr.f32.mxu0 %v8095
        %8337 = vmatmul.mubr.f32.gmra.mrb[0].mxu0 %v8091
        %v8338 = vpop.f32.mrb[0].mxu0
        %v8339 = vadd.f32 %v8268, %v8338
        %v8340 = vpop.f32.mrb[0].mxu0
        %v8341 = vadd.f32 %v8270, %v8340
        %8342 = vdwg.mxu0
        %8343 = vmatprep.subr.mxu0 %v8055
        %8344 = vmatpush1.msra.mxu0 %v8054
        %8345 = vmatprep.subr.mxu0 %v8059
        %8346 = vmatpush1.msra.mxu0 %v8058
        %8347 = vmatprep.subr.mxu0 %v8063
        %8348 = vmatpush1.msra.mxu0 %v8062
        %8349 = vmatprep.subr.mxu0 %v8067
        %8350 = vmatpush1.msra.mxu0 %v8066
        %8351 = vmatprep.subr.mxu0 0.0
        %8352 = vmatpush1.msra.mxu0 0.0
        %8353 = vmatprep.subr.mxu0 0.0
        %8354 = vmatpush1.msra.mxu0 0.0
        %8355 = vmatprep.subr.mxu0 0.0
        %8356 = vmatpush1.msra.mxu0 0.0
        %8357 = vmatprep.subr.mxu0 0.0
        %8358 = vmatpush1.msra.mxu0 0.0
        %8359 = vmatprep.subr.mxu0 0.0
        %8360 = vmatpush1.msra.mxu0 0.0
        %8361 = vmatprep.subr.mxu0 0.0
        %8362 = vmatpush1.msra.mxu0 0.0
        %8363 = vmatprep.subr.mxu0 0.0
        %8364 = vmatpush1.msra.mxu0 0.0
        %8365 = vmatprep.subr.mxu0 0.0
        %8366 = vmatpush1.msra.mxu0 0.0
        %8367 = vmatprep.subr.mxu0 0.0
        %8368 = vmatpush1.msra.mxu0 0.0
        %8369 = vmatprep.subr.mxu0 0.0
        %8370 = vmatpush1.msra.mxu0 0.0
        %8371 = vmatprep.subr.mxu0 0.0
        %8372 = vmatpush1.msra.mxu0 0.0
        %8373 = vmatprep.subr.mxu0 0.0
        %8374 = vmatpush1.msra.mxu0 0.0
        %8375 = vmatprep.subr.mxu0 0.0
        %8376 = vmatpush1.msra.mxu0 0.0
        %8377 = vmatprep.subr.mxu0 0.0
        %8378 = vmatpush1.msra.mxu0 0.0
        %8379 = vmatprep.subr.mxu0 0.0
        %8380 = vmatpush1.msra.mxu0 0.0
        %8381 = vmatprep.subr.mxu0 0.0
        %8382 = vmatpush1.msra.mxu0 0.0
        %8383 = vmatprep.subr.mxu0 0.0
        %8384 = vmatpush1.msra.mxu0 0.0
        %8385 = vmatprep.subr.mxu0 0.0
        %8386 = vmatpush1.msra.mxu0 0.0
        %8387 = vmatprep.subr.mxu0 0.0
        %8388 = vmatpush1.msra.mxu0 0.0
        %8389 = vmatprep.subr.mxu0 0.0
        %8390 = vmatpush1.msra.mxu0 0.0
        %8391 = vmatprep.subr.mxu0 0.0
        %8392 = vmatpush1.msra.mxu0 0.0
        %8393 = vmatprep.subr.mxu0 0.0
        %8394 = vmatpush1.msra.mxu0 0.0
        %8395 = vmatprep.subr.mxu0 0.0
        %8396 = vmatpush1.msra.mxu0 0.0
        %8397 = vmatprep.subr.mxu0 0.0
        %8398 = vmatpush1.msra.mxu0 0.0
        %8399 = vmatprep.subr.mxu0 0.0
        %8400 = vmatpush1.msra.mxu0 0.0
        %8401 = vmatprep.subr.mxu0 0.0
        %8402 = vmatpush1.msra.mxu0 0.0
        %8403 = vmatprep.subr.mxu0 0.0
        %8404 = vmatpush1.msra.mxu0 0.0
        %8405 = vmatprep.subr.mxu0 0.0
        %8406 = vmatpush1.msra.mxu0 0.0
        %8407 = vmatprep.mubr.f32.mxu0 0.0
        %8408 = vmatmul.mubr.f32.gmra.mrb[0].mxu0 %v8128
        %v8409 = vpop.f32.mrb[0].mxu0
        %v8410 = vadd.f32 %v8339, %v8409
        %v8411 = vpop.f32.mrb[0].mxu0
        %v8412 = vadd.f32 %v8341, %v8411
        %8413 = vdwg.mxu0
        %8414 = vmatprep.subr.mxu0 %v7673
        %8415 = vmatpush1.msra.mxu0 %v7672
        %8416 = vmatprep.subr.mxu0 %v7677
        %8417 = vmatpush1.msra.mxu0 %v7676
        %8418 = vmatprep.subr.mxu0 %v7681
        %8419 = vmatpush1.msra.mxu0 %v7680
        %8420 = vmatprep.subr.mxu0 %v7685
        %8421 = vmatpush1.msra.mxu0 %v7684
        %8422 = vmatprep.subr.mxu0 %v7689
        %8423 = vmatpush1.msra.mxu0 %v7688
        %8424 = vmatprep.subr.mxu0 %v7693
        %8425 = vmatpush1.msra.mxu0 %v7692
        %8426 = vmatprep.subr.mxu0 %v7697
        %8427 = vmatpush1.msra.mxu0 %v7696
        %8428 = vmatprep.subr.mxu0 %v7701
        %8429 = vmatpush1.msra.mxu0 %v7700
        %8430 = vmatprep.subr.mxu0 %v7705
        %8431 = vmatpush1.msra.mxu0 %v7704
        %8432 = vmatprep.subr.mxu0 %v7709
        %8433 = vmatpush1.msra.mxu0 %v7708
        %8434 = vmatprep.subr.mxu0 %v7713
        %8435 = vmatpush1.msra.mxu0 %v7712
        %8436 = vmatprep.subr.mxu0 %v7717
        %8437 = vmatpush1.msra.mxu0 %v7716
        %8438 = vmatprep.subr.mxu0 %v7721
        %8439 = vmatpush1.msra.mxu0 %v7720
        %8440 = vmatprep.subr.mxu0 %v7725
        %8441 = vmatpush1.msra.mxu0 %v7724
        %8442 = vmatprep.subr.mxu0 %v7729
        %8443 = vmatpush1.msra.mxu0 %v7728
        %8444 = vmatprep.subr.mxu0 %v7733
        %8445 = vmatpush1.msra.mxu0 %v7732
        %8446 = vmatprep.subr.mxu0 %v7737
        %8447 = vmatpush1.msra.mxu0 %v7736
        %8448 = vmatprep.subr.mxu0 %v7741
        %8449 = vmatpush1.msra.mxu0 %v7740
        %8450 = vmatprep.subr.mxu0 %v7745
        %8451 = vmatpush1.msra.mxu0 %v7744
        %8452 = vmatprep.subr.mxu0 %v7749
        %8453 = vmatpush1.msra.mxu0 %v7748
        %8454 = vmatprep.subr.mxu0 %v7753
        %8455 = vmatpush1.msra.mxu0 %v7752
        %8456 = vmatprep.subr.mxu0 %v7757
        %8457 = vmatpush1.msra.mxu0 %v7756
        %8458 = vmatprep.subr.mxu0 %v7761
        %8459 = vmatpush1.msra.mxu0 %v7760
        %8460 = vmatprep.subr.mxu0 %v7765
        %8461 = vmatpush1.msra.mxu0 %v7764
        %8462 = vmatprep.subr.mxu0 %v7769
        %8463 = vmatpush1.msra.mxu0 %v7768
        %8464 = vmatprep.subr.mxu0 %v7773
        %8465 = vmatpush1.msra.mxu0 %v7772
        %8466 = vmatprep.subr.mxu0 %v7777
        %8467 = vmatpush1.msra.mxu0 %v7776
        %8468 = vmatprep.subr.mxu0 %v7781
        %8469 = vmatpush1.msra.mxu0 %v7780
        %8470 = vmatprep.subr.mxu0 %v7785
        %8471 = vmatpush1.msra.mxu0 %v7784
        %8472 = vmatprep.subr.mxu0 %v7789
        %8473 = vmatpush1.msra.mxu0 %v7788
        %8474 = vmatprep.subr.mxu0 %v7793
        %8475 = vmatpush1.msra.mxu0 %v7792
        %8476 = vmatprep.subr.mxu0 %v7797
        %8477 = vmatpush1.msra.mxu0 %v7796
        %8478 = vmatprep.mubr.f32.mxu0 %v8079
        %8479 = vmatmul.mubr.f32.gmra.mrb[0].mxu0 %v8075
        %v8480 = vpop.f32.mrb[0].mxu0
        %v8481 = vadd.f32 %v8118, %v8480
        %v8482 = vpop.f32.mrb[0].mxu0
        %v8483 = vadd.f32 %v8122, %v8482
        %8484 = vdwg.mxu0
        %8485 = vmatprep.subr.mxu0 %v7801
        %8486 = vmatpush1.msra.mxu0 %v7800
        %8487 = vmatprep.subr.mxu0 %v7805
        %8488 = vmatpush1.msra.mxu0 %v7804
        %8489 = vmatprep.subr.mxu0 %v7809
        %8490 = vmatpush1.msra.mxu0 %v7808
        %8491 = vmatprep.subr.mxu0 %v7813
        %8492 = vmatpush1.msra.mxu0 %v7812
        %8493 = vmatprep.subr.mxu0 %v7817
        %8494 = vmatpush1.msra.mxu0 %v7816
        %8495 = vmatprep.subr.mxu0 %v7821
        %8496 = vmatpush1.msra.mxu0 %v7820
        %8497 = vmatprep.subr.mxu0 %v7825
        %8498 = vmatpush1.msra.mxu0 %v7824
        %8499 = vmatprep.subr.mxu0 %v7829
        %8500 = vmatpush1.msra.mxu0 %v7828
        %8501 = vmatprep.subr.mxu0 %v7833
        %8502 = vmatpush1.msra.mxu0 %v7832
        %8503 = vmatprep.subr.mxu0 %v7837
        %8504 = vmatpush1.msra.mxu0 %v7836
        %8505 = vmatprep.subr.mxu0 %v7841
        %8506 = vmatpush1.msra.mxu0 %v7840
        %8507 = vmatprep.subr.mxu0 %v7845
        %8508 = vmatpush1.msra.mxu0 %v7844
        %8509 = vmatprep.subr.mxu0 %v7849
        %8510 = vmatpush1.msra.mxu0 %v7848
        %8511 = vmatprep.subr.mxu0 %v7853
        %8512 = vmatpush1.msra.mxu0 %v7852
        %8513 = vmatprep.subr.mxu0 %v7857
        %8514 = vmatpush1.msra.mxu0 %v7856
        %8515 = vmatprep.subr.mxu0 %v7861
        %8516 = vmatpush1.msra.mxu0 %v7860
        %8517 = vmatprep.subr.mxu0 %v7865
        %8518 = vmatpush1.msra.mxu0 %v7864
        %8519 = vmatprep.subr.mxu0 %v7869
        %8520 = vmatpush1.msra.mxu0 %v7868
        %8521 = vmatprep.subr.mxu0 %v7873
        %8522 = vmatpush1.msra.mxu0 %v7872
        %8523 = vmatprep.subr.mxu0 %v7877
        %8524 = vmatpush1.msra.mxu0 %v7876
        %8525 = vmatprep.subr.mxu0 %v7881
        %8526 = vmatpush1.msra.mxu0 %v7880
        %8527 = vmatprep.subr.mxu0 %v7885
        %8528 = vmatpush1.msra.mxu0 %v7884
        %8529 = vmatprep.subr.mxu0 %v7889
        %8530 = vmatpush1.msra.mxu0 %v7888
        %8531 = vmatprep.subr.mxu0 %v7893
        %8532 = vmatpush1.msra.mxu0 %v7892
        %8533 = vmatprep.subr.mxu0 %v7897
        %8534 = vmatpush1.msra.mxu0 %v7896
        %8535 = vmatprep.subr.mxu0 %v7901
        %8536 = vmatpush1.msra.mxu0 %v7900
        %8537 = vmatprep.subr.mxu0 %v7905
        %8538 = vmatpush1.msra.mxu0 %v7904
        %8539 = vmatprep.subr.mxu0 %v7909
        %8540 = vmatpush1.msra.mxu0 %v7908
        %8541 = vmatprep.subr.mxu0 %v7913
        %8542 = vmatpush1.msra.mxu0 %v7912
        %8543 = vmatprep.subr.mxu0 %v7917
        %8544 = vmatpush1.msra.mxu0 %v7916
        %8545 = vmatprep.subr.mxu0 %v7921
        %8546 = vmatpush1.msra.mxu0 %v7920
        %8547 = vmatprep.subr.mxu0 %v7925
        %8548 = vmatpush1.msra.mxu0 %v7924
        %8549 = vmatprep.mubr.f32.mxu0 %v8087
        %8550 = vmatmul.mubr.f32.gmra.mrb[0].mxu0 %v8083
        %v8551 = vpop.f32.mrb[0].mxu0
        %v8552 = vadd.f32 %v8481, %v8551
        %v8553 = vpop.f32.mrb[0].mxu0
        %v8554 = vadd.f32 %v8483, %v8553
        %8555 = vdwg.mxu0
        %8556 = vmatprep.subr.mxu0 %v7929
        %8557 = vmatpush1.msra.mxu0 %v7928
        %8558 = vmatprep.subr.mxu0 %v7933
        %8559 = vmatpush1.msra.mxu0 %v7932
        %8560 = vmatprep.subr.mxu0 %v7937
        %8561 = vmatpush1.msra.mxu0 %v7936
        %8562 = vmatprep.subr.mxu0 %v7941
        %8563 = vmatpush1.msra.mxu0 %v7940
        %8564 = vmatprep.subr.mxu0 %v7945
        %8565 = vmatpush1.msra.mxu0 %v7944
        %8566 = vmatprep.subr.mxu0 %v7949
        %8567 = vmatpush1.msra.mxu0 %v7948
        %8568 = vmatprep.subr.mxu0 %v7953
        %8569 = vmatpush1.msra.mxu0 %v7952
        %8570 = vmatprep.subr.mxu0 %v7957
        %8571 = vmatpush1.msra.mxu0 %v7956
        %8572 = vmatprep.subr.mxu0 %v7961
        %8573 = vmatpush1.msra.mxu0 %v7960
        %8574 = vmatprep.subr.mxu0 %v7965
        %8575 = vmatpush1.msra.mxu0 %v7964
        %8576 = vmatprep.subr.mxu0 %v7969
        %8577 = vmatpush1.msra.mxu0 %v7968
        %8578 = vmatprep.subr.mxu0 %v7973
        %8579 = vmatpush1.msra.mxu0 %v7972
        %8580 = vmatprep.subr.mxu0 %v7977
        %8581 = vmatpush1.msra.mxu0 %v7976
        %8582 = vmatprep.subr.mxu0 %v7981
        %8583 = vmatpush1.msra.mxu0 %v7980
        %8584 = vmatprep.subr.mxu0 %v7985
        %8585 = vmatpush1.msra.mxu0 %v7984
        %8586 = vmatprep.subr.mxu0 %v7989
        %8587 = vmatpush1.msra.mxu0 %v7988
        %8588 = vmatprep.subr.mxu0 %v7993
        %8589 = vmatpush1.msra.mxu0 %v7992
        %8590 = vmatprep.subr.mxu0 %v7997
        %8591 = vmatpush1.msra.mxu0 %v7996
        %8592 = vmatprep.subr.mxu0 %v8001
        %8593 = vmatpush1.msra.mxu0 %v8000
        %8594 = vmatprep.subr.mxu0 %v8005
        %8595 = vmatpush1.msra.mxu0 %v8004
        %8596 = vmatprep.subr.mxu0 %v8009
        %8597 = vmatpush1.msra.mxu0 %v8008
        %8598 = vmatprep.subr.mxu0 %v8013
        %8599 = vmatpush1.msra.mxu0 %v8012
        %8600 = vmatprep.subr.mxu0 %v8017
        %8601 = vmatpush1.msra.mxu0 %v8016
        %8602 = vmatprep.subr.mxu0 %v8021
        %8603 = vmatpush1.msra.mxu0 %v8020
        %8604 = vmatprep.subr.mxu0 %v8025
        %8605 = vmatpush1.msra.mxu0 %v8024
        %8606 = vmatprep.subr.mxu0 %v8029
        %8607 = vmatpush1.msra.mxu0 %v8028
        %8608 = vmatprep.subr.mxu0 %v8033
        %8609 = vmatpush1.msra.mxu0 %v8032
        %8610 = vmatprep.subr.mxu0 %v8037
        %8611 = vmatpush1.msra.mxu0 %v8036
        %8612 = vmatprep.subr.mxu0 %v8041
        %8613 = vmatpush1.msra.mxu0 %v8040
        %8614 = vmatprep.subr.mxu0 %v8045
        %8615 = vmatpush1.msra.mxu0 %v8044
        %8616 = vmatprep.subr.mxu0 %v8049
        %8617 = vmatpush1.msra.mxu0 %v8048
        %8618 = vmatprep.subr.mxu0 %v8053
        %8619 = vmatpush1.msra.mxu0 %v8052
        %8620 = vmatprep.mubr.f32.mxu0 %v8095
        %8621 = vmatmul.mubr.f32.gmra.mrb[0].mxu0 %v8091
        %v8622 = vpop.f32.mrb[0].mxu0
        %v8623 = vadd.f32 %v8552, %v8622
        %v8624 = vpop.f32.mrb[0].mxu0
        %v8625 = vadd.f32 %v8554, %v8624
        %8626 = vdwg.mxu0
        %8627 = vmatprep.subr.mxu0 %v8057
        %8628 = vmatpush1.msra.mxu0 %v8056
        %8629 = vmatprep.subr.mxu0 %v8061
        %8630 = vmatpush1.msra.mxu0 %v8060
        %8631 = vmatprep.subr.mxu0 %v8065
        %8632 = vmatpush1.msra.mxu0 %v8064
        %8633 = vmatprep.subr.mxu0 %v8069
        %8634 = vmatpush1.msra.mxu0 %v8068
        %8635 = vmatprep.subr.mxu0 0.0
        %8636 = vmatpush1.msra.mxu0 0.0
        %8637 = vmatprep.subr.mxu0 0.0
        %8638 = vmatpush1.msra.mxu0 0.0
        %8639 = vmatprep.subr.mxu0 0.0
        %8640 = vmatpush1.msra.mxu0 0.0
        %8641 = vmatprep.subr.mxu0 0.0
        %8642 = vmatpush1.msra.mxu0 0.0
        %8643 = vmatprep.subr.mxu0 0.0
        %8644 = vmatpush1.msra.mxu0 0.0
        %8645 = vmatprep.subr.mxu0 0.0
        %8646 = vmatpush1.msra.mxu0 0.0
        %8647 = vmatprep.subr.mxu0 0.0
        %8648 = vmatpush1.msra.mxu0 0.0
        %8649 = vmatprep.subr.mxu0 0.0
        %8650 = vmatpush1.msra.mxu0 0.0
        %8651 = vmatprep.subr.mxu0 0.0
        %8652 = vmatpush1.msra.mxu0 0.0
        %8653 = vmatprep.subr.mxu0 0.0
        %8654 = vmatpush1.msra.mxu0 0.0
        %8655 = vmatprep.subr.mxu0 0.0
        %8656 = vmatpush1.msra.mxu0 0.0
        %8657 = vmatprep.subr.mxu0 0.0
        %8658 = vmatpush1.msra.mxu0 0.0
        %8659 = vmatprep.subr.mxu0 0.0
        %8660 = vmatpush1.msra.mxu0 0.0
        %8661 = vmatprep.subr.mxu0 0.0
        %8662 = vmatpush1.msra.mxu0 0.0
        %8663 = vmatprep.subr.mxu0 0.0
        %8664 = vmatpush1.msra.mxu0 0.0
        %8665 = vmatprep.subr.mxu0 0.0
        %8666 = vmatpush1.msra.mxu0 0.0
        %8667 = vmatprep.subr.mxu0 0.0
        %8668 = vmatpush1.msra.mxu0 0.0
        %8669 = vmatprep.subr.mxu0 0.0
        %8670 = vmatpush1.msra.mxu0 0.0
        %8671 = vmatprep.subr.mxu0 0.0
        %8672 = vmatpush1.msra.mxu0 0.0
        %8673 = vmatprep.subr.mxu0 0.0
        %8674 = vmatpush1.msra.mxu0 0.0
        %8675 = vmatprep.subr.mxu0 0.0
        %8676 = vmatpush1.msra.mxu0 0.0
        %8677 = vmatprep.subr.mxu0 0.0
        %8678 = vmatpush1.msra.mxu0 0.0
        %8679 = vmatprep.subr.mxu0 0.0
        %8680 = vmatpush1.msra.mxu0 0.0
        %8681 = vmatprep.subr.mxu0 0.0
        %8682 = vmatpush1.msra.mxu0 0.0
        %8683 = vmatprep.subr.mxu0 0.0
        %8684 = vmatpush1.msra.mxu0 0.0
        %8685 = vmatprep.subr.mxu0 0.0
        %8686 = vmatpush1.msra.mxu0 0.0
        %8687 = vmatprep.subr.mxu0 0.0
        %8688 = vmatpush1.msra.mxu0 0.0
        %8689 = vmatprep.subr.mxu0 0.0
        %8690 = vmatpush1.msra.mxu0 0.0
        %8691 = vmatprep.mubr.f32.mxu0 0.0
        %8692 = vmatmul.mubr.f32.gmra.mrb[0].mxu0 %v8128
        %v8693 = vpop.f32.mrb[0].mxu0
        %v8694 = vadd.f32 %v8623, %v8693
        %v8695 = vpop.f32.mrb[0].mxu0
        %v8696 = vadd.f32 %v8625, %v8695
        %8697 = vdwg.mxu0
        %v8698 = vmax.f32 %v8410, 0.0
        %v8699 = vmax.f32 %v8412, 0.0
        %v8700 = vmax.f32 %v8694, 0.0
        %v8701 = vmax.f32 %v8696, 0.0
        %v8702 = vld [vmem:[%s7] sm:$0xff]
        %v8703 = vld [vmem:[%s7 + $0x8] sm:$0xff]
        %v8704 = vld [vmem:[%s7 + $0x10] sm:$0xff]
        %v8705 = vld [vmem:[%s7 + $0x18] sm:$0xff]
        %v8706 = vld [vmem:[%s7 + $0x20] sm:$0xff]
        %v8707 = vld [vmem:[%s7 + $0x28] sm:$0xff]
        %v8708 = vld [vmem:[%s7 + $0x30] sm:$0xff]
        %v8709 = vld [vmem:[%s7 + $0x38] sm:$0xff]
        %v8710 = vld [vmem:[%s7 + $0x40] sm:$0xff]
        %v8711 = vld [vmem:[%s7 + $0x48] sm:$0xff]
        %v8712 = vld [vmem:[%s7 + $0x50] sm:$0xff]
        %v8713 = vld [vmem:[%s7 + $0x58] sm:$0xff]
        %v8714 = vld [vmem:[%s7 + $0x60] sm:$0xff]
        %v8715 = vld [vmem:[%s7 + $0x68] sm:$0xff]
        %v8716 = vld [vmem:[%s7 + $0x70] sm:$0xff]
        %v8717 = vld [vmem:[%s7 + $0x78] sm:$0xff]
        %v8718 = vld [vmem:[%s7 + $0x80] sm:$0xff]
        %v8719 = vld [vmem:[%s7 + $0x88] sm:$0xff]
        %v8720 = vld [vmem:[%s7 + $0x90] sm:$0xff]
        %v8721 = vld [vmem:[%s7 + $0x98] sm:$0xff]
        %v8722 = vld [vmem:[%s7 + $0xa0] sm:$0xff]
        %v8723 = vld [vmem:[%s7 + $0xa8] sm:$0xff]
        %v8724 = vld [vmem:[%s7 + $0xb0] sm:$0xff]
        %v8725 = vld [vmem:[%s7 + $0xb8] sm:$0xff]
        %v8726 = vld [vmem:[%s7 + $0xc0] sm:$0xff]
        %v8727 = vld [vmem:[%s7 + $0xc8] sm:$0xff]
        %v8728 = vld [vmem:[%s7 + $0xd0] sm:$0xff]
        %v8729 = vld [vmem:[%s7 + $0xd8] sm:$0xff]
        %v8730 = vld [vmem:[%s7 + $0xe0] sm:$0xff]
        %v8731 = vld [vmem:[%s7 + $0xe8] sm:$0xff]
        %v8732 = vld [vmem:[%s7 + $0xf0] sm:$0xff]
        %v8733 = vld [vmem:[%s7 + $0xf8] sm:$0xff]
        %v8734 = vld [vmem:[%s7 + $0x100] sm:$0xff]
        %v8735 = vld [vmem:[%s7 + $0x108] sm:$0xff]
        %v8736 = vld [vmem:[%s7 + $0x110] sm:$0xff]
        %v8737 = vld [vmem:[%s7 + $0x118] sm:$0xff]
        %v8738 = vld [vmem:[%s7 + $0x120] sm:$0xff]
        %v8739 = vld [vmem:[%s7 + $0x128] sm:$0xff]
        %v8740 = vld [vmem:[%s7 + $0x130] sm:$0xff]
        %v8741 = vld [vmem:[%s7 + $0x138] sm:$0xff]
        %v8742 = vld [vmem:[%s7 + $0x140] sm:$0xff]
        %v8743 = vld [vmem:[%s7 + $0x148] sm:$0xff]
        %v8744 = vld [vmem:[%s7 + $0x150] sm:$0xff]
        %v8745 = vld [vmem:[%s7 + $0x158] sm:$0xff]
        %v8746 = vld [vmem:[%s7 + $0x160] sm:$0xff]
        %v8747 = vld [vmem:[%s7 + $0x168] sm:$0xff]
        %v8748 = vld [vmem:[%s7 + $0x170] sm:$0xff]
        %v8749 = vld [vmem:[%s7 + $0x178] sm:$0xff]
        %v8750 = vld [vmem:[%s7 + $0x180] sm:$0xff]
        %v8751 = vld [vmem:[%s7 + $0x188] sm:$0xff]
        %v8752 = vld [vmem:[%s7 + $0x190] sm:$0xff]
        %v8753 = vld [vmem:[%s7 + $0x198] sm:$0xff]
        %v8754 = vld [vmem:[%s7 + $0x1a0] sm:$0xff]
        %v8755 = vld [vmem:[%s7 + $0x1a8] sm:$0xff]
        %v8756 = vld [vmem:[%s7 + $0x1b0] sm:$0xff]
        %v8757 = vld [vmem:[%s7 + $0x1b8] sm:$0xff]
        %v8758 = vld [vmem:[%s7 + $0x1c0] sm:$0xff]
        %v8759 = vld [vmem:[%s7 + $0x1c8] sm:$0xff]
        %v8760 = vld [vmem:[%s7 + $0x1d0] sm:$0xff]
        %v8761 = vld [vmem:[%s7 + $0x1d8] sm:$0xff]
        %v8762 = vld [vmem:[%s7 + $0x1e0] sm:$0xff]
        %v8763 = vld [vmem:[%s7 + $0x1e8] sm:$0xff]
        %v8764 = vld [vmem:[%s7 + $0x1f0] sm:$0xf]
        %v8765 = vld [vmem:[%s8] sm:$0x1]
        %v8767 = vsel %vm6604, %v8701, 0
        %v8770 = vsel %vm6698, %v8764, 0
        %8772 = vmatprep.subr.mxu0 0.0
        %8773 = vmatpush1.msra.mxu0 %v8702
        %8774 = vmatprep.subr.mxu0 0.0
        %8775 = vmatpush1.msra.mxu0 %v8703
        %8776 = vmatprep.subr.mxu0 0.0
        %8777 = vmatpush1.msra.mxu0 %v8704
        %8778 = vmatprep.subr.mxu0 0.0
        %8779 = vmatpush1.msra.mxu0 %v8705
        %8780 = vmatprep.subr.mxu0 0.0
        %8781 = vmatpush1.msra.mxu0 %v8706
        %8782 = vmatprep.subr.mxu0 0.0
        %8783 = vmatpush1.msra.mxu0 %v8707
        %8784 = vmatprep.subr.mxu0 0.0
        %8785 = vmatpush1.msra.mxu0 %v8708
        %8786 = vmatprep.subr.mxu0 0.0
        %8787 = vmatpush1.msra.mxu0 %v8709
        %8788 = vmatprep.subr.mxu0 0.0
        %8789 = vmatpush1.msra.mxu0 %v8710
        %8790 = vmatprep.subr.mxu0 0.0
        %8791 = vmatpush1.msra.mxu0 %v8711
        %8792 = vmatprep.subr.mxu0 0.0
        %8793 = vmatpush1.msra.mxu0 %v8712
        %8794 = vmatprep.subr.mxu0 0.0
        %8795 = vmatpush1.msra.mxu0 %v8713
        %8796 = vmatprep.subr.mxu0 0.0
        %8797 = vmatpush1.msra.mxu0 %v8714
        %8798 = vmatprep.subr.mxu0 0.0
        %8799 = vmatpush1.msra.mxu0 %v8715
        %8800 = vmatprep.subr.mxu0 0.0
        %8801 = vmatpush1.msra.mxu0 %v8716
        %8802 = vmatprep.subr.mxu0 0.0
        %8803 = vmatpush1.msra.mxu0 %v8717
        %8804 = vmatprep.subr.mxu0 0.0
        %8805 = vmatpush1.msra.mxu0 %v8718
        %8806 = vmatprep.subr.mxu0 0.0
        %8807 = vmatpush1.msra.mxu0 %v8719
        %8808 = vmatprep.subr.mxu0 0.0
        %8809 = vmatpush1.msra.mxu0 %v8720
        %8810 = vmatprep.subr.mxu0 0.0
        %8811 = vmatpush1.msra.mxu0 %v8721
        %8812 = vmatprep.subr.mxu0 0.0
        %8813 = vmatpush1.msra.mxu0 %v8722
        %8814 = vmatprep.subr.mxu0 0.0
        %8815 = vmatpush1.msra.mxu0 %v8723
        %8816 = vmatprep.subr.mxu0 0.0
        %8817 = vmatpush1.msra.mxu0 %v8724
        %8818 = vmatprep.subr.mxu0 0.0
        %8819 = vmatpush1.msra.mxu0 %v8725
        %8820 = vmatprep.subr.mxu0 0.0
        %8821 = vmatpush1.msra.mxu0 %v8726
        %8822 = vmatprep.subr.mxu0 0.0
        %8823 = vmatpush1.msra.mxu0 %v8727
        %8824 = vmatprep.subr.mxu0 0.0
        %8825 = vmatpush1.msra.mxu0 %v8728
        %8826 = vmatprep.subr.mxu0 0.0
        %8827 = vmatpush1.msra.mxu0 %v8729
        %8828 = vmatprep.subr.mxu0 0.0
        %8829 = vmatpush1.msra.mxu0 %v8730
        %8830 = vmatprep.subr.mxu0 0.0
        %8831 = vmatpush1.msra.mxu0 %v8731
        %8832 = vmatprep.subr.mxu0 0.0
        %8833 = vmatpush1.msra.mxu0 %v8732
        %8834 = vmatprep.subr.mxu0 0.0
        %8835 = vmatpush1.msra.mxu0 %v8733
        %8836 = vmatprep.mubr.f32.mxu0 %v8699
        %8837 = vmatmul.mubr.f32.gmra.mrb[0].mxu0 %v8698
        %v8838 = vpop.f32.mrb[0].mxu0
        %v8839 = vadd.f32 %v8765, %v8838
        %v8840 = vpop.f32.mrb[0].mxu0
        %8841 = vdwg.mxu0
        %8842 = vmatprep.subr.mxu0 0.0
        %8843 = vmatpush1.msra.mxu0 %v8734
        %8844 = vmatprep.subr.mxu0 0.0
        %8845 = vmatpush1.msra.mxu0 %v8735
        %8846 = vmatprep.subr.mxu0 0.0
        %8847 = vmatpush1.msra.mxu0 %v8736
        %8848 = vmatprep.subr.mxu0 0.0
        %8849 = vmatpush1.msra.mxu0 %v8737
        %8850 = vmatprep.subr.mxu0 0.0
        %8851 = vmatpush1.msra.mxu0 %v8738
        %8852 = vmatprep.subr.mxu0 0.0
        %8853 = vmatpush1.msra.mxu0 %v8739
        %8854 = vmatprep.subr.mxu0 0.0
        %8855 = vmatpush1.msra.mxu0 %v8740
        %8856 = vmatprep.subr.mxu0 0.0
        %8857 = vmatpush1.msra.mxu0 %v8741
        %8858 = vmatprep.subr.mxu0 0.0
        %8859 = vmatpush1.msra.mxu0 %v8742
        %8860 = vmatprep.subr.mxu0 0.0
        %8861 = vmatpush1.msra.mxu0 %v8743
        %8862 = vmatprep.subr.mxu0 0.0
        %8863 = vmatpush1.msra.mxu0 %v8744
        %8864 = vmatprep.subr.mxu0 0.0
        %8865 = vmatpush1.msra.mxu0 %v8745
        %8866 = vmatprep.subr.mxu0 0.0
        %8867 = vmatpush1.msra.mxu0 %v8746
        %8868 = vmatprep.subr.mxu0 0.0
        %8869 = vmatpush1.msra.mxu0 %v8747
        %8870 = vmatprep.subr.mxu0 0.0
        %8871 = vmatpush1.msra.mxu0 %v8748
        %8872 = vmatprep.subr.mxu0 0.0
        %8873 = vmatpush1.msra.mxu0 %v8749
        %8874 = vmatprep.subr.mxu0 0.0
        %8875 = vmatpush1.msra.mxu0 %v8750
        %8876 = vmatprep.subr.mxu0 0.0
        %8877 = vmatpush1.msra.mxu0 %v8751
        %8878 = vmatprep.subr.mxu0 0.0
        %8879 = vmatpush1.msra.mxu0 %v8752
        %8880 = vmatprep.subr.mxu0 0.0
        %8881 = vmatpush1.msra.mxu0 %v8753
        %8882 = vmatprep.subr.mxu0 0.0
        %8883 = vmatpush1.msra.mxu0 %v8754
        %8884 = vmatprep.subr.mxu0 0.0
        %8885 = vmatpush1.msra.mxu0 %v8755
        %8886 = vmatprep.subr.mxu0 0.0
        %8887 = vmatpush1.msra.mxu0 %v8756
        %8888 = vmatprep.subr.mxu0 0.0
        %8889 = vmatpush1.msra.mxu0 %v8757
        %8890 = vmatprep.subr.mxu0 0.0
        %8891 = vmatpush1.msra.mxu0 %v8758
        %8892 = vmatprep.subr.mxu0 0.0
        %8893 = vmatpush1.msra.mxu0 %v8759
        %8894 = vmatprep.subr.mxu0 0.0
        %8895 = vmatpush1.msra.mxu0 %v8760
        %8896 = vmatprep.subr.mxu0 0.0
        %8897 = vmatpush1.msra.mxu0 %v8761
        %8898 = vmatprep.subr.mxu0 0.0
        %8899 = vmatpush1.msra.mxu0 %v8762
        %8900 = vmatprep.subr.mxu0 0.0
        %8901 = vmatpush1.msra.mxu0 %v8763
        %8902 = vmatprep.subr.mxu0 0.0
        %8903 = vmatpush1.msra.mxu0 %v8770
        %8904 = vmatprep.subr.mxu0 0.0
        %8905 = vmatpush1.msra.mxu0 0.0
        %8906 = vmatprep.mubr.f32.mxu0 %v8767
        %8907 = vmatmul.mubr.f32.gmra.mrb[0].mxu0 %v8700
        %v8908 = vpop.f32.mrb[0].mxu0
        %v8909 = vadd.f32 %v8839, %v8908
        %v8910 = vpop.f32.mrb[0].mxu0
        %8911 = vdwg.mxu0
        %vm8912 = vcmask 73728
        %v8913 = vsel %vm8912, %v8909, -inf
        %8914 = vmax.xlane.f32.xlu0 %v8913
        %v8915 = vpop.xlane.xlu0 %8914
        %v8916 = vsub.f32 %v8909, %v8915
        %v8917 = vmul.f32 %v8916, 1.442695
        %v8918 = vpow.pop %v8917
        %v8919 = vsel %vm8912, %v8918, 0.0
        %8920 = vadd.xlane.f32.xlu0 %v8919
        %v8921 = vpop.xlane.xlu0 %8920
        %v8922 = vlog2.pop %v8921
        %v8923 = vmul.f32 %v8922, 0.6931472
        %v8924 = vadd.f32 %v8915, %v8923
        %v8925 = vsub.f32 %v8909, %v8924
        %8926 = vst.msk [vmem:[%s324] sm:$0x1] %vm8912, %v8925
        %s8927 = sand.u32 %s225, 1
        %s8928 = scalar_lea.sflag [#allocation7], %s8927
        %s8929 = sand.u32 %s225, 1
        %s8930 = scalar_lea.vmem [#allocation6], %s8929
        // Predicated region
        $region57: #{net_forward.1} parent=55 // pred_check
          %p8931 = pneg %p235
        $region58: #{net_forward.1} parent=55 // pred_check_branch
          %8933 = sbr.rel (%p8931) target = $region60
        $region59: #{net_forward.1} parent=55 // pred_region
          %s8935 = ssub.s32 16, 16
          %8936 = vsyncadd %s8928, %s8935
          %s8937 = smul.addr %s23, 16
          %s8938 = scalar_lea.hbm %s9, %s8937
          %s8940 = sshll.u32 %s8930, 4
          %s8941 = int_to_ptr.vmem [resolvable:$true] %s8940
          %8943 = dma.vmem_to_hbm [thread:$0]  %s8941, 16, %s8938, %s8928
        $region60: #{net_forward.1} parent=55 // pred_fallthru
          _
      $region56: #{net_forward.1} parent=5 // pred_fallthru
        _
      %p8944 = scmp.le.s32.totalorder 2, %s18
      // Predicated region
      $region61: #{net_forward.1} parent=5 // pred_check
        %p8945 = pneg %p8944
      $region62: #{net_forward.1} parent=5 // pred_check_branch
        %8947 = sbr.rel (%p8945) target = $region64
      $region63: #{net_forward.1} parent=5 // pred_region
        %s8948 = ssub.s32 %s18, 2
        // Predicated region
        $region65: #{net_forward.1} parent=63 // pred_check
          %p8949 = pneg %p241
        $region66: #{net_forward.1} parent=63 // pred_check_branch
          %8951 = sbr.rel (%p8949) target = $region68
        $region67: #{net_forward.1} parent=63 // pred_region
          %s8952 = sand.u32 %s226, 1
          %s8953 = scalar_lea.sflag [#allocation7], %s8952
          %s8954 = sand.u32 %s226, 1
          %s8955 = scalar_lea.vmem [#allocation6], %s8954
          %8956 = dma.done %s8953, 16
        $region68: #{net_forward.1} parent=63 // pred_fallthru
          _
      $region64: #{net_forward.1} parent=5 // pred_fallthru
        _
    $region6: #{net_forward.1} parent=1 // loop_footer
      %s22 = sadd.s32 1, %s18
    $region7: #{net_forward.1} parent=1 // loop_footer_branch
      %17 = sbr.rel target = $region3
    $region8: #{net_forward.1} parent=1 // loop_exit
      _
    %8957 = vsyncpa [#allocation7], 1
    %s8958 = scalar_lea.sflag [#allocation7], 1
    %8959 = vsyncpa %s8958, 1

</llo_original>
